<compile_context>
chip_gen: v7x
topology: tpu7x:2x2x1
jax: 0.10.0
libtpu: 0.0.40
codegen_flags: <defaults>
</compile_context>

<pallas_src>
import functools
import math

import jax
import jax.numpy as jnp
from jax.experimental import pallas as pl
from jax.experimental.pallas import tpu as pltpu

PRIMITIVES = [
    'none', 'max_pool_3x3', 'avg_pool_3x3', 'skip_connect',
    'sep_conv_3x3', 'sep_conv_5x5', 'dil_conv_3x3', 'dil_conv_5x5',
]

_BN_EPS = 1e-5


# ----------------------------------------------------------------------------
# in-kernel helpers
# ----------------------------------------------------------------------------
def _bn_rows(y):
    """Training-mode BatchNorm (affine=False) over axis 0 of a [M, C] tile."""
    m = jnp.mean(y, axis=0, keepdims=True)
    v = jnp.mean(jnp.square(y - m), axis=0, keepdims=True)   # biased, like PyTorch train BN
    return (y - m) * jax.lax.rsqrt(v + _BN_EPS)


def _bn_nhwc(y):
    """Training-mode BatchNorm (affine=False) over (N,H,W) of a [N,H,W,C] tile."""
    m = y
    for ax in (0, 1, 2):
        m = jnp.mean(m, axis=ax, keepdims=True)
    v = jnp.square(y - m)
    for ax in (0, 1, 2):
        v = jnp.mean(v, axis=ax, keepdims=True)
    return (y - m) * jax.lax.rsqrt(v + _BN_EPS)


# ----------------------------------------------------------------------------
# trace-time helpers (pure Python / cheap JAX glue)
# ----------------------------------------------------------------------------
def _pad_nhwc(x, pad, value=0.0):
    if pad == 0:
        return x
    return jnp.pad(x, ((0, 0), (pad, pad), (pad, pad), (0, 0)), constant_values=value)


def _tap_plan(k, stride, dil):
    """For each (ky,kx) tap: which stride-phase of the padded input it reads and the
    static (row, col) start inside that phase.  Phases are the stride-decimated copies
    of the padded input, so every in-kernel read is an unstrided static window."""
    phase_keys, taps = [], []
    for ky in range(k):
        for kx in range(k):
            oy, ox = ky * dil, kx * dil
            pk = (oy % stride, ox % stride)
            if pk not in phase_keys:
                phase_keys.append(pk)
            taps.append((phase_keys.index(pk), oy // stride, ox // stride))
    return tuple(phase_keys), tuple(taps)


def _out_size(H, pad, k, stride, dil):
    return (H + 2 * pad - dil * (k - 1) - 1) // stride + 1


# ----------------------------------------------------------------------------
# fused Pallas kernels (each op below is exactly ONE pallas_call)
# ----------------------------------------------------------------------------
@jax.jit
def stem_conv_bn(x, w):
    """Conv2d(3x3, pad=1, bias-free) + BatchNorm, fused.  Cin is tiny (3) so the
    spatial taps run as VPU MACs over shifted windows -- no im2col."""
    N, H, W, Cin = x.shape
    kh, kw, _, Cout = w.shape
    xp = _pad_nhwc(x, 1)
    taps = tuple((ky, kx) for ky in range(kh) for kx in range(kw))

    def kernel(w_ref, x_ref, o_ref):
        y = None
        for t, (ky, kx) in enumerate(taps):
            xs = x_ref[:, ky:ky + H, kx:kx + W, :]
            for ci in range(Cin):
                r = t * Cin + ci
                term = xs[..., ci:ci + 1] * w_ref[r:r + 1, :]
                y = term if y is None else y + term
        o_ref[...] = _bn_nhwc(y)

    return pl.pallas_call(
        kernel,
        out_shape=jax.ShapeDtypeStruct((N, H, W, Cout), jnp.float32),
    )(w.reshape(kh * kw * Cin, Cout), xp)


@functools.partial(jax.jit, static_argnames=('k', 'stride', 'pad', 'dil'))
def dw_pw_bn(x, dw, pw, *, k, stride, pad, dil):
    """Fused ReLU -> depthwise conv(k, stride, pad, dilation) -> 1x1 conv -> BatchNorm.
    Depthwise and pointwise both run on the VPU (C=8..16 lanes); stride-2 taps read
    phase-decimated copies of the padded input so all in-kernel loads are unstrided."""
    N, H, W, C = x.shape
    Cout = pw.shape[1]
    Ho = _out_size(H, pad, k, stride, dil)
    Wo = _out_size(W, pad, k, stride, dil)
    xp = _pad_nhwc(x, pad)
    phase_keys, taps = _tap_plan(k, stride, dil)
    phases = [xp[:, py::stride, px::stride, :] for (py, px) in phase_keys]
    nphase = len(phases)

    def kernel(dw_ref, pw_ref, *refs):
        phase_refs, o_ref = refs[:nphase], refs[-1]
        acc = None
        for t, (pi, sy, sx) in enumerate(taps):
            xs = jnp.maximum(phase_refs[pi][:, sy:sy + Ho, sx:sx + Wo, :], 0.0)
            term = xs * dw_ref[t:t + 1, :]
            acc = term if acc is None else acc + term
        y = None
        for ci in range(C):
            term = acc[..., ci:ci + 1] * pw_ref[ci:ci + 1, :]
            y = term if y is None else y + term
        o_ref[...] = _bn_nhwc(y)

    return pl.pallas_call(
        kernel,
        out_shape=jax.ShapeDtypeStruct((N, Ho, Wo, Cout), jnp.float32),
    )(dw.reshape(k * k, C), pw, *phases)


@functools.partial(jax.jit, static_argnames=('stride',))
def max_pool_3x3(x, *, stride):
    """MaxPool2d(3, stride, padding=1) as a single window-reduce kernel."""
    N, H, W, C = x.shape
    Ho = _out_size(H, 1, 3, stride, 1)
    Wo = _out_size(W, 1, 3, stride, 1)
    xp = _pad_nhwc(x, 1, value=-jnp.inf)
    phase_keys, taps = _tap_plan(3, stride, 1)
    phases = [xp[:, py::stride, px::stride, :] for (py, px) in phase_keys]
    nphase = len(phases)

    def kernel(*refs):
        phase_refs, o_ref = refs[:nphase], refs[-1]
        acc = None
        for (pi, sy, sx) in taps:
            s = phase_refs[pi][:, sy:sy + Ho, sx:sx + Wo, :]
            acc = s if acc is None else jnp.maximum(acc, s)
        o_ref[...] = acc

    return pl.pallas_call(
        kernel,
        out_shape=jax.ShapeDtypeStruct((N, Ho, Wo, C), jnp.float32),
    )(*phases)


@functools.partial(jax.jit, static_argnames=('stride',))
def avg_pool_3x3(x, *, stride):
    """AvgPool2d(3, stride, padding=1, count_include_pad=False), fused."""
    N, H, W, C = x.shape
    Ho = _out_size(H, 1, 3, stride, 1)
    Wo = _out_size(W, 1, 3, stride, 1)
    xp = _pad_nhwc(x, 1, value=0.0)
    phase_keys, taps = _tap_plan(3, stride, 1)
    phases = [xp[:, py::stride, px::stride, :] for (py, px) in phase_keys]
    nphase = len(phases)
    # per-position 1/valid_count (count_include_pad=False); trace-time constant
    cy = [min(i * stride + 2, H) - max(i * stride - 1, 0) for i in range(Ho)]
    cx = [min(j * stride + 2, W) - max(j * stride - 1, 0) for j in range(Wo)]
    inv_cnt = jnp.asarray([[1.0 / (a * b) for b in cx] for a in cy],
                          dtype=jnp.float32).reshape(1, Ho, Wo, 1)

    def kernel(*refs):
        phase_refs, inv_ref, o_ref = refs[:nphase], refs[nphase], refs[-1]
        acc = None
        for (pi, sy, sx) in taps:
            s = phase_refs[pi][:, sy:sy + Ho, sx:sx + Wo, :]
            acc = s if acc is None else acc + s
        o_ref[...] = acc * inv_ref[...]

    return pl.pallas_call(
        kernel,
        out_shape=jax.ShapeDtypeStruct((N, Ho, Wo, C), jnp.float32),
    )(*phases, inv_cnt)


def _pw_bn_kernel(x_ref, w_ref, o_ref):
    a = jnp.maximum(x_ref[...], 0.0)
    o_ref[...] = _bn_rows(jnp.dot(a, w_ref[...], preferred_element_type=jnp.float32))


@jax.jit
def relu_conv_bn_1x1(x, w):
    """ReLUConvBN with a 1x1 conv: one fused MXU matmul kernel on the [M, Cin] view."""
    N, H, W, Cin = x.shape
    Cout = w.shape[1]
    out = pl.pallas_call(
        _pw_bn_kernel,
        out_shape=jax.ShapeDtypeStruct((N * H * W, Cout), jnp.float32),
    )(x.reshape(N * H * W, Cin), w)
    return out.reshape(N, H, W, Cout)


def _fr_kernel(x0_ref, x1_ref, w1_ref, w2_ref, o_ref):
    ch = w1_ref.shape[1]
    for x_ref, w_ref, lo in ((x0_ref, w1_ref, 0), (x1_ref, w2_ref, ch)):
        a = jnp.maximum(x_ref[...], 0.0)
        y = jnp.dot(a, w_ref[...], preferred_element_type=jnp.float32)
        o_ref[:, lo:lo + ch] = _bn_rows(y)       # per-channel BN == BN of the concat


@jax.jit
def factorized_reduce(x, w1, w2):
    """ReLU -> two 1x1/stride-2 convs (even / odd spatial phase) -> concat -> BN,
    fused; the stride-2 subsampling is done in JAX and shrinks HBM traffic 4x."""
    N, H, W, Cin = x.shape
    ch = w1.shape[1]
    x0 = x[:, ::2, ::2, :]
    x1 = x[:, 1::2, 1::2, :]
    Ho, Wo = x0.shape[1], x0.shape[2]
    M = N * Ho * Wo
    out = pl.pallas_call(
        _fr_kernel,
        out_shape=jax.ShapeDtypeStruct((M, 2 * ch), jnp.float32),
    )(x0.reshape(M, Cin), x1.reshape(M, Cin), w1, w2)
    return out.reshape(N, Ho, Wo, 2 * ch)


@functools.partial(jax.jit, static_argnames=('idxs',))
def mixed_combine(z, ys, *, idxs):
    """out = sum_k z[idxs[k]] * ys[k]; z in SMEM, op outputs in VMEM (no stack copy).
    The 'none' primitive (exact zeros) is never computed nor read."""
    n = len(ys)

    def kernel(z_ref, *refs):
        y_refs, o_ref = refs[:n], refs[-1]
        acc = None
        for pos, zi in enumerate(idxs):
            term = y_refs[pos][...] * z_ref[zi]
            acc = term if acc is None else acc + term
        o_ref[...] = acc

    return pl.pallas_call(
        kernel,
        out_shape=jax.ShapeDtypeStruct(ys[0].shape, jnp.float32),
        in_specs=[pl.BlockSpec(memory_space=pltpu.MemorySpace.SMEM)]
        + [pl.BlockSpec(memory_space=pltpu.MemorySpace.VMEM)] * n,
        out_specs=pl.BlockSpec(memory_space=pltpu.MemorySpace.VMEM),
    )(z, *ys)


def _gap_fc_kernel(x_ref, w_ref, b_ref, o_ref):
    pooled = jnp.mean(x_ref[...], axis=1)                                   # [N, C]
    o_ref[...] = jnp.dot(pooled, w_ref[...],
                         preferred_element_type=jnp.float32) + b_ref[...]


@jax.jit
def gap_fc(x, w, b):
    """Fused AdaptiveAvgPool2d(1) + Linear."""
    N, H, W, C = x.shape
    ncls = w.shape[1]
    return pl.pallas_call(
        _gap_fc_kernel,
        out_shape=jax.ShapeDtypeStruct((N, ncls), jnp.float32),
    )(x.reshape(N, H * W, C), w, b.reshape(1, ncls))


# ----------------------------------------------------------------------------
# DARTS / SNAS operations built from the fused kernels
# ----------------------------------------------------------------------------
def sep_conv(x, p, k, pad, stride):
    y = dw_pw_bn(x, p['dw1'], p['pw1'], k=k, stride=stride, pad=pad, dil=1)
    return dw_pw_bn(y, p['dw2'], p['pw2'], k=k, stride=1, pad=pad, dil=1)


def mixed_op_forward(x, z, p, stride):
    ys, idxs = [], []
    ys.append(max_pool_3x3(x, stride=stride))
    idxs.append(1)
    ys.append(avg_pool_3x3(x, stride=stride))
    idxs.append(2)
    if stride == 1:
        ys.append(x)                                   # skip_connect == identity
    else:
        ys.append(factorized_reduce(x, p['skip_connect']['w1'], p['skip_connect']['w2']))
    idxs.append(3)
    ys.append(sep_conv(x, p['sep_conv_3x3'], 3, 1, stride))
    idxs.append(4)
    ys.append(sep_conv(x, p['sep_conv_5x5'], 5, 2, stride))
    idxs.append(5)
    ys.append(dw_pw_bn(x, p['dil_conv_3x3']['dw'], p['dil_conv_3x3']['pw'],
                       k=3, stride=stride, pad=2, dil=2))
    idxs.append(6)
    ys.append(dw_pw_bn(x, p['dil_conv_5x5']['dw'], p['dil_conv_5x5']['pw'],
                       k=5, stride=stride, pad=4, dil=2))
    idxs.append(7)
    # PRIMITIVES[0] == 'none' contributes exactly zero and is skipped.
    return mixed_combine(z, tuple(ys), idxs=tuple(idxs))


def cell_forward(cfg, p, s0, s1, Z):
    if cfg['reduction_prev']:
        s0 = factorized_reduce(s0, p['pre0']['w1'], p['pre0']['w2'])
    else:
        s0 = relu_conv_bn_1x1(s0, p['pre0']['w'])
    s1 = relu_conv_bn_1x1(s1, p['pre1']['w'])
    states = [s0, s1]
    offset = 0
    for _ in range(cfg['steps']):
        s = None
        for j, h in enumerate(states):
            o = mixed_op_forward(h, Z[offset + j], p['ops'][offset + j],
                                 cfg['strides'][offset + j])
            s = o if s is None else s + o
        offset += len(states)
        states.append(s)
    return jnp.concatenate(states[-cfg['multiplier']:], axis=-1)


# ----------------------------------------------------------------------------
# Deterministic parameter construction (shapes follow the PyTorch __init__)
# ----------------------------------------------------------------------------
class _ParamMaker:
    def __init__(self, key):
        self._key, self._n = key, 0

    def __call__(self, shape, scale=0.1):
        self._n += 1
        return scale * jax.random.normal(jax.random.fold_in(self._key, self._n),
                                         shape, jnp.float32)


def init_mixed_op(pm, C, stride):
    p = {}
    for k, name in ((3, 'sep_conv_3x3'), (5, 'sep_conv_5x5')):
        p[name] = {'dw1': pm((k, k, C)), 'pw1': pm((C, C)),
                   'dw2': pm((k, k, C)), 'pw2': pm((C, C))}
    for k, name in ((3, 'dil_conv_3x3'), (5, 'dil_conv_5x5')):
        p[name] = {'dw': pm((k, k, C)), 'pw': pm((C, C))}
    if stride != 1:
        p['skip_connect'] = {'w1': pm((C, C // 2)), 'w2': pm((C, C // 2))}
    return p


def mixed_op_cost(C, h, w, ratio=1.0):
    """Faithful reimplementation of MixedOp.__init__ cost bookkeeping (incl. its quirks:
    FLOP1 is overwritten with 0, pool primitives reuse the previous FLOP/MAC)."""
    costs = []
    FLOP, MAC = 0.0, 0.0
    for prim in PRIMITIVES:
        k = 5 if '5x5' in prim else 3
        if 'sep' in prim:
            FLOP = 0.0
            FLOP1 = FLOP / C
            FLOP2 = h * w * k * k
            FLOP = (FLOP1 + FLOP2) * 2
            MAC1 = h * w * (C + C) + C * C
            MAC2 = MAC1 + C * C / C
            MAC = (MAC1 + MAC2) * 2
        if 'dil' in prim:
            FLOP = w * h * C * C * k * k / C + w * h * C * C
            MAC1 = w * h * (C + C) + k * k * C * C / C
            MAC2 = w * h * (C + C) + 1 * 1 * C * C / 1
            MAC = MAC1 + MAC2
        if 'skip' in prim:
            FLOP, MAC = 0.0, 2.0 * C * h * w
        if 'none' in prim:
            FLOP, MAC = 0.0, 0.0
        costs.append(FLOP + ratio * MAC)
    return float(sum(costs))


def init_network(key, C=4, num_classes=10, layers=2, steps=4, multiplier=4,
                 stem_multiplier=3, input_channels=3, shape=(3, 16, 16)):
    pm = _ParamMaker(key)
    h, w = shape[1], shape[2]
    C_curr = stem_multiplier * C
    params = {'stem_w': pm((3, 3, input_channels, C_curr))}
    cfgs, cells = [], []
    C_pp, C_p, C_curr = C_curr, C_curr, C
    total_cost, reduction_prev = 0.0, False
    for i in range(layers):
        if i in [layers // 3, 2 * layers // 3]:
            C_curr *= 2
            reduction = True
            h, w = [int(math.ceil(1.0 * x / 2)) for x in [h, w]]
            assert h > 3 or w > 3
        else:
            reduction = False
        strides, ops = [], []
        for s in range(steps):
            for j in range(2 + s):
                stride = 2 if reduction and j < 2 else 1
                strides.append(stride)
                ops.append(init_mixed_op(pm, C_curr, stride))
        if reduction_prev:
            pre0 = {'w1': pm((C_pp, C_curr // 2)), 'w2': pm((C_pp, C_curr // 2))}
        else:
            pre0 = {'w': pm((C_pp, C_curr))}
        pre1 = {'w': pm((C_p, C_curr))}
        cells.append({'pre0': pre0, 'pre1': pre1, 'ops': ops})
        cfgs.append({'reduction': reduction, 'reduction_prev': reduction_prev,
                     'steps': steps, 'multiplier': multiplier, 'strides': strides})
        mc = mixed_op_cost(C_curr, h, w)
        step_costs = [(2 + s) * mc for s in range(steps)]
        total_cost += sum(step_costs[-multiplier:])
        reduction_prev = reduction
        C_pp, C_p = C_p, multiplier * C_curr
    params['cells'] = cells
    params['fc_w'] = pm((C_p, num_classes))      # Linear stored as [in, out]
    params['fc_b'] = pm((num_classes,))
    k_alpha = sum(2 + i for i in range(steps))
    params['alphas_normal'] = 0.001 * jax.random.normal(
        jax.random.fold_in(key, 900001), (k_alpha, len(PRIMITIVES)), jnp.float32)
    params['alphas_reduce'] = 0.001 * jax.random.normal(
        jax.random.fold_in(key, 900002), (k_alpha, len(PRIMITIVES)), jnp.float32)
    params['total_cost'] = jnp.float32(total_cost)
    return params, cfgs


# ----------------------------------------------------------------------------
# architect_dist (RelaxedOneHotCategorical / Concrete) and Network forward
# ----------------------------------------------------------------------------
@jax.jit
def architect_dist(key, alpha, temperature):
    # TODO(synk): torch's RelaxedOneHotCategorical(temperature, alpha) treats alpha as
    # (unnormalized) probs; with the 0.001*randn init those can be negative, so here we
    # use softmax(alpha) as the category probabilities to keep the density well-defined.
    k1, k2 = jax.random.split(key)
    logits = jax.nn.log_softmax(alpha, axis=-1)
    K = alpha.shape[-1]
    tau = jnp.float32(temperature)

    def sample(k):
        g = jax.random.gumbel(k, alpha.shape, jnp.float32)
        return jax.nn.softmax((logits + g) / tau, axis=-1)

    z = sample(k1)
    y = sample(k2)                                  # independent sample, like the torch code
    log_y = jnp.log(y + 1e-20)
    log_prob = (jax.scipy.special.gammaln(jnp.float32(K)) + (K - 1) * jnp.log(tau)
                + jnp.sum(logits - (tau + 1.0) * log_y, axis=-1)
                - K * jax.scipy.special.logsumexp(logits - tau * log_y, axis=-1))
    return z, -log_prob


def network_forward(params, cfgs, x_nchw, temperature, key):
    # layout: transpose the PyTorch NCHW input to NHWC once here.
    x = jnp.transpose(x_nchw, (0, 2, 3, 1)).astype(jnp.float32)
    s = stem_conv_bn(x, params['stem_w'])
    s0 = s1 = s
    score_function = None
    for i, (cfg, cp) in enumerate(zip(cfgs, params['cells'])):
        alpha = params['alphas_reduce'] if cfg['reduction'] else params['alphas_normal']
        Z, score_function = architect_dist(jax.random.fold_in(key, i), alpha, temperature)
        s2 = cell_forward(cfg, cp, s0, s1, Z)
        s0, s1 = s1, s2
    logits = gap_fc(s1, params['fc_w'], params['fc_b'])
    return logits, score_function, params['total_cost']


if __name__ == "__main__":
    root = jax.random.PRNGKey(0)
    k_param, k_input, k_sample = jax.random.split(root, 3)
    params, cfgs = init_network(k_param, C=4, num_classes=10, layers=2,
                                steps=4, multiplier=4, stem_multiplier=3,
                                input_channels=3, shape=(3, 16, 16))
    x = jax.random.normal(k_input, (2, 3, 16, 16), jnp.float32)   # NCHW, like the PyTorch module
    logits, score_fn, costs = network_forward(params, cfgs, x, 1.0, k_sample)
    jax.block_until_ready((logits, score_fn, costs))
    assert logits.shape == (2, 10)
    assert score_fn.shape == (14,)
    assert bool(jnp.all(jnp.isfinite(logits)))
    print("KERNEL_OK")
</pallas_src>

<mosaic_0001>
module attributes {stable_mosaic.version = 11 : i64} {
  func.func @kernel(%arg0: memref<27x12xf32, #tpu.memory_space<vmem>>, %arg1: memref<2x18x18x3xf32, #tpu.memory_space<vmem>>, %arg2: memref<2x16x16x12xf32, #tpu.memory_space<vmem>>) attributes {dimension_semantics = [], scalar_prefetch = 0 : i64, scratch_operands = 0 : i64, tpu.core_type = #tpu.core_type<tc>} {
    %c0 = arith.constant 0 : index
    %c0_0 = arith.constant 0 : index
    %c0_1 = arith.constant 0 : index
    %c0_2 = arith.constant 0 : index
    %0 = vector.load %arg1[%c0, %c0_0, %c0_1, %c0_2] : memref<2x18x18x3xf32, #tpu.memory_space<vmem>>, vector<2x16x16x3xf32>
    %1 = vector.extract_strided_slice %0 {offsets = [0, 0, 0, 0], sizes = [2, 16, 16, 1], strides = [1, 1, 1, 1]} : vector<2x16x16x3xf32> to vector<2x16x16x1xf32>
    %c0_3 = arith.constant 0 : index
    %c0_4 = arith.constant 0 : index
    %2 = vector.load %arg0[%c0_3, %c0_4] : memref<27x12xf32, #tpu.memory_space<vmem>>, vector<1x12xf32>
    %3 = vector.shape_cast %2 : vector<1x12xf32> to vector<1x1x1x12xf32>
    %4 = vector.broadcast %1 : vector<2x16x16x1xf32> to vector<2x16x16x12xf32>
    %5 = vector.broadcast %3 : vector<1x1x1x12xf32> to vector<2x16x16x12xf32>
    %6 = arith.mulf %4, %5 : vector<2x16x16x12xf32>
    %7 = vector.extract_strided_slice %0 {offsets = [0, 0, 0, 1], sizes = [2, 16, 16, 1], strides = [1, 1, 1, 1]} : vector<2x16x16x3xf32> to vector<2x16x16x1xf32>
    %c1 = arith.constant 1 : index
    %c0_5 = arith.constant 0 : index
    %8 = vector.load %arg0[%c1, %c0_5] : memref<27x12xf32, #tpu.memory_space<vmem>>, vector<1x12xf32>
    %9 = vector.shape_cast %8 : vector<1x12xf32> to vector<1x1x1x12xf32>
    %10 = vector.broadcast %7 : vector<2x16x16x1xf32> to vector<2x16x16x12xf32>
    %11 = vector.broadcast %9 : vector<1x1x1x12xf32> to vector<2x16x16x12xf32>
    %12 = arith.mulf %10, %11 : vector<2x16x16x12xf32>
    %13 = arith.addf %6, %12 : vector<2x16x16x12xf32>
    %14 = vector.extract_strided_slice %0 {offsets = [0, 0, 0, 2], sizes = [2, 16, 16, 1], strides = [1, 1, 1, 1]} : vector<2x16x16x3xf32> to vector<2x16x16x1xf32>
    %c2 = arith.constant 2 : index
    %c0_6 = arith.constant 0 : index
    %15 = vector.load %arg0[%c2, %c0_6] : memref<27x12xf32, #tpu.memory_space<vmem>>, vector<1x12xf32>
    %16 = vector.shape_cast %15 : vector<1x12xf32> to vector<1x1x1x12xf32>
    %17 = vector.broadcast %14 : vector<2x16x16x1xf32> to vector<2x16x16x12xf32>
    %18 = vector.broadcast %16 : vector<1x1x1x12xf32> to vector<2x16x16x12xf32>
    %19 = arith.mulf %17, %18 : vector<2x16x16x12xf32>
    %20 = arith.addf %13, %19 : vector<2x16x16x12xf32>
    %c0_7 = arith.constant 0 : index
    %c0_8 = arith.constant 0 : index
    %c1_9 = arith.constant 1 : index
    %c0_10 = arith.constant 0 : index
    %21 = vector.load %arg1[%c0_7, %c0_8, %c1_9, %c0_10] : memref<2x18x18x3xf32, #tpu.memory_space<vmem>>, vector<2x16x16x3xf32>
    %22 = vector.extract_strided_slice %21 {offsets = [0, 0, 0, 0], sizes = [2, 16, 16, 1], strides = [1, 1, 1, 1]} : vector<2x16x16x3xf32> to vector<2x16x16x1xf32>
    %c3 = arith.constant 3 : index
    %c0_11 = arith.constant 0 : index
    %23 = vector.load %arg0[%c3, %c0_11] : memref<27x12xf32, #tpu.memory_space<vmem>>, vector<1x12xf32>
    %24 = vector.shape_cast %23 : vector<1x12xf32> to vector<1x1x1x12xf32>
    %25 = vector.broadcast %22 : vector<2x16x16x1xf32> to vector<2x16x16x12xf32>
    %26 = vector.broadcast %24 : vector<1x1x1x12xf32> to vector<2x16x16x12xf32>
    %27 = arith.mulf %25, %26 : vector<2x16x16x12xf32>
    %28 = arith.addf %20, %27 : vector<2x16x16x12xf32>
    %29 = vector.extract_strided_slice %21 {offsets = [0, 0, 0, 1], sizes = [2, 16, 16, 1], strides = [1, 1, 1, 1]} : vector<2x16x16x3xf32> to vector<2x16x16x1xf32>
    %c4 = arith.constant 4 : index
    %c0_12 = arith.constant 0 : index
    %30 = vector.load %arg0[%c4, %c0_12] : memref<27x12xf32, #tpu.memory_space<vmem>>, vector<1x12xf32>
    %31 = vector.shape_cast %30 : vector<1x12xf32> to vector<1x1x1x12xf32>
    %32 = vector.broadcast %29 : vector<2x16x16x1xf32> to vector<2x16x16x12xf32>
    %33 = vector.broadcast %31 : vector<1x1x1x12xf32> to vector<2x16x16x12xf32>
    %34 = arith.mulf %32, %33 : vector<2x16x16x12xf32>
    %35 = arith.addf %28, %34 : vector<2x16x16x12xf32>
    %36 = vector.extract_strided_slice %21 {offsets = [0, 0, 0, 2], sizes = [2, 16, 16, 1], strides = [1, 1, 1, 1]} : vector<2x16x16x3xf32> to vector<2x16x16x1xf32>
    %c5 = arith.constant 5 : index
    %c0_13 = arith.constant 0 : index
    %37 = vector.load %arg0[%c5, %c0_13] : memref<27x12xf32, #tpu.memory_space<vmem>>, vector<1x12xf32>
    %38 = vector.shape_cast %37 : vector<1x12xf32> to vector<1x1x1x12xf32>
    %39 = vector.broadcast %36 : vector<2x16x16x1xf32> to vector<2x16x16x12xf32>
    %40 = vector.broadcast %38 : vector<1x1x1x12xf32> to vector<2x16x16x12xf32>
    %41 = arith.mulf %39, %40 : vector<2x16x16x12xf32>
    %42 = arith.addf %35, %41 : vector<2x16x16x12xf32>
    %c0_14 = arith.constant 0 : index
    %c0_15 = arith.constant 0 : index
    %c2_16 = arith.constant 2 : index
    %c0_17 = arith.constant 0 : index
    %43 = vector.load %arg1[%c0_14, %c0_15, %c2_16, %c0_17] : memref<2x18x18x3xf32, #tpu.memory_space<vmem>>, vector<2x16x16x3xf32>
    %44 = vector.extract_strided_slice %43 {offsets = [0, 0, 0, 0], sizes = [2, 16, 16, 1], strides = [1, 1, 1, 1]} : vector<2x16x16x3xf32> to vector<2x16x16x1xf32>
    %c6 = arith.constant 6 : index
    %c0_18 = arith.constant 0 : index
    %45 = vector.load %arg0[%c6, %c0_18] : memref<27x12xf32, #tpu.memory_space<vmem>>, vector<1x12xf32>
    %46 = vector.shape_cast %45 : vector<1x12xf32> to vector<1x1x1x12xf32>
    %47 = vector.broadcast %44 : vector<2x16x16x1xf32> to vector<2x16x16x12xf32>
    %48 = vector.broadcast %46 : vector<1x1x1x12xf32> to vector<2x16x16x12xf32>
    %49 = arith.mulf %47, %48 : vector<2x16x16x12xf32>
    %50 = arith.addf %42, %49 : vector<2x16x16x12xf32>
    %51 = vector.extract_strided_slice %43 {offsets = [0, 0, 0, 1], sizes = [2, 16, 16, 1], strides = [1, 1, 1, 1]} : vector<2x16x16x3xf32> to vector<2x16x16x1xf32>
    %c7 = arith.constant 7 : index
    %c0_19 = arith.constant 0 : index
    %52 = vector.load %arg0[%c7, %c0_19] : memref<27x12xf32, #tpu.memory_space<vmem>>, vector<1x12xf32>
    %53 = vector.shape_cast %52 : vector<1x12xf32> to vector<1x1x1x12xf32>
    %54 = vector.broadcast %51 : vector<2x16x16x1xf32> to vector<2x16x16x12xf32>
    %55 = vector.broadcast %53 : vector<1x1x1x12xf32> to vector<2x16x16x12xf32>
    %56 = arith.mulf %54, %55 : vector<2x16x16x12xf32>
    %57 = arith.addf %50, %56 : vector<2x16x16x12xf32>
    %58 = vector.extract_strided_slice %43 {offsets = [0, 0, 0, 2], sizes = [2, 16, 16, 1], strides = [1, 1, 1, 1]} : vector<2x16x16x3xf32> to vector<2x16x16x1xf32>
    %c8 = arith.constant 8 : index
    %c0_20 = arith.constant 0 : index
    %59 = vector.load %arg0[%c8, %c0_20] : memref<27x12xf32, #tpu.memory_space<vmem>>, vector<1x12xf32>
    %60 = vector.shape_cast %59 : vector<1x12xf32> to vector<1x1x1x12xf32>
    %61 = vector.broadcast %58 : vector<2x16x16x1xf32> to vector<2x16x16x12xf32>
    %62 = vector.broadcast %60 : vector<1x1x1x12xf32> to vector<2x16x16x12xf32>
    %63 = arith.mulf %61, %62 : vector<2x16x16x12xf32>
    %64 = arith.addf %57, %63 : vector<2x16x16x12xf32>
    %c0_21 = arith.constant 0 : index
    %c1_22 = arith.constant 1 : index
    %c0_23 = arith.constant 0 : index
    %c0_24 = arith.constant 0 : index
    %65 = vector.load %arg1[%c0_21, %c1_22, %c0_23, %c0_24] : memref<2x18x18x3xf32, #tpu.memory_space<vmem>>, vector<2x16x16x3xf32>
    %66 = vector.extract_strided_slice %65 {offsets = [0, 0, 0, 0], sizes = [2, 16, 16, 1], strides = [1, 1, 1, 1]} : vector<2x16x16x3xf32> to vector<2x16x16x1xf32>
    %c9 = arith.constant 9 : index
    %c0_25 = arith.constant 0 : index
    %67 = vector.load %arg0[%c9, %c0_25] : memref<27x12xf32, #tpu.memory_space<vmem>>, vector<1x12xf32>
    %68 = vector.shape_cast %67 : vector<1x12xf32> to vector<1x1x1x12xf32>
    %69 = vector.broadcast %66 : vector<2x16x16x1xf32> to vector<2x16x16x12xf32>
    %70 = vector.broadcast %68 : vector<1x1x1x12xf32> to vector<2x16x16x12xf32>
    %71 = arith.mulf %69, %70 : vector<2x16x16x12xf32>
    %72 = arith.addf %64, %71 : vector<2x16x16x12xf32>
    %73 = vector.extract_strided_slice %65 {offsets = [0, 0, 0, 1], sizes = [2, 16, 16, 1], strides = [1, 1, 1, 1]} : vector<2x16x16x3xf32> to vector<2x16x16x1xf32>
    %c10 = arith.constant 10 : index
    %c0_26 = arith.constant 0 : index
    %74 = vector.load %arg0[%c10, %c0_26] : memref<27x12xf32, #tpu.memory_space<vmem>>, vector<1x12xf32>
    %75 = vector.shape_cast %74 : vector<1x12xf32> to vector<1x1x1x12xf32>
    %76 = vector.broadcast %73 : vector<2x16x16x1xf32> to vector<2x16x16x12xf32>
    %77 = vector.broadcast %75 : vector<1x1x1x12xf32> to vector<2x16x16x12xf32>
    %78 = arith.mulf %76, %77 : vector<2x16x16x12xf32>
    %79 = arith.addf %72, %78 : vector<2x16x16x12xf32>
    %80 = vector.extract_strided_slice %65 {offsets = [0, 0, 0, 2], sizes = [2, 16, 16, 1], strides = [1, 1, 1, 1]} : vector<2x16x16x3xf32> to vector<2x16x16x1xf32>
    %c11 = arith.constant 11 : index
    %c0_27 = arith.constant 0 : index
    %81 = vector.load %arg0[%c11, %c0_27] : memref<27x12xf32, #tpu.memory_space<vmem>>, vector<1x12xf32>
    %82 = vector.shape_cast %81 : vector<1x12xf32> to vector<1x1x1x12xf32>
    %83 = vector.broadcast %80 : vector<2x16x16x1xf32> to vector<2x16x16x12xf32>
    %84 = vector.broadcast %82 : vector<1x1x1x12xf32> to vector<2x16x16x12xf32>
    %85 = arith.mulf %83, %84 : vector<2x16x16x12xf32>
    %86 = arith.addf %79, %85 : vector<2x16x16x12xf32>
    %c0_28 = arith.constant 0 : index
    %c1_29 = arith.constant 1 : index
    %c1_30 = arith.constant 1 : index
    %c0_31 = arith.constant 0 : index
    %87 = vector.load %arg1[%c0_28, %c1_29, %c1_30, %c0_31] : memref<2x18x18x3xf32, #tpu.memory_space<vmem>>, vector<2x16x16x3xf32>
    %88 = vector.extract_strided_slice %87 {offsets = [0, 0, 0, 0], sizes = [2, 16, 16, 1], strides = [1, 1, 1, 1]} : vector<2x16x16x3xf32> to vector<2x16x16x1xf32>
    %c12 = arith.constant 12 : index
    %c0_32 = arith.constant 0 : index
    %89 = vector.load %arg0[%c12, %c0_32] : memref<27x12xf32, #tpu.memory_space<vmem>>, vector<1x12xf32>
    %90 = vector.shape_cast %89 : vector<1x12xf32> to vector<1x1x1x12xf32>
    %91 = vector.broadcast %88 : vector<2x16x16x1xf32> to vector<2x16x16x12xf32>
    %92 = vector.broadcast %90 : vector<1x1x1x12xf32> to vector<2x16x16x12xf32>
    %93 = arith.mulf %91, %92 : vector<2x16x16x12xf32>
    %94 = arith.addf %86, %93 : vector<2x16x16x12xf32>
    %95 = vector.extract_strided_slice %87 {offsets = [0, 0, 0, 1], sizes = [2, 16, 16, 1], strides = [1, 1, 1, 1]} : vector<2x16x16x3xf32> to vector<2x16x16x1xf32>
    %c13 = arith.constant 13 : index
    %c0_33 = arith.constant 0 : index
    %96 = vector.load %arg0[%c13, %c0_33] : memref<27x12xf32, #tpu.memory_space<vmem>>, vector<1x12xf32>
    %97 = vector.shape_cast %96 : vector<1x12xf32> to vector<1x1x1x12xf32>
    %98 = vector.broadcast %95 : vector<2x16x16x1xf32> to vector<2x16x16x12xf32>
    %99 = vector.broadcast %97 : vector<1x1x1x12xf32> to vector<2x16x16x12xf32>
    %100 = arith.mulf %98, %99 : vector<2x16x16x12xf32>
    %101 = arith.addf %94, %100 : vector<2x16x16x12xf32>
    %102 = vector.extract_strided_slice %87 {offsets = [0, 0, 0, 2], sizes = [2, 16, 16, 1], strides = [1, 1, 1, 1]} : vector<2x16x16x3xf32> to vector<2x16x16x1xf32>
    %c14 = arith.constant 14 : index
    %c0_34 = arith.constant 0 : index
    %103 = vector.load %arg0[%c14, %c0_34] : memref<27x12xf32, #tpu.memory_space<vmem>>, vector<1x12xf32>
    %104 = vector.shape_cast %103 : vector<1x12xf32> to vector<1x1x1x12xf32>
    %105 = vector.broadcast %102 : vector<2x16x16x1xf32> to vector<2x16x16x12xf32>
    %106 = vector.broadcast %104 : vector<1x1x1x12xf32> to vector<2x16x16x12xf32>
    %107 = arith.mulf %105, %106 : vector<2x16x16x12xf32>
    %108 = arith.addf %101, %107 : vector<2x16x16x12xf32>
    %c0_35 = arith.constant 0 : index
    %c1_36 = arith.constant 1 : index
    %c2_37 = arith.constant 2 : index
    %c0_38 = arith.constant 0 : index
    %109 = vector.load %arg1[%c0_35, %c1_36, %c2_37, %c0_38] : memref<2x18x18x3xf32, #tpu.memory_space<vmem>>, vector<2x16x16x3xf32>
    %110 = vector.extract_strided_slice %109 {offsets = [0, 0, 0, 0], sizes = [2, 16, 16, 1], strides = [1, 1, 1, 1]} : vector<2x16x16x3xf32> to vector<2x16x16x1xf32>
    %c15 = arith.constant 15 : index
    %c0_39 = arith.constant 0 : index
    %111 = vector.load %arg0[%c15, %c0_39] : memref<27x12xf32, #tpu.memory_space<vmem>>, vector<1x12xf32>
    %112 = vector.shape_cast %111 : vector<1x12xf32> to vector<1x1x1x12xf32>
    %113 = vector.broadcast %110 : vector<2x16x16x1xf32> to vector<2x16x16x12xf32>
    %114 = vector.broadcast %112 : vector<1x1x1x12xf32> to vector<2x16x16x12xf32>
    %115 = arith.mulf %113, %114 : vector<2x16x16x12xf32>
    %116 = arith.addf %108, %115 : vector<2x16x16x12xf32>
    %117 = vector.extract_strided_slice %109 {offsets = [0, 0, 0, 1], sizes = [2, 16, 16, 1], strides = [1, 1, 1, 1]} : vector<2x16x16x3xf32> to vector<2x16x16x1xf32>
    %c16 = arith.constant 16 : index
    %c0_40 = arith.constant 0 : index
    %118 = vector.load %arg0[%c16, %c0_40] : memref<27x12xf32, #tpu.memory_space<vmem>>, vector<1x12xf32>
    %119 = vector.shape_cast %118 : vector<1x12xf32> to vector<1x1x1x12xf32>
    %120 = vector.broadcast %117 : vector<2x16x16x1xf32> to vector<2x16x16x12xf32>
    %121 = vector.broadcast %119 : vector<1x1x1x12xf32> to vector<2x16x16x12xf32>
    %122 = arith.mulf %120, %121 : vector<2x16x16x12xf32>
    %123 = arith.addf %116, %122 : vector<2x16x16x12xf32>
    %124 = vector.extract_strided_slice %109 {offsets = [0, 0, 0, 2], sizes = [2, 16, 16, 1], strides = [1, 1, 1, 1]} : vector<2x16x16x3xf32> to vector<2x16x16x1xf32>
    %c17 = arith.constant 17 : index
    %c0_41 = arith.constant 0 : index
    %125 = vector.load %arg0[%c17, %c0_41] : memref<27x12xf32, #tpu.memory_space<vmem>>, vector<1x12xf32>
    %126 = vector.shape_cast %125 : vector<1x12xf32> to vector<1x1x1x12xf32>
    %127 = vector.broadcast %124 : vector<2x16x16x1xf32> to vector<2x16x16x12xf32>
    %128 = vector.broadcast %126 : vector<1x1x1x12xf32> to vector<2x16x16x12xf32>
    %129 = arith.mulf %127, %128 : vector<2x16x16x12xf32>
    %130 = arith.addf %123, %129 : vector<2x16x16x12xf32>
    %c0_42 = arith.constant 0 : index
    %c2_43 = arith.constant 2 : index
    %c0_44 = arith.constant 0 : index
    %c0_45 = arith.constant 0 : index
    %131 = vector.load %arg1[%c0_42, %c2_43, %c0_44, %c0_45] : memref<2x18x18x3xf32, #tpu.memory_space<vmem>>, vector<2x16x16x3xf32>
    %132 = vector.extract_strided_slice %131 {offsets = [0, 0, 0, 0], sizes = [2, 16, 16, 1], strides = [1, 1, 1, 1]} : vector<2x16x16x3xf32> to vector<2x16x16x1xf32>
    %c18 = arith.constant 18 : index
    %c0_46 = arith.constant 0 : index
    %133 = vector.load %arg0[%c18, %c0_46] : memref<27x12xf32, #tpu.memory_space<vmem>>, vector<1x12xf32>
    %134 = vector.shape_cast %133 : vector<1x12xf32> to vector<1x1x1x12xf32>
    %135 = vector.broadcast %132 : vector<2x16x16x1xf32> to vector<2x16x16x12xf32>
    %136 = vector.broadcast %134 : vector<1x1x1x12xf32> to vector<2x16x16x12xf32>
    %137 = arith.mulf %135, %136 : vector<2x16x16x12xf32>
    %138 = arith.addf %130, %137 : vector<2x16x16x12xf32>
    %139 = vector.extract_strided_slice %131 {offsets = [0, 0, 0, 1], sizes = [2, 16, 16, 1], strides = [1, 1, 1, 1]} : vector<2x16x16x3xf32> to vector<2x16x16x1xf32>
    %c19 = arith.constant 19 : index
    %c0_47 = arith.constant 0 : index
    %140 = vector.load %arg0[%c19, %c0_47] : memref<27x12xf32, #tpu.memory_space<vmem>>, vector<1x12xf32>
    %141 = vector.shape_cast %140 : vector<1x12xf32> to vector<1x1x1x12xf32>
    %142 = vector.broadcast %139 : vector<2x16x16x1xf32> to vector<2x16x16x12xf32>
    %143 = vector.broadcast %141 : vector<1x1x1x12xf32> to vector<2x16x16x12xf32>
    %144 = arith.mulf %142, %143 : vector<2x16x16x12xf32>
    %145 = arith.addf %138, %144 : vector<2x16x16x12xf32>
    %146 = vector.extract_strided_slice %131 {offsets = [0, 0, 0, 2], sizes = [2, 16, 16, 1], strides = [1, 1, 1, 1]} : vector<2x16x16x3xf32> to vector<2x16x16x1xf32>
    %c20 = arith.constant 20 : index
    %c0_48 = arith.constant 0 : index
    %147 = vector.load %arg0[%c20, %c0_48] : memref<27x12xf32, #tpu.memory_space<vmem>>, vector<1x12xf32>
    %148 = vector.shape_cast %147 : vector<1x12xf32> to vector<1x1x1x12xf32>
    %149 = vector.broadcast %146 : vector<2x16x16x1xf32> to vector<2x16x16x12xf32>
    %150 = vector.broadcast %148 : vector<1x1x1x12xf32> to vector<2x16x16x12xf32>
    %151 = arith.mulf %149, %150 : vector<2x16x16x12xf32>
    %152 = arith.addf %145, %151 : vector<2x16x16x12xf32>
    %c0_49 = arith.constant 0 : index
    %c2_50 = arith.constant 2 : index
    %c1_51 = arith.constant 1 : index
    %c0_52 = arith.constant 0 : index
    %153 = vector.load %arg1[%c0_49, %c2_50, %c1_51, %c0_52] : memref<2x18x18x3xf32, #tpu.memory_space<vmem>>, vector<2x16x16x3xf32>
    %154 = vector.extract_strided_slice %153 {offsets = [0, 0, 0, 0], sizes = [2, 16, 16, 1], strides = [1, 1, 1, 1]} : vector<2x16x16x3xf32> to vector<2x16x16x1xf32>
    %c21 = arith.constant 21 : index
    %c0_53 = arith.constant 0 : index
    %155 = vector.load %arg0[%c21, %c0_53] : memref<27x12xf32, #tpu.memory_space<vmem>>, vector<1x12xf32>
    %156 = vector.shape_cast %155 : vector<1x12xf32> to vector<1x1x1x12xf32>
    %157 = vector.broadcast %154 : vector<2x16x16x1xf32> to vector<2x16x16x12xf32>
    %158 = vector.broadcast %156 : vector<1x1x1x12xf32> to vector<2x16x16x12xf32>
    %159 = arith.mulf %157, %158 : vector<2x16x16x12xf32>
    %160 = arith.addf %152, %159 : vector<2x16x16x12xf32>
    %161 = vector.extract_strided_slice %153 {offsets = [0, 0, 0, 1], sizes = [2, 16, 16, 1], strides = [1, 1, 1, 1]} : vector<2x16x16x3xf32> to vector<2x16x16x1xf32>
    %c22 = arith.constant 22 : index
    %c0_54 = arith.constant 0 : index
    %162 = vector.load %arg0[%c22, %c0_54] : memref<27x12xf32, #tpu.memory_space<vmem>>, vector<1x12xf32>
    %163 = vector.shape_cast %162 : vector<1x12xf32> to vector<1x1x1x12xf32>
    %164 = vector.broadcast %161 : vector<2x16x16x1xf32> to vector<2x16x16x12xf32>
    %165 = vector.broadcast %163 : vector<1x1x1x12xf32> to vector<2x16x16x12xf32>
    %166 = arith.mulf %164, %165 : vector<2x16x16x12xf32>
    %167 = arith.addf %160, %166 : vector<2x16x16x12xf32>
    %168 = vector.extract_strided_slice %153 {offsets = [0, 0, 0, 2], sizes = [2, 16, 16, 1], strides = [1, 1, 1, 1]} : vector<2x16x16x3xf32> to vector<2x16x16x1xf32>
    %c23 = arith.constant 23 : index
    %c0_55 = arith.constant 0 : index
    %169 = vector.load %arg0[%c23, %c0_55] : memref<27x12xf32, #tpu.memory_space<vmem>>, vector<1x12xf32>
    %170 = vector.shape_cast %169 : vector<1x12xf32> to vector<1x1x1x12xf32>
    %171 = vector.broadcast %168 : vector<2x16x16x1xf32> to vector<2x16x16x12xf32>
    %172 = vector.broadcast %170 : vector<1x1x1x12xf32> to vector<2x16x16x12xf32>
    %173 = arith.mulf %171, %172 : vector<2x16x16x12xf32>
    %174 = arith.addf %167, %173 : vector<2x16x16x12xf32>
    %c0_56 = arith.constant 0 : index
    %c2_57 = arith.constant 2 : index
    %c2_58 = arith.constant 2 : index
    %c0_59 = arith.constant 0 : index
    %175 = vector.load %arg1[%c0_56, %c2_57, %c2_58, %c0_59] : memref<2x18x18x3xf32, #tpu.memory_space<vmem>>, vector<2x16x16x3xf32>
    %176 = vector.extract_strided_slice %175 {offsets = [0, 0, 0, 0], sizes = [2, 16, 16, 1], strides = [1, 1, 1, 1]} : vector<2x16x16x3xf32> to vector<2x16x16x1xf32>
    %c24 = arith.constant 24 : index
    %c0_60 = arith.constant 0 : index
    %177 = vector.load %arg0[%c24, %c0_60] : memref<27x12xf32, #tpu.memory_space<vmem>>, vector<1x12xf32>
    %178 = vector.shape_cast %177 : vector<1x12xf32> to vector<1x1x1x12xf32>
    %179 = vector.broadcast %176 : vector<2x16x16x1xf32> to vector<2x16x16x12xf32>
    %180 = vector.broadcast %178 : vector<1x1x1x12xf32> to vector<2x16x16x12xf32>
    %181 = arith.mulf %179, %180 : vector<2x16x16x12xf32>
    %182 = arith.addf %174, %181 : vector<2x16x16x12xf32>
    %183 = vector.extract_strided_slice %175 {offsets = [0, 0, 0, 1], sizes = [2, 16, 16, 1], strides = [1, 1, 1, 1]} : vector<2x16x16x3xf32> to vector<2x16x16x1xf32>
    %c25 = arith.constant 25 : index
    %c0_61 = arith.constant 0 : index
    %184 = vector.load %arg0[%c25, %c0_61] : memref<27x12xf32, #tpu.memory_space<vmem>>, vector<1x12xf32>
    %185 = vector.shape_cast %184 : vector<1x12xf32> to vector<1x1x1x12xf32>
    %186 = vector.broadcast %183 : vector<2x16x16x1xf32> to vector<2x16x16x12xf32>
    %187 = vector.broadcast %185 : vector<1x1x1x12xf32> to vector<2x16x16x12xf32>
    %188 = arith.mulf %186, %187 : vector<2x16x16x12xf32>
    %189 = arith.addf %182, %188 : vector<2x16x16x12xf32>
    %190 = vector.extract_strided_slice %175 {offsets = [0, 0, 0, 2], sizes = [2, 16, 16, 1], strides = [1, 1, 1, 1]} : vector<2x16x16x3xf32> to vector<2x16x16x1xf32>
    %c26 = arith.constant 26 : index
    %c0_62 = arith.constant 0 : index
    %191 = vector.load %arg0[%c26, %c0_62] : memref<27x12xf32, #tpu.memory_space<vmem>>, vector<1x12xf32>
    %192 = vector.shape_cast %191 : vector<1x12xf32> to vector<1x1x1x12xf32>
    %193 = vector.broadcast %190 : vector<2x16x16x1xf32> to vector<2x16x16x12xf32>
    %194 = vector.broadcast %192 : vector<1x1x1x12xf32> to vector<2x16x16x12xf32>
    %195 = arith.mulf %193, %194 : vector<2x16x16x12xf32>
    %196 = arith.addf %189, %195 : vector<2x16x16x12xf32>
    %cst = arith.constant dense<0.000000e+00> : vector<16x16x12xf32>
    %197 = vector.multi_reduction <add>, %196, %cst [0] : vector<2x16x16x12xf32> to vector<16x16x12xf32>
    %198 = vector.shape_cast %197 : vector<16x16x12xf32> to vector<1x16x16x12xf32>
    %cst_63 = arith.constant 2.000000e+00 : f32
    %199 = vector.broadcast %cst_63 : f32 to vector<1x16x16x12xf32>
    %200 = arith.divf %198, %199 : vector<1x16x16x12xf32>
    %cst_64 = arith.constant dense<0.000000e+00> : vector<1x16x12xf32>
    %201 = vector.multi_reduction <add>, %200, %cst_64 [1] : vector<1x16x16x12xf32> to vector<1x16x12xf32>
    %202 = vector.shape_cast %201 : vector<1x16x12xf32> to vector<1x1x16x12xf32>
    %cst_65 = arith.constant 1.600000e+01 : f32
    %203 = vector.broadcast %cst_65 : f32 to vector<1x1x16x12xf32>
    %204 = arith.divf %202, %203 : vector<1x1x16x12xf32>
    %cst_66 = arith.constant dense<0.000000e+00> : vector<1x1x12xf32>
    %205 = vector.multi_reduction <add>, %204, %cst_66 [2] : vector<1x1x16x12xf32> to vector<1x1x12xf32>
    %206 = vector.shape_cast %205 : vector<1x1x12xf32> to vector<1x1x1x12xf32>
    %cst_67 = arith.constant 1.600000e+01 : f32
    %207 = vector.broadcast %cst_67 : f32 to vector<1x1x1x12xf32>
    %208 = arith.divf %206, %207 : vector<1x1x1x12xf32>
    %209 = vector.broadcast %208 : vector<1x1x1x12xf32> to vector<2x16x16x12xf32>
    %210 = arith.subf %196, %209 : vector<2x16x16x12xf32>
    %211 = arith.mulf %210, %210 : vector<2x16x16x12xf32>
    %cst_68 = arith.constant dense<0.000000e+00> : vector<16x16x12xf32>
    %212 = vector.multi_reduction <add>, %211, %cst_68 [0] : vector<2x16x16x12xf32> to vector<16x16x12xf32>
    %213 = vector.shape_cast %212 : vector<16x16x12xf32> to vector<1x16x16x12xf32>
    %cst_69 = arith.constant 2.000000e+00 : f32
    %214 = vector.broadcast %cst_69 : f32 to vector<1x16x16x12xf32>
    %215 = arith.divf %213, %214 : vector<1x16x16x12xf32>
    %cst_70 = arith.constant dense<0.000000e+00> : vector<1x16x12xf32>
    %216 = vector.multi_reduction <add>, %215, %cst_70 [1] : vector<1x16x16x12xf32> to vector<1x16x12xf32>
    %217 = vector.shape_cast %216 : vector<1x16x12xf32> to vector<1x1x16x12xf32>
    %cst_71 = arith.constant 1.600000e+01 : f32
    %218 = vector.broadcast %cst_71 : f32 to vector<1x1x16x12xf32>
    %219 = arith.divf %217, %218 : vector<1x1x16x12xf32>
    %cst_72 = arith.constant dense<0.000000e+00> : vector<1x1x12xf32>
    %220 = vector.multi_reduction <add>, %219, %cst_72 [2] : vector<1x1x16x12xf32> to vector<1x1x12xf32>
    %221 = vector.shape_cast %220 : vector<1x1x12xf32> to vector<1x1x1x12xf32>
    %cst_73 = arith.constant 1.600000e+01 : f32
    %222 = vector.broadcast %cst_73 : f32 to vector<1x1x1x12xf32>
    %223 = arith.divf %221, %222 : vector<1x1x1x12xf32>
    %224 = vector.broadcast %208 : vector<1x1x1x12xf32> to vector<2x16x16x12xf32>
    %225 = arith.subf %196, %224 : vector<2x16x16x12xf32>
    %cst_74 = arith.constant 9.99999974E-6 : f32
    %226 = vector.broadcast %cst_74 : f32 to vector<1x1x1x12xf32>
    %227 = arith.addf %223, %226 : vector<1x1x1x12xf32>
    %228 = math.rsqrt %227 : vector<1x1x1x12xf32>
    %229 = vector.broadcast %228 : vector<1x1x1x12xf32> to vector<2x16x16x12xf32>
    %230 = arith.mulf %225, %229 : vector<2x16x16x12xf32>
    %c0_75 = arith.constant 0 : index
    %c0_76 = arith.constant 0 : index
    %c0_77 = arith.constant 0 : index
    %c0_78 = arith.constant 0 : index
    %231 = vector.load %arg2[%c0_75, %c0_76, %c0_77, %c0_78] : memref<2x16x16x12xf32, #tpu.memory_space<vmem>>, vector<2x16x16x12xf32>
    tpu.vector_store %arg2[%c0_75, %c0_76, %c0_77, %c0_78], %230 {strides = array<i32>} : memref<2x16x16x12xf32, #tpu.memory_space<vmem>>, vector<2x16x16x12xf32>,
    return
  }
}

</mosaic_0001>

<llo_original>
// kernel: stem_conv_bn.1
$region0: #{stem_conv_bn.1}
  #allocation0 [shape = 'u32[]', space=smem, size = 0x4, offset = 0x4, fixed_abs, tag = 'smem constant byte address 0x4 - core index']
  #allocation1 [shape = 'u32[144,128]{1,0:T(1,128)}', space=vmem, size = 0x12000, scoped, tag = 'internal scratch']
  %s0 = inlined_call_operand.vmem [shape: f32[27,12], index: 0, kind: input, shape index: {}]
  %s1 = inlined_call_operand.vmem [shape: f32[2,18,18,3], index: 1, kind: input, shape index: {}]
  %s2 = inlined_call_operand.vmem [shape: f32[2,16,16,12], index: 2, kind: output, shape index: {}]
  %s3 = sld [smem:[#allocation0]]
  $region18: #{stem_conv_bn.1} parent=0
    _
  %s5 = ssub.s32 1, %s3
  %s6 = scalar_select 0, %s5, %s3
  // Predicated region
  $region2: #{stem_conv_bn.1} parent=0 // pred_check
    _
  $region3: #{stem_conv_bn.1} parent=0 // pred_check_branch
    %8 = sbr.rel (0) target = $region5
  $region4: #{stem_conv_bn.1} parent=0 // pred_region
    _
  $region5: #{stem_conv_bn.1} parent=0 // pred_fallthru
    _
  // Predicated region
  $region6: #{stem_conv_bn.1} parent=0 // pred_check
    _
  $region7: #{stem_conv_bn.1} parent=0 // pred_check_branch
    %10 = sbr.rel (0) target = $region9
  $region8: #{stem_conv_bn.1} parent=0 // pred_region
    _
  $region9: #{stem_conv_bn.1} parent=0 // pred_fallthru
    _
  %v11 = vld [vmem:[%s1] sm:$0xff]
  %v12 = vld [vmem:[%s1 + $0x8] sm:$0xff]
  %v13 = vld [vmem:[%s1 + $0x18] sm:$0xff]
  %v14 = vld [vmem:[%s1 + $0x20] sm:$0xff]
  %v15 = vld [vmem:[%s1 + $0x30] sm:$0xff]
  %v16 = vld [vmem:[%s1 + $0x38] sm:$0xff]
  %v17 = vld [vmem:[%s1 + $0x48] sm:$0xff]
  %v18 = vld [vmem:[%s1 + $0x50] sm:$0xff]
  %v19 = vld [vmem:[%s1 + $0x60] sm:$0xff]
  %v20 = vld [vmem:[%s1 + $0x68] sm:$0xff]
  %v21 = vld [vmem:[%s1 + $0x78] sm:$0xff]
  %v22 = vld [vmem:[%s1 + $0x80] sm:$0xff]
  %v23 = vld [vmem:[%s1 + $0x90] sm:$0xff]
  %v24 = vld [vmem:[%s1 + $0x98] sm:$0xff]
  %v25 = vld [vmem:[%s1 + $0xa8] sm:$0xff]
  %v26 = vld [vmem:[%s1 + $0xb0] sm:$0xff]
  %v27 = vld [vmem:[%s1 + $0xc0] sm:$0xff]
  %v28 = vld [vmem:[%s1 + $0xc8] sm:$0xff]
  %v29 = vld [vmem:[%s1 + $0xd8] sm:$0xff]
  %v30 = vld [vmem:[%s1 + $0xe0] sm:$0xff]
  %v31 = vld [vmem:[%s1 + $0xf0] sm:$0xff]
  %v32 = vld [vmem:[%s1 + $0xf8] sm:$0xff]
  %v33 = vld [vmem:[%s1 + $0x108] sm:$0xff]
  %v34 = vld [vmem:[%s1 + $0x110] sm:$0xff]
  %v35 = vld [vmem:[%s1 + $0x120] sm:$0xff]
  %v36 = vld [vmem:[%s1 + $0x128] sm:$0xff]
  %v37 = vld [vmem:[%s1 + $0x138] sm:$0xff]
  %v38 = vld [vmem:[%s1 + $0x140] sm:$0xff]
  %v39 = vld [vmem:[%s1 + $0x150] sm:$0xff]
  %v40 = vld [vmem:[%s1 + $0x158] sm:$0xff]
  %v41 = vld [vmem:[%s1 + $0x168] sm:$0xff]
  %v42 = vld [vmem:[%s1 + $0x170] sm:$0xff]
  %v43 = vld [vmem:[%s1 + $0x1b0] sm:$0xff]
  %v44 = vld [vmem:[%s1 + $0x1b8] sm:$0xff]
  %v45 = vld [vmem:[%s1 + $0x1c8] sm:$0xff]
  %v46 = vld [vmem:[%s1 + $0x1d0] sm:$0xff]
  %v47 = vld [vmem:[%s1 + $0x1e0] sm:$0xff]
  %v48 = vld [vmem:[%s1 + $0x1e8] sm:$0xff]
  %v49 = vld [vmem:[%s1 + $0x1f8] sm:$0xff]
  %v50 = vld [vmem:[%s1 + $0x200] sm:$0xff]
  %v51 = vld [vmem:[%s1 + $0x210] sm:$0xff]
  %v52 = vld [vmem:[%s1 + $0x218] sm:$0xff]
  %v53 = vld [vmem:[%s1 + $0x228] sm:$0xff]
  %v54 = vld [vmem:[%s1 + $0x230] sm:$0xff]
  %v55 = vld [vmem:[%s1 + $0x240] sm:$0xff]
  %v56 = vld [vmem:[%s1 + $0x248] sm:$0xff]
  %v57 = vld [vmem:[%s1 + $0x258] sm:$0xff]
  %v58 = vld [vmem:[%s1 + $0x260] sm:$0xff]
  %v59 = vld [vmem:[%s1 + $0x270] sm:$0xff]
  %v60 = vld [vmem:[%s1 + $0x278] sm:$0xff]
  %v61 = vld [vmem:[%s1 + $0x288] sm:$0xff]
  %v62 = vld [vmem:[%s1 + $0x290] sm:$0xff]
  %v63 = vld [vmem:[%s1 + $0x2a0] sm:$0xff]
  %v64 = vld [vmem:[%s1 + $0x2a8] sm:$0xff]
  %v65 = vld [vmem:[%s1 + $0x2b8] sm:$0xff]
  %v66 = vld [vmem:[%s1 + $0x2c0] sm:$0xff]
  %v67 = vld [vmem:[%s1 + $0x2d0] sm:$0xff]
  %v68 = vld [vmem:[%s1 + $0x2d8] sm:$0xff]
  %v69 = vld [vmem:[%s1 + $0x2e8] sm:$0xff]
  %v70 = vld [vmem:[%s1 + $0x2f0] sm:$0xff]
  %v71 = vld [vmem:[%s1 + $0x300] sm:$0xff]
  %v72 = vld [vmem:[%s1 + $0x308] sm:$0xff]
  %v73 = vld [vmem:[%s1 + $0x318] sm:$0xff]
  %v74 = vld [vmem:[%s1 + $0x320] sm:$0xff]
  %v75 = vld [vmem:[%s0] sm:$0x1]
  %77 = vset.pattern.permute.xlu0 0
  %78 = vperm.xlu0 %77, %v11
  %v79 = vpop.permute.xlu0 %78
  %82 = vset.pattern.permute.xlu0 0
  %83 = vperm.xlu0 %82, %v12
  %v84 = vpop.permute.xlu0 %83
  %87 = vset.pattern.permute.xlu0 0
  %88 = vperm.xlu0 %87, %v13
  %v89 = vpop.permute.xlu0 %88
  %92 = vset.pattern.permute.xlu0 0
  %93 = vperm.xlu0 %92, %v14
  %v94 = vpop.permute.xlu0 %93
  %97 = vset.pattern.permute.xlu0 0
  %98 = vperm.xlu0 %97, %v15
  %v99 = vpop.permute.xlu0 %98
  %102 = vset.pattern.permute.xlu0 0
  %103 = vperm.xlu0 %102, %v16
  %v104 = vpop.permute.xlu0 %103
  %107 = vset.pattern.permute.xlu0 0
  %108 = vperm.xlu0 %107, %v17
  %v109 = vpop.permute.xlu0 %108
  %112 = vset.pattern.permute.xlu0 0
  %113 = vperm.xlu0 %112, %v18
  %v114 = vpop.permute.xlu0 %113
  %117 = vset.pattern.permute.xlu0 0
  %118 = vperm.xlu0 %117, %v19
  %v119 = vpop.permute.xlu0 %118
  %122 = vset.pattern.permute.xlu0 0
  %123 = vperm.xlu0 %122, %v20
  %v124 = vpop.permute.xlu0 %123
  %127 = vset.pattern.permute.xlu0 0
  %128 = vperm.xlu0 %127, %v21
  %v129 = vpop.permute.xlu0 %128
  %132 = vset.pattern.permute.xlu0 0
  %133 = vperm.xlu0 %132, %v22
  %v134 = vpop.permute.xlu0 %133
  %137 = vset.pattern.permute.xlu0 0
  %138 = vperm.xlu0 %137, %v23
  %v139 = vpop.permute.xlu0 %138
  %142 = vset.pattern.permute.xlu0 0
  %143 = vperm.xlu0 %142, %v24
  %v144 = vpop.permute.xlu0 %143
  %147 = vset.pattern.permute.xlu0 0
  %148 = vperm.xlu0 %147, %v25
  %v149 = vpop.permute.xlu0 %148
  %152 = vset.pattern.permute.xlu0 0
  %153 = vperm.xlu0 %152, %v26
  %v154 = vpop.permute.xlu0 %153
  %157 = vset.pattern.permute.xlu0 0
  %158 = vperm.xlu0 %157, %v27
  %v159 = vpop.permute.xlu0 %158
  %162 = vset.pattern.permute.xlu0 0
  %163 = vperm.xlu0 %162, %v28
  %v164 = vpop.permute.xlu0 %163
  %167 = vset.pattern.permute.xlu0 0
  %168 = vperm.xlu0 %167, %v29
  %v169 = vpop.permute.xlu0 %168
  %172 = vset.pattern.permute.xlu0 0
  %173 = vperm.xlu0 %172, %v30
  %v174 = vpop.permute.xlu0 %173
  %177 = vset.pattern.permute.xlu0 0
  %178 = vperm.xlu0 %177, %v31
  %v179 = vpop.permute.xlu0 %178
  %182 = vset.pattern.permute.xlu0 0
  %183 = vperm.xlu0 %182, %v32
  %v184 = vpop.permute.xlu0 %183
  %187 = vset.pattern.permute.xlu0 0
  %188 = vperm.xlu0 %187, %v33
  %v189 = vpop.permute.xlu0 %188
  %192 = vset.pattern.permute.xlu0 0
  %193 = vperm.xlu0 %192, %v34
  %v194 = vpop.permute.xlu0 %193
  %197 = vset.pattern.permute.xlu0 0
  %198 = vperm.xlu0 %197, %v35
  %v199 = vpop.permute.xlu0 %198
  %202 = vset.pattern.permute.xlu0 0
  %203 = vperm.xlu0 %202, %v36
  %v204 = vpop.permute.xlu0 %203
  %207 = vset.pattern.permute.xlu0 0
  %208 = vperm.xlu0 %207, %v37
  %v209 = vpop.permute.xlu0 %208
  %212 = vset.pattern.permute.xlu0 0
  %213 = vperm.xlu0 %212, %v38
  %v214 = vpop.permute.xlu0 %213
  %217 = vset.pattern.permute.xlu0 0
  %218 = vperm.xlu0 %217, %v39
  %v219 = vpop.permute.xlu0 %218
  %222 = vset.pattern.permute.xlu0 0
  %223 = vperm.xlu0 %222, %v40
  %v224 = vpop.permute.xlu0 %223
  %227 = vset.pattern.permute.xlu0 0
  %228 = vperm.xlu0 %227, %v41
  %v229 = vpop.permute.xlu0 %228
  %232 = vset.pattern.permute.xlu0 0
  %233 = vperm.xlu0 %232, %v42
  %v234 = vpop.permute.xlu0 %233
  %237 = vset.pattern.permute.xlu0 0
  %238 = vperm.xlu0 %237, %v43
  %v239 = vpop.permute.xlu0 %238
  %242 = vset.pattern.permute.xlu0 0
  %243 = vperm.xlu0 %242, %v44
  %v244 = vpop.permute.xlu0 %243
  %247 = vset.pattern.permute.xlu0 0
  %248 = vperm.xlu0 %247, %v45
  %v249 = vpop.permute.xlu0 %248
  %252 = vset.pattern.permute.xlu0 0
  %253 = vperm.xlu0 %252, %v46
  %v254 = vpop.permute.xlu0 %253
  %257 = vset.pattern.permute.xlu0 0
  %258 = vperm.xlu0 %257, %v47
  %v259 = vpop.permute.xlu0 %258
  %262 = vset.pattern.permute.xlu0 0
  %263 = vperm.xlu0 %262, %v48
  %v264 = vpop.permute.xlu0 %263
  %267 = vset.pattern.permute.xlu0 0
  %268 = vperm.xlu0 %267, %v49
  %v269 = vpop.permute.xlu0 %268
  %272 = vset.pattern.permute.xlu0 0
  %273 = vperm.xlu0 %272, %v50
  %v274 = vpop.permute.xlu0 %273
  %277 = vset.pattern.permute.xlu0 0
  %278 = vperm.xlu0 %277, %v51
  %v279 = vpop.permute.xlu0 %278
  %282 = vset.pattern.permute.xlu0 0
  %283 = vperm.xlu0 %282, %v52
  %v284 = vpop.permute.xlu0 %283
  %287 = vset.pattern.permute.xlu0 0
  %288 = vperm.xlu0 %287, %v53
  %v289 = vpop.permute.xlu0 %288
  %292 = vset.pattern.permute.xlu0 0
  %293 = vperm.xlu0 %292, %v54
  %v294 = vpop.permute.xlu0 %293
  %297 = vset.pattern.permute.xlu0 0
  %298 = vperm.xlu0 %297, %v55
  %v299 = vpop.permute.xlu0 %298
  %302 = vset.pattern.permute.xlu0 0
  %303 = vperm.xlu0 %302, %v56
  %v304 = vpop.permute.xlu0 %303
  %307 = vset.pattern.permute.xlu0 0
  %308 = vperm.xlu0 %307, %v57
  %v309 = vpop.permute.xlu0 %308
  %312 = vset.pattern.permute.xlu0 0
  %313 = vperm.xlu0 %312, %v58
  %v314 = vpop.permute.xlu0 %313
  %317 = vset.pattern.permute.xlu0 0
  %318 = vperm.xlu0 %317, %v59
  %v319 = vpop.permute.xlu0 %318
  %322 = vset.pattern.permute.xlu0 0
  %323 = vperm.xlu0 %322, %v60
  %v324 = vpop.permute.xlu0 %323
  %327 = vset.pattern.permute.xlu0 0
  %328 = vperm.xlu0 %327, %v61
  %v329 = vpop.permute.xlu0 %328
  %332 = vset.pattern.permute.xlu0 0
  %333 = vperm.xlu0 %332, %v62
  %v334 = vpop.permute.xlu0 %333
  %337 = vset.pattern.permute.xlu0 0
  %338 = vperm.xlu0 %337, %v63
  %v339 = vpop.permute.xlu0 %338
  %342 = vset.pattern.permute.xlu0 0
  %343 = vperm.xlu0 %342, %v64
  %v344 = vpop.permute.xlu0 %343
  %347 = vset.pattern.permute.xlu0 0
  %348 = vperm.xlu0 %347, %v65
  %v349 = vpop.permute.xlu0 %348
  %352 = vset.pattern.permute.xlu0 0
  %353 = vperm.xlu0 %352, %v66
  %v354 = vpop.permute.xlu0 %353
  %357 = vset.pattern.permute.xlu0 0
  %358 = vperm.xlu0 %357, %v67
  %v359 = vpop.permute.xlu0 %358
  %362 = vset.pattern.permute.xlu0 0
  %363 = vperm.xlu0 %362, %v68
  %v364 = vpop.permute.xlu0 %363
  %367 = vset.pattern.permute.xlu0 0
  %368 = vperm.xlu0 %367, %v69
  %v369 = vpop.permute.xlu0 %368
  %372 = vset.pattern.permute.xlu0 0
  %373 = vperm.xlu0 %372, %v70
  %v374 = vpop.permute.xlu0 %373
  %377 = vset.pattern.permute.xlu0 0
  %378 = vperm.xlu0 %377, %v71
  %v379 = vpop.permute.xlu0 %378
  %382 = vset.pattern.permute.xlu0 0
  %383 = vperm.xlu0 %382, %v72
  %v384 = vpop.permute.xlu0 %383
  %387 = vset.pattern.permute.xlu0 0
  %388 = vperm.xlu0 %387, %v73
  %v389 = vpop.permute.xlu0 %388
  %392 = vset.pattern.permute.xlu0 0
  %393 = vperm.xlu0 %392, %v74
  %v394 = vpop.permute.xlu0 %393
  %v396 = vlaneseq
  %v397 = vshrl.u32 %v396, 7
  %v398 = vsub.s32 0, %v397
  %v399 = vrot.slane %v75, %v398
  %v400 = vmul.f32 %v79, %v399
  %v401 = vmul.f32 %v84, %v399
  %v402 = vmul.f32 %v89, %v399
  %v403 = vmul.f32 %v94, %v399
  %v404 = vmul.f32 %v99, %v399
  %v405 = vmul.f32 %v104, %v399
  %v406 = vmul.f32 %v109, %v399
  %v407 = vmul.f32 %v114, %v399
  %v408 = vmul.f32 %v119, %v399
  %v409 = vmul.f32 %v124, %v399
  %v410 = vmul.f32 %v129, %v399
  %v411 = vmul.f32 %v134, %v399
  %v412 = vmul.f32 %v139, %v399
  %v413 = vmul.f32 %v144, %v399
  %v414 = vmul.f32 %v149, %v399
  %v415 = vmul.f32 %v154, %v399
  %v416 = vmul.f32 %v159, %v399
  %v417 = vmul.f32 %v164, %v399
  %v418 = vmul.f32 %v169, %v399
  %v419 = vmul.f32 %v174, %v399
  %v420 = vmul.f32 %v179, %v399
  %v421 = vmul.f32 %v184, %v399
  %v422 = vmul.f32 %v189, %v399
  %v423 = vmul.f32 %v194, %v399
  %v424 = vmul.f32 %v199, %v399
  %v425 = vmul.f32 %v204, %v399
  %v426 = vmul.f32 %v209, %v399
  %v427 = vmul.f32 %v214, %v399
  %v428 = vmul.f32 %v219, %v399
  %v429 = vmul.f32 %v224, %v399
  %v430 = vmul.f32 %v229, %v399
  %v431 = vmul.f32 %v234, %v399
  %v432 = vmul.f32 %v239, %v399
  %v433 = vmul.f32 %v244, %v399
  %v434 = vmul.f32 %v249, %v399
  %v435 = vmul.f32 %v254, %v399
  %v436 = vmul.f32 %v259, %v399
  %v437 = vmul.f32 %v264, %v399
  %v438 = vmul.f32 %v269, %v399
  %v439 = vmul.f32 %v274, %v399
  %v440 = vmul.f32 %v279, %v399
  %v441 = vmul.f32 %v284, %v399
  %v442 = vmul.f32 %v289, %v399
  %v443 = vmul.f32 %v294, %v399
  %v444 = vmul.f32 %v299, %v399
  %v445 = vmul.f32 %v304, %v399
  %v446 = vmul.f32 %v309, %v399
  %v447 = vmul.f32 %v314, %v399
  %v448 = vmul.f32 %v319, %v399
  %v449 = vmul.f32 %v324, %v399
  %v450 = vmul.f32 %v329, %v399
  %v451 = vmul.f32 %v334, %v399
  %v452 = vmul.f32 %v339, %v399
  %v453 = vmul.f32 %v344, %v399
  %v454 = vmul.f32 %v349, %v399
  %v455 = vmul.f32 %v354, %v399
  %v456 = vmul.f32 %v359, %v399
  %v457 = vmul.f32 %v364, %v399
  %v458 = vmul.f32 %v369, %v399
  %v459 = vmul.f32 %v374, %v399
  %v460 = vmul.f32 %v379, %v399
  %v461 = vmul.f32 %v384, %v399
  %v462 = vmul.f32 %v389, %v399
  %v463 = vmul.f32 %v394, %v399
  %v464 = vld [vmem:[%s0 + $0x1] sm:$0x1]
  %465 = vset.pattern.permute.xlu0 1
  %466 = vperm.xlu0 %465, %v11
  %v467 = vpop.permute.xlu0 %466
  %469 = vset.pattern.permute.xlu0 1
  %470 = vperm.xlu0 %469, %v12
  %v471 = vpop.permute.xlu0 %470
  %473 = vset.pattern.permute.xlu0 1
  %474 = vperm.xlu0 %473, %v13
  %v475 = vpop.permute.xlu0 %474
  %477 = vset.pattern.permute.xlu0 1
  %478 = vperm.xlu0 %477, %v14
  %v479 = vpop.permute.xlu0 %478
  %481 = vset.pattern.permute.xlu0 1
  %482 = vperm.xlu0 %481, %v15
  %v483 = vpop.permute.xlu0 %482
  %485 = vset.pattern.permute.xlu0 1
  %486 = vperm.xlu0 %485, %v16
  %v487 = vpop.permute.xlu0 %486
  %489 = vset.pattern.permute.xlu0 1
  %490 = vperm.xlu0 %489, %v17
  %v491 = vpop.permute.xlu0 %490
  %493 = vset.pattern.permute.xlu0 1
  %494 = vperm.xlu0 %493, %v18
  %v495 = vpop.permute.xlu0 %494
  %497 = vset.pattern.permute.xlu0 1
  %498 = vperm.xlu0 %497, %v19
  %v499 = vpop.permute.xlu0 %498
  %501 = vset.pattern.permute.xlu0 1
  %502 = vperm.xlu0 %501, %v20
  %v503 = vpop.permute.xlu0 %502
  %505 = vset.pattern.permute.xlu0 1
  %506 = vperm.xlu0 %505, %v21
  %v507 = vpop.permute.xlu0 %506
  %509 = vset.pattern.permute.xlu0 1
  %510 = vperm.xlu0 %509, %v22
  %v511 = vpop.permute.xlu0 %510
  %513 = vset.pattern.permute.xlu0 1
  %514 = vperm.xlu0 %513, %v23
  %v515 = vpop.permute.xlu0 %514
  %517 = vset.pattern.permute.xlu0 1
  %518 = vperm.xlu0 %517, %v24
  %v519 = vpop.permute.xlu0 %518
  %521 = vset.pattern.permute.xlu0 1
  %522 = vperm.xlu0 %521, %v25
  %v523 = vpop.permute.xlu0 %522
  %525 = vset.pattern.permute.xlu0 1
  %526 = vperm.xlu0 %525, %v26
  %v527 = vpop.permute.xlu0 %526
  %529 = vset.pattern.permute.xlu0 1
  %530 = vperm.xlu0 %529, %v27
  %v531 = vpop.permute.xlu0 %530
  %533 = vset.pattern.permute.xlu0 1
  %534 = vperm.xlu0 %533, %v28
  %v535 = vpop.permute.xlu0 %534
  %537 = vset.pattern.permute.xlu0 1
  %538 = vperm.xlu0 %537, %v29
  %v539 = vpop.permute.xlu0 %538
  %541 = vset.pattern.permute.xlu0 1
  %542 = vperm.xlu0 %541, %v30
  %v543 = vpop.permute.xlu0 %542
  %545 = vset.pattern.permute.xlu0 1
  %546 = vperm.xlu0 %545, %v31
  %v547 = vpop.permute.xlu0 %546
  %549 = vset.pattern.permute.xlu0 1
  %550 = vperm.xlu0 %549, %v32
  %v551 = vpop.permute.xlu0 %550
  %553 = vset.pattern.permute.xlu0 1
  %554 = vperm.xlu0 %553, %v33
  %v555 = vpop.permute.xlu0 %554
  %557 = vset.pattern.permute.xlu0 1
  %558 = vperm.xlu0 %557, %v34
  %v559 = vpop.permute.xlu0 %558
  %561 = vset.pattern.permute.xlu0 1
  %562 = vperm.xlu0 %561, %v35
  %v563 = vpop.permute.xlu0 %562
  %565 = vset.pattern.permute.xlu0 1
  %566 = vperm.xlu0 %565, %v36
  %v567 = vpop.permute.xlu0 %566
  %569 = vset.pattern.permute.xlu0 1
  %570 = vperm.xlu0 %569, %v37
  %v571 = vpop.permute.xlu0 %570
  %573 = vset.pattern.permute.xlu0 1
  %574 = vperm.xlu0 %573, %v38
  %v575 = vpop.permute.xlu0 %574
  %577 = vset.pattern.permute.xlu0 1
  %578 = vperm.xlu0 %577, %v39
  %v579 = vpop.permute.xlu0 %578
  %581 = vset.pattern.permute.xlu0 1
  %582 = vperm.xlu0 %581, %v40
  %v583 = vpop.permute.xlu0 %582
  %585 = vset.pattern.permute.xlu0 1
  %586 = vperm.xlu0 %585, %v41
  %v587 = vpop.permute.xlu0 %586
  %589 = vset.pattern.permute.xlu0 1
  %590 = vperm.xlu0 %589, %v42
  %v591 = vpop.permute.xlu0 %590
  %593 = vset.pattern.permute.xlu0 1
  %594 = vperm.xlu0 %593, %v43
  %v595 = vpop.permute.xlu0 %594
  %597 = vset.pattern.permute.xlu0 1
  %598 = vperm.xlu0 %597, %v44
  %v599 = vpop.permute.xlu0 %598
  %601 = vset.pattern.permute.xlu0 1
  %602 = vperm.xlu0 %601, %v45
  %v603 = vpop.permute.xlu0 %602
  %605 = vset.pattern.permute.xlu0 1
  %606 = vperm.xlu0 %605, %v46
  %v607 = vpop.permute.xlu0 %606
  %609 = vset.pattern.permute.xlu0 1
  %610 = vperm.xlu0 %609, %v47
  %v611 = vpop.permute.xlu0 %610
  %613 = vset.pattern.permute.xlu0 1
  %614 = vperm.xlu0 %613, %v48
  %v615 = vpop.permute.xlu0 %614
  %617 = vset.pattern.permute.xlu0 1
  %618 = vperm.xlu0 %617, %v49
  %v619 = vpop.permute.xlu0 %618
  %621 = vset.pattern.permute.xlu0 1
  %622 = vperm.xlu0 %621, %v50
  %v623 = vpop.permute.xlu0 %622
  %625 = vset.pattern.permute.xlu0 1
  %626 = vperm.xlu0 %625, %v51
  %v627 = vpop.permute.xlu0 %626
  %629 = vset.pattern.permute.xlu0 1
  %630 = vperm.xlu0 %629, %v52
  %v631 = vpop.permute.xlu0 %630
  %633 = vset.pattern.permute.xlu0 1
  %634 = vperm.xlu0 %633, %v53
  %v635 = vpop.permute.xlu0 %634
  %637 = vset.pattern.permute.xlu0 1
  %638 = vperm.xlu0 %637, %v54
  %v639 = vpop.permute.xlu0 %638
  %641 = vset.pattern.permute.xlu0 1
  %642 = vperm.xlu0 %641, %v55
  %v643 = vpop.permute.xlu0 %642
  %645 = vset.pattern.permute.xlu0 1
  %646 = vperm.xlu0 %645, %v56
  %v647 = vpop.permute.xlu0 %646
  %649 = vset.pattern.permute.xlu0 1
  %650 = vperm.xlu0 %649, %v57
  %v651 = vpop.permute.xlu0 %650
  %653 = vset.pattern.permute.xlu0 1
  %654 = vperm.xlu0 %653, %v58
  %v655 = vpop.permute.xlu0 %654
  %657 = vset.pattern.permute.xlu0 1
  %658 = vperm.xlu0 %657, %v59
  %v659 = vpop.permute.xlu0 %658
  %661 = vset.pattern.permute.xlu0 1
  %662 = vperm.xlu0 %661, %v60
  %v663 = vpop.permute.xlu0 %662
  %665 = vset.pattern.permute.xlu0 1
  %666 = vperm.xlu0 %665, %v61
  %v667 = vpop.permute.xlu0 %666
  %669 = vset.pattern.permute.xlu0 1
  %670 = vperm.xlu0 %669, %v62
  %v671 = vpop.permute.xlu0 %670
  %673 = vset.pattern.permute.xlu0 1
  %674 = vperm.xlu0 %673, %v63
  %v675 = vpop.permute.xlu0 %674
  %677 = vset.pattern.permute.xlu0 1
  %678 = vperm.xlu0 %677, %v64
  %v679 = vpop.permute.xlu0 %678
  %681 = vset.pattern.permute.xlu0 1
  %682 = vperm.xlu0 %681, %v65
  %v683 = vpop.permute.xlu0 %682
  %685 = vset.pattern.permute.xlu0 1
  %686 = vperm.xlu0 %685, %v66
  %v687 = vpop.permute.xlu0 %686
  %689 = vset.pattern.permute.xlu0 1
  %690 = vperm.xlu0 %689, %v67
  %v691 = vpop.permute.xlu0 %690
  %693 = vset.pattern.permute.xlu0 1
  %694 = vperm.xlu0 %693, %v68
  %v695 = vpop.permute.xlu0 %694
  %697 = vset.pattern.permute.xlu0 1
  %698 = vperm.xlu0 %697, %v69
  %v699 = vpop.permute.xlu0 %698
  %701 = vset.pattern.permute.xlu0 1
  %702 = vperm.xlu0 %701, %v70
  %v703 = vpop.permute.xlu0 %702
  %705 = vset.pattern.permute.xlu0 1
  %706 = vperm.xlu0 %705, %v71
  %v707 = vpop.permute.xlu0 %706
  %709 = vset.pattern.permute.xlu0 1
  %710 = vperm.xlu0 %709, %v72
  %v711 = vpop.permute.xlu0 %710
  %713 = vset.pattern.permute.xlu0 1
  %714 = vperm.xlu0 %713, %v73
  %v715 = vpop.permute.xlu0 %714
  %717 = vset.pattern.permute.xlu0 1
  %718 = vperm.xlu0 %717, %v74
  %v719 = vpop.permute.xlu0 %718
  %v721 = vlaneseq
  %v722 = vshrl.u32 %v721, 7
  %v723 = vsub.s32 0, %v722
  %v724 = vrot.slane %v464, %v723
  %v725 = vmul.f32 %v467, %v724
  %v726 = vmul.f32 %v471, %v724
  %v727 = vmul.f32 %v475, %v724
  %v728 = vmul.f32 %v479, %v724
  %v729 = vmul.f32 %v483, %v724
  %v730 = vmul.f32 %v487, %v724
  %v731 = vmul.f32 %v491, %v724
  %v732 = vmul.f32 %v495, %v724
  %v733 = vmul.f32 %v499, %v724
  %v734 = vmul.f32 %v503, %v724
  %v735 = vmul.f32 %v507, %v724
  %v736 = vmul.f32 %v511, %v724
  %v737 = vmul.f32 %v515, %v724
  %v738 = vmul.f32 %v519, %v724
  %v739 = vmul.f32 %v523, %v724
  %v740 = vmul.f32 %v527, %v724
  %v741 = vmul.f32 %v531, %v724
  %v742 = vmul.f32 %v535, %v724
  %v743 = vmul.f32 %v539, %v724
  %v744 = vmul.f32 %v543, %v724
  %v745 = vmul.f32 %v547, %v724
  %v746 = vmul.f32 %v551, %v724
  %v747 = vmul.f32 %v555, %v724
  %v748 = vmul.f32 %v559, %v724
  %v749 = vmul.f32 %v563, %v724
  %v750 = vmul.f32 %v567, %v724
  %v751 = vmul.f32 %v571, %v724
  %v752 = vmul.f32 %v575, %v724
  %v753 = vmul.f32 %v579, %v724
  %v754 = vmul.f32 %v583, %v724
  %v755 = vmul.f32 %v587, %v724
  %v756 = vmul.f32 %v591, %v724
  %v757 = vmul.f32 %v595, %v724
  %v758 = vmul.f32 %v599, %v724
  %v759 = vmul.f32 %v603, %v724
  %v760 = vmul.f32 %v607, %v724
  %v761 = vmul.f32 %v611, %v724
  %v762 = vmul.f32 %v615, %v724
  %v763 = vmul.f32 %v619, %v724
  %v764 = vmul.f32 %v623, %v724
  %v765 = vmul.f32 %v627, %v724
  %v766 = vmul.f32 %v631, %v724
  %v767 = vmul.f32 %v635, %v724
  %v768 = vmul.f32 %v639, %v724
  %v769 = vmul.f32 %v643, %v724
  %v770 = vmul.f32 %v647, %v724
  %v771 = vmul.f32 %v651, %v724
  %v772 = vmul.f32 %v655, %v724
  %v773 = vmul.f32 %v659, %v724
  %v774 = vmul.f32 %v663, %v724
  %v775 = vmul.f32 %v667, %v724
  %v776 = vmul.f32 %v671, %v724
  %v777 = vmul.f32 %v675, %v724
  %v778 = vmul.f32 %v679, %v724
  %v779 = vmul.f32 %v683, %v724
  %v780 = vmul.f32 %v687, %v724
  %v781 = vmul.f32 %v691, %v724
  %v782 = vmul.f32 %v695, %v724
  %v783 = vmul.f32 %v699, %v724
  %v784 = vmul.f32 %v703, %v724
  %v785 = vmul.f32 %v707, %v724
  %v786 = vmul.f32 %v711, %v724
  %v787 = vmul.f32 %v715, %v724
  %v788 = vmul.f32 %v719, %v724
  %v789 = vadd.f32 %v400, %v725
  %v790 = vadd.f32 %v401, %v726
  %v791 = vadd.f32 %v402, %v727
  %v792 = vadd.f32 %v403, %v728
  %v793 = vadd.f32 %v404, %v729
  %v794 = vadd.f32 %v405, %v730
  %v795 = vadd.f32 %v406, %v731
  %v796 = vadd.f32 %v407, %v732
  %v797 = vadd.f32 %v408, %v733
  %v798 = vadd.f32 %v409, %v734
  %v799 = vadd.f32 %v410, %v735
  %v800 = vadd.f32 %v411, %v736
  %v801 = vadd.f32 %v412, %v737
  %v802 = vadd.f32 %v413, %v738
  %v803 = vadd.f32 %v414, %v739
  %v804 = vadd.f32 %v415, %v740
  %v805 = vadd.f32 %v416, %v741
  %v806 = vadd.f32 %v417, %v742
  %v807 = vadd.f32 %v418, %v743
  %v808 = vadd.f32 %v419, %v744
  %v809 = vadd.f32 %v420, %v745
  %v810 = vadd.f32 %v421, %v746
  %v811 = vadd.f32 %v422, %v747
  %v812 = vadd.f32 %v423, %v748
  %v813 = vadd.f32 %v424, %v749
  %v814 = vadd.f32 %v425, %v750
  %v815 = vadd.f32 %v426, %v751
  %v816 = vadd.f32 %v427, %v752
  %v817 = vadd.f32 %v428, %v753
  %v818 = vadd.f32 %v429, %v754
  %v819 = vadd.f32 %v430, %v755
  %v820 = vadd.f32 %v431, %v756
  %v821 = vadd.f32 %v432, %v757
  %v822 = vadd.f32 %v433, %v758
  %v823 = vadd.f32 %v434, %v759
  %v824 = vadd.f32 %v435, %v760
  %v825 = vadd.f32 %v436, %v761
  %v826 = vadd.f32 %v437, %v762
  %v827 = vadd.f32 %v438, %v763
  %v828 = vadd.f32 %v439, %v764
  %v829 = vadd.f32 %v440, %v765
  %v830 = vadd.f32 %v441, %v766
  %v831 = vadd.f32 %v442, %v767
  %v832 = vadd.f32 %v443, %v768
  %v833 = vadd.f32 %v444, %v769
  %v834 = vadd.f32 %v445, %v770
  %v835 = vadd.f32 %v446, %v771
  %v836 = vadd.f32 %v447, %v772
  %v837 = vadd.f32 %v448, %v773
  %v838 = vadd.f32 %v449, %v774
  %v839 = vadd.f32 %v450, %v775
  %v840 = vadd.f32 %v451, %v776
  %v841 = vadd.f32 %v452, %v777
  %v842 = vadd.f32 %v453, %v778
  %v843 = vadd.f32 %v454, %v779
  %v844 = vadd.f32 %v455, %v780
  %v845 = vadd.f32 %v456, %v781
  %v846 = vadd.f32 %v457, %v782
  %v847 = vadd.f32 %v458, %v783
  %v848 = vadd.f32 %v459, %v784
  %v849 = vadd.f32 %v460, %v785
  %v850 = vadd.f32 %v461, %v786
  %v851 = vadd.f32 %v462, %v787
  %v852 = vadd.f32 %v463, %v788
  %v853 = vld [vmem:[%s0 + $0x2] sm:$0x1]
  %854 = vset.pattern.permute.xlu0 2
  %855 = vperm.xlu0 %854, %v11
  %v856 = vpop.permute.xlu0 %855
  %858 = vset.pattern.permute.xlu0 2
  %859 = vperm.xlu0 %858, %v12
  %v860 = vpop.permute.xlu0 %859
  %862 = vset.pattern.permute.xlu0 2
  %863 = vperm.xlu0 %862, %v13
  %v864 = vpop.permute.xlu0 %863
  %866 = vset.pattern.permute.xlu0 2
  %867 = vperm.xlu0 %866, %v14
  %v868 = vpop.permute.xlu0 %867
  %870 = vset.pattern.permute.xlu0 2
  %871 = vperm.xlu0 %870, %v15
  %v872 = vpop.permute.xlu0 %871
  %874 = vset.pattern.permute.xlu0 2
  %875 = vperm.xlu0 %874, %v16
  %v876 = vpop.permute.xlu0 %875
  %878 = vset.pattern.permute.xlu0 2
  %879 = vperm.xlu0 %878, %v17
  %v880 = vpop.permute.xlu0 %879
  %882 = vset.pattern.permute.xlu0 2
  %883 = vperm.xlu0 %882, %v18
  %v884 = vpop.permute.xlu0 %883
  %886 = vset.pattern.permute.xlu0 2
  %887 = vperm.xlu0 %886, %v19
  %v888 = vpop.permute.xlu0 %887
  %890 = vset.pattern.permute.xlu0 2
  %891 = vperm.xlu0 %890, %v20
  %v892 = vpop.permute.xlu0 %891
  %894 = vset.pattern.permute.xlu0 2
  %895 = vperm.xlu0 %894, %v21
  %v896 = vpop.permute.xlu0 %895
  %898 = vset.pattern.permute.xlu0 2
  %899 = vperm.xlu0 %898, %v22
  %v900 = vpop.permute.xlu0 %899
  %902 = vset.pattern.permute.xlu0 2
  %903 = vperm.xlu0 %902, %v23
  %v904 = vpop.permute.xlu0 %903
  %906 = vset.pattern.permute.xlu0 2
  %907 = vperm.xlu0 %906, %v24
  %v908 = vpop.permute.xlu0 %907
  %910 = vset.pattern.permute.xlu0 2
  %911 = vperm.xlu0 %910, %v25
  %v912 = vpop.permute.xlu0 %911
  %914 = vset.pattern.permute.xlu0 2
  %915 = vperm.xlu0 %914, %v26
  %v916 = vpop.permute.xlu0 %915
  %918 = vset.pattern.permute.xlu0 2
  %919 = vperm.xlu0 %918, %v27
  %v920 = vpop.permute.xlu0 %919
  %922 = vset.pattern.permute.xlu0 2
  %923 = vperm.xlu0 %922, %v28
  %v924 = vpop.permute.xlu0 %923
  %926 = vset.pattern.permute.xlu0 2
  %927 = vperm.xlu0 %926, %v29
  %v928 = vpop.permute.xlu0 %927
  %930 = vset.pattern.permute.xlu0 2
  %931 = vperm.xlu0 %930, %v30
  %v932 = vpop.permute.xlu0 %931
  %934 = vset.pattern.permute.xlu0 2
  %935 = vperm.xlu0 %934, %v31
  %v936 = vpop.permute.xlu0 %935
  %938 = vset.pattern.permute.xlu0 2
  %939 = vperm.xlu0 %938, %v32
  %v940 = vpop.permute.xlu0 %939
  %942 = vset.pattern.permute.xlu0 2
  %943 = vperm.xlu0 %942, %v33
  %v944 = vpop.permute.xlu0 %943
  %946 = vset.pattern.permute.xlu0 2
  %947 = vperm.xlu0 %946, %v34
  %v948 = vpop.permute.xlu0 %947
  %950 = vset.pattern.permute.xlu0 2
  %951 = vperm.xlu0 %950, %v35
  %v952 = vpop.permute.xlu0 %951
  %954 = vset.pattern.permute.xlu0 2
  %955 = vperm.xlu0 %954, %v36
  %v956 = vpop.permute.xlu0 %955
  %958 = vset.pattern.permute.xlu0 2
  %959 = vperm.xlu0 %958, %v37
  %v960 = vpop.permute.xlu0 %959
  %962 = vset.pattern.permute.xlu0 2
  %963 = vperm.xlu0 %962, %v38
  %v964 = vpop.permute.xlu0 %963
  %966 = vset.pattern.permute.xlu0 2
  %967 = vperm.xlu0 %966, %v39
  %v968 = vpop.permute.xlu0 %967
  %970 = vset.pattern.permute.xlu0 2
  %971 = vperm.xlu0 %970, %v40
  %v972 = vpop.permute.xlu0 %971
  %974 = vset.pattern.permute.xlu0 2
  %975 = vperm.xlu0 %974, %v41
  %v976 = vpop.permute.xlu0 %975
  %978 = vset.pattern.permute.xlu0 2
  %979 = vperm.xlu0 %978, %v42
  %v980 = vpop.permute.xlu0 %979
  %982 = vset.pattern.permute.xlu0 2
  %983 = vperm.xlu0 %982, %v43
  %v984 = vpop.permute.xlu0 %983
  %986 = vset.pattern.permute.xlu0 2
  %987 = vperm.xlu0 %986, %v44
  %v988 = vpop.permute.xlu0 %987
  %990 = vset.pattern.permute.xlu0 2
  %991 = vperm.xlu0 %990, %v45
  %v992 = vpop.permute.xlu0 %991
  %994 = vset.pattern.permute.xlu0 2
  %995 = vperm.xlu0 %994, %v46
  %v996 = vpop.permute.xlu0 %995
  %998 = vset.pattern.permute.xlu0 2
  %999 = vperm.xlu0 %998, %v47
  %v1000 = vpop.permute.xlu0 %999
  %1002 = vset.pattern.permute.xlu0 2
  %1003 = vperm.xlu0 %1002, %v48
  %v1004 = vpop.permute.xlu0 %1003
  %1006 = vset.pattern.permute.xlu0 2
  %1007 = vperm.xlu0 %1006, %v49
  %v1008 = vpop.permute.xlu0 %1007
  %1010 = vset.pattern.permute.xlu0 2
  %1011 = vperm.xlu0 %1010, %v50
  %v1012 = vpop.permute.xlu0 %1011
  %1014 = vset.pattern.permute.xlu0 2
  %1015 = vperm.xlu0 %1014, %v51
  %v1016 = vpop.permute.xlu0 %1015
  %1018 = vset.pattern.permute.xlu0 2
  %1019 = vperm.xlu0 %1018, %v52
  %v1020 = vpop.permute.xlu0 %1019
  %1022 = vset.pattern.permute.xlu0 2
  %1023 = vperm.xlu0 %1022, %v53
  %v1024 = vpop.permute.xlu0 %1023
  %1026 = vset.pattern.permute.xlu0 2
  %1027 = vperm.xlu0 %1026, %v54
  %v1028 = vpop.permute.xlu0 %1027
  %1030 = vset.pattern.permute.xlu0 2
  %1031 = vperm.xlu0 %1030, %v55
  %v1032 = vpop.permute.xlu0 %1031
  %1034 = vset.pattern.permute.xlu0 2
  %1035 = vperm.xlu0 %1034, %v56
  %v1036 = vpop.permute.xlu0 %1035
  %1038 = vset.pattern.permute.xlu0 2
  %1039 = vperm.xlu0 %1038, %v57
  %v1040 = vpop.permute.xlu0 %1039
  %1042 = vset.pattern.permute.xlu0 2
  %1043 = vperm.xlu0 %1042, %v58
  %v1044 = vpop.permute.xlu0 %1043
  %1046 = vset.pattern.permute.xlu0 2
  %1047 = vperm.xlu0 %1046, %v59
  %v1048 = vpop.permute.xlu0 %1047
  %1050 = vset.pattern.permute.xlu0 2
  %1051 = vperm.xlu0 %1050, %v60
  %v1052 = vpop.permute.xlu0 %1051
  %1054 = vset.pattern.permute.xlu0 2
  %1055 = vperm.xlu0 %1054, %v61
  %v1056 = vpop.permute.xlu0 %1055
  %1058 = vset.pattern.permute.xlu0 2
  %1059 = vperm.xlu0 %1058, %v62
  %v1060 = vpop.permute.xlu0 %1059
  %1062 = vset.pattern.permute.xlu0 2
  %1063 = vperm.xlu0 %1062, %v63
  %v1064 = vpop.permute.xlu0 %1063
  %1066 = vset.pattern.permute.xlu0 2
  %1067 = vperm.xlu0 %1066, %v64
  %v1068 = vpop.permute.xlu0 %1067
  %1070 = vset.pattern.permute.xlu0 2
  %1071 = vperm.xlu0 %1070, %v65
  %v1072 = vpop.permute.xlu0 %1071
  %1074 = vset.pattern.permute.xlu0 2
  %1075 = vperm.xlu0 %1074, %v66
  %v1076 = vpop.permute.xlu0 %1075
  %1078 = vset.pattern.permute.xlu0 2
  %1079 = vperm.xlu0 %1078, %v67
  %v1080 = vpop.permute.xlu0 %1079
  %1082 = vset.pattern.permute.xlu0 2
  %1083 = vperm.xlu0 %1082, %v68
  %v1084 = vpop.permute.xlu0 %1083
  %1086 = vset.pattern.permute.xlu0 2
  %1087 = vperm.xlu0 %1086, %v69
  %v1088 = vpop.permute.xlu0 %1087
  %1090 = vset.pattern.permute.xlu0 2
  %1091 = vperm.xlu0 %1090, %v70
  %v1092 = vpop.permute.xlu0 %1091
  %1094 = vset.pattern.permute.xlu0 2
  %1095 = vperm.xlu0 %1094, %v71
  %v1096 = vpop.permute.xlu0 %1095
  %1098 = vset.pattern.permute.xlu0 2
  %1099 = vperm.xlu0 %1098, %v72
  %v1100 = vpop.permute.xlu0 %1099
  %1102 = vset.pattern.permute.xlu0 2
  %1103 = vperm.xlu0 %1102, %v73
  %v1104 = vpop.permute.xlu0 %1103
  %1106 = vset.pattern.permute.xlu0 2
  %1107 = vperm.xlu0 %1106, %v74
  %v1108 = vpop.permute.xlu0 %1107
  %v1110 = vlaneseq
  %v1111 = vshrl.u32 %v1110, 7
  %v1112 = vsub.s32 0, %v1111
  %v1113 = vrot.slane %v853, %v1112
  %v1114 = vmul.f32 %v856, %v1113
  %v1115 = vmul.f32 %v860, %v1113
  %v1116 = vmul.f32 %v864, %v1113
  %v1117 = vmul.f32 %v868, %v1113
  %v1118 = vmul.f32 %v872, %v1113
  %v1119 = vmul.f32 %v876, %v1113
  %v1120 = vmul.f32 %v880, %v1113
  %v1121 = vmul.f32 %v884, %v1113
  %v1122 = vmul.f32 %v888, %v1113
  %v1123 = vmul.f32 %v892, %v1113
  %v1124 = vmul.f32 %v896, %v1113
  %v1125 = vmul.f32 %v900, %v1113
  %v1126 = vmul.f32 %v904, %v1113
  %v1127 = vmul.f32 %v908, %v1113
  %v1128 = vmul.f32 %v912, %v1113
  %v1129 = vmul.f32 %v916, %v1113
  %v1130 = vmul.f32 %v920, %v1113
  %v1131 = vmul.f32 %v924, %v1113
  %v1132 = vmul.f32 %v928, %v1113
  %v1133 = vmul.f32 %v932, %v1113
  %v1134 = vmul.f32 %v936, %v1113
  %v1135 = vmul.f32 %v940, %v1113
  %v1136 = vmul.f32 %v944, %v1113
  %v1137 = vmul.f32 %v948, %v1113
  %v1138 = vmul.f32 %v952, %v1113
  %v1139 = vmul.f32 %v956, %v1113
  %v1140 = vmul.f32 %v960, %v1113
  %v1141 = vmul.f32 %v964, %v1113
  %v1142 = vmul.f32 %v968, %v1113
  %v1143 = vmul.f32 %v972, %v1113
  %v1144 = vmul.f32 %v976, %v1113
  %v1145 = vmul.f32 %v980, %v1113
  %v1146 = vmul.f32 %v984, %v1113
  %v1147 = vmul.f32 %v988, %v1113
  %v1148 = vmul.f32 %v992, %v1113
  %v1149 = vmul.f32 %v996, %v1113
  %v1150 = vmul.f32 %v1000, %v1113
  %v1151 = vmul.f32 %v1004, %v1113
  %v1152 = vmul.f32 %v1008, %v1113
  %v1153 = vmul.f32 %v1012, %v1113
  %v1154 = vmul.f32 %v1016, %v1113
  %v1155 = vmul.f32 %v1020, %v1113
  %v1156 = vmul.f32 %v1024, %v1113
  %v1157 = vmul.f32 %v1028, %v1113
  %v1158 = vmul.f32 %v1032, %v1113
  %v1159 = vmul.f32 %v1036, %v1113
  %v1160 = vmul.f32 %v1040, %v1113
  %v1161 = vmul.f32 %v1044, %v1113
  %v1162 = vmul.f32 %v1048, %v1113
  %v1163 = vmul.f32 %v1052, %v1113
  %v1164 = vmul.f32 %v1056, %v1113
  %v1165 = vmul.f32 %v1060, %v1113
  %v1166 = vmul.f32 %v1064, %v1113
  %v1167 = vmul.f32 %v1068, %v1113
  %v1168 = vmul.f32 %v1072, %v1113
  %v1169 = vmul.f32 %v1076, %v1113
  %v1170 = vmul.f32 %v1080, %v1113
  %v1171 = vmul.f32 %v1084, %v1113
  %v1172 = vmul.f32 %v1088, %v1113
  %v1173 = vmul.f32 %v1092, %v1113
  %v1174 = vmul.f32 %v1096, %v1113
  %v1175 = vmul.f32 %v1100, %v1113
  %v1176 = vmul.f32 %v1104, %v1113
  %v1177 = vmul.f32 %v1108, %v1113
  %v1178 = vadd.f32 %v789, %v1114
  %v1179 = vadd.f32 %v790, %v1115
  %v1180 = vadd.f32 %v791, %v1116
  %v1181 = vadd.f32 %v792, %v1117
  %v1182 = vadd.f32 %v793, %v1118
  %v1183 = vadd.f32 %v794, %v1119
  %v1184 = vadd.f32 %v795, %v1120
  %v1185 = vadd.f32 %v796, %v1121
  %v1186 = vadd.f32 %v797, %v1122
  %v1187 = vadd.f32 %v798, %v1123
  %v1188 = vadd.f32 %v799, %v1124
  %v1189 = vadd.f32 %v800, %v1125
  %v1190 = vadd.f32 %v801, %v1126
  %v1191 = vadd.f32 %v802, %v1127
  %v1192 = vadd.f32 %v803, %v1128
  %v1193 = vadd.f32 %v804, %v1129
  %v1194 = vadd.f32 %v805, %v1130
  %v1195 = vadd.f32 %v806, %v1131
  %v1196 = vadd.f32 %v807, %v1132
  %v1197 = vadd.f32 %v808, %v1133
  %v1198 = vadd.f32 %v809, %v1134
  %v1199 = vadd.f32 %v810, %v1135
  %v1200 = vadd.f32 %v811, %v1136
  %v1201 = vadd.f32 %v812, %v1137
  %v1202 = vadd.f32 %v813, %v1138
  %v1203 = vadd.f32 %v814, %v1139
  %v1204 = vadd.f32 %v815, %v1140
  %v1205 = vadd.f32 %v816, %v1141
  %v1206 = vadd.f32 %v817, %v1142
  %v1207 = vadd.f32 %v818, %v1143
  %v1208 = vadd.f32 %v819, %v1144
  %v1209 = vadd.f32 %v820, %v1145
  %v1210 = vadd.f32 %v821, %v1146
  %v1211 = vadd.f32 %v822, %v1147
  %v1212 = vadd.f32 %v823, %v1148
  %v1213 = vadd.f32 %v824, %v1149
  %v1214 = vadd.f32 %v825, %v1150
  %v1215 = vadd.f32 %v826, %v1151
  %v1216 = vadd.f32 %v827, %v1152
  %v1217 = vadd.f32 %v828, %v1153
  %v1218 = vadd.f32 %v829, %v1154
  %v1219 = vadd.f32 %v830, %v1155
  %v1220 = vadd.f32 %v831, %v1156
  %v1221 = vadd.f32 %v832, %v1157
  %v1222 = vadd.f32 %v833, %v1158
  %v1223 = vadd.f32 %v834, %v1159
  %v1224 = vadd.f32 %v835, %v1160
  %v1225 = vadd.f32 %v836, %v1161
  %v1226 = vadd.f32 %v837, %v1162
  %v1227 = vadd.f32 %v838, %v1163
  %v1228 = vadd.f32 %v839, %v1164
  %v1229 = vadd.f32 %v840, %v1165
  %v1230 = vadd.f32 %v841, %v1166
  %v1231 = vadd.f32 %v842, %v1167
  %v1232 = vadd.f32 %v843, %v1168
  %v1233 = vadd.f32 %v844, %v1169
  %v1234 = vadd.f32 %v845, %v1170
  %v1235 = vadd.f32 %v846, %v1171
  %v1236 = vadd.f32 %v847, %v1172
  %v1237 = vadd.f32 %v848, %v1173
  %v1238 = vadd.f32 %v849, %v1174
  %v1239 = vadd.f32 %v850, %v1175
  %v1240 = vadd.f32 %v851, %v1176
  %v1241 = vadd.f32 %v852, %v1177
  %v1242 = vld [vmem:[%s1 + $0x1] sm:$0xff]
  %v1243 = vld [vmem:[%s1 + $0x9] sm:$0xff]
  %v1244 = vld [vmem:[%s1 + $0x19] sm:$0xff]
  %v1245 = vld [vmem:[%s1 + $0x21] sm:$0xff]
  %v1246 = vld [vmem:[%s1 + $0x31] sm:$0xff]
  %v1247 = vld [vmem:[%s1 + $0x39] sm:$0xff]
  %v1248 = vld [vmem:[%s1 + $0x49] sm:$0xff]
  %v1249 = vld [vmem:[%s1 + $0x51] sm:$0xff]
  %v1250 = vld [vmem:[%s1 + $0x61] sm:$0xff]
  %v1251 = vld [vmem:[%s1 + $0x69] sm:$0xff]
  %v1252 = vld [vmem:[%s1 + $0x79] sm:$0xff]
  %v1253 = vld [vmem:[%s1 + $0x81] sm:$0xff]
  %v1254 = vld [vmem:[%s1 + $0x91] sm:$0xff]
  %v1255 = vld [vmem:[%s1 + $0x99] sm:$0xff]
  %v1256 = vld [vmem:[%s1 + $0xa9] sm:$0xff]
  %v1257 = vld [vmem:[%s1 + $0xb1] sm:$0xff]
  %v1258 = vld [vmem:[%s1 + $0xc1] sm:$0xff]
  %v1259 = vld [vmem:[%s1 + $0xc9] sm:$0xff]
  %v1260 = vld [vmem:[%s1 + $0xd9] sm:$0xff]
  %v1261 = vld [vmem:[%s1 + $0xe1] sm:$0xff]
  %v1262 = vld [vmem:[%s1 + $0xf1] sm:$0xff]
  %v1263 = vld [vmem:[%s1 + $0xf9] sm:$0xff]
  %v1264 = vld [vmem:[%s1 + $0x109] sm:$0xff]
  %v1265 = vld [vmem:[%s1 + $0x111] sm:$0xff]
  %v1266 = vld [vmem:[%s1 + $0x121] sm:$0xff]
  %v1267 = vld [vmem:[%s1 + $0x129] sm:$0xff]
  %v1268 = vld [vmem:[%s1 + $0x139] sm:$0xff]
  %v1269 = vld [vmem:[%s1 + $0x141] sm:$0xff]
  %v1270 = vld [vmem:[%s1 + $0x151] sm:$0xff]
  %v1271 = vld [vmem:[%s1 + $0x159] sm:$0xff]
  %v1272 = vld [vmem:[%s1 + $0x169] sm:$0xff]
  %v1273 = vld [vmem:[%s1 + $0x171] sm:$0xff]
  %v1274 = vld [vmem:[%s1 + $0x1b1] sm:$0xff]
  %v1275 = vld [vmem:[%s1 + $0x1b9] sm:$0xff]
  %v1276 = vld [vmem:[%s1 + $0x1c9] sm:$0xff]
  %v1277 = vld [vmem:[%s1 + $0x1d1] sm:$0xff]
  %v1278 = vld [vmem:[%s1 + $0x1e1] sm:$0xff]
  %v1279 = vld [vmem:[%s1 + $0x1e9] sm:$0xff]
  %v1280 = vld [vmem:[%s1 + $0x1f9] sm:$0xff]
  %v1281 = vld [vmem:[%s1 + $0x201] sm:$0xff]
  %v1282 = vld [vmem:[%s1 + $0x211] sm:$0xff]
  %v1283 = vld [vmem:[%s1 + $0x219] sm:$0xff]
  %v1284 = vld [vmem:[%s1 + $0x229] sm:$0xff]
  %v1285 = vld [vmem:[%s1 + $0x231] sm:$0xff]
  %v1286 = vld [vmem:[%s1 + $0x241] sm:$0xff]
  %v1287 = vld [vmem:[%s1 + $0x249] sm:$0xff]
  %v1288 = vld [vmem:[%s1 + $0x259] sm:$0xff]
  %v1289 = vld [vmem:[%s1 + $0x261] sm:$0xff]
  %v1290 = vld [vmem:[%s1 + $0x271] sm:$0xff]
  %v1291 = vld [vmem:[%s1 + $0x279] sm:$0xff]
  %v1292 = vld [vmem:[%s1 + $0x289] sm:$0xff]
  %v1293 = vld [vmem:[%s1 + $0x291] sm:$0xff]
  %v1294 = vld [vmem:[%s1 + $0x2a1] sm:$0xff]
  %v1295 = vld [vmem:[%s1 + $0x2a9] sm:$0xff]
  %v1296 = vld [vmem:[%s1 + $0x2b9] sm:$0xff]
  %v1297 = vld [vmem:[%s1 + $0x2c1] sm:$0xff]
  %v1298 = vld [vmem:[%s1 + $0x2d1] sm:$0xff]
  %v1299 = vld [vmem:[%s1 + $0x2d9] sm:$0xff]
  %v1300 = vld [vmem:[%s1 + $0x2e9] sm:$0xff]
  %v1301 = vld [vmem:[%s1 + $0x2f1] sm:$0xff]
  %v1302 = vld [vmem:[%s1 + $0x301] sm:$0xff]
  %v1303 = vld [vmem:[%s1 + $0x309] sm:$0xff]
  %v1304 = vld [vmem:[%s1 + $0x319] sm:$0xff]
  %v1305 = vld [vmem:[%s1 + $0x321] sm:$0xff]
  %v1306 = vld [vmem:[%s0 + $0x3] sm:$0x1]
  %1308 = vset.pattern.permute.xlu0 0
  %1309 = vperm.xlu0 %1308, %v1242
  %v1310 = vpop.permute.xlu0 %1309
  %1313 = vset.pattern.permute.xlu0 0
  %1314 = vperm.xlu0 %1313, %v1243
  %v1315 = vpop.permute.xlu0 %1314
  %1318 = vset.pattern.permute.xlu0 0
  %1319 = vperm.xlu0 %1318, %v1244
  %v1320 = vpop.permute.xlu0 %1319
  %1323 = vset.pattern.permute.xlu0 0
  %1324 = vperm.xlu0 %1323, %v1245
  %v1325 = vpop.permute.xlu0 %1324
  %1328 = vset.pattern.permute.xlu0 0
  %1329 = vperm.xlu0 %1328, %v1246
  %v1330 = vpop.permute.xlu0 %1329
  %1333 = vset.pattern.permute.xlu0 0
  %1334 = vperm.xlu0 %1333, %v1247
  %v1335 = vpop.permute.xlu0 %1334
  %1338 = vset.pattern.permute.xlu0 0
  %1339 = vperm.xlu0 %1338, %v1248
  %v1340 = vpop.permute.xlu0 %1339
  %1343 = vset.pattern.permute.xlu0 0
  %1344 = vperm.xlu0 %1343, %v1249
  %v1345 = vpop.permute.xlu0 %1344
  %1348 = vset.pattern.permute.xlu0 0
  %1349 = vperm.xlu0 %1348, %v1250
  %v1350 = vpop.permute.xlu0 %1349
  %1353 = vset.pattern.permute.xlu0 0
  %1354 = vperm.xlu0 %1353, %v1251
  %v1355 = vpop.permute.xlu0 %1354
  %1358 = vset.pattern.permute.xlu0 0
  %1359 = vperm.xlu0 %1358, %v1252
  %v1360 = vpop.permute.xlu0 %1359
  %1363 = vset.pattern.permute.xlu0 0
  %1364 = vperm.xlu0 %1363, %v1253
  %v1365 = vpop.permute.xlu0 %1364
  %1368 = vset.pattern.permute.xlu0 0
  %1369 = vperm.xlu0 %1368, %v1254
  %v1370 = vpop.permute.xlu0 %1369
  %1373 = vset.pattern.permute.xlu0 0
  %1374 = vperm.xlu0 %1373, %v1255
  %v1375 = vpop.permute.xlu0 %1374
  %1378 = vset.pattern.permute.xlu0 0
  %1379 = vperm.xlu0 %1378, %v1256
  %v1380 = vpop.permute.xlu0 %1379
  %1383 = vset.pattern.permute.xlu0 0
  %1384 = vperm.xlu0 %1383, %v1257
  %v1385 = vpop.permute.xlu0 %1384
  %1388 = vset.pattern.permute.xlu0 0
  %1389 = vperm.xlu0 %1388, %v1258
  %v1390 = vpop.permute.xlu0 %1389
  %1393 = vset.pattern.permute.xlu0 0
  %1394 = vperm.xlu0 %1393, %v1259
  %v1395 = vpop.permute.xlu0 %1394
  %1398 = vset.pattern.permute.xlu0 0
  %1399 = vperm.xlu0 %1398, %v1260
  %v1400 = vpop.permute.xlu0 %1399
  %1403 = vset.pattern.permute.xlu0 0
  %1404 = vperm.xlu0 %1403, %v1261
  %v1405 = vpop.permute.xlu0 %1404
  %1408 = vset.pattern.permute.xlu0 0
  %1409 = vperm.xlu0 %1408, %v1262
  %v1410 = vpop.permute.xlu0 %1409
  %1413 = vset.pattern.permute.xlu0 0
  %1414 = vperm.xlu0 %1413, %v1263
  %v1415 = vpop.permute.xlu0 %1414
  %1418 = vset.pattern.permute.xlu0 0
  %1419 = vperm.xlu0 %1418, %v1264
  %v1420 = vpop.permute.xlu0 %1419
  %1423 = vset.pattern.permute.xlu0 0
  %1424 = vperm.xlu0 %1423, %v1265
  %v1425 = vpop.permute.xlu0 %1424
  %1428 = vset.pattern.permute.xlu0 0
  %1429 = vperm.xlu0 %1428, %v1266
  %v1430 = vpop.permute.xlu0 %1429
  %1433 = vset.pattern.permute.xlu0 0
  %1434 = vperm.xlu0 %1433, %v1267
  %v1435 = vpop.permute.xlu0 %1434
  %1438 = vset.pattern.permute.xlu0 0
  %1439 = vperm.xlu0 %1438, %v1268
  %v1440 = vpop.permute.xlu0 %1439
  %1443 = vset.pattern.permute.xlu0 0
  %1444 = vperm.xlu0 %1443, %v1269
  %v1445 = vpop.permute.xlu0 %1444
  %1448 = vset.pattern.permute.xlu0 0
  %1449 = vperm.xlu0 %1448, %v1270
  %v1450 = vpop.permute.xlu0 %1449
  %1453 = vset.pattern.permute.xlu0 0
  %1454 = vperm.xlu0 %1453, %v1271
  %v1455 = vpop.permute.xlu0 %1454
  %1458 = vset.pattern.permute.xlu0 0
  %1459 = vperm.xlu0 %1458, %v1272
  %v1460 = vpop.permute.xlu0 %1459
  %1463 = vset.pattern.permute.xlu0 0
  %1464 = vperm.xlu0 %1463, %v1273
  %v1465 = vpop.permute.xlu0 %1464
  %1468 = vset.pattern.permute.xlu0 0
  %1469 = vperm.xlu0 %1468, %v1274
  %v1470 = vpop.permute.xlu0 %1469
  %1473 = vset.pattern.permute.xlu0 0
  %1474 = vperm.xlu0 %1473, %v1275
  %v1475 = vpop.permute.xlu0 %1474
  %1478 = vset.pattern.permute.xlu0 0
  %1479 = vperm.xlu0 %1478, %v1276
  %v1480 = vpop.permute.xlu0 %1479
  %1483 = vset.pattern.permute.xlu0 0
  %1484 = vperm.xlu0 %1483, %v1277
  %v1485 = vpop.permute.xlu0 %1484
  %1488 = vset.pattern.permute.xlu0 0
  %1489 = vperm.xlu0 %1488, %v1278
  %v1490 = vpop.permute.xlu0 %1489
  %1493 = vset.pattern.permute.xlu0 0
  %1494 = vperm.xlu0 %1493, %v1279
  %v1495 = vpop.permute.xlu0 %1494
  %1498 = vset.pattern.permute.xlu0 0
  %1499 = vperm.xlu0 %1498, %v1280
  %v1500 = vpop.permute.xlu0 %1499
  %1503 = vset.pattern.permute.xlu0 0
  %1504 = vperm.xlu0 %1503, %v1281
  %v1505 = vpop.permute.xlu0 %1504
  %1508 = vset.pattern.permute.xlu0 0
  %1509 = vperm.xlu0 %1508, %v1282
  %v1510 = vpop.permute.xlu0 %1509
  %1513 = vset.pattern.permute.xlu0 0
  %1514 = vperm.xlu0 %1513, %v1283
  %v1515 = vpop.permute.xlu0 %1514
  %1518 = vset.pattern.permute.xlu0 0
  %1519 = vperm.xlu0 %1518, %v1284
  %v1520 = vpop.permute.xlu0 %1519
  %1523 = vset.pattern.permute.xlu0 0
  %1524 = vperm.xlu0 %1523, %v1285
  %v1525 = vpop.permute.xlu0 %1524
  %1528 = vset.pattern.permute.xlu0 0
  %1529 = vperm.xlu0 %1528, %v1286
  %v1530 = vpop.permute.xlu0 %1529
  %1533 = vset.pattern.permute.xlu0 0
  %1534 = vperm.xlu0 %1533, %v1287
  %v1535 = vpop.permute.xlu0 %1534
  %1538 = vset.pattern.permute.xlu0 0
  %1539 = vperm.xlu0 %1538, %v1288
  %v1540 = vpop.permute.xlu0 %1539
  %1543 = vset.pattern.permute.xlu0 0
  %1544 = vperm.xlu0 %1543, %v1289
  %v1545 = vpop.permute.xlu0 %1544
  %1548 = vset.pattern.permute.xlu0 0
  %1549 = vperm.xlu0 %1548, %v1290
  %v1550 = vpop.permute.xlu0 %1549
  %1553 = vset.pattern.permute.xlu0 0
  %1554 = vperm.xlu0 %1553, %v1291
  %v1555 = vpop.permute.xlu0 %1554
  %1558 = vset.pattern.permute.xlu0 0
  %1559 = vperm.xlu0 %1558, %v1292
  %v1560 = vpop.permute.xlu0 %1559
  %1563 = vset.pattern.permute.xlu0 0
  %1564 = vperm.xlu0 %1563, %v1293
  %v1565 = vpop.permute.xlu0 %1564
  %1568 = vset.pattern.permute.xlu0 0
  %1569 = vperm.xlu0 %1568, %v1294
  %v1570 = vpop.permute.xlu0 %1569
  %1573 = vset.pattern.permute.xlu0 0
  %1574 = vperm.xlu0 %1573, %v1295
  %v1575 = vpop.permute.xlu0 %1574
  %1578 = vset.pattern.permute.xlu0 0
  %1579 = vperm.xlu0 %1578, %v1296
  %v1580 = vpop.permute.xlu0 %1579
  %1583 = vset.pattern.permute.xlu0 0
  %1584 = vperm.xlu0 %1583, %v1297
  %v1585 = vpop.permute.xlu0 %1584
  %1588 = vset.pattern.permute.xlu0 0
  %1589 = vperm.xlu0 %1588, %v1298
  %v1590 = vpop.permute.xlu0 %1589
  %1593 = vset.pattern.permute.xlu0 0
  %1594 = vperm.xlu0 %1593, %v1299
  %v1595 = vpop.permute.xlu0 %1594
  %1598 = vset.pattern.permute.xlu0 0
  %1599 = vperm.xlu0 %1598, %v1300
  %v1600 = vpop.permute.xlu0 %1599
  %1603 = vset.pattern.permute.xlu0 0
  %1604 = vperm.xlu0 %1603, %v1301
  %v1605 = vpop.permute.xlu0 %1604
  %1608 = vset.pattern.permute.xlu0 0
  %1609 = vperm.xlu0 %1608, %v1302
  %v1610 = vpop.permute.xlu0 %1609
  %1613 = vset.pattern.permute.xlu0 0
  %1614 = vperm.xlu0 %1613, %v1303
  %v1615 = vpop.permute.xlu0 %1614
  %1618 = vset.pattern.permute.xlu0 0
  %1619 = vperm.xlu0 %1618, %v1304
  %v1620 = vpop.permute.xlu0 %1619
  %1623 = vset.pattern.permute.xlu0 0
  %1624 = vperm.xlu0 %1623, %v1305
  %v1625 = vpop.permute.xlu0 %1624
  %v1627 = vlaneseq
  %v1628 = vshrl.u32 %v1627, 7
  %v1629 = vsub.s32 0, %v1628
  %v1630 = vrot.slane %v1306, %v1629
  %v1631 = vmul.f32 %v1310, %v1630
  %v1632 = vmul.f32 %v1315, %v1630
  %v1633 = vmul.f32 %v1320, %v1630
  %v1634 = vmul.f32 %v1325, %v1630
  %v1635 = vmul.f32 %v1330, %v1630
  %v1636 = vmul.f32 %v1335, %v1630
  %v1637 = vmul.f32 %v1340, %v1630
  %v1638 = vmul.f32 %v1345, %v1630
  %v1639 = vmul.f32 %v1350, %v1630
  %v1640 = vmul.f32 %v1355, %v1630
  %v1641 = vmul.f32 %v1360, %v1630
  %v1642 = vmul.f32 %v1365, %v1630
  %v1643 = vmul.f32 %v1370, %v1630
  %v1644 = vmul.f32 %v1375, %v1630
  %v1645 = vmul.f32 %v1380, %v1630
  %v1646 = vmul.f32 %v1385, %v1630
  %v1647 = vmul.f32 %v1390, %v1630
  %v1648 = vmul.f32 %v1395, %v1630
  %v1649 = vmul.f32 %v1400, %v1630
  %v1650 = vmul.f32 %v1405, %v1630
  %v1651 = vmul.f32 %v1410, %v1630
  %v1652 = vmul.f32 %v1415, %v1630
  %v1653 = vmul.f32 %v1420, %v1630
  %v1654 = vmul.f32 %v1425, %v1630
  %v1655 = vmul.f32 %v1430, %v1630
  %v1656 = vmul.f32 %v1435, %v1630
  %v1657 = vmul.f32 %v1440, %v1630
  %v1658 = vmul.f32 %v1445, %v1630
  %v1659 = vmul.f32 %v1450, %v1630
  %v1660 = vmul.f32 %v1455, %v1630
  %v1661 = vmul.f32 %v1460, %v1630
  %v1662 = vmul.f32 %v1465, %v1630
  %v1663 = vmul.f32 %v1470, %v1630
  %v1664 = vmul.f32 %v1475, %v1630
  %v1665 = vmul.f32 %v1480, %v1630
  %v1666 = vmul.f32 %v1485, %v1630
  %v1667 = vmul.f32 %v1490, %v1630
  %v1668 = vmul.f32 %v1495, %v1630
  %v1669 = vmul.f32 %v1500, %v1630
  %v1670 = vmul.f32 %v1505, %v1630
  %v1671 = vmul.f32 %v1510, %v1630
  %v1672 = vmul.f32 %v1515, %v1630
  %v1673 = vmul.f32 %v1520, %v1630
  %v1674 = vmul.f32 %v1525, %v1630
  %v1675 = vmul.f32 %v1530, %v1630
  %v1676 = vmul.f32 %v1535, %v1630
  %v1677 = vmul.f32 %v1540, %v1630
  %v1678 = vmul.f32 %v1545, %v1630
  %v1679 = vmul.f32 %v1550, %v1630
  %v1680 = vmul.f32 %v1555, %v1630
  %v1681 = vmul.f32 %v1560, %v1630
  %v1682 = vmul.f32 %v1565, %v1630
  %v1683 = vmul.f32 %v1570, %v1630
  %v1684 = vmul.f32 %v1575, %v1630
  %v1685 = vmul.f32 %v1580, %v1630
  %v1686 = vmul.f32 %v1585, %v1630
  %v1687 = vmul.f32 %v1590, %v1630
  %v1688 = vmul.f32 %v1595, %v1630
  %v1689 = vmul.f32 %v1600, %v1630
  %v1690 = vmul.f32 %v1605, %v1630
  %v1691 = vmul.f32 %v1610, %v1630
  %v1692 = vmul.f32 %v1615, %v1630
  %v1693 = vmul.f32 %v1620, %v1630
  %v1694 = vmul.f32 %v1625, %v1630
  %v1695 = vadd.f32 %v1178, %v1631
  %v1696 = vadd.f32 %v1179, %v1632
  %v1697 = vadd.f32 %v1180, %v1633
  %v1698 = vadd.f32 %v1181, %v1634
  %v1699 = vadd.f32 %v1182, %v1635
  %v1700 = vadd.f32 %v1183, %v1636
  %v1701 = vadd.f32 %v1184, %v1637
  %v1702 = vadd.f32 %v1185, %v1638
  %v1703 = vadd.f32 %v1186, %v1639
  %v1704 = vadd.f32 %v1187, %v1640
  %v1705 = vadd.f32 %v1188, %v1641
  %v1706 = vadd.f32 %v1189, %v1642
  %v1707 = vadd.f32 %v1190, %v1643
  %v1708 = vadd.f32 %v1191, %v1644
  %v1709 = vadd.f32 %v1192, %v1645
  %v1710 = vadd.f32 %v1193, %v1646
  %v1711 = vadd.f32 %v1194, %v1647
  %v1712 = vadd.f32 %v1195, %v1648
  %v1713 = vadd.f32 %v1196, %v1649
  %v1714 = vadd.f32 %v1197, %v1650
  %v1715 = vadd.f32 %v1198, %v1651
  %v1716 = vadd.f32 %v1199, %v1652
  %v1717 = vadd.f32 %v1200, %v1653
  %v1718 = vadd.f32 %v1201, %v1654
  %v1719 = vadd.f32 %v1202, %v1655
  %v1720 = vadd.f32 %v1203, %v1656
  %v1721 = vadd.f32 %v1204, %v1657
  %v1722 = vadd.f32 %v1205, %v1658
  %v1723 = vadd.f32 %v1206, %v1659
  %v1724 = vadd.f32 %v1207, %v1660
  %v1725 = vadd.f32 %v1208, %v1661
  %v1726 = vadd.f32 %v1209, %v1662
  %v1727 = vadd.f32 %v1210, %v1663
  %v1728 = vadd.f32 %v1211, %v1664
  %v1729 = vadd.f32 %v1212, %v1665
  %v1730 = vadd.f32 %v1213, %v1666
  %v1731 = vadd.f32 %v1214, %v1667
  %v1732 = vadd.f32 %v1215, %v1668
  %v1733 = vadd.f32 %v1216, %v1669
  %v1734 = vadd.f32 %v1217, %v1670
  %v1735 = vadd.f32 %v1218, %v1671
  %v1736 = vadd.f32 %v1219, %v1672
  %v1737 = vadd.f32 %v1220, %v1673
  %v1738 = vadd.f32 %v1221, %v1674
  %v1739 = vadd.f32 %v1222, %v1675
  %v1740 = vadd.f32 %v1223, %v1676
  %v1741 = vadd.f32 %v1224, %v1677
  %v1742 = vadd.f32 %v1225, %v1678
  %v1743 = vadd.f32 %v1226, %v1679
  %v1744 = vadd.f32 %v1227, %v1680
  %v1745 = vadd.f32 %v1228, %v1681
  %v1746 = vadd.f32 %v1229, %v1682
  %v1747 = vadd.f32 %v1230, %v1683
  %v1748 = vadd.f32 %v1231, %v1684
  %v1749 = vadd.f32 %v1232, %v1685
  %v1750 = vadd.f32 %v1233, %v1686
  %v1751 = vadd.f32 %v1234, %v1687
  %v1752 = vadd.f32 %v1235, %v1688
  %v1753 = vadd.f32 %v1236, %v1689
  %v1754 = vadd.f32 %v1237, %v1690
  %v1755 = vadd.f32 %v1238, %v1691
  %v1756 = vadd.f32 %v1239, %v1692
  %v1757 = vadd.f32 %v1240, %v1693
  %v1758 = vadd.f32 %v1241, %v1694
  %v1759 = vld [vmem:[%s0 + $0x4] sm:$0x1]
  %1760 = vset.pattern.permute.xlu0 1
  %1761 = vperm.xlu0 %1760, %v1242
  %v1762 = vpop.permute.xlu0 %1761
  %1764 = vset.pattern.permute.xlu0 1
  %1765 = vperm.xlu0 %1764, %v1243
  %v1766 = vpop.permute.xlu0 %1765
  %1768 = vset.pattern.permute.xlu0 1
  %1769 = vperm.xlu0 %1768, %v1244
  %v1770 = vpop.permute.xlu0 %1769
  %1772 = vset.pattern.permute.xlu0 1
  %1773 = vperm.xlu0 %1772, %v1245
  %v1774 = vpop.permute.xlu0 %1773
  %1776 = vset.pattern.permute.xlu0 1
  %1777 = vperm.xlu0 %1776, %v1246
  %v1778 = vpop.permute.xlu0 %1777
  %1780 = vset.pattern.permute.xlu0 1
  %1781 = vperm.xlu0 %1780, %v1247
  %v1782 = vpop.permute.xlu0 %1781
  %1784 = vset.pattern.permute.xlu0 1
  %1785 = vperm.xlu0 %1784, %v1248
  %v1786 = vpop.permute.xlu0 %1785
  %1788 = vset.pattern.permute.xlu0 1
  %1789 = vperm.xlu0 %1788, %v1249
  %v1790 = vpop.permute.xlu0 %1789
  %1792 = vset.pattern.permute.xlu0 1
  %1793 = vperm.xlu0 %1792, %v1250
  %v1794 = vpop.permute.xlu0 %1793
  %1796 = vset.pattern.permute.xlu0 1
  %1797 = vperm.xlu0 %1796, %v1251
  %v1798 = vpop.permute.xlu0 %1797
  %1800 = vset.pattern.permute.xlu0 1
  %1801 = vperm.xlu0 %1800, %v1252
  %v1802 = vpop.permute.xlu0 %1801
  %1804 = vset.pattern.permute.xlu0 1
  %1805 = vperm.xlu0 %1804, %v1253
  %v1806 = vpop.permute.xlu0 %1805
  %1808 = vset.pattern.permute.xlu0 1
  %1809 = vperm.xlu0 %1808, %v1254
  %v1810 = vpop.permute.xlu0 %1809
  %1812 = vset.pattern.permute.xlu0 1
  %1813 = vperm.xlu0 %1812, %v1255
  %v1814 = vpop.permute.xlu0 %1813
  %1816 = vset.pattern.permute.xlu0 1
  %1817 = vperm.xlu0 %1816, %v1256
  %v1818 = vpop.permute.xlu0 %1817
  %1820 = vset.pattern.permute.xlu0 1
  %1821 = vperm.xlu0 %1820, %v1257
  %v1822 = vpop.permute.xlu0 %1821
  %1824 = vset.pattern.permute.xlu0 1
  %1825 = vperm.xlu0 %1824, %v1258
  %v1826 = vpop.permute.xlu0 %1825
  %1828 = vset.pattern.permute.xlu0 1
  %1829 = vperm.xlu0 %1828, %v1259
  %v1830 = vpop.permute.xlu0 %1829
  %1832 = vset.pattern.permute.xlu0 1
  %1833 = vperm.xlu0 %1832, %v1260
  %v1834 = vpop.permute.xlu0 %1833
  %1836 = vset.pattern.permute.xlu0 1
  %1837 = vperm.xlu0 %1836, %v1261
  %v1838 = vpop.permute.xlu0 %1837
  %1840 = vset.pattern.permute.xlu0 1
  %1841 = vperm.xlu0 %1840, %v1262
  %v1842 = vpop.permute.xlu0 %1841
  %1844 = vset.pattern.permute.xlu0 1
  %1845 = vperm.xlu0 %1844, %v1263
  %v1846 = vpop.permute.xlu0 %1845
  %1848 = vset.pattern.permute.xlu0 1
  %1849 = vperm.xlu0 %1848, %v1264
  %v1850 = vpop.permute.xlu0 %1849
  %1852 = vset.pattern.permute.xlu0 1
  %1853 = vperm.xlu0 %1852, %v1265
  %v1854 = vpop.permute.xlu0 %1853
  %1856 = vset.pattern.permute.xlu0 1
  %1857 = vperm.xlu0 %1856, %v1266
  %v1858 = vpop.permute.xlu0 %1857
  %1860 = vset.pattern.permute.xlu0 1
  %1861 = vperm.xlu0 %1860, %v1267
  %v1862 = vpop.permute.xlu0 %1861
  %1864 = vset.pattern.permute.xlu0 1
  %1865 = vperm.xlu0 %1864, %v1268
  %v1866 = vpop.permute.xlu0 %1865
  %1868 = vset.pattern.permute.xlu0 1
  %1869 = vperm.xlu0 %1868, %v1269
  %v1870 = vpop.permute.xlu0 %1869
  %1872 = vset.pattern.permute.xlu0 1
  %1873 = vperm.xlu0 %1872, %v1270
  %v1874 = vpop.permute.xlu0 %1873
  %1876 = vset.pattern.permute.xlu0 1
  %1877 = vperm.xlu0 %1876, %v1271
  %v1878 = vpop.permute.xlu0 %1877
  %1880 = vset.pattern.permute.xlu0 1
  %1881 = vperm.xlu0 %1880, %v1272
  %v1882 = vpop.permute.xlu0 %1881
  %1884 = vset.pattern.permute.xlu0 1
  %1885 = vperm.xlu0 %1884, %v1273
  %v1886 = vpop.permute.xlu0 %1885
  %1888 = vset.pattern.permute.xlu0 1
  %1889 = vperm.xlu0 %1888, %v1274
  %v1890 = vpop.permute.xlu0 %1889
  %1892 = vset.pattern.permute.xlu0 1
  %1893 = vperm.xlu0 %1892, %v1275
  %v1894 = vpop.permute.xlu0 %1893
  %1896 = vset.pattern.permute.xlu0 1
  %1897 = vperm.xlu0 %1896, %v1276
  %v1898 = vpop.permute.xlu0 %1897
  %1900 = vset.pattern.permute.xlu0 1
  %1901 = vperm.xlu0 %1900, %v1277
  %v1902 = vpop.permute.xlu0 %1901
  %1904 = vset.pattern.permute.xlu0 1
  %1905 = vperm.xlu0 %1904, %v1278
  %v1906 = vpop.permute.xlu0 %1905
  %1908 = vset.pattern.permute.xlu0 1
  %1909 = vperm.xlu0 %1908, %v1279
  %v1910 = vpop.permute.xlu0 %1909
  %1912 = vset.pattern.permute.xlu0 1
  %1913 = vperm.xlu0 %1912, %v1280
  %v1914 = vpop.permute.xlu0 %1913
  %1916 = vset.pattern.permute.xlu0 1
  %1917 = vperm.xlu0 %1916, %v1281
  %v1918 = vpop.permute.xlu0 %1917
  %1920 = vset.pattern.permute.xlu0 1
  %1921 = vperm.xlu0 %1920, %v1282
  %v1922 = vpop.permute.xlu0 %1921
  %1924 = vset.pattern.permute.xlu0 1
  %1925 = vperm.xlu0 %1924, %v1283
  %v1926 = vpop.permute.xlu0 %1925
  %1928 = vset.pattern.permute.xlu0 1
  %1929 = vperm.xlu0 %1928, %v1284
  %v1930 = vpop.permute.xlu0 %1929
  %1932 = vset.pattern.permute.xlu0 1
  %1933 = vperm.xlu0 %1932, %v1285
  %v1934 = vpop.permute.xlu0 %1933
  %1936 = vset.pattern.permute.xlu0 1
  %1937 = vperm.xlu0 %1936, %v1286
  %v1938 = vpop.permute.xlu0 %1937
  %1940 = vset.pattern.permute.xlu0 1
  %1941 = vperm.xlu0 %1940, %v1287
  %v1942 = vpop.permute.xlu0 %1941
  %1944 = vset.pattern.permute.xlu0 1
  %1945 = vperm.xlu0 %1944, %v1288
  %v1946 = vpop.permute.xlu0 %1945
  %1948 = vset.pattern.permute.xlu0 1
  %1949 = vperm.xlu0 %1948, %v1289
  %v1950 = vpop.permute.xlu0 %1949
  %1952 = vset.pattern.permute.xlu0 1
  %1953 = vperm.xlu0 %1952, %v1290
  %v1954 = vpop.permute.xlu0 %1953
  %1956 = vset.pattern.permute.xlu0 1
  %1957 = vperm.xlu0 %1956, %v1291
  %v1958 = vpop.permute.xlu0 %1957
  %1960 = vset.pattern.permute.xlu0 1
  %1961 = vperm.xlu0 %1960, %v1292
  %v1962 = vpop.permute.xlu0 %1961
  %1964 = vset.pattern.permute.xlu0 1
  %1965 = vperm.xlu0 %1964, %v1293
  %v1966 = vpop.permute.xlu0 %1965
  %1968 = vset.pattern.permute.xlu0 1
  %1969 = vperm.xlu0 %1968, %v1294
  %v1970 = vpop.permute.xlu0 %1969
  %1972 = vset.pattern.permute.xlu0 1
  %1973 = vperm.xlu0 %1972, %v1295
  %v1974 = vpop.permute.xlu0 %1973
  %1976 = vset.pattern.permute.xlu0 1
  %1977 = vperm.xlu0 %1976, %v1296
  %v1978 = vpop.permute.xlu0 %1977
  %1980 = vset.pattern.permute.xlu0 1
  %1981 = vperm.xlu0 %1980, %v1297
  %v1982 = vpop.permute.xlu0 %1981
  %1984 = vset.pattern.permute.xlu0 1
  %1985 = vperm.xlu0 %1984, %v1298
  %v1986 = vpop.permute.xlu0 %1985
  %1988 = vset.pattern.permute.xlu0 1
  %1989 = vperm.xlu0 %1988, %v1299
  %v1990 = vpop.permute.xlu0 %1989
  %1992 = vset.pattern.permute.xlu0 1
  %1993 = vperm.xlu0 %1992, %v1300
  %v1994 = vpop.permute.xlu0 %1993
  %1996 = vset.pattern.permute.xlu0 1
  %1997 = vperm.xlu0 %1996, %v1301
  %v1998 = vpop.permute.xlu0 %1997
  %2000 = vset.pattern.permute.xlu0 1
  %2001 = vperm.xlu0 %2000, %v1302
  %v2002 = vpop.permute.xlu0 %2001
  %2004 = vset.pattern.permute.xlu0 1
  %2005 = vperm.xlu0 %2004, %v1303
  %v2006 = vpop.permute.xlu0 %2005
  %2008 = vset.pattern.permute.xlu0 1
  %2009 = vperm.xlu0 %2008, %v1304
  %v2010 = vpop.permute.xlu0 %2009
  %2012 = vset.pattern.permute.xlu0 1
  %2013 = vperm.xlu0 %2012, %v1305
  %v2014 = vpop.permute.xlu0 %2013
  %v2016 = vlaneseq
  %v2017 = vshrl.u32 %v2016, 7
  %v2018 = vsub.s32 0, %v2017
  %v2019 = vrot.slane %v1759, %v2018
  %v2020 = vmul.f32 %v1762, %v2019
  %v2021 = vmul.f32 %v1766, %v2019
  %v2022 = vmul.f32 %v1770, %v2019
  %v2023 = vmul.f32 %v1774, %v2019
  %v2024 = vmul.f32 %v1778, %v2019
  %v2025 = vmul.f32 %v1782, %v2019
  %v2026 = vmul.f32 %v1786, %v2019
  %v2027 = vmul.f32 %v1790, %v2019
  %v2028 = vmul.f32 %v1794, %v2019
  %v2029 = vmul.f32 %v1798, %v2019
  %v2030 = vmul.f32 %v1802, %v2019
  %v2031 = vmul.f32 %v1806, %v2019
  %v2032 = vmul.f32 %v1810, %v2019
  %v2033 = vmul.f32 %v1814, %v2019
  %v2034 = vmul.f32 %v1818, %v2019
  %v2035 = vmul.f32 %v1822, %v2019
  %v2036 = vmul.f32 %v1826, %v2019
  %v2037 = vmul.f32 %v1830, %v2019
  %v2038 = vmul.f32 %v1834, %v2019
  %v2039 = vmul.f32 %v1838, %v2019
  %v2040 = vmul.f32 %v1842, %v2019
  %v2041 = vmul.f32 %v1846, %v2019
  %v2042 = vmul.f32 %v1850, %v2019
  %v2043 = vmul.f32 %v1854, %v2019
  %v2044 = vmul.f32 %v1858, %v2019
  %v2045 = vmul.f32 %v1862, %v2019
  %v2046 = vmul.f32 %v1866, %v2019
  %v2047 = vmul.f32 %v1870, %v2019
  %v2048 = vmul.f32 %v1874, %v2019
  %v2049 = vmul.f32 %v1878, %v2019
  %v2050 = vmul.f32 %v1882, %v2019
  %v2051 = vmul.f32 %v1886, %v2019
  %v2052 = vmul.f32 %v1890, %v2019
  %v2053 = vmul.f32 %v1894, %v2019
  %v2054 = vmul.f32 %v1898, %v2019
  %v2055 = vmul.f32 %v1902, %v2019
  %v2056 = vmul.f32 %v1906, %v2019
  %v2057 = vmul.f32 %v1910, %v2019
  %v2058 = vmul.f32 %v1914, %v2019
  %v2059 = vmul.f32 %v1918, %v2019
  %v2060 = vmul.f32 %v1922, %v2019
  %v2061 = vmul.f32 %v1926, %v2019
  %v2062 = vmul.f32 %v1930, %v2019
  %v2063 = vmul.f32 %v1934, %v2019
  %v2064 = vmul.f32 %v1938, %v2019
  %v2065 = vmul.f32 %v1942, %v2019
  %v2066 = vmul.f32 %v1946, %v2019
  %v2067 = vmul.f32 %v1950, %v2019
  %v2068 = vmul.f32 %v1954, %v2019
  %v2069 = vmul.f32 %v1958, %v2019
  %v2070 = vmul.f32 %v1962, %v2019
  %v2071 = vmul.f32 %v1966, %v2019
  %v2072 = vmul.f32 %v1970, %v2019
  %v2073 = vmul.f32 %v1974, %v2019
  %v2074 = vmul.f32 %v1978, %v2019
  %v2075 = vmul.f32 %v1982, %v2019
  %v2076 = vmul.f32 %v1986, %v2019
  %v2077 = vmul.f32 %v1990, %v2019
  %v2078 = vmul.f32 %v1994, %v2019
  %v2079 = vmul.f32 %v1998, %v2019
  %v2080 = vmul.f32 %v2002, %v2019
  %v2081 = vmul.f32 %v2006, %v2019
  %v2082 = vmul.f32 %v2010, %v2019
  %v2083 = vmul.f32 %v2014, %v2019
  %v2084 = vadd.f32 %v1695, %v2020
  %v2085 = vadd.f32 %v1696, %v2021
  %v2086 = vadd.f32 %v1697, %v2022
  %v2087 = vadd.f32 %v1698, %v2023
  %v2088 = vadd.f32 %v1699, %v2024
  %v2089 = vadd.f32 %v1700, %v2025
  %v2090 = vadd.f32 %v1701, %v2026
  %v2091 = vadd.f32 %v1702, %v2027
  %v2092 = vadd.f32 %v1703, %v2028
  %v2093 = vadd.f32 %v1704, %v2029
  %v2094 = vadd.f32 %v1705, %v2030
  %v2095 = vadd.f32 %v1706, %v2031
  %v2096 = vadd.f32 %v1707, %v2032
  %v2097 = vadd.f32 %v1708, %v2033
  %v2098 = vadd.f32 %v1709, %v2034
  %v2099 = vadd.f32 %v1710, %v2035
  %v2100 = vadd.f32 %v1711, %v2036
  %v2101 = vadd.f32 %v1712, %v2037
  %v2102 = vadd.f32 %v1713, %v2038
  %v2103 = vadd.f32 %v1714, %v2039
  %v2104 = vadd.f32 %v1715, %v2040
  %v2105 = vadd.f32 %v1716, %v2041
  %v2106 = vadd.f32 %v1717, %v2042
  %v2107 = vadd.f32 %v1718, %v2043
  %v2108 = vadd.f32 %v1719, %v2044
  %v2109 = vadd.f32 %v1720, %v2045
  %v2110 = vadd.f32 %v1721, %v2046
  %v2111 = vadd.f32 %v1722, %v2047
  %v2112 = vadd.f32 %v1723, %v2048
  %v2113 = vadd.f32 %v1724, %v2049
  %v2114 = vadd.f32 %v1725, %v2050
  %v2115 = vadd.f32 %v1726, %v2051
  %v2116 = vadd.f32 %v1727, %v2052
  %v2117 = vadd.f32 %v1728, %v2053
  %v2118 = vadd.f32 %v1729, %v2054
  %v2119 = vadd.f32 %v1730, %v2055
  %v2120 = vadd.f32 %v1731, %v2056
  %v2121 = vadd.f32 %v1732, %v2057
  %v2122 = vadd.f32 %v1733, %v2058
  %v2123 = vadd.f32 %v1734, %v2059
  %v2124 = vadd.f32 %v1735, %v2060
  %v2125 = vadd.f32 %v1736, %v2061
  %v2126 = vadd.f32 %v1737, %v2062
  %v2127 = vadd.f32 %v1738, %v2063
  %v2128 = vadd.f32 %v1739, %v2064
  %v2129 = vadd.f32 %v1740, %v2065
  %v2130 = vadd.f32 %v1741, %v2066
  %v2131 = vadd.f32 %v1742, %v2067
  %v2132 = vadd.f32 %v1743, %v2068
  %v2133 = vadd.f32 %v1744, %v2069
  %v2134 = vadd.f32 %v1745, %v2070
  %v2135 = vadd.f32 %v1746, %v2071
  %v2136 = vadd.f32 %v1747, %v2072
  %v2137 = vadd.f32 %v1748, %v2073
  %v2138 = vadd.f32 %v1749, %v2074
  %v2139 = vadd.f32 %v1750, %v2075
  %v2140 = vadd.f32 %v1751, %v2076
  %v2141 = vadd.f32 %v1752, %v2077
  %v2142 = vadd.f32 %v1753, %v2078
  %v2143 = vadd.f32 %v1754, %v2079
  %v2144 = vadd.f32 %v1755, %v2080
  %v2145 = vadd.f32 %v1756, %v2081
  %v2146 = vadd.f32 %v1757, %v2082
  %v2147 = vadd.f32 %v1758, %v2083
  %v2148 = vld [vmem:[%s0 + $0x5] sm:$0x1]
  %2149 = vset.pattern.permute.xlu0 2
  %2150 = vperm.xlu0 %2149, %v1242
  %v2151 = vpop.permute.xlu0 %2150
  %2153 = vset.pattern.permute.xlu0 2
  %2154 = vperm.xlu0 %2153, %v1243
  %v2155 = vpop.permute.xlu0 %2154
  %2157 = vset.pattern.permute.xlu0 2
  %2158 = vperm.xlu0 %2157, %v1244
  %v2159 = vpop.permute.xlu0 %2158
  %2161 = vset.pattern.permute.xlu0 2
  %2162 = vperm.xlu0 %2161, %v1245
  %v2163 = vpop.permute.xlu0 %2162
  %2165 = vset.pattern.permute.xlu0 2
  %2166 = vperm.xlu0 %2165, %v1246
  %v2167 = vpop.permute.xlu0 %2166
  %2169 = vset.pattern.permute.xlu0 2
  %2170 = vperm.xlu0 %2169, %v1247
  %v2171 = vpop.permute.xlu0 %2170
  %2173 = vset.pattern.permute.xlu0 2
  %2174 = vperm.xlu0 %2173, %v1248
  %v2175 = vpop.permute.xlu0 %2174
  %2177 = vset.pattern.permute.xlu0 2
  %2178 = vperm.xlu0 %2177, %v1249
  %v2179 = vpop.permute.xlu0 %2178
  %2181 = vset.pattern.permute.xlu0 2
  %2182 = vperm.xlu0 %2181, %v1250
  %v2183 = vpop.permute.xlu0 %2182
  %2185 = vset.pattern.permute.xlu0 2
  %2186 = vperm.xlu0 %2185, %v1251
  %v2187 = vpop.permute.xlu0 %2186
  %2189 = vset.pattern.permute.xlu0 2
  %2190 = vperm.xlu0 %2189, %v1252
  %v2191 = vpop.permute.xlu0 %2190
  %2193 = vset.pattern.permute.xlu0 2
  %2194 = vperm.xlu0 %2193, %v1253
  %v2195 = vpop.permute.xlu0 %2194
  %2197 = vset.pattern.permute.xlu0 2
  %2198 = vperm.xlu0 %2197, %v1254
  %v2199 = vpop.permute.xlu0 %2198
  %2201 = vset.pattern.permute.xlu0 2
  %2202 = vperm.xlu0 %2201, %v1255
  %v2203 = vpop.permute.xlu0 %2202
  %2205 = vset.pattern.permute.xlu0 2
  %2206 = vperm.xlu0 %2205, %v1256
  %v2207 = vpop.permute.xlu0 %2206
  %2209 = vset.pattern.permute.xlu0 2
  %2210 = vperm.xlu0 %2209, %v1257
  %v2211 = vpop.permute.xlu0 %2210
  %2213 = vset.pattern.permute.xlu0 2
  %2214 = vperm.xlu0 %2213, %v1258
  %v2215 = vpop.permute.xlu0 %2214
  %2217 = vset.pattern.permute.xlu0 2
  %2218 = vperm.xlu0 %2217, %v1259
  %v2219 = vpop.permute.xlu0 %2218
  %2221 = vset.pattern.permute.xlu0 2
  %2222 = vperm.xlu0 %2221, %v1260
  %v2223 = vpop.permute.xlu0 %2222
  %2225 = vset.pattern.permute.xlu0 2
  %2226 = vperm.xlu0 %2225, %v1261
  %v2227 = vpop.permute.xlu0 %2226
  %2229 = vset.pattern.permute.xlu0 2
  %2230 = vperm.xlu0 %2229, %v1262
  %v2231 = vpop.permute.xlu0 %2230
  %2233 = vset.pattern.permute.xlu0 2
  %2234 = vperm.xlu0 %2233, %v1263
  %v2235 = vpop.permute.xlu0 %2234
  %2237 = vset.pattern.permute.xlu0 2
  %2238 = vperm.xlu0 %2237, %v1264
  %v2239 = vpop.permute.xlu0 %2238
  %2241 = vset.pattern.permute.xlu0 2
  %2242 = vperm.xlu0 %2241, %v1265
  %v2243 = vpop.permute.xlu0 %2242
  %2245 = vset.pattern.permute.xlu0 2
  %2246 = vperm.xlu0 %2245, %v1266
  %v2247 = vpop.permute.xlu0 %2246
  %2249 = vset.pattern.permute.xlu0 2
  %2250 = vperm.xlu0 %2249, %v1267
  %v2251 = vpop.permute.xlu0 %2250
  %2253 = vset.pattern.permute.xlu0 2
  %2254 = vperm.xlu0 %2253, %v1268
  %v2255 = vpop.permute.xlu0 %2254
  %2257 = vset.pattern.permute.xlu0 2
  %2258 = vperm.xlu0 %2257, %v1269
  %v2259 = vpop.permute.xlu0 %2258
  %2261 = vset.pattern.permute.xlu0 2
  %2262 = vperm.xlu0 %2261, %v1270
  %v2263 = vpop.permute.xlu0 %2262
  %2265 = vset.pattern.permute.xlu0 2
  %2266 = vperm.xlu0 %2265, %v1271
  %v2267 = vpop.permute.xlu0 %2266
  %2269 = vset.pattern.permute.xlu0 2
  %2270 = vperm.xlu0 %2269, %v1272
  %v2271 = vpop.permute.xlu0 %2270
  %2273 = vset.pattern.permute.xlu0 2
  %2274 = vperm.xlu0 %2273, %v1273
  %v2275 = vpop.permute.xlu0 %2274
  %2277 = vset.pattern.permute.xlu0 2
  %2278 = vperm.xlu0 %2277, %v1274
  %v2279 = vpop.permute.xlu0 %2278
  %2281 = vset.pattern.permute.xlu0 2
  %2282 = vperm.xlu0 %2281, %v1275
  %v2283 = vpop.permute.xlu0 %2282
  %2285 = vset.pattern.permute.xlu0 2
  %2286 = vperm.xlu0 %2285, %v1276
  %v2287 = vpop.permute.xlu0 %2286
  %2289 = vset.pattern.permute.xlu0 2
  %2290 = vperm.xlu0 %2289, %v1277
  %v2291 = vpop.permute.xlu0 %2290
  %2293 = vset.pattern.permute.xlu0 2
  %2294 = vperm.xlu0 %2293, %v1278
  %v2295 = vpop.permute.xlu0 %2294
  %2297 = vset.pattern.permute.xlu0 2
  %2298 = vperm.xlu0 %2297, %v1279
  %v2299 = vpop.permute.xlu0 %2298
  %2301 = vset.pattern.permute.xlu0 2
  %2302 = vperm.xlu0 %2301, %v1280
  %v2303 = vpop.permute.xlu0 %2302
  %2305 = vset.pattern.permute.xlu0 2
  %2306 = vperm.xlu0 %2305, %v1281
  %v2307 = vpop.permute.xlu0 %2306
  %2309 = vset.pattern.permute.xlu0 2
  %2310 = vperm.xlu0 %2309, %v1282
  %v2311 = vpop.permute.xlu0 %2310
  %2313 = vset.pattern.permute.xlu0 2
  %2314 = vperm.xlu0 %2313, %v1283
  %v2315 = vpop.permute.xlu0 %2314
  %2317 = vset.pattern.permute.xlu0 2
  %2318 = vperm.xlu0 %2317, %v1284
  %v2319 = vpop.permute.xlu0 %2318
  %2321 = vset.pattern.permute.xlu0 2
  %2322 = vperm.xlu0 %2321, %v1285
  %v2323 = vpop.permute.xlu0 %2322
  %2325 = vset.pattern.permute.xlu0 2
  %2326 = vperm.xlu0 %2325, %v1286
  %v2327 = vpop.permute.xlu0 %2326
  %2329 = vset.pattern.permute.xlu0 2
  %2330 = vperm.xlu0 %2329, %v1287
  %v2331 = vpop.permute.xlu0 %2330
  %2333 = vset.pattern.permute.xlu0 2
  %2334 = vperm.xlu0 %2333, %v1288
  %v2335 = vpop.permute.xlu0 %2334
  %2337 = vset.pattern.permute.xlu0 2
  %2338 = vperm.xlu0 %2337, %v1289
  %v2339 = vpop.permute.xlu0 %2338
  %2341 = vset.pattern.permute.xlu0 2
  %2342 = vperm.xlu0 %2341, %v1290
  %v2343 = vpop.permute.xlu0 %2342
  %2345 = vset.pattern.permute.xlu0 2
  %2346 = vperm.xlu0 %2345, %v1291
  %v2347 = vpop.permute.xlu0 %2346
  %2349 = vset.pattern.permute.xlu0 2
  %2350 = vperm.xlu0 %2349, %v1292
  %v2351 = vpop.permute.xlu0 %2350
  %2353 = vset.pattern.permute.xlu0 2
  %2354 = vperm.xlu0 %2353, %v1293
  %v2355 = vpop.permute.xlu0 %2354
  %2357 = vset.pattern.permute.xlu0 2
  %2358 = vperm.xlu0 %2357, %v1294
  %v2359 = vpop.permute.xlu0 %2358
  %2361 = vset.pattern.permute.xlu0 2
  %2362 = vperm.xlu0 %2361, %v1295
  %v2363 = vpop.permute.xlu0 %2362
  %2365 = vset.pattern.permute.xlu0 2
  %2366 = vperm.xlu0 %2365, %v1296
  %v2367 = vpop.permute.xlu0 %2366
  %2369 = vset.pattern.permute.xlu0 2
  %2370 = vperm.xlu0 %2369, %v1297
  %v2371 = vpop.permute.xlu0 %2370
  %2373 = vset.pattern.permute.xlu0 2
  %2374 = vperm.xlu0 %2373, %v1298
  %v2375 = vpop.permute.xlu0 %2374
  %2377 = vset.pattern.permute.xlu0 2
  %2378 = vperm.xlu0 %2377, %v1299
  %v2379 = vpop.permute.xlu0 %2378
  %2381 = vset.pattern.permute.xlu0 2
  %2382 = vperm.xlu0 %2381, %v1300
  %v2383 = vpop.permute.xlu0 %2382
  %2385 = vset.pattern.permute.xlu0 2
  %2386 = vperm.xlu0 %2385, %v1301
  %v2387 = vpop.permute.xlu0 %2386
  %2389 = vset.pattern.permute.xlu0 2
  %2390 = vperm.xlu0 %2389, %v1302
  %v2391 = vpop.permute.xlu0 %2390
  %2393 = vset.pattern.permute.xlu0 2
  %2394 = vperm.xlu0 %2393, %v1303
  %v2395 = vpop.permute.xlu0 %2394
  %2397 = vset.pattern.permute.xlu0 2
  %2398 = vperm.xlu0 %2397, %v1304
  %v2399 = vpop.permute.xlu0 %2398
  %2401 = vset.pattern.permute.xlu0 2
  %2402 = vperm.xlu0 %2401, %v1305
  %v2403 = vpop.permute.xlu0 %2402
  %v2405 = vlaneseq
  %v2406 = vshrl.u32 %v2405, 7
  %v2407 = vsub.s32 0, %v2406
  %v2408 = vrot.slane %v2148, %v2407
  %v2409 = vmul.f32 %v2151, %v2408
  %v2410 = vmul.f32 %v2155, %v2408
  %v2411 = vmul.f32 %v2159, %v2408
  %v2412 = vmul.f32 %v2163, %v2408
  %v2413 = vmul.f32 %v2167, %v2408
  %v2414 = vmul.f32 %v2171, %v2408
  %v2415 = vmul.f32 %v2175, %v2408
  %v2416 = vmul.f32 %v2179, %v2408
  %v2417 = vmul.f32 %v2183, %v2408
  %v2418 = vmul.f32 %v2187, %v2408
  %v2419 = vmul.f32 %v2191, %v2408
  %v2420 = vmul.f32 %v2195, %v2408
  %v2421 = vmul.f32 %v2199, %v2408
  %v2422 = vmul.f32 %v2203, %v2408
  %v2423 = vmul.f32 %v2207, %v2408
  %v2424 = vmul.f32 %v2211, %v2408
  %v2425 = vmul.f32 %v2215, %v2408
  %v2426 = vmul.f32 %v2219, %v2408
  %v2427 = vmul.f32 %v2223, %v2408
  %v2428 = vmul.f32 %v2227, %v2408
  %v2429 = vmul.f32 %v2231, %v2408
  %v2430 = vmul.f32 %v2235, %v2408
  %v2431 = vmul.f32 %v2239, %v2408
  %v2432 = vmul.f32 %v2243, %v2408
  %v2433 = vmul.f32 %v2247, %v2408
  %v2434 = vmul.f32 %v2251, %v2408
  %v2435 = vmul.f32 %v2255, %v2408
  %v2436 = vmul.f32 %v2259, %v2408
  %v2437 = vmul.f32 %v2263, %v2408
  %v2438 = vmul.f32 %v2267, %v2408
  %v2439 = vmul.f32 %v2271, %v2408
  %v2440 = vmul.f32 %v2275, %v2408
  %v2441 = vmul.f32 %v2279, %v2408
  %v2442 = vmul.f32 %v2283, %v2408
  %v2443 = vmul.f32 %v2287, %v2408
  %v2444 = vmul.f32 %v2291, %v2408
  %v2445 = vmul.f32 %v2295, %v2408
  %v2446 = vmul.f32 %v2299, %v2408
  %v2447 = vmul.f32 %v2303, %v2408
  %v2448 = vmul.f32 %v2307, %v2408
  %v2449 = vmul.f32 %v2311, %v2408
  %v2450 = vmul.f32 %v2315, %v2408
  %v2451 = vmul.f32 %v2319, %v2408
  %v2452 = vmul.f32 %v2323, %v2408
  %v2453 = vmul.f32 %v2327, %v2408
  %v2454 = vmul.f32 %v2331, %v2408
  %v2455 = vmul.f32 %v2335, %v2408
  %v2456 = vmul.f32 %v2339, %v2408
  %v2457 = vmul.f32 %v2343, %v2408
  %v2458 = vmul.f32 %v2347, %v2408
  %v2459 = vmul.f32 %v2351, %v2408
  %v2460 = vmul.f32 %v2355, %v2408
  %v2461 = vmul.f32 %v2359, %v2408
  %v2462 = vmul.f32 %v2363, %v2408
  %v2463 = vmul.f32 %v2367, %v2408
  %v2464 = vmul.f32 %v2371, %v2408
  %v2465 = vmul.f32 %v2375, %v2408
  %v2466 = vmul.f32 %v2379, %v2408
  %v2467 = vmul.f32 %v2383, %v2408
  %v2468 = vmul.f32 %v2387, %v2408
  %v2469 = vmul.f32 %v2391, %v2408
  %v2470 = vmul.f32 %v2395, %v2408
  %v2471 = vmul.f32 %v2399, %v2408
  %v2472 = vmul.f32 %v2403, %v2408
  %v2473 = vadd.f32 %v2084, %v2409
  %v2474 = vadd.f32 %v2085, %v2410
  %v2475 = vadd.f32 %v2086, %v2411
  %v2476 = vadd.f32 %v2087, %v2412
  %v2477 = vadd.f32 %v2088, %v2413
  %v2478 = vadd.f32 %v2089, %v2414
  %v2479 = vadd.f32 %v2090, %v2415
  %v2480 = vadd.f32 %v2091, %v2416
  %v2481 = vadd.f32 %v2092, %v2417
  %v2482 = vadd.f32 %v2093, %v2418
  %v2483 = vadd.f32 %v2094, %v2419
  %v2484 = vadd.f32 %v2095, %v2420
  %v2485 = vadd.f32 %v2096, %v2421
  %v2486 = vadd.f32 %v2097, %v2422
  %v2487 = vadd.f32 %v2098, %v2423
  %v2488 = vadd.f32 %v2099, %v2424
  %v2489 = vadd.f32 %v2100, %v2425
  %v2490 = vadd.f32 %v2101, %v2426
  %v2491 = vadd.f32 %v2102, %v2427
  %v2492 = vadd.f32 %v2103, %v2428
  %v2493 = vadd.f32 %v2104, %v2429
  %v2494 = vadd.f32 %v2105, %v2430
  %v2495 = vadd.f32 %v2106, %v2431
  %v2496 = vadd.f32 %v2107, %v2432
  %v2497 = vadd.f32 %v2108, %v2433
  %v2498 = vadd.f32 %v2109, %v2434
  %v2499 = vadd.f32 %v2110, %v2435
  %v2500 = vadd.f32 %v2111, %v2436
  %v2501 = vadd.f32 %v2112, %v2437
  %v2502 = vadd.f32 %v2113, %v2438
  %v2503 = vadd.f32 %v2114, %v2439
  %v2504 = vadd.f32 %v2115, %v2440
  %v2505 = vadd.f32 %v2116, %v2441
  %v2506 = vadd.f32 %v2117, %v2442
  %v2507 = vadd.f32 %v2118, %v2443
  %v2508 = vadd.f32 %v2119, %v2444
  %v2509 = vadd.f32 %v2120, %v2445
  %v2510 = vadd.f32 %v2121, %v2446
  %v2511 = vadd.f32 %v2122, %v2447
  %v2512 = vadd.f32 %v2123, %v2448
  %v2513 = vadd.f32 %v2124, %v2449
  %v2514 = vadd.f32 %v2125, %v2450
  %v2515 = vadd.f32 %v2126, %v2451
  %v2516 = vadd.f32 %v2127, %v2452
  %v2517 = vadd.f32 %v2128, %v2453
  %v2518 = vadd.f32 %v2129, %v2454
  %v2519 = vadd.f32 %v2130, %v2455
  %v2520 = vadd.f32 %v2131, %v2456
  %v2521 = vadd.f32 %v2132, %v2457
  %v2522 = vadd.f32 %v2133, %v2458
  %v2523 = vadd.f32 %v2134, %v2459
  %v2524 = vadd.f32 %v2135, %v2460
  %v2525 = vadd.f32 %v2136, %v2461
  %v2526 = vadd.f32 %v2137, %v2462
  %v2527 = vadd.f32 %v2138, %v2463
  %v2528 = vadd.f32 %v2139, %v2464
  %v2529 = vadd.f32 %v2140, %v2465
  %v2530 = vadd.f32 %v2141, %v2466
  %v2531 = vadd.f32 %v2142, %v2467
  %v2532 = vadd.f32 %v2143, %v2468
  %v2533 = vadd.f32 %v2144, %v2469
  %v2534 = vadd.f32 %v2145, %v2470
  %v2535 = vadd.f32 %v2146, %v2471
  %v2536 = vadd.f32 %v2147, %v2472
  %v2537 = vld [vmem:[%s1 + $0x2] sm:$0xff]
  %v2538 = vld [vmem:[%s1 + $0xa] sm:$0xff]
  %v2539 = vld [vmem:[%s1 + $0x1a] sm:$0xff]
  %v2540 = vld [vmem:[%s1 + $0x22] sm:$0xff]
  %v2541 = vld [vmem:[%s1 + $0x32] sm:$0xff]
  %v2542 = vld [vmem:[%s1 + $0x3a] sm:$0xff]
  %v2543 = vld [vmem:[%s1 + $0x4a] sm:$0xff]
  %v2544 = vld [vmem:[%s1 + $0x52] sm:$0xff]
  %v2545 = vld [vmem:[%s1 + $0x62] sm:$0xff]
  %v2546 = vld [vmem:[%s1 + $0x6a] sm:$0xff]
  %v2547 = vld [vmem:[%s1 + $0x7a] sm:$0xff]
  %v2548 = vld [vmem:[%s1 + $0x82] sm:$0xff]
  %v2549 = vld [vmem:[%s1 + $0x92] sm:$0xff]
  %v2550 = vld [vmem:[%s1 + $0x9a] sm:$0xff]
  %v2551 = vld [vmem:[%s1 + $0xaa] sm:$0xff]
  %v2552 = vld [vmem:[%s1 + $0xb2] sm:$0xff]
  %v2553 = vld [vmem:[%s1 + $0xc2] sm:$0xff]
  %v2554 = vld [vmem:[%s1 + $0xca] sm:$0xff]
  %v2555 = vld [vmem:[%s1 + $0xda] sm:$0xff]
  %v2556 = vld [vmem:[%s1 + $0xe2] sm:$0xff]
  %v2557 = vld [vmem:[%s1 + $0xf2] sm:$0xff]
  %v2558 = vld [vmem:[%s1 + $0xfa] sm:$0xff]
  %v2559 = vld [vmem:[%s1 + $0x10a] sm:$0xff]
  %v2560 = vld [vmem:[%s1 + $0x112] sm:$0xff]
  %v2561 = vld [vmem:[%s1 + $0x122] sm:$0xff]
  %v2562 = vld [vmem:[%s1 + $0x12a] sm:$0xff]
  %v2563 = vld [vmem:[%s1 + $0x13a] sm:$0xff]
  %v2564 = vld [vmem:[%s1 + $0x142] sm:$0xff]
  %v2565 = vld [vmem:[%s1 + $0x152] sm:$0xff]
  %v2566 = vld [vmem:[%s1 + $0x15a] sm:$0xff]
  %v2567 = vld [vmem:[%s1 + $0x16a] sm:$0xff]
  %v2568 = vld [vmem:[%s1 + $0x172] sm:$0xff]
  %v2569 = vld [vmem:[%s1 + $0x1b2] sm:$0xff]
  %v2570 = vld [vmem:[%s1 + $0x1ba] sm:$0xff]
  %v2571 = vld [vmem:[%s1 + $0x1ca] sm:$0xff]
  %v2572 = vld [vmem:[%s1 + $0x1d2] sm:$0xff]
  %v2573 = vld [vmem:[%s1 + $0x1e2] sm:$0xff]
  %v2574 = vld [vmem:[%s1 + $0x1ea] sm:$0xff]
  %v2575 = vld [vmem:[%s1 + $0x1fa] sm:$0xff]
  %v2576 = vld [vmem:[%s1 + $0x202] sm:$0xff]
  %v2577 = vld [vmem:[%s1 + $0x212] sm:$0xff]
  %v2578 = vld [vmem:[%s1 + $0x21a] sm:$0xff]
  %v2579 = vld [vmem:[%s1 + $0x22a] sm:$0xff]
  %v2580 = vld [vmem:[%s1 + $0x232] sm:$0xff]
  %v2581 = vld [vmem:[%s1 + $0x242] sm:$0xff]
  %v2582 = vld [vmem:[%s1 + $0x24a] sm:$0xff]
  %v2583 = vld [vmem:[%s1 + $0x25a] sm:$0xff]
  %v2584 = vld [vmem:[%s1 + $0x262] sm:$0xff]
  %v2585 = vld [vmem:[%s1 + $0x272] sm:$0xff]
  %v2586 = vld [vmem:[%s1 + $0x27a] sm:$0xff]
  %v2587 = vld [vmem:[%s1 + $0x28a] sm:$0xff]
  %v2588 = vld [vmem:[%s1 + $0x292] sm:$0xff]
  %v2589 = vld [vmem:[%s1 + $0x2a2] sm:$0xff]
  %v2590 = vld [vmem:[%s1 + $0x2aa] sm:$0xff]
  %v2591 = vld [vmem:[%s1 + $0x2ba] sm:$0xff]
  %v2592 = vld [vmem:[%s1 + $0x2c2] sm:$0xff]
  %v2593 = vld [vmem:[%s1 + $0x2d2] sm:$0xff]
  %v2594 = vld [vmem:[%s1 + $0x2da] sm:$0xff]
  %v2595 = vld [vmem:[%s1 + $0x2ea] sm:$0xff]
  %v2596 = vld [vmem:[%s1 + $0x2f2] sm:$0xff]
  %v2597 = vld [vmem:[%s1 + $0x302] sm:$0xff]
  %v2598 = vld [vmem:[%s1 + $0x30a] sm:$0xff]
  %v2599 = vld [vmem:[%s1 + $0x31a] sm:$0xff]
  %v2600 = vld [vmem:[%s1 + $0x322] sm:$0xff]
  %v2601 = vld [vmem:[%s0 + $0x6] sm:$0x1]
  %2603 = vset.pattern.permute.xlu0 0
  %2604 = vperm.xlu0 %2603, %v2537
  %v2605 = vpop.permute.xlu0 %2604
  %2608 = vset.pattern.permute.xlu0 0
  %2609 = vperm.xlu0 %2608, %v2538
  %v2610 = vpop.permute.xlu0 %2609
  %2613 = vset.pattern.permute.xlu0 0
  %2614 = vperm.xlu0 %2613, %v2539
  %v2615 = vpop.permute.xlu0 %2614
  %2618 = vset.pattern.permute.xlu0 0
  %2619 = vperm.xlu0 %2618, %v2540
  %v2620 = vpop.permute.xlu0 %2619
  %2623 = vset.pattern.permute.xlu0 0
  %2624 = vperm.xlu0 %2623, %v2541
  %v2625 = vpop.permute.xlu0 %2624
  %2628 = vset.pattern.permute.xlu0 0
  %2629 = vperm.xlu0 %2628, %v2542
  %v2630 = vpop.permute.xlu0 %2629
  %2633 = vset.pattern.permute.xlu0 0
  %2634 = vperm.xlu0 %2633, %v2543
  %v2635 = vpop.permute.xlu0 %2634
  %2638 = vset.pattern.permute.xlu0 0
  %2639 = vperm.xlu0 %2638, %v2544
  %v2640 = vpop.permute.xlu0 %2639
  %2643 = vset.pattern.permute.xlu0 0
  %2644 = vperm.xlu0 %2643, %v2545
  %v2645 = vpop.permute.xlu0 %2644
  %2648 = vset.pattern.permute.xlu0 0
  %2649 = vperm.xlu0 %2648, %v2546
  %v2650 = vpop.permute.xlu0 %2649
  %2653 = vset.pattern.permute.xlu0 0
  %2654 = vperm.xlu0 %2653, %v2547
  %v2655 = vpop.permute.xlu0 %2654
  %2658 = vset.pattern.permute.xlu0 0
  %2659 = vperm.xlu0 %2658, %v2548
  %v2660 = vpop.permute.xlu0 %2659
  %2663 = vset.pattern.permute.xlu0 0
  %2664 = vperm.xlu0 %2663, %v2549
  %v2665 = vpop.permute.xlu0 %2664
  %2668 = vset.pattern.permute.xlu0 0
  %2669 = vperm.xlu0 %2668, %v2550
  %v2670 = vpop.permute.xlu0 %2669
  %2673 = vset.pattern.permute.xlu0 0
  %2674 = vperm.xlu0 %2673, %v2551
  %v2675 = vpop.permute.xlu0 %2674
  %2678 = vset.pattern.permute.xlu0 0
  %2679 = vperm.xlu0 %2678, %v2552
  %v2680 = vpop.permute.xlu0 %2679
  %2683 = vset.pattern.permute.xlu0 0
  %2684 = vperm.xlu0 %2683, %v2553
  %v2685 = vpop.permute.xlu0 %2684
  %2688 = vset.pattern.permute.xlu0 0
  %2689 = vperm.xlu0 %2688, %v2554
  %v2690 = vpop.permute.xlu0 %2689
  %2693 = vset.pattern.permute.xlu0 0
  %2694 = vperm.xlu0 %2693, %v2555
  %v2695 = vpop.permute.xlu0 %2694
  %2698 = vset.pattern.permute.xlu0 0
  %2699 = vperm.xlu0 %2698, %v2556
  %v2700 = vpop.permute.xlu0 %2699
  %2703 = vset.pattern.permute.xlu0 0
  %2704 = vperm.xlu0 %2703, %v2557
  %v2705 = vpop.permute.xlu0 %2704
  %2708 = vset.pattern.permute.xlu0 0
  %2709 = vperm.xlu0 %2708, %v2558
  %v2710 = vpop.permute.xlu0 %2709
  %2713 = vset.pattern.permute.xlu0 0
  %2714 = vperm.xlu0 %2713, %v2559
  %v2715 = vpop.permute.xlu0 %2714
  %2718 = vset.pattern.permute.xlu0 0
  %2719 = vperm.xlu0 %2718, %v2560
  %v2720 = vpop.permute.xlu0 %2719
  %2723 = vset.pattern.permute.xlu0 0
  %2724 = vperm.xlu0 %2723, %v2561
  %v2725 = vpop.permute.xlu0 %2724
  %2728 = vset.pattern.permute.xlu0 0
  %2729 = vperm.xlu0 %2728, %v2562
  %v2730 = vpop.permute.xlu0 %2729
  %2733 = vset.pattern.permute.xlu0 0
  %2734 = vperm.xlu0 %2733, %v2563
  %v2735 = vpop.permute.xlu0 %2734
  %2738 = vset.pattern.permute.xlu0 0
  %2739 = vperm.xlu0 %2738, %v2564
  %v2740 = vpop.permute.xlu0 %2739
  %2743 = vset.pattern.permute.xlu0 0
  %2744 = vperm.xlu0 %2743, %v2565
  %v2745 = vpop.permute.xlu0 %2744
  %2748 = vset.pattern.permute.xlu0 0
  %2749 = vperm.xlu0 %2748, %v2566
  %v2750 = vpop.permute.xlu0 %2749
  %2753 = vset.pattern.permute.xlu0 0
  %2754 = vperm.xlu0 %2753, %v2567
  %v2755 = vpop.permute.xlu0 %2754
  %2758 = vset.pattern.permute.xlu0 0
  %2759 = vperm.xlu0 %2758, %v2568
  %v2760 = vpop.permute.xlu0 %2759
  %2763 = vset.pattern.permute.xlu0 0
  %2764 = vperm.xlu0 %2763, %v2569
  %v2765 = vpop.permute.xlu0 %2764
  %2768 = vset.pattern.permute.xlu0 0
  %2769 = vperm.xlu0 %2768, %v2570
  %v2770 = vpop.permute.xlu0 %2769
  %2773 = vset.pattern.permute.xlu0 0
  %2774 = vperm.xlu0 %2773, %v2571
  %v2775 = vpop.permute.xlu0 %2774
  %2778 = vset.pattern.permute.xlu0 0
  %2779 = vperm.xlu0 %2778, %v2572
  %v2780 = vpop.permute.xlu0 %2779
  %2783 = vset.pattern.permute.xlu0 0
  %2784 = vperm.xlu0 %2783, %v2573
  %v2785 = vpop.permute.xlu0 %2784
  %2788 = vset.pattern.permute.xlu0 0
  %2789 = vperm.xlu0 %2788, %v2574
  %v2790 = vpop.permute.xlu0 %2789
  %2793 = vset.pattern.permute.xlu0 0
  %2794 = vperm.xlu0 %2793, %v2575
  %v2795 = vpop.permute.xlu0 %2794
  %2798 = vset.pattern.permute.xlu0 0
  %2799 = vperm.xlu0 %2798, %v2576
  %v2800 = vpop.permute.xlu0 %2799
  %2803 = vset.pattern.permute.xlu0 0
  %2804 = vperm.xlu0 %2803, %v2577
  %v2805 = vpop.permute.xlu0 %2804
  %2808 = vset.pattern.permute.xlu0 0
  %2809 = vperm.xlu0 %2808, %v2578
  %v2810 = vpop.permute.xlu0 %2809
  %2813 = vset.pattern.permute.xlu0 0
  %2814 = vperm.xlu0 %2813, %v2579
  %v2815 = vpop.permute.xlu0 %2814
  %2818 = vset.pattern.permute.xlu0 0
  %2819 = vperm.xlu0 %2818, %v2580
  %v2820 = vpop.permute.xlu0 %2819
  %2823 = vset.pattern.permute.xlu0 0
  %2824 = vperm.xlu0 %2823, %v2581
  %v2825 = vpop.permute.xlu0 %2824
  %2828 = vset.pattern.permute.xlu0 0
  %2829 = vperm.xlu0 %2828, %v2582
  %v2830 = vpop.permute.xlu0 %2829
  %2833 = vset.pattern.permute.xlu0 0
  %2834 = vperm.xlu0 %2833, %v2583
  %v2835 = vpop.permute.xlu0 %2834
  %2838 = vset.pattern.permute.xlu0 0
  %2839 = vperm.xlu0 %2838, %v2584
  %v2840 = vpop.permute.xlu0 %2839
  %2843 = vset.pattern.permute.xlu0 0
  %2844 = vperm.xlu0 %2843, %v2585
  %v2845 = vpop.permute.xlu0 %2844
  %2848 = vset.pattern.permute.xlu0 0
  %2849 = vperm.xlu0 %2848, %v2586
  %v2850 = vpop.permute.xlu0 %2849
  %2853 = vset.pattern.permute.xlu0 0
  %2854 = vperm.xlu0 %2853, %v2587
  %v2855 = vpop.permute.xlu0 %2854
  %2858 = vset.pattern.permute.xlu0 0
  %2859 = vperm.xlu0 %2858, %v2588
  %v2860 = vpop.permute.xlu0 %2859
  %2863 = vset.pattern.permute.xlu0 0
  %2864 = vperm.xlu0 %2863, %v2589
  %v2865 = vpop.permute.xlu0 %2864
  %2868 = vset.pattern.permute.xlu0 0
  %2869 = vperm.xlu0 %2868, %v2590
  %v2870 = vpop.permute.xlu0 %2869
  %2873 = vset.pattern.permute.xlu0 0
  %2874 = vperm.xlu0 %2873, %v2591
  %v2875 = vpop.permute.xlu0 %2874
  %2878 = vset.pattern.permute.xlu0 0
  %2879 = vperm.xlu0 %2878, %v2592
  %v2880 = vpop.permute.xlu0 %2879
  %2883 = vset.pattern.permute.xlu0 0
  %2884 = vperm.xlu0 %2883, %v2593
  %v2885 = vpop.permute.xlu0 %2884
  %2888 = vset.pattern.permute.xlu0 0
  %2889 = vperm.xlu0 %2888, %v2594
  %v2890 = vpop.permute.xlu0 %2889
  %2893 = vset.pattern.permute.xlu0 0
  %2894 = vperm.xlu0 %2893, %v2595
  %v2895 = vpop.permute.xlu0 %2894
  %2898 = vset.pattern.permute.xlu0 0
  %2899 = vperm.xlu0 %2898, %v2596
  %v2900 = vpop.permute.xlu0 %2899
  %2903 = vset.pattern.permute.xlu0 0
  %2904 = vperm.xlu0 %2903, %v2597
  %v2905 = vpop.permute.xlu0 %2904
  %2908 = vset.pattern.permute.xlu0 0
  %2909 = vperm.xlu0 %2908, %v2598
  %v2910 = vpop.permute.xlu0 %2909
  %2913 = vset.pattern.permute.xlu0 0
  %2914 = vperm.xlu0 %2913, %v2599
  %v2915 = vpop.permute.xlu0 %2914
  %2918 = vset.pattern.permute.xlu0 0
  %2919 = vperm.xlu0 %2918, %v2600
  %v2920 = vpop.permute.xlu0 %2919
  %v2922 = vlaneseq
  %v2923 = vshrl.u32 %v2922, 7
  %v2924 = vsub.s32 0, %v2923
  %v2925 = vrot.slane %v2601, %v2924
  %v2926 = vmul.f32 %v2605, %v2925
  %v2927 = vmul.f32 %v2610, %v2925
  %v2928 = vmul.f32 %v2615, %v2925
  %v2929 = vmul.f32 %v2620, %v2925
  %v2930 = vmul.f32 %v2625, %v2925
  %v2931 = vmul.f32 %v2630, %v2925
  %v2932 = vmul.f32 %v2635, %v2925
  %v2933 = vmul.f32 %v2640, %v2925
  %v2934 = vmul.f32 %v2645, %v2925
  %v2935 = vmul.f32 %v2650, %v2925
  %v2936 = vmul.f32 %v2655, %v2925
  %v2937 = vmul.f32 %v2660, %v2925
  %v2938 = vmul.f32 %v2665, %v2925
  %v2939 = vmul.f32 %v2670, %v2925
  %v2940 = vmul.f32 %v2675, %v2925
  %v2941 = vmul.f32 %v2680, %v2925
  %v2942 = vmul.f32 %v2685, %v2925
  %v2943 = vmul.f32 %v2690, %v2925
  %v2944 = vmul.f32 %v2695, %v2925
  %v2945 = vmul.f32 %v2700, %v2925
  %v2946 = vmul.f32 %v2705, %v2925
  %v2947 = vmul.f32 %v2710, %v2925
  %v2948 = vmul.f32 %v2715, %v2925
  %v2949 = vmul.f32 %v2720, %v2925
  %v2950 = vmul.f32 %v2725, %v2925
  %v2951 = vmul.f32 %v2730, %v2925
  %v2952 = vmul.f32 %v2735, %v2925
  %v2953 = vmul.f32 %v2740, %v2925
  %v2954 = vmul.f32 %v2745, %v2925
  %v2955 = vmul.f32 %v2750, %v2925
  %v2956 = vmul.f32 %v2755, %v2925
  %v2957 = vmul.f32 %v2760, %v2925
  %v2958 = vmul.f32 %v2765, %v2925
  %v2959 = vmul.f32 %v2770, %v2925
  %v2960 = vmul.f32 %v2775, %v2925
  %v2961 = vmul.f32 %v2780, %v2925
  %v2962 = vmul.f32 %v2785, %v2925
  %v2963 = vmul.f32 %v2790, %v2925
  %v2964 = vmul.f32 %v2795, %v2925
  %v2965 = vmul.f32 %v2800, %v2925
  %v2966 = vmul.f32 %v2805, %v2925
  %v2967 = vmul.f32 %v2810, %v2925
  %v2968 = vmul.f32 %v2815, %v2925
  %v2969 = vmul.f32 %v2820, %v2925
  %v2970 = vmul.f32 %v2825, %v2925
  %v2971 = vmul.f32 %v2830, %v2925
  %v2972 = vmul.f32 %v2835, %v2925
  %v2973 = vmul.f32 %v2840, %v2925
  %v2974 = vmul.f32 %v2845, %v2925
  %v2975 = vmul.f32 %v2850, %v2925
  %v2976 = vmul.f32 %v2855, %v2925
  %v2977 = vmul.f32 %v2860, %v2925
  %v2978 = vmul.f32 %v2865, %v2925
  %v2979 = vmul.f32 %v2870, %v2925
  %v2980 = vmul.f32 %v2875, %v2925
  %v2981 = vmul.f32 %v2880, %v2925
  %v2982 = vmul.f32 %v2885, %v2925
  %v2983 = vmul.f32 %v2890, %v2925
  %v2984 = vmul.f32 %v2895, %v2925
  %v2985 = vmul.f32 %v2900, %v2925
  %v2986 = vmul.f32 %v2905, %v2925
  %v2987 = vmul.f32 %v2910, %v2925
  %v2988 = vmul.f32 %v2915, %v2925
  %v2989 = vmul.f32 %v2920, %v2925
  %v2990 = vadd.f32 %v2473, %v2926
  %v2991 = vadd.f32 %v2474, %v2927
  %v2992 = vadd.f32 %v2475, %v2928
  %v2993 = vadd.f32 %v2476, %v2929
  %v2994 = vadd.f32 %v2477, %v2930
  %v2995 = vadd.f32 %v2478, %v2931
  %v2996 = vadd.f32 %v2479, %v2932
  %v2997 = vadd.f32 %v2480, %v2933
  %v2998 = vadd.f32 %v2481, %v2934
  %v2999 = vadd.f32 %v2482, %v2935
  %v3000 = vadd.f32 %v2483, %v2936
  %v3001 = vadd.f32 %v2484, %v2937
  %v3002 = vadd.f32 %v2485, %v2938
  %v3003 = vadd.f32 %v2486, %v2939
  %v3004 = vadd.f32 %v2487, %v2940
  %v3005 = vadd.f32 %v2488, %v2941
  %v3006 = vadd.f32 %v2489, %v2942
  %v3007 = vadd.f32 %v2490, %v2943
  %v3008 = vadd.f32 %v2491, %v2944
  %v3009 = vadd.f32 %v2492, %v2945
  %v3010 = vadd.f32 %v2493, %v2946
  %v3011 = vadd.f32 %v2494, %v2947
  %v3012 = vadd.f32 %v2495, %v2948
  %v3013 = vadd.f32 %v2496, %v2949
  %v3014 = vadd.f32 %v2497, %v2950
  %v3015 = vadd.f32 %v2498, %v2951
  %v3016 = vadd.f32 %v2499, %v2952
  %v3017 = vadd.f32 %v2500, %v2953
  %v3018 = vadd.f32 %v2501, %v2954
  %v3019 = vadd.f32 %v2502, %v2955
  %v3020 = vadd.f32 %v2503, %v2956
  %v3021 = vadd.f32 %v2504, %v2957
  %v3022 = vadd.f32 %v2505, %v2958
  %v3023 = vadd.f32 %v2506, %v2959
  %v3024 = vadd.f32 %v2507, %v2960
  %v3025 = vadd.f32 %v2508, %v2961
  %v3026 = vadd.f32 %v2509, %v2962
  %v3027 = vadd.f32 %v2510, %v2963
  %v3028 = vadd.f32 %v2511, %v2964
  %v3029 = vadd.f32 %v2512, %v2965
  %v3030 = vadd.f32 %v2513, %v2966
  %v3031 = vadd.f32 %v2514, %v2967
  %v3032 = vadd.f32 %v2515, %v2968
  %v3033 = vadd.f32 %v2516, %v2969
  %v3034 = vadd.f32 %v2517, %v2970
  %v3035 = vadd.f32 %v2518, %v2971
  %v3036 = vadd.f32 %v2519, %v2972
  %v3037 = vadd.f32 %v2520, %v2973
  %v3038 = vadd.f32 %v2521, %v2974
  %v3039 = vadd.f32 %v2522, %v2975
  %v3040 = vadd.f32 %v2523, %v2976
  %v3041 = vadd.f32 %v2524, %v2977
  %v3042 = vadd.f32 %v2525, %v2978
  %v3043 = vadd.f32 %v2526, %v2979
  %v3044 = vadd.f32 %v2527, %v2980
  %v3045 = vadd.f32 %v2528, %v2981
  %v3046 = vadd.f32 %v2529, %v2982
  %v3047 = vadd.f32 %v2530, %v2983
  %v3048 = vadd.f32 %v2531, %v2984
  %v3049 = vadd.f32 %v2532, %v2985
  %v3050 = vadd.f32 %v2533, %v2986
  %v3051 = vadd.f32 %v2534, %v2987
  %v3052 = vadd.f32 %v2535, %v2988
  %v3053 = vadd.f32 %v2536, %v2989
  %v3054 = vld [vmem:[%s0 + $0x7] sm:$0x1]
  %3055 = vset.pattern.permute.xlu0 1
  %3056 = vperm.xlu0 %3055, %v2537
  %v3057 = vpop.permute.xlu0 %3056
  %3059 = vset.pattern.permute.xlu0 1
  %3060 = vperm.xlu0 %3059, %v2538
  %v3061 = vpop.permute.xlu0 %3060
  %3063 = vset.pattern.permute.xlu0 1
  %3064 = vperm.xlu0 %3063, %v2539
  %v3065 = vpop.permute.xlu0 %3064
  %3067 = vset.pattern.permute.xlu0 1
  %3068 = vperm.xlu0 %3067, %v2540
  %v3069 = vpop.permute.xlu0 %3068
  %3071 = vset.pattern.permute.xlu0 1
  %3072 = vperm.xlu0 %3071, %v2541
  %v3073 = vpop.permute.xlu0 %3072
  %3075 = vset.pattern.permute.xlu0 1
  %3076 = vperm.xlu0 %3075, %v2542
  %v3077 = vpop.permute.xlu0 %3076
  %3079 = vset.pattern.permute.xlu0 1
  %3080 = vperm.xlu0 %3079, %v2543
  %v3081 = vpop.permute.xlu0 %3080
  %3083 = vset.pattern.permute.xlu0 1
  %3084 = vperm.xlu0 %3083, %v2544
  %v3085 = vpop.permute.xlu0 %3084
  %3087 = vset.pattern.permute.xlu0 1
  %3088 = vperm.xlu0 %3087, %v2545
  %v3089 = vpop.permute.xlu0 %3088
  %3091 = vset.pattern.permute.xlu0 1
  %3092 = vperm.xlu0 %3091, %v2546
  %v3093 = vpop.permute.xlu0 %3092
  %3095 = vset.pattern.permute.xlu0 1
  %3096 = vperm.xlu0 %3095, %v2547
  %v3097 = vpop.permute.xlu0 %3096
  %3099 = vset.pattern.permute.xlu0 1
  %3100 = vperm.xlu0 %3099, %v2548
  %v3101 = vpop.permute.xlu0 %3100
  %3103 = vset.pattern.permute.xlu0 1
  %3104 = vperm.xlu0 %3103, %v2549
  %v3105 = vpop.permute.xlu0 %3104
  %3107 = vset.pattern.permute.xlu0 1
  %3108 = vperm.xlu0 %3107, %v2550
  %v3109 = vpop.permute.xlu0 %3108
  %3111 = vset.pattern.permute.xlu0 1
  %3112 = vperm.xlu0 %3111, %v2551
  %v3113 = vpop.permute.xlu0 %3112
  %3115 = vset.pattern.permute.xlu0 1
  %3116 = vperm.xlu0 %3115, %v2552
  %v3117 = vpop.permute.xlu0 %3116
  %3119 = vset.pattern.permute.xlu0 1
  %3120 = vperm.xlu0 %3119, %v2553
  %v3121 = vpop.permute.xlu0 %3120
  %3123 = vset.pattern.permute.xlu0 1
  %3124 = vperm.xlu0 %3123, %v2554
  %v3125 = vpop.permute.xlu0 %3124
  %3127 = vset.pattern.permute.xlu0 1
  %3128 = vperm.xlu0 %3127, %v2555
  %v3129 = vpop.permute.xlu0 %3128
  %3131 = vset.pattern.permute.xlu0 1
  %3132 = vperm.xlu0 %3131, %v2556
  %v3133 = vpop.permute.xlu0 %3132
  %3135 = vset.pattern.permute.xlu0 1
  %3136 = vperm.xlu0 %3135, %v2557
  %v3137 = vpop.permute.xlu0 %3136
  %3139 = vset.pattern.permute.xlu0 1
  %3140 = vperm.xlu0 %3139, %v2558
  %v3141 = vpop.permute.xlu0 %3140
  %3143 = vset.pattern.permute.xlu0 1
  %3144 = vperm.xlu0 %3143, %v2559
  %v3145 = vpop.permute.xlu0 %3144
  %3147 = vset.pattern.permute.xlu0 1
  %3148 = vperm.xlu0 %3147, %v2560
  %v3149 = vpop.permute.xlu0 %3148
  %3151 = vset.pattern.permute.xlu0 1
  %3152 = vperm.xlu0 %3151, %v2561
  %v3153 = vpop.permute.xlu0 %3152
  %3155 = vset.pattern.permute.xlu0 1
  %3156 = vperm.xlu0 %3155, %v2562
  %v3157 = vpop.permute.xlu0 %3156
  %3159 = vset.pattern.permute.xlu0 1
  %3160 = vperm.xlu0 %3159, %v2563
  %v3161 = vpop.permute.xlu0 %3160
  %3163 = vset.pattern.permute.xlu0 1
  %3164 = vperm.xlu0 %3163, %v2564
  %v3165 = vpop.permute.xlu0 %3164
  %3167 = vset.pattern.permute.xlu0 1
  %3168 = vperm.xlu0 %3167, %v2565
  %v3169 = vpop.permute.xlu0 %3168
  %3171 = vset.pattern.permute.xlu0 1
  %3172 = vperm.xlu0 %3171, %v2566
  %v3173 = vpop.permute.xlu0 %3172
  %3175 = vset.pattern.permute.xlu0 1
  %3176 = vperm.xlu0 %3175, %v2567
  %v3177 = vpop.permute.xlu0 %3176
  %3179 = vset.pattern.permute.xlu0 1
  %3180 = vperm.xlu0 %3179, %v2568
  %v3181 = vpop.permute.xlu0 %3180
  %3183 = vset.pattern.permute.xlu0 1
  %3184 = vperm.xlu0 %3183, %v2569
  %v3185 = vpop.permute.xlu0 %3184
  %3187 = vset.pattern.permute.xlu0 1
  %3188 = vperm.xlu0 %3187, %v2570
  %v3189 = vpop.permute.xlu0 %3188
  %3191 = vset.pattern.permute.xlu0 1
  %3192 = vperm.xlu0 %3191, %v2571
  %v3193 = vpop.permute.xlu0 %3192
  %3195 = vset.pattern.permute.xlu0 1
  %3196 = vperm.xlu0 %3195, %v2572
  %v3197 = vpop.permute.xlu0 %3196
  %3199 = vset.pattern.permute.xlu0 1
  %3200 = vperm.xlu0 %3199, %v2573
  %v3201 = vpop.permute.xlu0 %3200
  %3203 = vset.pattern.permute.xlu0 1
  %3204 = vperm.xlu0 %3203, %v2574
  %v3205 = vpop.permute.xlu0 %3204
  %3207 = vset.pattern.permute.xlu0 1
  %3208 = vperm.xlu0 %3207, %v2575
  %v3209 = vpop.permute.xlu0 %3208
  %3211 = vset.pattern.permute.xlu0 1
  %3212 = vperm.xlu0 %3211, %v2576
  %v3213 = vpop.permute.xlu0 %3212
  %3215 = vset.pattern.permute.xlu0 1
  %3216 = vperm.xlu0 %3215, %v2577
  %v3217 = vpop.permute.xlu0 %3216
  %3219 = vset.pattern.permute.xlu0 1
  %3220 = vperm.xlu0 %3219, %v2578
  %v3221 = vpop.permute.xlu0 %3220
  %3223 = vset.pattern.permute.xlu0 1
  %3224 = vperm.xlu0 %3223, %v2579
  %v3225 = vpop.permute.xlu0 %3224
  %3227 = vset.pattern.permute.xlu0 1
  %3228 = vperm.xlu0 %3227, %v2580
  %v3229 = vpop.permute.xlu0 %3228
  %3231 = vset.pattern.permute.xlu0 1
  %3232 = vperm.xlu0 %3231, %v2581
  %v3233 = vpop.permute.xlu0 %3232
  %3235 = vset.pattern.permute.xlu0 1
  %3236 = vperm.xlu0 %3235, %v2582
  %v3237 = vpop.permute.xlu0 %3236
  %3239 = vset.pattern.permute.xlu0 1
  %3240 = vperm.xlu0 %3239, %v2583
  %v3241 = vpop.permute.xlu0 %3240
  %3243 = vset.pattern.permute.xlu0 1
  %3244 = vperm.xlu0 %3243, %v2584
  %v3245 = vpop.permute.xlu0 %3244
  %3247 = vset.pattern.permute.xlu0 1
  %3248 = vperm.xlu0 %3247, %v2585
  %v3249 = vpop.permute.xlu0 %3248
  %3251 = vset.pattern.permute.xlu0 1
  %3252 = vperm.xlu0 %3251, %v2586
  %v3253 = vpop.permute.xlu0 %3252
  %3255 = vset.pattern.permute.xlu0 1
  %3256 = vperm.xlu0 %3255, %v2587
  %v3257 = vpop.permute.xlu0 %3256
  %3259 = vset.pattern.permute.xlu0 1
  %3260 = vperm.xlu0 %3259, %v2588
  %v3261 = vpop.permute.xlu0 %3260
  %3263 = vset.pattern.permute.xlu0 1
  %3264 = vperm.xlu0 %3263, %v2589
  %v3265 = vpop.permute.xlu0 %3264
  %3267 = vset.pattern.permute.xlu0 1
  %3268 = vperm.xlu0 %3267, %v2590
  %v3269 = vpop.permute.xlu0 %3268
  %3271 = vset.pattern.permute.xlu0 1
  %3272 = vperm.xlu0 %3271, %v2591
  %v3273 = vpop.permute.xlu0 %3272
  %3275 = vset.pattern.permute.xlu0 1
  %3276 = vperm.xlu0 %3275, %v2592
  %v3277 = vpop.permute.xlu0 %3276
  %3279 = vset.pattern.permute.xlu0 1
  %3280 = vperm.xlu0 %3279, %v2593
  %v3281 = vpop.permute.xlu0 %3280
  %3283 = vset.pattern.permute.xlu0 1
  %3284 = vperm.xlu0 %3283, %v2594
  %v3285 = vpop.permute.xlu0 %3284
  %3287 = vset.pattern.permute.xlu0 1
  %3288 = vperm.xlu0 %3287, %v2595
  %v3289 = vpop.permute.xlu0 %3288
  %3291 = vset.pattern.permute.xlu0 1
  %3292 = vperm.xlu0 %3291, %v2596
  %v3293 = vpop.permute.xlu0 %3292
  %3295 = vset.pattern.permute.xlu0 1
  %3296 = vperm.xlu0 %3295, %v2597
  %v3297 = vpop.permute.xlu0 %3296
  %3299 = vset.pattern.permute.xlu0 1
  %3300 = vperm.xlu0 %3299, %v2598
  %v3301 = vpop.permute.xlu0 %3300
  %3303 = vset.pattern.permute.xlu0 1
  %3304 = vperm.xlu0 %3303, %v2599
  %v3305 = vpop.permute.xlu0 %3304
  %3307 = vset.pattern.permute.xlu0 1
  %3308 = vperm.xlu0 %3307, %v2600
  %v3309 = vpop.permute.xlu0 %3308
  %v3311 = vlaneseq
  %v3312 = vshrl.u32 %v3311, 7
  %v3313 = vsub.s32 0, %v3312
  %v3314 = vrot.slane %v3054, %v3313
  %v3315 = vmul.f32 %v3057, %v3314
  %v3316 = vmul.f32 %v3061, %v3314
  %v3317 = vmul.f32 %v3065, %v3314
  %v3318 = vmul.f32 %v3069, %v3314
  %v3319 = vmul.f32 %v3073, %v3314
  %v3320 = vmul.f32 %v3077, %v3314
  %v3321 = vmul.f32 %v3081, %v3314
  %v3322 = vmul.f32 %v3085, %v3314
  %v3323 = vmul.f32 %v3089, %v3314
  %v3324 = vmul.f32 %v3093, %v3314
  %v3325 = vmul.f32 %v3097, %v3314
  %v3326 = vmul.f32 %v3101, %v3314
  %v3327 = vmul.f32 %v3105, %v3314
  %v3328 = vmul.f32 %v3109, %v3314
  %v3329 = vmul.f32 %v3113, %v3314
  %v3330 = vmul.f32 %v3117, %v3314
  %v3331 = vmul.f32 %v3121, %v3314
  %v3332 = vmul.f32 %v3125, %v3314
  %v3333 = vmul.f32 %v3129, %v3314
  %v3334 = vmul.f32 %v3133, %v3314
  %v3335 = vmul.f32 %v3137, %v3314
  %v3336 = vmul.f32 %v3141, %v3314
  %v3337 = vmul.f32 %v3145, %v3314
  %v3338 = vmul.f32 %v3149, %v3314
  %v3339 = vmul.f32 %v3153, %v3314
  %v3340 = vmul.f32 %v3157, %v3314
  %v3341 = vmul.f32 %v3161, %v3314
  %v3342 = vmul.f32 %v3165, %v3314
  %v3343 = vmul.f32 %v3169, %v3314
  %v3344 = vmul.f32 %v3173, %v3314
  %v3345 = vmul.f32 %v3177, %v3314
  %v3346 = vmul.f32 %v3181, %v3314
  %v3347 = vmul.f32 %v3185, %v3314
  %v3348 = vmul.f32 %v3189, %v3314
  %v3349 = vmul.f32 %v3193, %v3314
  %v3350 = vmul.f32 %v3197, %v3314
  %v3351 = vmul.f32 %v3201, %v3314
  %v3352 = vmul.f32 %v3205, %v3314
  %v3353 = vmul.f32 %v3209, %v3314
  %v3354 = vmul.f32 %v3213, %v3314
  %v3355 = vmul.f32 %v3217, %v3314
  %v3356 = vmul.f32 %v3221, %v3314
  %v3357 = vmul.f32 %v3225, %v3314
  %v3358 = vmul.f32 %v3229, %v3314
  %v3359 = vmul.f32 %v3233, %v3314
  %v3360 = vmul.f32 %v3237, %v3314
  %v3361 = vmul.f32 %v3241, %v3314
  %v3362 = vmul.f32 %v3245, %v3314
  %v3363 = vmul.f32 %v3249, %v3314
  %v3364 = vmul.f32 %v3253, %v3314
  %v3365 = vmul.f32 %v3257, %v3314
  %v3366 = vmul.f32 %v3261, %v3314
  %v3367 = vmul.f32 %v3265, %v3314
  %v3368 = vmul.f32 %v3269, %v3314
  %v3369 = vmul.f32 %v3273, %v3314
  %v3370 = vmul.f32 %v3277, %v3314
  %v3371 = vmul.f32 %v3281, %v3314
  %v3372 = vmul.f32 %v3285, %v3314
  %v3373 = vmul.f32 %v3289, %v3314
  %v3374 = vmul.f32 %v3293, %v3314
  %v3375 = vmul.f32 %v3297, %v3314
  %v3376 = vmul.f32 %v3301, %v3314
  %v3377 = vmul.f32 %v3305, %v3314
  %v3378 = vmul.f32 %v3309, %v3314
  %v3379 = vadd.f32 %v2990, %v3315
  %v3380 = vadd.f32 %v2991, %v3316
  %v3381 = vadd.f32 %v2992, %v3317
  %v3382 = vadd.f32 %v2993, %v3318
  %v3383 = vadd.f32 %v2994, %v3319
  %v3384 = vadd.f32 %v2995, %v3320
  %v3385 = vadd.f32 %v2996, %v3321
  %v3386 = vadd.f32 %v2997, %v3322
  %v3387 = vadd.f32 %v2998, %v3323
  %v3388 = vadd.f32 %v2999, %v3324
  %v3389 = vadd.f32 %v3000, %v3325
  %v3390 = vadd.f32 %v3001, %v3326
  %v3391 = vadd.f32 %v3002, %v3327
  %v3392 = vadd.f32 %v3003, %v3328
  %v3393 = vadd.f32 %v3004, %v3329
  %v3394 = vadd.f32 %v3005, %v3330
  %v3395 = vadd.f32 %v3006, %v3331
  %v3396 = vadd.f32 %v3007, %v3332
  %v3397 = vadd.f32 %v3008, %v3333
  %v3398 = vadd.f32 %v3009, %v3334
  %v3399 = vadd.f32 %v3010, %v3335
  %v3400 = vadd.f32 %v3011, %v3336
  %v3401 = vadd.f32 %v3012, %v3337
  %v3402 = vadd.f32 %v3013, %v3338
  %v3403 = vadd.f32 %v3014, %v3339
  %v3404 = vadd.f32 %v3015, %v3340
  %v3405 = vadd.f32 %v3016, %v3341
  %v3406 = vadd.f32 %v3017, %v3342
  %v3407 = vadd.f32 %v3018, %v3343
  %v3408 = vadd.f32 %v3019, %v3344
  %v3409 = vadd.f32 %v3020, %v3345
  %v3410 = vadd.f32 %v3021, %v3346
  %v3411 = vadd.f32 %v3022, %v3347
  %v3412 = vadd.f32 %v3023, %v3348
  %v3413 = vadd.f32 %v3024, %v3349
  %v3414 = vadd.f32 %v3025, %v3350
  %v3415 = vadd.f32 %v3026, %v3351
  %v3416 = vadd.f32 %v3027, %v3352
  %v3417 = vadd.f32 %v3028, %v3353
  %v3418 = vadd.f32 %v3029, %v3354
  %v3419 = vadd.f32 %v3030, %v3355
  %v3420 = vadd.f32 %v3031, %v3356
  %v3421 = vadd.f32 %v3032, %v3357
  %v3422 = vadd.f32 %v3033, %v3358
  %v3423 = vadd.f32 %v3034, %v3359
  %v3424 = vadd.f32 %v3035, %v3360
  %v3425 = vadd.f32 %v3036, %v3361
  %v3426 = vadd.f32 %v3037, %v3362
  %v3427 = vadd.f32 %v3038, %v3363
  %v3428 = vadd.f32 %v3039, %v3364
  %v3429 = vadd.f32 %v3040, %v3365
  %v3430 = vadd.f32 %v3041, %v3366
  %v3431 = vadd.f32 %v3042, %v3367
  %v3432 = vadd.f32 %v3043, %v3368
  %v3433 = vadd.f32 %v3044, %v3369
  %v3434 = vadd.f32 %v3045, %v3370
  %v3435 = vadd.f32 %v3046, %v3371
  %v3436 = vadd.f32 %v3047, %v3372
  %v3437 = vadd.f32 %v3048, %v3373
  %v3438 = vadd.f32 %v3049, %v3374
  %v3439 = vadd.f32 %v3050, %v3375
  %v3440 = vadd.f32 %v3051, %v3376
  %v3441 = vadd.f32 %v3052, %v3377
  %v3442 = vadd.f32 %v3053, %v3378
  %v3443 = vld [vmem:[%s0 + $0x8] sm:$0x1]
  %3444 = vset.pattern.permute.xlu0 2
  %3445 = vperm.xlu0 %3444, %v2537
  %v3446 = vpop.permute.xlu0 %3445
  %3448 = vset.pattern.permute.xlu0 2
  %3449 = vperm.xlu0 %3448, %v2538
  %v3450 = vpop.permute.xlu0 %3449
  %3452 = vset.pattern.permute.xlu0 2
  %3453 = vperm.xlu0 %3452, %v2539
  %v3454 = vpop.permute.xlu0 %3453
  %3456 = vset.pattern.permute.xlu0 2
  %3457 = vperm.xlu0 %3456, %v2540
  %v3458 = vpop.permute.xlu0 %3457
  %3460 = vset.pattern.permute.xlu0 2
  %3461 = vperm.xlu0 %3460, %v2541
  %v3462 = vpop.permute.xlu0 %3461
  %3464 = vset.pattern.permute.xlu0 2
  %3465 = vperm.xlu0 %3464, %v2542
  %v3466 = vpop.permute.xlu0 %3465
  %3468 = vset.pattern.permute.xlu0 2
  %3469 = vperm.xlu0 %3468, %v2543
  %v3470 = vpop.permute.xlu0 %3469
  %3472 = vset.pattern.permute.xlu0 2
  %3473 = vperm.xlu0 %3472, %v2544
  %v3474 = vpop.permute.xlu0 %3473
  %3476 = vset.pattern.permute.xlu0 2
  %3477 = vperm.xlu0 %3476, %v2545
  %v3478 = vpop.permute.xlu0 %3477
  %3480 = vset.pattern.permute.xlu0 2
  %3481 = vperm.xlu0 %3480, %v2546
  %v3482 = vpop.permute.xlu0 %3481
  %3484 = vset.pattern.permute.xlu0 2
  %3485 = vperm.xlu0 %3484, %v2547
  %v3486 = vpop.permute.xlu0 %3485
  %3488 = vset.pattern.permute.xlu0 2
  %3489 = vperm.xlu0 %3488, %v2548
  %v3490 = vpop.permute.xlu0 %3489
  %3492 = vset.pattern.permute.xlu0 2
  %3493 = vperm.xlu0 %3492, %v2549
  %v3494 = vpop.permute.xlu0 %3493
  %3496 = vset.pattern.permute.xlu0 2
  %3497 = vperm.xlu0 %3496, %v2550
  %v3498 = vpop.permute.xlu0 %3497
  %3500 = vset.pattern.permute.xlu0 2
  %3501 = vperm.xlu0 %3500, %v2551
  %v3502 = vpop.permute.xlu0 %3501
  %3504 = vset.pattern.permute.xlu0 2
  %3505 = vperm.xlu0 %3504, %v2552
  %v3506 = vpop.permute.xlu0 %3505
  %3508 = vset.pattern.permute.xlu0 2
  %3509 = vperm.xlu0 %3508, %v2553
  %v3510 = vpop.permute.xlu0 %3509
  %3512 = vset.pattern.permute.xlu0 2
  %3513 = vperm.xlu0 %3512, %v2554
  %v3514 = vpop.permute.xlu0 %3513
  %3516 = vset.pattern.permute.xlu0 2
  %3517 = vperm.xlu0 %3516, %v2555
  %v3518 = vpop.permute.xlu0 %3517
  %3520 = vset.pattern.permute.xlu0 2
  %3521 = vperm.xlu0 %3520, %v2556
  %v3522 = vpop.permute.xlu0 %3521
  %3524 = vset.pattern.permute.xlu0 2
  %3525 = vperm.xlu0 %3524, %v2557
  %v3526 = vpop.permute.xlu0 %3525
  %3528 = vset.pattern.permute.xlu0 2
  %3529 = vperm.xlu0 %3528, %v2558
  %v3530 = vpop.permute.xlu0 %3529
  %3532 = vset.pattern.permute.xlu0 2
  %3533 = vperm.xlu0 %3532, %v2559
  %v3534 = vpop.permute.xlu0 %3533
  %3536 = vset.pattern.permute.xlu0 2
  %3537 = vperm.xlu0 %3536, %v2560
  %v3538 = vpop.permute.xlu0 %3537
  %3540 = vset.pattern.permute.xlu0 2
  %3541 = vperm.xlu0 %3540, %v2561
  %v3542 = vpop.permute.xlu0 %3541
  %3544 = vset.pattern.permute.xlu0 2
  %3545 = vperm.xlu0 %3544, %v2562
  %v3546 = vpop.permute.xlu0 %3545
  %3548 = vset.pattern.permute.xlu0 2
  %3549 = vperm.xlu0 %3548, %v2563
  %v3550 = vpop.permute.xlu0 %3549
  %3552 = vset.pattern.permute.xlu0 2
  %3553 = vperm.xlu0 %3552, %v2564
  %v3554 = vpop.permute.xlu0 %3553
  %3556 = vset.pattern.permute.xlu0 2
  %3557 = vperm.xlu0 %3556, %v2565
  %v3558 = vpop.permute.xlu0 %3557
  %3560 = vset.pattern.permute.xlu0 2
  %3561 = vperm.xlu0 %3560, %v2566
  %v3562 = vpop.permute.xlu0 %3561
  %3564 = vset.pattern.permute.xlu0 2
  %3565 = vperm.xlu0 %3564, %v2567
  %v3566 = vpop.permute.xlu0 %3565
  %3568 = vset.pattern.permute.xlu0 2
  %3569 = vperm.xlu0 %3568, %v2568
  %v3570 = vpop.permute.xlu0 %3569
  %3572 = vset.pattern.permute.xlu0 2
  %3573 = vperm.xlu0 %3572, %v2569
  %v3574 = vpop.permute.xlu0 %3573
  %3576 = vset.pattern.permute.xlu0 2
  %3577 = vperm.xlu0 %3576, %v2570
  %v3578 = vpop.permute.xlu0 %3577
  %3580 = vset.pattern.permute.xlu0 2
  %3581 = vperm.xlu0 %3580, %v2571
  %v3582 = vpop.permute.xlu0 %3581
  %3584 = vset.pattern.permute.xlu0 2
  %3585 = vperm.xlu0 %3584, %v2572
  %v3586 = vpop.permute.xlu0 %3585
  %3588 = vset.pattern.permute.xlu0 2
  %3589 = vperm.xlu0 %3588, %v2573
  %v3590 = vpop.permute.xlu0 %3589
  %3592 = vset.pattern.permute.xlu0 2
  %3593 = vperm.xlu0 %3592, %v2574
  %v3594 = vpop.permute.xlu0 %3593
  %3596 = vset.pattern.permute.xlu0 2
  %3597 = vperm.xlu0 %3596, %v2575
  %v3598 = vpop.permute.xlu0 %3597
  %3600 = vset.pattern.permute.xlu0 2
  %3601 = vperm.xlu0 %3600, %v2576
  %v3602 = vpop.permute.xlu0 %3601
  %3604 = vset.pattern.permute.xlu0 2
  %3605 = vperm.xlu0 %3604, %v2577
  %v3606 = vpop.permute.xlu0 %3605
  %3608 = vset.pattern.permute.xlu0 2
  %3609 = vperm.xlu0 %3608, %v2578
  %v3610 = vpop.permute.xlu0 %3609
  %3612 = vset.pattern.permute.xlu0 2
  %3613 = vperm.xlu0 %3612, %v2579
  %v3614 = vpop.permute.xlu0 %3613
  %3616 = vset.pattern.permute.xlu0 2
  %3617 = vperm.xlu0 %3616, %v2580
  %v3618 = vpop.permute.xlu0 %3617
  %3620 = vset.pattern.permute.xlu0 2
  %3621 = vperm.xlu0 %3620, %v2581
  %v3622 = vpop.permute.xlu0 %3621
  %3624 = vset.pattern.permute.xlu0 2
  %3625 = vperm.xlu0 %3624, %v2582
  %v3626 = vpop.permute.xlu0 %3625
  %3628 = vset.pattern.permute.xlu0 2
  %3629 = vperm.xlu0 %3628, %v2583
  %v3630 = vpop.permute.xlu0 %3629
  %3632 = vset.pattern.permute.xlu0 2
  %3633 = vperm.xlu0 %3632, %v2584
  %v3634 = vpop.permute.xlu0 %3633
  %3636 = vset.pattern.permute.xlu0 2
  %3637 = vperm.xlu0 %3636, %v2585
  %v3638 = vpop.permute.xlu0 %3637
  %3640 = vset.pattern.permute.xlu0 2
  %3641 = vperm.xlu0 %3640, %v2586
  %v3642 = vpop.permute.xlu0 %3641
  %3644 = vset.pattern.permute.xlu0 2
  %3645 = vperm.xlu0 %3644, %v2587
  %v3646 = vpop.permute.xlu0 %3645
  %3648 = vset.pattern.permute.xlu0 2
  %3649 = vperm.xlu0 %3648, %v2588
  %v3650 = vpop.permute.xlu0 %3649
  %3652 = vset.pattern.permute.xlu0 2
  %3653 = vperm.xlu0 %3652, %v2589
  %v3654 = vpop.permute.xlu0 %3653
  %3656 = vset.pattern.permute.xlu0 2
  %3657 = vperm.xlu0 %3656, %v2590
  %v3658 = vpop.permute.xlu0 %3657
  %3660 = vset.pattern.permute.xlu0 2
  %3661 = vperm.xlu0 %3660, %v2591
  %v3662 = vpop.permute.xlu0 %3661
  %3664 = vset.pattern.permute.xlu0 2
  %3665 = vperm.xlu0 %3664, %v2592
  %v3666 = vpop.permute.xlu0 %3665
  %3668 = vset.pattern.permute.xlu0 2
  %3669 = vperm.xlu0 %3668, %v2593
  %v3670 = vpop.permute.xlu0 %3669
  %3672 = vset.pattern.permute.xlu0 2
  %3673 = vperm.xlu0 %3672, %v2594
  %v3674 = vpop.permute.xlu0 %3673
  %3676 = vset.pattern.permute.xlu0 2
  %3677 = vperm.xlu0 %3676, %v2595
  %v3678 = vpop.permute.xlu0 %3677
  %3680 = vset.pattern.permute.xlu0 2
  %3681 = vperm.xlu0 %3680, %v2596
  %v3682 = vpop.permute.xlu0 %3681
  %3684 = vset.pattern.permute.xlu0 2
  %3685 = vperm.xlu0 %3684, %v2597
  %v3686 = vpop.permute.xlu0 %3685
  %3688 = vset.pattern.permute.xlu0 2
  %3689 = vperm.xlu0 %3688, %v2598
  %v3690 = vpop.permute.xlu0 %3689
  %3692 = vset.pattern.permute.xlu0 2
  %3693 = vperm.xlu0 %3692, %v2599
  %v3694 = vpop.permute.xlu0 %3693
  %3696 = vset.pattern.permute.xlu0 2
  %3697 = vperm.xlu0 %3696, %v2600
  %v3698 = vpop.permute.xlu0 %3697
  %v3700 = vlaneseq
  %v3701 = vshrl.u32 %v3700, 7
  %v3702 = vsub.s32 0, %v3701
  %v3703 = vrot.slane %v3443, %v3702
  %v3704 = vmul.f32 %v3446, %v3703
  %v3705 = vmul.f32 %v3450, %v3703
  %v3706 = vmul.f32 %v3454, %v3703
  %v3707 = vmul.f32 %v3458, %v3703
  %v3708 = vmul.f32 %v3462, %v3703
  %v3709 = vmul.f32 %v3466, %v3703
  %v3710 = vmul.f32 %v3470, %v3703
  %v3711 = vmul.f32 %v3474, %v3703
  %v3712 = vmul.f32 %v3478, %v3703
  %v3713 = vmul.f32 %v3482, %v3703
  %v3714 = vmul.f32 %v3486, %v3703
  %v3715 = vmul.f32 %v3490, %v3703
  %v3716 = vmul.f32 %v3494, %v3703
  %v3717 = vmul.f32 %v3498, %v3703
  %v3718 = vmul.f32 %v3502, %v3703
  %v3719 = vmul.f32 %v3506, %v3703
  %v3720 = vmul.f32 %v3510, %v3703
  %v3721 = vmul.f32 %v3514, %v3703
  %v3722 = vmul.f32 %v3518, %v3703
  %v3723 = vmul.f32 %v3522, %v3703
  %v3724 = vmul.f32 %v3526, %v3703
  %v3725 = vmul.f32 %v3530, %v3703
  %v3726 = vmul.f32 %v3534, %v3703
  %v3727 = vmul.f32 %v3538, %v3703
  %v3728 = vmul.f32 %v3542, %v3703
  %v3729 = vmul.f32 %v3546, %v3703
  %v3730 = vmul.f32 %v3550, %v3703
  %v3731 = vmul.f32 %v3554, %v3703
  %v3732 = vmul.f32 %v3558, %v3703
  %v3733 = vmul.f32 %v3562, %v3703
  %v3734 = vmul.f32 %v3566, %v3703
  %v3735 = vmul.f32 %v3570, %v3703
  %v3736 = vmul.f32 %v3574, %v3703
  %v3737 = vmul.f32 %v3578, %v3703
  %v3738 = vmul.f32 %v3582, %v3703
  %v3739 = vmul.f32 %v3586, %v3703
  %v3740 = vmul.f32 %v3590, %v3703
  %v3741 = vmul.f32 %v3594, %v3703
  %v3742 = vmul.f32 %v3598, %v3703
  %v3743 = vmul.f32 %v3602, %v3703
  %v3744 = vmul.f32 %v3606, %v3703
  %v3745 = vmul.f32 %v3610, %v3703
  %v3746 = vmul.f32 %v3614, %v3703
  %v3747 = vmul.f32 %v3618, %v3703
  %v3748 = vmul.f32 %v3622, %v3703
  %v3749 = vmul.f32 %v3626, %v3703
  %v3750 = vmul.f32 %v3630, %v3703
  %v3751 = vmul.f32 %v3634, %v3703
  %v3752 = vmul.f32 %v3638, %v3703
  %v3753 = vmul.f32 %v3642, %v3703
  %v3754 = vmul.f32 %v3646, %v3703
  %v3755 = vmul.f32 %v3650, %v3703
  %v3756 = vmul.f32 %v3654, %v3703
  %v3757 = vmul.f32 %v3658, %v3703
  %v3758 = vmul.f32 %v3662, %v3703
  %v3759 = vmul.f32 %v3666, %v3703
  %v3760 = vmul.f32 %v3670, %v3703
  %v3761 = vmul.f32 %v3674, %v3703
  %v3762 = vmul.f32 %v3678, %v3703
  %v3763 = vmul.f32 %v3682, %v3703
  %v3764 = vmul.f32 %v3686, %v3703
  %v3765 = vmul.f32 %v3690, %v3703
  %v3766 = vmul.f32 %v3694, %v3703
  %v3767 = vmul.f32 %v3698, %v3703
  %v3768 = vadd.f32 %v3379, %v3704
  %v3769 = vadd.f32 %v3380, %v3705
  %v3770 = vadd.f32 %v3381, %v3706
  %v3771 = vadd.f32 %v3382, %v3707
  %v3772 = vadd.f32 %v3383, %v3708
  %v3773 = vadd.f32 %v3384, %v3709
  %v3774 = vadd.f32 %v3385, %v3710
  %v3775 = vadd.f32 %v3386, %v3711
  %v3776 = vadd.f32 %v3387, %v3712
  %v3777 = vadd.f32 %v3388, %v3713
  %v3778 = vadd.f32 %v3389, %v3714
  %v3779 = vadd.f32 %v3390, %v3715
  %v3780 = vadd.f32 %v3391, %v3716
  %v3781 = vadd.f32 %v3392, %v3717
  %v3782 = vadd.f32 %v3393, %v3718
  %v3783 = vadd.f32 %v3394, %v3719
  %v3784 = vadd.f32 %v3395, %v3720
  %v3785 = vadd.f32 %v3396, %v3721
  %v3786 = vadd.f32 %v3397, %v3722
  %v3787 = vadd.f32 %v3398, %v3723
  %v3788 = vadd.f32 %v3399, %v3724
  %v3789 = vadd.f32 %v3400, %v3725
  %v3790 = vadd.f32 %v3401, %v3726
  %v3791 = vadd.f32 %v3402, %v3727
  %v3792 = vadd.f32 %v3403, %v3728
  %v3793 = vadd.f32 %v3404, %v3729
  %v3794 = vadd.f32 %v3405, %v3730
  %v3795 = vadd.f32 %v3406, %v3731
  %v3796 = vadd.f32 %v3407, %v3732
  %v3797 = vadd.f32 %v3408, %v3733
  %v3798 = vadd.f32 %v3409, %v3734
  %v3799 = vadd.f32 %v3410, %v3735
  %v3800 = vadd.f32 %v3411, %v3736
  %v3801 = vadd.f32 %v3412, %v3737
  %v3802 = vadd.f32 %v3413, %v3738
  %v3803 = vadd.f32 %v3414, %v3739
  %v3804 = vadd.f32 %v3415, %v3740
  %v3805 = vadd.f32 %v3416, %v3741
  %v3806 = vadd.f32 %v3417, %v3742
  %v3807 = vadd.f32 %v3418, %v3743
  %v3808 = vadd.f32 %v3419, %v3744
  %v3809 = vadd.f32 %v3420, %v3745
  %v3810 = vadd.f32 %v3421, %v3746
  %v3811 = vadd.f32 %v3422, %v3747
  %v3812 = vadd.f32 %v3423, %v3748
  %v3813 = vadd.f32 %v3424, %v3749
  %v3814 = vadd.f32 %v3425, %v3750
  %v3815 = vadd.f32 %v3426, %v3751
  %v3816 = vadd.f32 %v3427, %v3752
  %v3817 = vadd.f32 %v3428, %v3753
  %v3818 = vadd.f32 %v3429, %v3754
  %v3819 = vadd.f32 %v3430, %v3755
  %v3820 = vadd.f32 %v3431, %v3756
  %v3821 = vadd.f32 %v3432, %v3757
  %v3822 = vadd.f32 %v3433, %v3758
  %v3823 = vadd.f32 %v3434, %v3759
  %v3824 = vadd.f32 %v3435, %v3760
  %v3825 = vadd.f32 %v3436, %v3761
  %v3826 = vadd.f32 %v3437, %v3762
  %v3827 = vadd.f32 %v3438, %v3763
  %v3828 = vadd.f32 %v3439, %v3764
  %v3829 = vadd.f32 %v3440, %v3765
  %v3830 = vadd.f32 %v3441, %v3766
  %v3831 = vadd.f32 %v3442, %v3767
  %s3832 = scalar_lea.vmem %s1, 24
  %v3833 = vld [vmem:[%s3832] sm:$0xff]
  %v3834 = vld [vmem:[%s3832 + $0x8] sm:$0xff]
  %v3835 = vld [vmem:[%s3832 + $0x18] sm:$0xff]
  %v3836 = vld [vmem:[%s3832 + $0x20] sm:$0xff]
  %v3837 = vld [vmem:[%s3832 + $0x30] sm:$0xff]
  %v3838 = vld [vmem:[%s3832 + $0x38] sm:$0xff]
  %v3839 = vld [vmem:[%s3832 + $0x48] sm:$0xff]
  %v3840 = vld [vmem:[%s3832 + $0x50] sm:$0xff]
  %v3841 = vld [vmem:[%s3832 + $0x60] sm:$0xff]
  %v3842 = vld [vmem:[%s3832 + $0x68] sm:$0xff]
  %v3843 = vld [vmem:[%s3832 + $0x78] sm:$0xff]
  %v3844 = vld [vmem:[%s3832 + $0x80] sm:$0xff]
  %v3845 = vld [vmem:[%s3832 + $0x90] sm:$0xff]
  %v3846 = vld [vmem:[%s3832 + $0x98] sm:$0xff]
  %v3847 = vld [vmem:[%s3832 + $0xa8] sm:$0xff]
  %v3848 = vld [vmem:[%s3832 + $0xb0] sm:$0xff]
  %v3849 = vld [vmem:[%s3832 + $0xc0] sm:$0xff]
  %v3850 = vld [vmem:[%s3832 + $0xc8] sm:$0xff]
  %v3851 = vld [vmem:[%s3832 + $0xd8] sm:$0xff]
  %v3852 = vld [vmem:[%s3832 + $0xe0] sm:$0xff]
  %v3853 = vld [vmem:[%s3832 + $0xf0] sm:$0xff]
  %v3854 = vld [vmem:[%s3832 + $0xf8] sm:$0xff]
  %v3855 = vld [vmem:[%s3832 + $0x108] sm:$0xff]
  %v3856 = vld [vmem:[%s3832 + $0x110] sm:$0xff]
  %v3857 = vld [vmem:[%s3832 + $0x120] sm:$0xff]
  %v3858 = vld [vmem:[%s3832 + $0x128] sm:$0xff]
  %v3859 = vld [vmem:[%s3832 + $0x138] sm:$0xff]
  %v3860 = vld [vmem:[%s3832 + $0x140] sm:$0xff]
  %v3861 = vld [vmem:[%s3832 + $0x150] sm:$0xff]
  %v3862 = vld [vmem:[%s3832 + $0x158] sm:$0xff]
  %v3863 = vld [vmem:[%s3832 + $0x168] sm:$0xff]
  %v3864 = vld [vmem:[%s3832 + $0x170] sm:$0xff]
  %v3865 = vld [vmem:[%s3832 + $0x1b0] sm:$0xff]
  %v3866 = vld [vmem:[%s3832 + $0x1b8] sm:$0xff]
  %v3867 = vld [vmem:[%s3832 + $0x1c8] sm:$0xff]
  %v3868 = vld [vmem:[%s3832 + $0x1d0] sm:$0xff]
  %v3869 = vld [vmem:[%s3832 + $0x1e0] sm:$0xff]
  %v3870 = vld [vmem:[%s3832 + $0x1e8] sm:$0xff]
  %v3871 = vld [vmem:[%s3832 + $0x1f8] sm:$0xff]
  %v3872 = vld [vmem:[%s3832 + $0x200] sm:$0xff]
  %v3873 = vld [vmem:[%s3832 + $0x210] sm:$0xff]
  %v3874 = vld [vmem:[%s3832 + $0x218] sm:$0xff]
  %v3875 = vld [vmem:[%s3832 + $0x228] sm:$0xff]
  %v3876 = vld [vmem:[%s3832 + $0x230] sm:$0xff]
  %v3877 = vld [vmem:[%s3832 + $0x240] sm:$0xff]
  %v3878 = vld [vmem:[%s3832 + $0x248] sm:$0xff]
  %v3879 = vld [vmem:[%s3832 + $0x258] sm:$0xff]
  %v3880 = vld [vmem:[%s3832 + $0x260] sm:$0xff]
  %v3881 = vld [vmem:[%s3832 + $0x270] sm:$0xff]
  %v3882 = vld [vmem:[%s3832 + $0x278] sm:$0xff]
  %v3883 = vld [vmem:[%s3832 + $0x288] sm:$0xff]
  %v3884 = vld [vmem:[%s3832 + $0x290] sm:$0xff]
  %v3885 = vld [vmem:[%s3832 + $0x2a0] sm:$0xff]
  %v3886 = vld [vmem:[%s3832 + $0x2a8] sm:$0xff]
  %v3887 = vld [vmem:[%s3832 + $0x2b8] sm:$0xff]
  %v3888 = vld [vmem:[%s3832 + $0x2c0] sm:$0xff]
  %v3889 = vld [vmem:[%s3832 + $0x2d0] sm:$0xff]
  %v3890 = vld [vmem:[%s3832 + $0x2d8] sm:$0xff]
  %v3891 = vld [vmem:[%s3832 + $0x2e8] sm:$0xff]
  %v3892 = vld [vmem:[%s3832 + $0x2f0] sm:$0xff]
  %v3893 = vld [vmem:[%s3832 + $0x300] sm:$0xff]
  %v3894 = vld [vmem:[%s3832 + $0x308] sm:$0xff]
  %v3895 = vld [vmem:[%s3832 + $0x318] sm:$0xff]
  %v3896 = vld [vmem:[%s3832 + $0x320] sm:$0xff]
  %v3897 = vld [vmem:[%s0 + $0x9] sm:$0x1]
  %3899 = vset.pattern.permute.xlu0 0
  %3900 = vperm.xlu0 %3899, %v3833
  %v3901 = vpop.permute.xlu0 %3900
  %3904 = vset.pattern.permute.xlu0 0
  %3905 = vperm.xlu0 %3904, %v3834
  %v3906 = vpop.permute.xlu0 %3905
  %3909 = vset.pattern.permute.xlu0 0
  %3910 = vperm.xlu0 %3909, %v3835
  %v3911 = vpop.permute.xlu0 %3910
  %3914 = vset.pattern.permute.xlu0 0
  %3915 = vperm.xlu0 %3914, %v3836
  %v3916 = vpop.permute.xlu0 %3915
  %3919 = vset.pattern.permute.xlu0 0
  %3920 = vperm.xlu0 %3919, %v3837
  %v3921 = vpop.permute.xlu0 %3920
  %3924 = vset.pattern.permute.xlu0 0
  %3925 = vperm.xlu0 %3924, %v3838
  %v3926 = vpop.permute.xlu0 %3925
  %3929 = vset.pattern.permute.xlu0 0
  %3930 = vperm.xlu0 %3929, %v3839
  %v3931 = vpop.permute.xlu0 %3930
  %3934 = vset.pattern.permute.xlu0 0
  %3935 = vperm.xlu0 %3934, %v3840
  %v3936 = vpop.permute.xlu0 %3935
  %3939 = vset.pattern.permute.xlu0 0
  %3940 = vperm.xlu0 %3939, %v3841
  %v3941 = vpop.permute.xlu0 %3940
  %3944 = vset.pattern.permute.xlu0 0
  %3945 = vperm.xlu0 %3944, %v3842
  %v3946 = vpop.permute.xlu0 %3945
  %3949 = vset.pattern.permute.xlu0 0
  %3950 = vperm.xlu0 %3949, %v3843
  %v3951 = vpop.permute.xlu0 %3950
  %3954 = vset.pattern.permute.xlu0 0
  %3955 = vperm.xlu0 %3954, %v3844
  %v3956 = vpop.permute.xlu0 %3955
  %3959 = vset.pattern.permute.xlu0 0
  %3960 = vperm.xlu0 %3959, %v3845
  %v3961 = vpop.permute.xlu0 %3960
  %3964 = vset.pattern.permute.xlu0 0
  %3965 = vperm.xlu0 %3964, %v3846
  %v3966 = vpop.permute.xlu0 %3965
  %3969 = vset.pattern.permute.xlu0 0
  %3970 = vperm.xlu0 %3969, %v3847
  %v3971 = vpop.permute.xlu0 %3970
  %3974 = vset.pattern.permute.xlu0 0
  %3975 = vperm.xlu0 %3974, %v3848
  %v3976 = vpop.permute.xlu0 %3975
  %3979 = vset.pattern.permute.xlu0 0
  %3980 = vperm.xlu0 %3979, %v3849
  %v3981 = vpop.permute.xlu0 %3980
  %3984 = vset.pattern.permute.xlu0 0
  %3985 = vperm.xlu0 %3984, %v3850
  %v3986 = vpop.permute.xlu0 %3985
  %3989 = vset.pattern.permute.xlu0 0
  %3990 = vperm.xlu0 %3989, %v3851
  %v3991 = vpop.permute.xlu0 %3990
  %3994 = vset.pattern.permute.xlu0 0
  %3995 = vperm.xlu0 %3994, %v3852
  %v3996 = vpop.permute.xlu0 %3995
  %3999 = vset.pattern.permute.xlu0 0
  %4000 = vperm.xlu0 %3999, %v3853
  %v4001 = vpop.permute.xlu0 %4000
  %4004 = vset.pattern.permute.xlu0 0
  %4005 = vperm.xlu0 %4004, %v3854
  %v4006 = vpop.permute.xlu0 %4005
  %4009 = vset.pattern.permute.xlu0 0
  %4010 = vperm.xlu0 %4009, %v3855
  %v4011 = vpop.permute.xlu0 %4010
  %4014 = vset.pattern.permute.xlu0 0
  %4015 = vperm.xlu0 %4014, %v3856
  %v4016 = vpop.permute.xlu0 %4015
  %4019 = vset.pattern.permute.xlu0 0
  %4020 = vperm.xlu0 %4019, %v3857
  %v4021 = vpop.permute.xlu0 %4020
  %4024 = vset.pattern.permute.xlu0 0
  %4025 = vperm.xlu0 %4024, %v3858
  %v4026 = vpop.permute.xlu0 %4025
  %4029 = vset.pattern.permute.xlu0 0
  %4030 = vperm.xlu0 %4029, %v3859
  %v4031 = vpop.permute.xlu0 %4030
  %4034 = vset.pattern.permute.xlu0 0
  %4035 = vperm.xlu0 %4034, %v3860
  %v4036 = vpop.permute.xlu0 %4035
  %4039 = vset.pattern.permute.xlu0 0
  %4040 = vperm.xlu0 %4039, %v3861
  %v4041 = vpop.permute.xlu0 %4040
  %4044 = vset.pattern.permute.xlu0 0
  %4045 = vperm.xlu0 %4044, %v3862
  %v4046 = vpop.permute.xlu0 %4045
  %4049 = vset.pattern.permute.xlu0 0
  %4050 = vperm.xlu0 %4049, %v3863
  %v4051 = vpop.permute.xlu0 %4050
  %4054 = vset.pattern.permute.xlu0 0
  %4055 = vperm.xlu0 %4054, %v3864
  %v4056 = vpop.permute.xlu0 %4055
  %4059 = vset.pattern.permute.xlu0 0
  %4060 = vperm.xlu0 %4059, %v3865
  %v4061 = vpop.permute.xlu0 %4060
  %4064 = vset.pattern.permute.xlu0 0
  %4065 = vperm.xlu0 %4064, %v3866
  %v4066 = vpop.permute.xlu0 %4065
  %4069 = vset.pattern.permute.xlu0 0
  %4070 = vperm.xlu0 %4069, %v3867
  %v4071 = vpop.permute.xlu0 %4070
  %4074 = vset.pattern.permute.xlu0 0
  %4075 = vperm.xlu0 %4074, %v3868
  %v4076 = vpop.permute.xlu0 %4075
  %4079 = vset.pattern.permute.xlu0 0
  %4080 = vperm.xlu0 %4079, %v3869
  %v4081 = vpop.permute.xlu0 %4080
  %4084 = vset.pattern.permute.xlu0 0
  %4085 = vperm.xlu0 %4084, %v3870
  %v4086 = vpop.permute.xlu0 %4085
  %4089 = vset.pattern.permute.xlu0 0
  %4090 = vperm.xlu0 %4089, %v3871
  %v4091 = vpop.permute.xlu0 %4090
  %4094 = vset.pattern.permute.xlu0 0
  %4095 = vperm.xlu0 %4094, %v3872
  %v4096 = vpop.permute.xlu0 %4095
  %4099 = vset.pattern.permute.xlu0 0
  %4100 = vperm.xlu0 %4099, %v3873
  %v4101 = vpop.permute.xlu0 %4100
  %4104 = vset.pattern.permute.xlu0 0
  %4105 = vperm.xlu0 %4104, %v3874
  %v4106 = vpop.permute.xlu0 %4105
  %4109 = vset.pattern.permute.xlu0 0
  %4110 = vperm.xlu0 %4109, %v3875
  %v4111 = vpop.permute.xlu0 %4110
  %4114 = vset.pattern.permute.xlu0 0
  %4115 = vperm.xlu0 %4114, %v3876
  %v4116 = vpop.permute.xlu0 %4115
  %4119 = vset.pattern.permute.xlu0 0
  %4120 = vperm.xlu0 %4119, %v3877
  %v4121 = vpop.permute.xlu0 %4120
  %4124 = vset.pattern.permute.xlu0 0
  %4125 = vperm.xlu0 %4124, %v3878
  %v4126 = vpop.permute.xlu0 %4125
  %4129 = vset.pattern.permute.xlu0 0
  %4130 = vperm.xlu0 %4129, %v3879
  %v4131 = vpop.permute.xlu0 %4130
  %4134 = vset.pattern.permute.xlu0 0
  %4135 = vperm.xlu0 %4134, %v3880
  %v4136 = vpop.permute.xlu0 %4135
  %4139 = vset.pattern.permute.xlu0 0
  %4140 = vperm.xlu0 %4139, %v3881
  %v4141 = vpop.permute.xlu0 %4140
  %4144 = vset.pattern.permute.xlu0 0
  %4145 = vperm.xlu0 %4144, %v3882
  %v4146 = vpop.permute.xlu0 %4145
  %4149 = vset.pattern.permute.xlu0 0
  %4150 = vperm.xlu0 %4149, %v3883
  %v4151 = vpop.permute.xlu0 %4150
  %4154 = vset.pattern.permute.xlu0 0
  %4155 = vperm.xlu0 %4154, %v3884
  %v4156 = vpop.permute.xlu0 %4155
  %4159 = vset.pattern.permute.xlu0 0
  %4160 = vperm.xlu0 %4159, %v3885
  %v4161 = vpop.permute.xlu0 %4160
  %4164 = vset.pattern.permute.xlu0 0
  %4165 = vperm.xlu0 %4164, %v3886
  %v4166 = vpop.permute.xlu0 %4165
  %4169 = vset.pattern.permute.xlu0 0
  %4170 = vperm.xlu0 %4169, %v3887
  %v4171 = vpop.permute.xlu0 %4170
  %4174 = vset.pattern.permute.xlu0 0
  %4175 = vperm.xlu0 %4174, %v3888
  %v4176 = vpop.permute.xlu0 %4175
  %4179 = vset.pattern.permute.xlu0 0
  %4180 = vperm.xlu0 %4179, %v3889
  %v4181 = vpop.permute.xlu0 %4180
  %4184 = vset.pattern.permute.xlu0 0
  %4185 = vperm.xlu0 %4184, %v3890
  %v4186 = vpop.permute.xlu0 %4185
  %4189 = vset.pattern.permute.xlu0 0
  %4190 = vperm.xlu0 %4189, %v3891
  %v4191 = vpop.permute.xlu0 %4190
  %4194 = vset.pattern.permute.xlu0 0
  %4195 = vperm.xlu0 %4194, %v3892
  %v4196 = vpop.permute.xlu0 %4195
  %4199 = vset.pattern.permute.xlu0 0
  %4200 = vperm.xlu0 %4199, %v3893
  %v4201 = vpop.permute.xlu0 %4200
  %4204 = vset.pattern.permute.xlu0 0
  %4205 = vperm.xlu0 %4204, %v3894
  %v4206 = vpop.permute.xlu0 %4205
  %4209 = vset.pattern.permute.xlu0 0
  %4210 = vperm.xlu0 %4209, %v3895
  %v4211 = vpop.permute.xlu0 %4210
  %4214 = vset.pattern.permute.xlu0 0
  %4215 = vperm.xlu0 %4214, %v3896
  %v4216 = vpop.permute.xlu0 %4215
  %v4218 = vlaneseq
  %v4219 = vshrl.u32 %v4218, 7
  %v4220 = vsub.s32 0, %v4219
  %v4221 = vrot.slane %v3897, %v4220
  %v4222 = vmul.f32 %v3901, %v4221
  %v4223 = vmul.f32 %v3906, %v4221
  %v4224 = vmul.f32 %v3911, %v4221
  %v4225 = vmul.f32 %v3916, %v4221
  %v4226 = vmul.f32 %v3921, %v4221
  %v4227 = vmul.f32 %v3926, %v4221
  %v4228 = vmul.f32 %v3931, %v4221
  %v4229 = vmul.f32 %v3936, %v4221
  %v4230 = vmul.f32 %v3941, %v4221
  %v4231 = vmul.f32 %v3946, %v4221
  %v4232 = vmul.f32 %v3951, %v4221
  %v4233 = vmul.f32 %v3956, %v4221
  %v4234 = vmul.f32 %v3961, %v4221
  %v4235 = vmul.f32 %v3966, %v4221
  %v4236 = vmul.f32 %v3971, %v4221
  %v4237 = vmul.f32 %v3976, %v4221
  %v4238 = vmul.f32 %v3981, %v4221
  %v4239 = vmul.f32 %v3986, %v4221
  %v4240 = vmul.f32 %v3991, %v4221
  %v4241 = vmul.f32 %v3996, %v4221
  %v4242 = vmul.f32 %v4001, %v4221
  %v4243 = vmul.f32 %v4006, %v4221
  %v4244 = vmul.f32 %v4011, %v4221
  %v4245 = vmul.f32 %v4016, %v4221
  %v4246 = vmul.f32 %v4021, %v4221
  %v4247 = vmul.f32 %v4026, %v4221
  %v4248 = vmul.f32 %v4031, %v4221
  %v4249 = vmul.f32 %v4036, %v4221
  %v4250 = vmul.f32 %v4041, %v4221
  %v4251 = vmul.f32 %v4046, %v4221
  %v4252 = vmul.f32 %v4051, %v4221
  %v4253 = vmul.f32 %v4056, %v4221
  %v4254 = vmul.f32 %v4061, %v4221
  %v4255 = vmul.f32 %v4066, %v4221
  %v4256 = vmul.f32 %v4071, %v4221
  %v4257 = vmul.f32 %v4076, %v4221
  %v4258 = vmul.f32 %v4081, %v4221
  %v4259 = vmul.f32 %v4086, %v4221
  %v4260 = vmul.f32 %v4091, %v4221
  %v4261 = vmul.f32 %v4096, %v4221
  %v4262 = vmul.f32 %v4101, %v4221
  %v4263 = vmul.f32 %v4106, %v4221
  %v4264 = vmul.f32 %v4111, %v4221
  %v4265 = vmul.f32 %v4116, %v4221
  %v4266 = vmul.f32 %v4121, %v4221
  %v4267 = vmul.f32 %v4126, %v4221
  %v4268 = vmul.f32 %v4131, %v4221
  %v4269 = vmul.f32 %v4136, %v4221
  %v4270 = vmul.f32 %v4141, %v4221
  %v4271 = vmul.f32 %v4146, %v4221
  %v4272 = vmul.f32 %v4151, %v4221
  %v4273 = vmul.f32 %v4156, %v4221
  %v4274 = vmul.f32 %v4161, %v4221
  %v4275 = vmul.f32 %v4166, %v4221
  %v4276 = vmul.f32 %v4171, %v4221
  %v4277 = vmul.f32 %v4176, %v4221
  %v4278 = vmul.f32 %v4181, %v4221
  %v4279 = vmul.f32 %v4186, %v4221
  %v4280 = vmul.f32 %v4191, %v4221
  %v4281 = vmul.f32 %v4196, %v4221
  %v4282 = vmul.f32 %v4201, %v4221
  %v4283 = vmul.f32 %v4206, %v4221
  %v4284 = vmul.f32 %v4211, %v4221
  %v4285 = vmul.f32 %v4216, %v4221
  %v4286 = vadd.f32 %v3768, %v4222
  %v4287 = vadd.f32 %v3769, %v4223
  %v4288 = vadd.f32 %v3770, %v4224
  %v4289 = vadd.f32 %v3771, %v4225
  %v4290 = vadd.f32 %v3772, %v4226
  %v4291 = vadd.f32 %v3773, %v4227
  %v4292 = vadd.f32 %v3774, %v4228
  %v4293 = vadd.f32 %v3775, %v4229
  %v4294 = vadd.f32 %v3776, %v4230
  %v4295 = vadd.f32 %v3777, %v4231
  %v4296 = vadd.f32 %v3778, %v4232
  %v4297 = vadd.f32 %v3779, %v4233
  %v4298 = vadd.f32 %v3780, %v4234
  %v4299 = vadd.f32 %v3781, %v4235
  %v4300 = vadd.f32 %v3782, %v4236
  %v4301 = vadd.f32 %v3783, %v4237
  %v4302 = vadd.f32 %v3784, %v4238
  %v4303 = vadd.f32 %v3785, %v4239
  %v4304 = vadd.f32 %v3786, %v4240
  %v4305 = vadd.f32 %v3787, %v4241
  %v4306 = vadd.f32 %v3788, %v4242
  %v4307 = vadd.f32 %v3789, %v4243
  %v4308 = vadd.f32 %v3790, %v4244
  %v4309 = vadd.f32 %v3791, %v4245
  %v4310 = vadd.f32 %v3792, %v4246
  %v4311 = vadd.f32 %v3793, %v4247
  %v4312 = vadd.f32 %v3794, %v4248
  %v4313 = vadd.f32 %v3795, %v4249
  %v4314 = vadd.f32 %v3796, %v4250
  %v4315 = vadd.f32 %v3797, %v4251
  %v4316 = vadd.f32 %v3798, %v4252
  %v4317 = vadd.f32 %v3799, %v4253
  %v4318 = vadd.f32 %v3800, %v4254
  %v4319 = vadd.f32 %v3801, %v4255
  %v4320 = vadd.f32 %v3802, %v4256
  %v4321 = vadd.f32 %v3803, %v4257
  %v4322 = vadd.f32 %v3804, %v4258
  %v4323 = vadd.f32 %v3805, %v4259
  %v4324 = vadd.f32 %v3806, %v4260
  %v4325 = vadd.f32 %v3807, %v4261
  %v4326 = vadd.f32 %v3808, %v4262
  %v4327 = vadd.f32 %v3809, %v4263
  %v4328 = vadd.f32 %v3810, %v4264
  %v4329 = vadd.f32 %v3811, %v4265
  %v4330 = vadd.f32 %v3812, %v4266
  %v4331 = vadd.f32 %v3813, %v4267
  %v4332 = vadd.f32 %v3814, %v4268
  %v4333 = vadd.f32 %v3815, %v4269
  %v4334 = vadd.f32 %v3816, %v4270
  %v4335 = vadd.f32 %v3817, %v4271
  %v4336 = vadd.f32 %v3818, %v4272
  %v4337 = vadd.f32 %v3819, %v4273
  %v4338 = vadd.f32 %v3820, %v4274
  %v4339 = vadd.f32 %v3821, %v4275
  %v4340 = vadd.f32 %v3822, %v4276
  %v4341 = vadd.f32 %v3823, %v4277
  %v4342 = vadd.f32 %v3824, %v4278
  %v4343 = vadd.f32 %v3825, %v4279
  %v4344 = vadd.f32 %v3826, %v4280
  %v4345 = vadd.f32 %v3827, %v4281
  %v4346 = vadd.f32 %v3828, %v4282
  %v4347 = vadd.f32 %v3829, %v4283
  %v4348 = vadd.f32 %v3830, %v4284
  %v4349 = vadd.f32 %v3831, %v4285
  %v4350 = vld [vmem:[%s0 + $0xa] sm:$0x1]
  %4351 = vset.pattern.permute.xlu0 1
  %4352 = vperm.xlu0 %4351, %v3833
  %v4353 = vpop.permute.xlu0 %4352
  %4355 = vset.pattern.permute.xlu0 1
  %4356 = vperm.xlu0 %4355, %v3834
  %v4357 = vpop.permute.xlu0 %4356
  %4359 = vset.pattern.permute.xlu0 1
  %4360 = vperm.xlu0 %4359, %v3835
  %v4361 = vpop.permute.xlu0 %4360
  %4363 = vset.pattern.permute.xlu0 1
  %4364 = vperm.xlu0 %4363, %v3836
  %v4365 = vpop.permute.xlu0 %4364
  %4367 = vset.pattern.permute.xlu0 1
  %4368 = vperm.xlu0 %4367, %v3837
  %v4369 = vpop.permute.xlu0 %4368
  %4371 = vset.pattern.permute.xlu0 1
  %4372 = vperm.xlu0 %4371, %v3838
  %v4373 = vpop.permute.xlu0 %4372
  %4375 = vset.pattern.permute.xlu0 1
  %4376 = vperm.xlu0 %4375, %v3839
  %v4377 = vpop.permute.xlu0 %4376
  %4379 = vset.pattern.permute.xlu0 1
  %4380 = vperm.xlu0 %4379, %v3840
  %v4381 = vpop.permute.xlu0 %4380
  %4383 = vset.pattern.permute.xlu0 1
  %4384 = vperm.xlu0 %4383, %v3841
  %v4385 = vpop.permute.xlu0 %4384
  %4387 = vset.pattern.permute.xlu0 1
  %4388 = vperm.xlu0 %4387, %v3842
  %v4389 = vpop.permute.xlu0 %4388
  %4391 = vset.pattern.permute.xlu0 1
  %4392 = vperm.xlu0 %4391, %v3843
  %v4393 = vpop.permute.xlu0 %4392
  %4395 = vset.pattern.permute.xlu0 1
  %4396 = vperm.xlu0 %4395, %v3844
  %v4397 = vpop.permute.xlu0 %4396
  %4399 = vset.pattern.permute.xlu0 1
  %4400 = vperm.xlu0 %4399, %v3845
  %v4401 = vpop.permute.xlu0 %4400
  %4403 = vset.pattern.permute.xlu0 1
  %4404 = vperm.xlu0 %4403, %v3846
  %v4405 = vpop.permute.xlu0 %4404
  %4407 = vset.pattern.permute.xlu0 1
  %4408 = vperm.xlu0 %4407, %v3847
  %v4409 = vpop.permute.xlu0 %4408
  %4411 = vset.pattern.permute.xlu0 1
  %4412 = vperm.xlu0 %4411, %v3848
  %v4413 = vpop.permute.xlu0 %4412
  %4415 = vset.pattern.permute.xlu0 1
  %4416 = vperm.xlu0 %4415, %v3849
  %v4417 = vpop.permute.xlu0 %4416
  %4419 = vset.pattern.permute.xlu0 1
  %4420 = vperm.xlu0 %4419, %v3850
  %v4421 = vpop.permute.xlu0 %4420
  %4423 = vset.pattern.permute.xlu0 1
  %4424 = vperm.xlu0 %4423, %v3851
  %v4425 = vpop.permute.xlu0 %4424
  %4427 = vset.pattern.permute.xlu0 1
  %4428 = vperm.xlu0 %4427, %v3852
  %v4429 = vpop.permute.xlu0 %4428
  %4431 = vset.pattern.permute.xlu0 1
  %4432 = vperm.xlu0 %4431, %v3853
  %v4433 = vpop.permute.xlu0 %4432
  %4435 = vset.pattern.permute.xlu0 1
  %4436 = vperm.xlu0 %4435, %v3854
  %v4437 = vpop.permute.xlu0 %4436
  %4439 = vset.pattern.permute.xlu0 1
  %4440 = vperm.xlu0 %4439, %v3855
  %v4441 = vpop.permute.xlu0 %4440
  %4443 = vset.pattern.permute.xlu0 1
  %4444 = vperm.xlu0 %4443, %v3856
  %v4445 = vpop.permute.xlu0 %4444
  %4447 = vset.pattern.permute.xlu0 1
  %4448 = vperm.xlu0 %4447, %v3857
  %v4449 = vpop.permute.xlu0 %4448
  %4451 = vset.pattern.permute.xlu0 1
  %4452 = vperm.xlu0 %4451, %v3858
  %v4453 = vpop.permute.xlu0 %4452
  %4455 = vset.pattern.permute.xlu0 1
  %4456 = vperm.xlu0 %4455, %v3859
  %v4457 = vpop.permute.xlu0 %4456
  %4459 = vset.pattern.permute.xlu0 1
  %4460 = vperm.xlu0 %4459, %v3860
  %v4461 = vpop.permute.xlu0 %4460
  %4463 = vset.pattern.permute.xlu0 1
  %4464 = vperm.xlu0 %4463, %v3861
  %v4465 = vpop.permute.xlu0 %4464
  %4467 = vset.pattern.permute.xlu0 1
  %4468 = vperm.xlu0 %4467, %v3862
  %v4469 = vpop.permute.xlu0 %4468
  %4471 = vset.pattern.permute.xlu0 1
  %4472 = vperm.xlu0 %4471, %v3863
  %v4473 = vpop.permute.xlu0 %4472
  %4475 = vset.pattern.permute.xlu0 1
  %4476 = vperm.xlu0 %4475, %v3864
  %v4477 = vpop.permute.xlu0 %4476
  %4479 = vset.pattern.permute.xlu0 1
  %4480 = vperm.xlu0 %4479, %v3865
  %v4481 = vpop.permute.xlu0 %4480
  %4483 = vset.pattern.permute.xlu0 1
  %4484 = vperm.xlu0 %4483, %v3866
  %v4485 = vpop.permute.xlu0 %4484
  %4487 = vset.pattern.permute.xlu0 1
  %4488 = vperm.xlu0 %4487, %v3867
  %v4489 = vpop.permute.xlu0 %4488
  %4491 = vset.pattern.permute.xlu0 1
  %4492 = vperm.xlu0 %4491, %v3868
  %v4493 = vpop.permute.xlu0 %4492
  %4495 = vset.pattern.permute.xlu0 1
  %4496 = vperm.xlu0 %4495, %v3869
  %v4497 = vpop.permute.xlu0 %4496
  %4499 = vset.pattern.permute.xlu0 1
  %4500 = vperm.xlu0 %4499, %v3870
  %v4501 = vpop.permute.xlu0 %4500
  %4503 = vset.pattern.permute.xlu0 1
  %4504 = vperm.xlu0 %4503, %v3871
  %v4505 = vpop.permute.xlu0 %4504
  %4507 = vset.pattern.permute.xlu0 1
  %4508 = vperm.xlu0 %4507, %v3872
  %v4509 = vpop.permute.xlu0 %4508
  %4511 = vset.pattern.permute.xlu0 1
  %4512 = vperm.xlu0 %4511, %v3873
  %v4513 = vpop.permute.xlu0 %4512
  %4515 = vset.pattern.permute.xlu0 1
  %4516 = vperm.xlu0 %4515, %v3874
  %v4517 = vpop.permute.xlu0 %4516
  %4519 = vset.pattern.permute.xlu0 1
  %4520 = vperm.xlu0 %4519, %v3875
  %v4521 = vpop.permute.xlu0 %4520
  %4523 = vset.pattern.permute.xlu0 1
  %4524 = vperm.xlu0 %4523, %v3876
  %v4525 = vpop.permute.xlu0 %4524
  %4527 = vset.pattern.permute.xlu0 1
  %4528 = vperm.xlu0 %4527, %v3877
  %v4529 = vpop.permute.xlu0 %4528
  %4531 = vset.pattern.permute.xlu0 1
  %4532 = vperm.xlu0 %4531, %v3878
  %v4533 = vpop.permute.xlu0 %4532
  %4535 = vset.pattern.permute.xlu0 1
  %4536 = vperm.xlu0 %4535, %v3879
  %v4537 = vpop.permute.xlu0 %4536
  %4539 = vset.pattern.permute.xlu0 1
  %4540 = vperm.xlu0 %4539, %v3880
  %v4541 = vpop.permute.xlu0 %4540
  %4543 = vset.pattern.permute.xlu0 1
  %4544 = vperm.xlu0 %4543, %v3881
  %v4545 = vpop.permute.xlu0 %4544
  %4547 = vset.pattern.permute.xlu0 1
  %4548 = vperm.xlu0 %4547, %v3882
  %v4549 = vpop.permute.xlu0 %4548
  %4551 = vset.pattern.permute.xlu0 1
  %4552 = vperm.xlu0 %4551, %v3883
  %v4553 = vpop.permute.xlu0 %4552
  %4555 = vset.pattern.permute.xlu0 1
  %4556 = vperm.xlu0 %4555, %v3884
  %v4557 = vpop.permute.xlu0 %4556
  %4559 = vset.pattern.permute.xlu0 1
  %4560 = vperm.xlu0 %4559, %v3885
  %v4561 = vpop.permute.xlu0 %4560
  %4563 = vset.pattern.permute.xlu0 1
  %4564 = vperm.xlu0 %4563, %v3886
  %v4565 = vpop.permute.xlu0 %4564
  %4567 = vset.pattern.permute.xlu0 1
  %4568 = vperm.xlu0 %4567, %v3887
  %v4569 = vpop.permute.xlu0 %4568
  %4571 = vset.pattern.permute.xlu0 1
  %4572 = vperm.xlu0 %4571, %v3888
  %v4573 = vpop.permute.xlu0 %4572
  %4575 = vset.pattern.permute.xlu0 1
  %4576 = vperm.xlu0 %4575, %v3889
  %v4577 = vpop.permute.xlu0 %4576
  %4579 = vset.pattern.permute.xlu0 1
  %4580 = vperm.xlu0 %4579, %v3890
  %v4581 = vpop.permute.xlu0 %4580
  %4583 = vset.pattern.permute.xlu0 1
  %4584 = vperm.xlu0 %4583, %v3891
  %v4585 = vpop.permute.xlu0 %4584
  %4587 = vset.pattern.permute.xlu0 1
  %4588 = vperm.xlu0 %4587, %v3892
  %v4589 = vpop.permute.xlu0 %4588
  %4591 = vset.pattern.permute.xlu0 1
  %4592 = vperm.xlu0 %4591, %v3893
  %v4593 = vpop.permute.xlu0 %4592
  %4595 = vset.pattern.permute.xlu0 1
  %4596 = vperm.xlu0 %4595, %v3894
  %v4597 = vpop.permute.xlu0 %4596
  %4599 = vset.pattern.permute.xlu0 1
  %4600 = vperm.xlu0 %4599, %v3895
  %v4601 = vpop.permute.xlu0 %4600
  %4603 = vset.pattern.permute.xlu0 1
  %4604 = vperm.xlu0 %4603, %v3896
  %v4605 = vpop.permute.xlu0 %4604
  %v4607 = vlaneseq
  %v4608 = vshrl.u32 %v4607, 7
  %v4609 = vsub.s32 0, %v4608
  %v4610 = vrot.slane %v4350, %v4609
  %v4611 = vmul.f32 %v4353, %v4610
  %v4612 = vmul.f32 %v4357, %v4610
  %v4613 = vmul.f32 %v4361, %v4610
  %v4614 = vmul.f32 %v4365, %v4610
  %v4615 = vmul.f32 %v4369, %v4610
  %v4616 = vmul.f32 %v4373, %v4610
  %v4617 = vmul.f32 %v4377, %v4610
  %v4618 = vmul.f32 %v4381, %v4610
  %v4619 = vmul.f32 %v4385, %v4610
  %v4620 = vmul.f32 %v4389, %v4610
  %v4621 = vmul.f32 %v4393, %v4610
  %v4622 = vmul.f32 %v4397, %v4610
  %v4623 = vmul.f32 %v4401, %v4610
  %v4624 = vmul.f32 %v4405, %v4610
  %v4625 = vmul.f32 %v4409, %v4610
  %v4626 = vmul.f32 %v4413, %v4610
  %v4627 = vmul.f32 %v4417, %v4610
  %v4628 = vmul.f32 %v4421, %v4610
  %v4629 = vmul.f32 %v4425, %v4610
  %v4630 = vmul.f32 %v4429, %v4610
  %v4631 = vmul.f32 %v4433, %v4610
  %v4632 = vmul.f32 %v4437, %v4610
  %v4633 = vmul.f32 %v4441, %v4610
  %v4634 = vmul.f32 %v4445, %v4610
  %v4635 = vmul.f32 %v4449, %v4610
  %v4636 = vmul.f32 %v4453, %v4610
  %v4637 = vmul.f32 %v4457, %v4610
  %v4638 = vmul.f32 %v4461, %v4610
  %v4639 = vmul.f32 %v4465, %v4610
  %v4640 = vmul.f32 %v4469, %v4610
  %v4641 = vmul.f32 %v4473, %v4610
  %v4642 = vmul.f32 %v4477, %v4610
  %v4643 = vmul.f32 %v4481, %v4610
  %v4644 = vmul.f32 %v4485, %v4610
  %v4645 = vmul.f32 %v4489, %v4610
  %v4646 = vmul.f32 %v4493, %v4610
  %v4647 = vmul.f32 %v4497, %v4610
  %v4648 = vmul.f32 %v4501, %v4610
  %v4649 = vmul.f32 %v4505, %v4610
  %v4650 = vmul.f32 %v4509, %v4610
  %v4651 = vmul.f32 %v4513, %v4610
  %v4652 = vmul.f32 %v4517, %v4610
  %v4653 = vmul.f32 %v4521, %v4610
  %v4654 = vmul.f32 %v4525, %v4610
  %v4655 = vmul.f32 %v4529, %v4610
  %v4656 = vmul.f32 %v4533, %v4610
  %v4657 = vmul.f32 %v4537, %v4610
  %v4658 = vmul.f32 %v4541, %v4610
  %v4659 = vmul.f32 %v4545, %v4610
  %v4660 = vmul.f32 %v4549, %v4610
  %v4661 = vmul.f32 %v4553, %v4610
  %v4662 = vmul.f32 %v4557, %v4610
  %v4663 = vmul.f32 %v4561, %v4610
  %v4664 = vmul.f32 %v4565, %v4610
  %v4665 = vmul.f32 %v4569, %v4610
  %v4666 = vmul.f32 %v4573, %v4610
  %v4667 = vmul.f32 %v4577, %v4610
  %v4668 = vmul.f32 %v4581, %v4610
  %v4669 = vmul.f32 %v4585, %v4610
  %v4670 = vmul.f32 %v4589, %v4610
  %v4671 = vmul.f32 %v4593, %v4610
  %v4672 = vmul.f32 %v4597, %v4610
  %v4673 = vmul.f32 %v4601, %v4610
  %v4674 = vmul.f32 %v4605, %v4610
  %v4675 = vadd.f32 %v4286, %v4611
  %v4676 = vadd.f32 %v4287, %v4612
  %v4677 = vadd.f32 %v4288, %v4613
  %v4678 = vadd.f32 %v4289, %v4614
  %v4679 = vadd.f32 %v4290, %v4615
  %v4680 = vadd.f32 %v4291, %v4616
  %v4681 = vadd.f32 %v4292, %v4617
  %v4682 = vadd.f32 %v4293, %v4618
  %v4683 = vadd.f32 %v4294, %v4619
  %v4684 = vadd.f32 %v4295, %v4620
  %v4685 = vadd.f32 %v4296, %v4621
  %v4686 = vadd.f32 %v4297, %v4622
  %v4687 = vadd.f32 %v4298, %v4623
  %v4688 = vadd.f32 %v4299, %v4624
  %v4689 = vadd.f32 %v4300, %v4625
  %v4690 = vadd.f32 %v4301, %v4626
  %v4691 = vadd.f32 %v4302, %v4627
  %v4692 = vadd.f32 %v4303, %v4628
  %v4693 = vadd.f32 %v4304, %v4629
  %v4694 = vadd.f32 %v4305, %v4630
  %v4695 = vadd.f32 %v4306, %v4631
  %v4696 = vadd.f32 %v4307, %v4632
  %v4697 = vadd.f32 %v4308, %v4633
  %v4698 = vadd.f32 %v4309, %v4634
  %v4699 = vadd.f32 %v4310, %v4635
  %v4700 = vadd.f32 %v4311, %v4636
  %v4701 = vadd.f32 %v4312, %v4637
  %v4702 = vadd.f32 %v4313, %v4638
  %v4703 = vadd.f32 %v4314, %v4639
  %v4704 = vadd.f32 %v4315, %v4640
  %v4705 = vadd.f32 %v4316, %v4641
  %v4706 = vadd.f32 %v4317, %v4642
  %v4707 = vadd.f32 %v4318, %v4643
  %v4708 = vadd.f32 %v4319, %v4644
  %v4709 = vadd.f32 %v4320, %v4645
  %v4710 = vadd.f32 %v4321, %v4646
  %v4711 = vadd.f32 %v4322, %v4647
  %v4712 = vadd.f32 %v4323, %v4648
  %v4713 = vadd.f32 %v4324, %v4649
  %v4714 = vadd.f32 %v4325, %v4650
  %v4715 = vadd.f32 %v4326, %v4651
  %v4716 = vadd.f32 %v4327, %v4652
  %v4717 = vadd.f32 %v4328, %v4653
  %v4718 = vadd.f32 %v4329, %v4654
  %v4719 = vadd.f32 %v4330, %v4655
  %v4720 = vadd.f32 %v4331, %v4656
  %v4721 = vadd.f32 %v4332, %v4657
  %v4722 = vadd.f32 %v4333, %v4658
  %v4723 = vadd.f32 %v4334, %v4659
  %v4724 = vadd.f32 %v4335, %v4660
  %v4725 = vadd.f32 %v4336, %v4661
  %v4726 = vadd.f32 %v4337, %v4662
  %v4727 = vadd.f32 %v4338, %v4663
  %v4728 = vadd.f32 %v4339, %v4664
  %v4729 = vadd.f32 %v4340, %v4665
  %v4730 = vadd.f32 %v4341, %v4666
  %v4731 = vadd.f32 %v4342, %v4667
  %v4732 = vadd.f32 %v4343, %v4668
  %v4733 = vadd.f32 %v4344, %v4669
  %v4734 = vadd.f32 %v4345, %v4670
  %v4735 = vadd.f32 %v4346, %v4671
  %v4736 = vadd.f32 %v4347, %v4672
  %v4737 = vadd.f32 %v4348, %v4673
  %v4738 = vadd.f32 %v4349, %v4674
  %v4739 = vld [vmem:[%s0 + $0xb] sm:$0x1]
  %4740 = vset.pattern.permute.xlu0 2
  %4741 = vperm.xlu0 %4740, %v3833
  %v4742 = vpop.permute.xlu0 %4741
  %4744 = vset.pattern.permute.xlu0 2
  %4745 = vperm.xlu0 %4744, %v3834
  %v4746 = vpop.permute.xlu0 %4745
  %4748 = vset.pattern.permute.xlu0 2
  %4749 = vperm.xlu0 %4748, %v3835
  %v4750 = vpop.permute.xlu0 %4749
  %4752 = vset.pattern.permute.xlu0 2
  %4753 = vperm.xlu0 %4752, %v3836
  %v4754 = vpop.permute.xlu0 %4753
  %4756 = vset.pattern.permute.xlu0 2
  %4757 = vperm.xlu0 %4756, %v3837
  %v4758 = vpop.permute.xlu0 %4757
  %4760 = vset.pattern.permute.xlu0 2
  %4761 = vperm.xlu0 %4760, %v3838
  %v4762 = vpop.permute.xlu0 %4761
  %4764 = vset.pattern.permute.xlu0 2
  %4765 = vperm.xlu0 %4764, %v3839
  %v4766 = vpop.permute.xlu0 %4765
  %4768 = vset.pattern.permute.xlu0 2
  %4769 = vperm.xlu0 %4768, %v3840
  %v4770 = vpop.permute.xlu0 %4769
  %4772 = vset.pattern.permute.xlu0 2
  %4773 = vperm.xlu0 %4772, %v3841
  %v4774 = vpop.permute.xlu0 %4773
  %4776 = vset.pattern.permute.xlu0 2
  %4777 = vperm.xlu0 %4776, %v3842
  %v4778 = vpop.permute.xlu0 %4777
  %4780 = vset.pattern.permute.xlu0 2
  %4781 = vperm.xlu0 %4780, %v3843
  %v4782 = vpop.permute.xlu0 %4781
  %4784 = vset.pattern.permute.xlu0 2
  %4785 = vperm.xlu0 %4784, %v3844
  %v4786 = vpop.permute.xlu0 %4785
  %4788 = vset.pattern.permute.xlu0 2
  %4789 = vperm.xlu0 %4788, %v3845
  %v4790 = vpop.permute.xlu0 %4789
  %4792 = vset.pattern.permute.xlu0 2
  %4793 = vperm.xlu0 %4792, %v3846
  %v4794 = vpop.permute.xlu0 %4793
  %4796 = vset.pattern.permute.xlu0 2
  %4797 = vperm.xlu0 %4796, %v3847
  %v4798 = vpop.permute.xlu0 %4797
  %4800 = vset.pattern.permute.xlu0 2
  %4801 = vperm.xlu0 %4800, %v3848
  %v4802 = vpop.permute.xlu0 %4801
  %4804 = vset.pattern.permute.xlu0 2
  %4805 = vperm.xlu0 %4804, %v3849
  %v4806 = vpop.permute.xlu0 %4805
  %4808 = vset.pattern.permute.xlu0 2
  %4809 = vperm.xlu0 %4808, %v3850
  %v4810 = vpop.permute.xlu0 %4809
  %4812 = vset.pattern.permute.xlu0 2
  %4813 = vperm.xlu0 %4812, %v3851
  %v4814 = vpop.permute.xlu0 %4813
  %4816 = vset.pattern.permute.xlu0 2
  %4817 = vperm.xlu0 %4816, %v3852
  %v4818 = vpop.permute.xlu0 %4817
  %4820 = vset.pattern.permute.xlu0 2
  %4821 = vperm.xlu0 %4820, %v3853
  %v4822 = vpop.permute.xlu0 %4821
  %4824 = vset.pattern.permute.xlu0 2
  %4825 = vperm.xlu0 %4824, %v3854
  %v4826 = vpop.permute.xlu0 %4825
  %4828 = vset.pattern.permute.xlu0 2
  %4829 = vperm.xlu0 %4828, %v3855
  %v4830 = vpop.permute.xlu0 %4829
  %4832 = vset.pattern.permute.xlu0 2
  %4833 = vperm.xlu0 %4832, %v3856
  %v4834 = vpop.permute.xlu0 %4833
  %4836 = vset.pattern.permute.xlu0 2
  %4837 = vperm.xlu0 %4836, %v3857
  %v4838 = vpop.permute.xlu0 %4837
  %4840 = vset.pattern.permute.xlu0 2
  %4841 = vperm.xlu0 %4840, %v3858
  %v4842 = vpop.permute.xlu0 %4841
  %4844 = vset.pattern.permute.xlu0 2
  %4845 = vperm.xlu0 %4844, %v3859
  %v4846 = vpop.permute.xlu0 %4845
  %4848 = vset.pattern.permute.xlu0 2
  %4849 = vperm.xlu0 %4848, %v3860
  %v4850 = vpop.permute.xlu0 %4849
  %4852 = vset.pattern.permute.xlu0 2
  %4853 = vperm.xlu0 %4852, %v3861
  %v4854 = vpop.permute.xlu0 %4853
  %4856 = vset.pattern.permute.xlu0 2
  %4857 = vperm.xlu0 %4856, %v3862
  %v4858 = vpop.permute.xlu0 %4857
  %4860 = vset.pattern.permute.xlu0 2
  %4861 = vperm.xlu0 %4860, %v3863
  %v4862 = vpop.permute.xlu0 %4861
  %4864 = vset.pattern.permute.xlu0 2
  %4865 = vperm.xlu0 %4864, %v3864
  %v4866 = vpop.permute.xlu0 %4865
  %4868 = vset.pattern.permute.xlu0 2
  %4869 = vperm.xlu0 %4868, %v3865
  %v4870 = vpop.permute.xlu0 %4869
  %4872 = vset.pattern.permute.xlu0 2
  %4873 = vperm.xlu0 %4872, %v3866
  %v4874 = vpop.permute.xlu0 %4873
  %4876 = vset.pattern.permute.xlu0 2
  %4877 = vperm.xlu0 %4876, %v3867
  %v4878 = vpop.permute.xlu0 %4877
  %4880 = vset.pattern.permute.xlu0 2
  %4881 = vperm.xlu0 %4880, %v3868
  %v4882 = vpop.permute.xlu0 %4881
  %4884 = vset.pattern.permute.xlu0 2
  %4885 = vperm.xlu0 %4884, %v3869
  %v4886 = vpop.permute.xlu0 %4885
  %4888 = vset.pattern.permute.xlu0 2
  %4889 = vperm.xlu0 %4888, %v3870
  %v4890 = vpop.permute.xlu0 %4889
  %4892 = vset.pattern.permute.xlu0 2
  %4893 = vperm.xlu0 %4892, %v3871
  %v4894 = vpop.permute.xlu0 %4893
  %4896 = vset.pattern.permute.xlu0 2
  %4897 = vperm.xlu0 %4896, %v3872
  %v4898 = vpop.permute.xlu0 %4897
  %4900 = vset.pattern.permute.xlu0 2
  %4901 = vperm.xlu0 %4900, %v3873
  %v4902 = vpop.permute.xlu0 %4901
  %4904 = vset.pattern.permute.xlu0 2
  %4905 = vperm.xlu0 %4904, %v3874
  %v4906 = vpop.permute.xlu0 %4905
  %4908 = vset.pattern.permute.xlu0 2
  %4909 = vperm.xlu0 %4908, %v3875
  %v4910 = vpop.permute.xlu0 %4909
  %4912 = vset.pattern.permute.xlu0 2
  %4913 = vperm.xlu0 %4912, %v3876
  %v4914 = vpop.permute.xlu0 %4913
  %4916 = vset.pattern.permute.xlu0 2
  %4917 = vperm.xlu0 %4916, %v3877
  %v4918 = vpop.permute.xlu0 %4917
  %4920 = vset.pattern.permute.xlu0 2
  %4921 = vperm.xlu0 %4920, %v3878
  %v4922 = vpop.permute.xlu0 %4921
  %4924 = vset.pattern.permute.xlu0 2
  %4925 = vperm.xlu0 %4924, %v3879
  %v4926 = vpop.permute.xlu0 %4925
  %4928 = vset.pattern.permute.xlu0 2
  %4929 = vperm.xlu0 %4928, %v3880
  %v4930 = vpop.permute.xlu0 %4929
  %4932 = vset.pattern.permute.xlu0 2
  %4933 = vperm.xlu0 %4932, %v3881
  %v4934 = vpop.permute.xlu0 %4933
  %4936 = vset.pattern.permute.xlu0 2
  %4937 = vperm.xlu0 %4936, %v3882
  %v4938 = vpop.permute.xlu0 %4937
  %4940 = vset.pattern.permute.xlu0 2
  %4941 = vperm.xlu0 %4940, %v3883
  %v4942 = vpop.permute.xlu0 %4941
  %4944 = vset.pattern.permute.xlu0 2
  %4945 = vperm.xlu0 %4944, %v3884
  %v4946 = vpop.permute.xlu0 %4945
  %4948 = vset.pattern.permute.xlu0 2
  %4949 = vperm.xlu0 %4948, %v3885
  %v4950 = vpop.permute.xlu0 %4949
  %4952 = vset.pattern.permute.xlu0 2
  %4953 = vperm.xlu0 %4952, %v3886
  %v4954 = vpop.permute.xlu0 %4953
  %4956 = vset.pattern.permute.xlu0 2
  %4957 = vperm.xlu0 %4956, %v3887
  %v4958 = vpop.permute.xlu0 %4957
  %4960 = vset.pattern.permute.xlu0 2
  %4961 = vperm.xlu0 %4960, %v3888
  %v4962 = vpop.permute.xlu0 %4961
  %4964 = vset.pattern.permute.xlu0 2
  %4965 = vperm.xlu0 %4964, %v3889
  %v4966 = vpop.permute.xlu0 %4965
  %4968 = vset.pattern.permute.xlu0 2
  %4969 = vperm.xlu0 %4968, %v3890
  %v4970 = vpop.permute.xlu0 %4969
  %4972 = vset.pattern.permute.xlu0 2
  %4973 = vperm.xlu0 %4972, %v3891
  %v4974 = vpop.permute.xlu0 %4973
  %4976 = vset.pattern.permute.xlu0 2
  %4977 = vperm.xlu0 %4976, %v3892
  %v4978 = vpop.permute.xlu0 %4977
  %4980 = vset.pattern.permute.xlu0 2
  %4981 = vperm.xlu0 %4980, %v3893
  %v4982 = vpop.permute.xlu0 %4981
  %4984 = vset.pattern.permute.xlu0 2
  %4985 = vperm.xlu0 %4984, %v3894
  %v4986 = vpop.permute.xlu0 %4985
  %4988 = vset.pattern.permute.xlu0 2
  %4989 = vperm.xlu0 %4988, %v3895
  %v4990 = vpop.permute.xlu0 %4989
  %4992 = vset.pattern.permute.xlu0 2
  %4993 = vperm.xlu0 %4992, %v3896
  %v4994 = vpop.permute.xlu0 %4993
  %v4996 = vlaneseq
  %v4997 = vshrl.u32 %v4996, 7
  %v4998 = vsub.s32 0, %v4997
  %v4999 = vrot.slane %v4739, %v4998
  %v5000 = vmul.f32 %v4742, %v4999
  %v5001 = vmul.f32 %v4746, %v4999
  %v5002 = vmul.f32 %v4750, %v4999
  %v5003 = vmul.f32 %v4754, %v4999
  %v5004 = vmul.f32 %v4758, %v4999
  %v5005 = vmul.f32 %v4762, %v4999
  %v5006 = vmul.f32 %v4766, %v4999
  %v5007 = vmul.f32 %v4770, %v4999
  %v5008 = vmul.f32 %v4774, %v4999
  %v5009 = vmul.f32 %v4778, %v4999
  %v5010 = vmul.f32 %v4782, %v4999
  %v5011 = vmul.f32 %v4786, %v4999
  %v5012 = vmul.f32 %v4790, %v4999
  %v5013 = vmul.f32 %v4794, %v4999
  %v5014 = vmul.f32 %v4798, %v4999
  %v5015 = vmul.f32 %v4802, %v4999
  %v5016 = vmul.f32 %v4806, %v4999
  %v5017 = vmul.f32 %v4810, %v4999
  %v5018 = vmul.f32 %v4814, %v4999
  %v5019 = vmul.f32 %v4818, %v4999
  %v5020 = vmul.f32 %v4822, %v4999
  %v5021 = vmul.f32 %v4826, %v4999
  %v5022 = vmul.f32 %v4830, %v4999
  %v5023 = vmul.f32 %v4834, %v4999
  %v5024 = vmul.f32 %v4838, %v4999
  %v5025 = vmul.f32 %v4842, %v4999
  %v5026 = vmul.f32 %v4846, %v4999
  %v5027 = vmul.f32 %v4850, %v4999
  %v5028 = vmul.f32 %v4854, %v4999
  %v5029 = vmul.f32 %v4858, %v4999
  %v5030 = vmul.f32 %v4862, %v4999
  %v5031 = vmul.f32 %v4866, %v4999
  %v5032 = vmul.f32 %v4870, %v4999
  %v5033 = vmul.f32 %v4874, %v4999
  %v5034 = vmul.f32 %v4878, %v4999
  %v5035 = vmul.f32 %v4882, %v4999
  %v5036 = vmul.f32 %v4886, %v4999
  %v5037 = vmul.f32 %v4890, %v4999
  %v5038 = vmul.f32 %v4894, %v4999
  %v5039 = vmul.f32 %v4898, %v4999
  %v5040 = vmul.f32 %v4902, %v4999
  %v5041 = vmul.f32 %v4906, %v4999
  %v5042 = vmul.f32 %v4910, %v4999
  %v5043 = vmul.f32 %v4914, %v4999
  %v5044 = vmul.f32 %v4918, %v4999
  %v5045 = vmul.f32 %v4922, %v4999
  %v5046 = vmul.f32 %v4926, %v4999
  %v5047 = vmul.f32 %v4930, %v4999
  %v5048 = vmul.f32 %v4934, %v4999
  %v5049 = vmul.f32 %v4938, %v4999
  %v5050 = vmul.f32 %v4942, %v4999
  %v5051 = vmul.f32 %v4946, %v4999
  %v5052 = vmul.f32 %v4950, %v4999
  %v5053 = vmul.f32 %v4954, %v4999
  %v5054 = vmul.f32 %v4958, %v4999
  %v5055 = vmul.f32 %v4962, %v4999
  %v5056 = vmul.f32 %v4966, %v4999
  %v5057 = vmul.f32 %v4970, %v4999
  %v5058 = vmul.f32 %v4974, %v4999
  %v5059 = vmul.f32 %v4978, %v4999
  %v5060 = vmul.f32 %v4982, %v4999
  %v5061 = vmul.f32 %v4986, %v4999
  %v5062 = vmul.f32 %v4990, %v4999
  %v5063 = vmul.f32 %v4994, %v4999
  %v5064 = vadd.f32 %v4675, %v5000
  %v5065 = vadd.f32 %v4676, %v5001
  %v5066 = vadd.f32 %v4677, %v5002
  %v5067 = vadd.f32 %v4678, %v5003
  %v5068 = vadd.f32 %v4679, %v5004
  %v5069 = vadd.f32 %v4680, %v5005
  %v5070 = vadd.f32 %v4681, %v5006
  %v5071 = vadd.f32 %v4682, %v5007
  %v5072 = vadd.f32 %v4683, %v5008
  %v5073 = vadd.f32 %v4684, %v5009
  %v5074 = vadd.f32 %v4685, %v5010
  %v5075 = vadd.f32 %v4686, %v5011
  %v5076 = vadd.f32 %v4687, %v5012
  %v5077 = vadd.f32 %v4688, %v5013
  %v5078 = vadd.f32 %v4689, %v5014
  %v5079 = vadd.f32 %v4690, %v5015
  %v5080 = vadd.f32 %v4691, %v5016
  %v5081 = vadd.f32 %v4692, %v5017
  %v5082 = vadd.f32 %v4693, %v5018
  %v5083 = vadd.f32 %v4694, %v5019
  %v5084 = vadd.f32 %v4695, %v5020
  %v5085 = vadd.f32 %v4696, %v5021
  %v5086 = vadd.f32 %v4697, %v5022
  %v5087 = vadd.f32 %v4698, %v5023
  %v5088 = vadd.f32 %v4699, %v5024
  %v5089 = vadd.f32 %v4700, %v5025
  %v5090 = vadd.f32 %v4701, %v5026
  %v5091 = vadd.f32 %v4702, %v5027
  %v5092 = vadd.f32 %v4703, %v5028
  %v5093 = vadd.f32 %v4704, %v5029
  %v5094 = vadd.f32 %v4705, %v5030
  %v5095 = vadd.f32 %v4706, %v5031
  %v5096 = vadd.f32 %v4707, %v5032
  %v5097 = vadd.f32 %v4708, %v5033
  %v5098 = vadd.f32 %v4709, %v5034
  %v5099 = vadd.f32 %v4710, %v5035
  %v5100 = vadd.f32 %v4711, %v5036
  %v5101 = vadd.f32 %v4712, %v5037
  %v5102 = vadd.f32 %v4713, %v5038
  %v5103 = vadd.f32 %v4714, %v5039
  %v5104 = vadd.f32 %v4715, %v5040
  %v5105 = vadd.f32 %v4716, %v5041
  %v5106 = vadd.f32 %v4717, %v5042
  %v5107 = vadd.f32 %v4718, %v5043
  %v5108 = vadd.f32 %v4719, %v5044
  %v5109 = vadd.f32 %v4720, %v5045
  %v5110 = vadd.f32 %v4721, %v5046
  %v5111 = vadd.f32 %v4722, %v5047
  %v5112 = vadd.f32 %v4723, %v5048
  %v5113 = vadd.f32 %v4724, %v5049
  %v5114 = vadd.f32 %v4725, %v5050
  %v5115 = vadd.f32 %v4726, %v5051
  %v5116 = vadd.f32 %v4727, %v5052
  %v5117 = vadd.f32 %v4728, %v5053
  %v5118 = vadd.f32 %v4729, %v5054
  %v5119 = vadd.f32 %v4730, %v5055
  %v5120 = vadd.f32 %v4731, %v5056
  %v5121 = vadd.f32 %v4732, %v5057
  %v5122 = vadd.f32 %v4733, %v5058
  %v5123 = vadd.f32 %v4734, %v5059
  %v5124 = vadd.f32 %v4735, %v5060
  %v5125 = vadd.f32 %v4736, %v5061
  %v5126 = vadd.f32 %v4737, %v5062
  %v5127 = vadd.f32 %v4738, %v5063
  %v5128 = vld [vmem:[%s3832 + $0x1] sm:$0xff]
  %v5129 = vld [vmem:[%s3832 + $0x9] sm:$0xff]
  %v5130 = vld [vmem:[%s3832 + $0x19] sm:$0xff]
  %v5131 = vld [vmem:[%s3832 + $0x21] sm:$0xff]
  %v5132 = vld [vmem:[%s3832 + $0x31] sm:$0xff]
  %v5133 = vld [vmem:[%s3832 + $0x39] sm:$0xff]
  %v5134 = vld [vmem:[%s3832 + $0x49] sm:$0xff]
  %v5135 = vld [vmem:[%s3832 + $0x51] sm:$0xff]
  %v5136 = vld [vmem:[%s3832 + $0x61] sm:$0xff]
  %v5137 = vld [vmem:[%s3832 + $0x69] sm:$0xff]
  %v5138 = vld [vmem:[%s3832 + $0x79] sm:$0xff]
  %v5139 = vld [vmem:[%s3832 + $0x81] sm:$0xff]
  %v5140 = vld [vmem:[%s3832 + $0x91] sm:$0xff]
  %v5141 = vld [vmem:[%s3832 + $0x99] sm:$0xff]
  %v5142 = vld [vmem:[%s3832 + $0xa9] sm:$0xff]
  %v5143 = vld [vmem:[%s3832 + $0xb1] sm:$0xff]
  %v5144 = vld [vmem:[%s3832 + $0xc1] sm:$0xff]
  %v5145 = vld [vmem:[%s3832 + $0xc9] sm:$0xff]
  %v5146 = vld [vmem:[%s3832 + $0xd9] sm:$0xff]
  %v5147 = vld [vmem:[%s3832 + $0xe1] sm:$0xff]
  %v5148 = vld [vmem:[%s3832 + $0xf1] sm:$0xff]
  %v5149 = vld [vmem:[%s3832 + $0xf9] sm:$0xff]
  %v5150 = vld [vmem:[%s3832 + $0x109] sm:$0xff]
  %v5151 = vld [vmem:[%s3832 + $0x111] sm:$0xff]
  %v5152 = vld [vmem:[%s3832 + $0x121] sm:$0xff]
  %v5153 = vld [vmem:[%s3832 + $0x129] sm:$0xff]
  %v5154 = vld [vmem:[%s3832 + $0x139] sm:$0xff]
  %v5155 = vld [vmem:[%s3832 + $0x141] sm:$0xff]
  %v5156 = vld [vmem:[%s3832 + $0x151] sm:$0xff]
  %v5157 = vld [vmem:[%s3832 + $0x159] sm:$0xff]
  %v5158 = vld [vmem:[%s3832 + $0x169] sm:$0xff]
  %v5159 = vld [vmem:[%s3832 + $0x171] sm:$0xff]
  %v5160 = vld [vmem:[%s3832 + $0x1b1] sm:$0xff]
  %v5161 = vld [vmem:[%s3832 + $0x1b9] sm:$0xff]
  %v5162 = vld [vmem:[%s3832 + $0x1c9] sm:$0xff]
  %v5163 = vld [vmem:[%s3832 + $0x1d1] sm:$0xff]
  %v5164 = vld [vmem:[%s3832 + $0x1e1] sm:$0xff]
  %v5165 = vld [vmem:[%s3832 + $0x1e9] sm:$0xff]
  %v5166 = vld [vmem:[%s3832 + $0x1f9] sm:$0xff]
  %v5167 = vld [vmem:[%s3832 + $0x201] sm:$0xff]
  %v5168 = vld [vmem:[%s3832 + $0x211] sm:$0xff]
  %v5169 = vld [vmem:[%s3832 + $0x219] sm:$0xff]
  %v5170 = vld [vmem:[%s3832 + $0x229] sm:$0xff]
  %v5171 = vld [vmem:[%s3832 + $0x231] sm:$0xff]
  %v5172 = vld [vmem:[%s3832 + $0x241] sm:$0xff]
  %v5173 = vld [vmem:[%s3832 + $0x249] sm:$0xff]
  %v5174 = vld [vmem:[%s3832 + $0x259] sm:$0xff]
  %v5175 = vld [vmem:[%s3832 + $0x261] sm:$0xff]
  %v5176 = vld [vmem:[%s3832 + $0x271] sm:$0xff]
  %v5177 = vld [vmem:[%s3832 + $0x279] sm:$0xff]
  %v5178 = vld [vmem:[%s3832 + $0x289] sm:$0xff]
  %v5179 = vld [vmem:[%s3832 + $0x291] sm:$0xff]
  %v5180 = vld [vmem:[%s3832 + $0x2a1] sm:$0xff]
  %v5181 = vld [vmem:[%s3832 + $0x2a9] sm:$0xff]
  %v5182 = vld [vmem:[%s3832 + $0x2b9] sm:$0xff]
  %v5183 = vld [vmem:[%s3832 + $0x2c1] sm:$0xff]
  %v5184 = vld [vmem:[%s3832 + $0x2d1] sm:$0xff]
  %v5185 = vld [vmem:[%s3832 + $0x2d9] sm:$0xff]
  %v5186 = vld [vmem:[%s3832 + $0x2e9] sm:$0xff]
  %v5187 = vld [vmem:[%s3832 + $0x2f1] sm:$0xff]
  %v5188 = vld [vmem:[%s3832 + $0x301] sm:$0xff]
  %v5189 = vld [vmem:[%s3832 + $0x309] sm:$0xff]
  %v5190 = vld [vmem:[%s3832 + $0x319] sm:$0xff]
  %v5191 = vld [vmem:[%s3832 + $0x321] sm:$0xff]
  %v5192 = vld [vmem:[%s0 + $0xc] sm:$0x1]
  %5194 = vset.pattern.permute.xlu0 0
  %5195 = vperm.xlu0 %5194, %v5128
  %v5196 = vpop.permute.xlu0 %5195
  %5199 = vset.pattern.permute.xlu0 0
  %5200 = vperm.xlu0 %5199, %v5129
  %v5201 = vpop.permute.xlu0 %5200
  %5204 = vset.pattern.permute.xlu0 0
  %5205 = vperm.xlu0 %5204, %v5130
  %v5206 = vpop.permute.xlu0 %5205
  %5209 = vset.pattern.permute.xlu0 0
  %5210 = vperm.xlu0 %5209, %v5131
  %v5211 = vpop.permute.xlu0 %5210
  %5214 = vset.pattern.permute.xlu0 0
  %5215 = vperm.xlu0 %5214, %v5132
  %v5216 = vpop.permute.xlu0 %5215
  %5219 = vset.pattern.permute.xlu0 0
  %5220 = vperm.xlu0 %5219, %v5133
  %v5221 = vpop.permute.xlu0 %5220
  %5224 = vset.pattern.permute.xlu0 0
  %5225 = vperm.xlu0 %5224, %v5134
  %v5226 = vpop.permute.xlu0 %5225
  %5229 = vset.pattern.permute.xlu0 0
  %5230 = vperm.xlu0 %5229, %v5135
  %v5231 = vpop.permute.xlu0 %5230
  %5234 = vset.pattern.permute.xlu0 0
  %5235 = vperm.xlu0 %5234, %v5136
  %v5236 = vpop.permute.xlu0 %5235
  %5239 = vset.pattern.permute.xlu0 0
  %5240 = vperm.xlu0 %5239, %v5137
  %v5241 = vpop.permute.xlu0 %5240
  %5244 = vset.pattern.permute.xlu0 0
  %5245 = vperm.xlu0 %5244, %v5138
  %v5246 = vpop.permute.xlu0 %5245
  %5249 = vset.pattern.permute.xlu0 0
  %5250 = vperm.xlu0 %5249, %v5139
  %v5251 = vpop.permute.xlu0 %5250
  %5254 = vset.pattern.permute.xlu0 0
  %5255 = vperm.xlu0 %5254, %v5140
  %v5256 = vpop.permute.xlu0 %5255
  %5259 = vset.pattern.permute.xlu0 0
  %5260 = vperm.xlu0 %5259, %v5141
  %v5261 = vpop.permute.xlu0 %5260
  %5264 = vset.pattern.permute.xlu0 0
  %5265 = vperm.xlu0 %5264, %v5142
  %v5266 = vpop.permute.xlu0 %5265
  %5269 = vset.pattern.permute.xlu0 0
  %5270 = vperm.xlu0 %5269, %v5143
  %v5271 = vpop.permute.xlu0 %5270
  %5274 = vset.pattern.permute.xlu0 0
  %5275 = vperm.xlu0 %5274, %v5144
  %v5276 = vpop.permute.xlu0 %5275
  %5279 = vset.pattern.permute.xlu0 0
  %5280 = vperm.xlu0 %5279, %v5145
  %v5281 = vpop.permute.xlu0 %5280
  %5284 = vset.pattern.permute.xlu0 0
  %5285 = vperm.xlu0 %5284, %v5146
  %v5286 = vpop.permute.xlu0 %5285
  %5289 = vset.pattern.permute.xlu0 0
  %5290 = vperm.xlu0 %5289, %v5147
  %v5291 = vpop.permute.xlu0 %5290
  %5294 = vset.pattern.permute.xlu0 0
  %5295 = vperm.xlu0 %5294, %v5148
  %v5296 = vpop.permute.xlu0 %5295
  %5299 = vset.pattern.permute.xlu0 0
  %5300 = vperm.xlu0 %5299, %v5149
  %v5301 = vpop.permute.xlu0 %5300
  %5304 = vset.pattern.permute.xlu0 0
  %5305 = vperm.xlu0 %5304, %v5150
  %v5306 = vpop.permute.xlu0 %5305
  %5309 = vset.pattern.permute.xlu0 0
  %5310 = vperm.xlu0 %5309, %v5151
  %v5311 = vpop.permute.xlu0 %5310
  %5314 = vset.pattern.permute.xlu0 0
  %5315 = vperm.xlu0 %5314, %v5152
  %v5316 = vpop.permute.xlu0 %5315
  %5319 = vset.pattern.permute.xlu0 0
  %5320 = vperm.xlu0 %5319, %v5153
  %v5321 = vpop.permute.xlu0 %5320
  %5324 = vset.pattern.permute.xlu0 0
  %5325 = vperm.xlu0 %5324, %v5154
  %v5326 = vpop.permute.xlu0 %5325
  %5329 = vset.pattern.permute.xlu0 0
  %5330 = vperm.xlu0 %5329, %v5155
  %v5331 = vpop.permute.xlu0 %5330
  %5334 = vset.pattern.permute.xlu0 0
  %5335 = vperm.xlu0 %5334, %v5156
  %v5336 = vpop.permute.xlu0 %5335
  %5339 = vset.pattern.permute.xlu0 0
  %5340 = vperm.xlu0 %5339, %v5157
  %v5341 = vpop.permute.xlu0 %5340
  %5344 = vset.pattern.permute.xlu0 0
  %5345 = vperm.xlu0 %5344, %v5158
  %v5346 = vpop.permute.xlu0 %5345
  %5349 = vset.pattern.permute.xlu0 0
  %5350 = vperm.xlu0 %5349, %v5159
  %v5351 = vpop.permute.xlu0 %5350
  %5354 = vset.pattern.permute.xlu0 0
  %5355 = vperm.xlu0 %5354, %v5160
  %v5356 = vpop.permute.xlu0 %5355
  %5359 = vset.pattern.permute.xlu0 0
  %5360 = vperm.xlu0 %5359, %v5161
  %v5361 = vpop.permute.xlu0 %5360
  %5364 = vset.pattern.permute.xlu0 0
  %5365 = vperm.xlu0 %5364, %v5162
  %v5366 = vpop.permute.xlu0 %5365
  %5369 = vset.pattern.permute.xlu0 0
  %5370 = vperm.xlu0 %5369, %v5163
  %v5371 = vpop.permute.xlu0 %5370
  %5374 = vset.pattern.permute.xlu0 0
  %5375 = vperm.xlu0 %5374, %v5164
  %v5376 = vpop.permute.xlu0 %5375
  %5379 = vset.pattern.permute.xlu0 0
  %5380 = vperm.xlu0 %5379, %v5165
  %v5381 = vpop.permute.xlu0 %5380
  %5384 = vset.pattern.permute.xlu0 0
  %5385 = vperm.xlu0 %5384, %v5166
  %v5386 = vpop.permute.xlu0 %5385
  %5389 = vset.pattern.permute.xlu0 0
  %5390 = vperm.xlu0 %5389, %v5167
  %v5391 = vpop.permute.xlu0 %5390
  %5394 = vset.pattern.permute.xlu0 0
  %5395 = vperm.xlu0 %5394, %v5168
  %v5396 = vpop.permute.xlu0 %5395
  %5399 = vset.pattern.permute.xlu0 0
  %5400 = vperm.xlu0 %5399, %v5169
  %v5401 = vpop.permute.xlu0 %5400
  %5404 = vset.pattern.permute.xlu0 0
  %5405 = vperm.xlu0 %5404, %v5170
  %v5406 = vpop.permute.xlu0 %5405
  %5409 = vset.pattern.permute.xlu0 0
  %5410 = vperm.xlu0 %5409, %v5171
  %v5411 = vpop.permute.xlu0 %5410
  %5414 = vset.pattern.permute.xlu0 0
  %5415 = vperm.xlu0 %5414, %v5172
  %v5416 = vpop.permute.xlu0 %5415
  %5419 = vset.pattern.permute.xlu0 0
  %5420 = vperm.xlu0 %5419, %v5173
  %v5421 = vpop.permute.xlu0 %5420
  %5424 = vset.pattern.permute.xlu0 0
  %5425 = vperm.xlu0 %5424, %v5174
  %v5426 = vpop.permute.xlu0 %5425
  %5429 = vset.pattern.permute.xlu0 0
  %5430 = vperm.xlu0 %5429, %v5175
  %v5431 = vpop.permute.xlu0 %5430
  %5434 = vset.pattern.permute.xlu0 0
  %5435 = vperm.xlu0 %5434, %v5176
  %v5436 = vpop.permute.xlu0 %5435
  %5439 = vset.pattern.permute.xlu0 0
  %5440 = vperm.xlu0 %5439, %v5177
  %v5441 = vpop.permute.xlu0 %5440
  %5444 = vset.pattern.permute.xlu0 0
  %5445 = vperm.xlu0 %5444, %v5178
  %v5446 = vpop.permute.xlu0 %5445
  %5449 = vset.pattern.permute.xlu0 0
  %5450 = vperm.xlu0 %5449, %v5179
  %v5451 = vpop.permute.xlu0 %5450
  %5454 = vset.pattern.permute.xlu0 0
  %5455 = vperm.xlu0 %5454, %v5180
  %v5456 = vpop.permute.xlu0 %5455
  %5459 = vset.pattern.permute.xlu0 0
  %5460 = vperm.xlu0 %5459, %v5181
  %v5461 = vpop.permute.xlu0 %5460
  %5464 = vset.pattern.permute.xlu0 0
  %5465 = vperm.xlu0 %5464, %v5182
  %v5466 = vpop.permute.xlu0 %5465
  %5469 = vset.pattern.permute.xlu0 0
  %5470 = vperm.xlu0 %5469, %v5183
  %v5471 = vpop.permute.xlu0 %5470
  %5474 = vset.pattern.permute.xlu0 0
  %5475 = vperm.xlu0 %5474, %v5184
  %v5476 = vpop.permute.xlu0 %5475
  %5479 = vset.pattern.permute.xlu0 0
  %5480 = vperm.xlu0 %5479, %v5185
  %v5481 = vpop.permute.xlu0 %5480
  %5484 = vset.pattern.permute.xlu0 0
  %5485 = vperm.xlu0 %5484, %v5186
  %v5486 = vpop.permute.xlu0 %5485
  %5489 = vset.pattern.permute.xlu0 0
  %5490 = vperm.xlu0 %5489, %v5187
  %v5491 = vpop.permute.xlu0 %5490
  %5494 = vset.pattern.permute.xlu0 0
  %5495 = vperm.xlu0 %5494, %v5188
  %v5496 = vpop.permute.xlu0 %5495
  %5499 = vset.pattern.permute.xlu0 0
  %5500 = vperm.xlu0 %5499, %v5189
  %v5501 = vpop.permute.xlu0 %5500
  %5504 = vset.pattern.permute.xlu0 0
  %5505 = vperm.xlu0 %5504, %v5190
  %v5506 = vpop.permute.xlu0 %5505
  %5509 = vset.pattern.permute.xlu0 0
  %5510 = vperm.xlu0 %5509, %v5191
  %v5511 = vpop.permute.xlu0 %5510
  %v5513 = vlaneseq
  %v5514 = vshrl.u32 %v5513, 7
  %v5515 = vsub.s32 0, %v5514
  %v5516 = vrot.slane %v5192, %v5515
  %v5517 = vmul.f32 %v5196, %v5516
  %v5518 = vmul.f32 %v5201, %v5516
  %v5519 = vmul.f32 %v5206, %v5516
  %v5520 = vmul.f32 %v5211, %v5516
  %v5521 = vmul.f32 %v5216, %v5516
  %v5522 = vmul.f32 %v5221, %v5516
  %v5523 = vmul.f32 %v5226, %v5516
  %v5524 = vmul.f32 %v5231, %v5516
  %v5525 = vmul.f32 %v5236, %v5516
  %v5526 = vmul.f32 %v5241, %v5516
  %v5527 = vmul.f32 %v5246, %v5516
  %v5528 = vmul.f32 %v5251, %v5516
  %v5529 = vmul.f32 %v5256, %v5516
  %v5530 = vmul.f32 %v5261, %v5516
  %v5531 = vmul.f32 %v5266, %v5516
  %v5532 = vmul.f32 %v5271, %v5516
  %v5533 = vmul.f32 %v5276, %v5516
  %v5534 = vmul.f32 %v5281, %v5516
  %v5535 = vmul.f32 %v5286, %v5516
  %v5536 = vmul.f32 %v5291, %v5516
  %v5537 = vmul.f32 %v5296, %v5516
  %v5538 = vmul.f32 %v5301, %v5516
  %v5539 = vmul.f32 %v5306, %v5516
  %v5540 = vmul.f32 %v5311, %v5516
  %v5541 = vmul.f32 %v5316, %v5516
  %v5542 = vmul.f32 %v5321, %v5516
  %v5543 = vmul.f32 %v5326, %v5516
  %v5544 = vmul.f32 %v5331, %v5516
  %v5545 = vmul.f32 %v5336, %v5516
  %v5546 = vmul.f32 %v5341, %v5516
  %v5547 = vmul.f32 %v5346, %v5516
  %v5548 = vmul.f32 %v5351, %v5516
  %v5549 = vmul.f32 %v5356, %v5516
  %v5550 = vmul.f32 %v5361, %v5516
  %v5551 = vmul.f32 %v5366, %v5516
  %v5552 = vmul.f32 %v5371, %v5516
  %v5553 = vmul.f32 %v5376, %v5516
  %v5554 = vmul.f32 %v5381, %v5516
  %v5555 = vmul.f32 %v5386, %v5516
  %v5556 = vmul.f32 %v5391, %v5516
  %v5557 = vmul.f32 %v5396, %v5516
  %v5558 = vmul.f32 %v5401, %v5516
  %v5559 = vmul.f32 %v5406, %v5516
  %v5560 = vmul.f32 %v5411, %v5516
  %v5561 = vmul.f32 %v5416, %v5516
  %v5562 = vmul.f32 %v5421, %v5516
  %v5563 = vmul.f32 %v5426, %v5516
  %v5564 = vmul.f32 %v5431, %v5516
  %v5565 = vmul.f32 %v5436, %v5516
  %v5566 = vmul.f32 %v5441, %v5516
  %v5567 = vmul.f32 %v5446, %v5516
  %v5568 = vmul.f32 %v5451, %v5516
  %v5569 = vmul.f32 %v5456, %v5516
  %v5570 = vmul.f32 %v5461, %v5516
  %v5571 = vmul.f32 %v5466, %v5516
  %v5572 = vmul.f32 %v5471, %v5516
  %v5573 = vmul.f32 %v5476, %v5516
  %v5574 = vmul.f32 %v5481, %v5516
  %v5575 = vmul.f32 %v5486, %v5516
  %v5576 = vmul.f32 %v5491, %v5516
  %v5577 = vmul.f32 %v5496, %v5516
  %v5578 = vmul.f32 %v5501, %v5516
  %v5579 = vmul.f32 %v5506, %v5516
  %v5580 = vmul.f32 %v5511, %v5516
  %v5581 = vadd.f32 %v5064, %v5517
  %v5582 = vadd.f32 %v5065, %v5518
  %v5583 = vadd.f32 %v5066, %v5519
  %v5584 = vadd.f32 %v5067, %v5520
  %v5585 = vadd.f32 %v5068, %v5521
  %v5586 = vadd.f32 %v5069, %v5522
  %v5587 = vadd.f32 %v5070, %v5523
  %v5588 = vadd.f32 %v5071, %v5524
  %v5589 = vadd.f32 %v5072, %v5525
  %v5590 = vadd.f32 %v5073, %v5526
  %v5591 = vadd.f32 %v5074, %v5527
  %v5592 = vadd.f32 %v5075, %v5528
  %v5593 = vadd.f32 %v5076, %v5529
  %v5594 = vadd.f32 %v5077, %v5530
  %v5595 = vadd.f32 %v5078, %v5531
  %v5596 = vadd.f32 %v5079, %v5532
  %v5597 = vadd.f32 %v5080, %v5533
  %v5598 = vadd.f32 %v5081, %v5534
  %v5599 = vadd.f32 %v5082, %v5535
  %v5600 = vadd.f32 %v5083, %v5536
  %v5601 = vadd.f32 %v5084, %v5537
  %v5602 = vadd.f32 %v5085, %v5538
  %v5603 = vadd.f32 %v5086, %v5539
  %v5604 = vadd.f32 %v5087, %v5540
  %v5605 = vadd.f32 %v5088, %v5541
  %v5606 = vadd.f32 %v5089, %v5542
  %v5607 = vadd.f32 %v5090, %v5543
  %v5608 = vadd.f32 %v5091, %v5544
  %v5609 = vadd.f32 %v5092, %v5545
  %v5610 = vadd.f32 %v5093, %v5546
  %v5611 = vadd.f32 %v5094, %v5547
  %v5612 = vadd.f32 %v5095, %v5548
  %v5613 = vadd.f32 %v5096, %v5549
  %v5614 = vadd.f32 %v5097, %v5550
  %v5615 = vadd.f32 %v5098, %v5551
  %v5616 = vadd.f32 %v5099, %v5552
  %v5617 = vadd.f32 %v5100, %v5553
  %v5618 = vadd.f32 %v5101, %v5554
  %v5619 = vadd.f32 %v5102, %v5555
  %v5620 = vadd.f32 %v5103, %v5556
  %v5621 = vadd.f32 %v5104, %v5557
  %v5622 = vadd.f32 %v5105, %v5558
  %v5623 = vadd.f32 %v5106, %v5559
  %v5624 = vadd.f32 %v5107, %v5560
  %v5625 = vadd.f32 %v5108, %v5561
  %v5626 = vadd.f32 %v5109, %v5562
  %v5627 = vadd.f32 %v5110, %v5563
  %v5628 = vadd.f32 %v5111, %v5564
  %v5629 = vadd.f32 %v5112, %v5565
  %v5630 = vadd.f32 %v5113, %v5566
  %v5631 = vadd.f32 %v5114, %v5567
  %v5632 = vadd.f32 %v5115, %v5568
  %v5633 = vadd.f32 %v5116, %v5569
  %v5634 = vadd.f32 %v5117, %v5570
  %v5635 = vadd.f32 %v5118, %v5571
  %v5636 = vadd.f32 %v5119, %v5572
  %v5637 = vadd.f32 %v5120, %v5573
  %v5638 = vadd.f32 %v5121, %v5574
  %v5639 = vadd.f32 %v5122, %v5575
  %v5640 = vadd.f32 %v5123, %v5576
  %v5641 = vadd.f32 %v5124, %v5577
  %v5642 = vadd.f32 %v5125, %v5578
  %v5643 = vadd.f32 %v5126, %v5579
  %v5644 = vadd.f32 %v5127, %v5580
  %v5645 = vld [vmem:[%s0 + $0xd] sm:$0x1]
  %5646 = vset.pattern.permute.xlu0 1
  %5647 = vperm.xlu0 %5646, %v5128
  %v5648 = vpop.permute.xlu0 %5647
  %5650 = vset.pattern.permute.xlu0 1
  %5651 = vperm.xlu0 %5650, %v5129
  %v5652 = vpop.permute.xlu0 %5651
  %5654 = vset.pattern.permute.xlu0 1
  %5655 = vperm.xlu0 %5654, %v5130
  %v5656 = vpop.permute.xlu0 %5655
  %5658 = vset.pattern.permute.xlu0 1
  %5659 = vperm.xlu0 %5658, %v5131
  %v5660 = vpop.permute.xlu0 %5659
  %5662 = vset.pattern.permute.xlu0 1
  %5663 = vperm.xlu0 %5662, %v5132
  %v5664 = vpop.permute.xlu0 %5663
  %5666 = vset.pattern.permute.xlu0 1
  %5667 = vperm.xlu0 %5666, %v5133
  %v5668 = vpop.permute.xlu0 %5667
  %5670 = vset.pattern.permute.xlu0 1
  %5671 = vperm.xlu0 %5670, %v5134
  %v5672 = vpop.permute.xlu0 %5671
  %5674 = vset.pattern.permute.xlu0 1
  %5675 = vperm.xlu0 %5674, %v5135
  %v5676 = vpop.permute.xlu0 %5675
  %5678 = vset.pattern.permute.xlu0 1
  %5679 = vperm.xlu0 %5678, %v5136
  %v5680 = vpop.permute.xlu0 %5679
  %5682 = vset.pattern.permute.xlu0 1
  %5683 = vperm.xlu0 %5682, %v5137
  %v5684 = vpop.permute.xlu0 %5683
  %5686 = vset.pattern.permute.xlu0 1
  %5687 = vperm.xlu0 %5686, %v5138
  %v5688 = vpop.permute.xlu0 %5687
  %5690 = vset.pattern.permute.xlu0 1
  %5691 = vperm.xlu0 %5690, %v5139
  %v5692 = vpop.permute.xlu0 %5691
  %5694 = vset.pattern.permute.xlu0 1
  %5695 = vperm.xlu0 %5694, %v5140
  %v5696 = vpop.permute.xlu0 %5695
  %5698 = vset.pattern.permute.xlu0 1
  %5699 = vperm.xlu0 %5698, %v5141
  %v5700 = vpop.permute.xlu0 %5699
  %5702 = vset.pattern.permute.xlu0 1
  %5703 = vperm.xlu0 %5702, %v5142
  %v5704 = vpop.permute.xlu0 %5703
  %5706 = vset.pattern.permute.xlu0 1
  %5707 = vperm.xlu0 %5706, %v5143
  %v5708 = vpop.permute.xlu0 %5707
  %5710 = vset.pattern.permute.xlu0 1
  %5711 = vperm.xlu0 %5710, %v5144
  %v5712 = vpop.permute.xlu0 %5711
  %5714 = vset.pattern.permute.xlu0 1
  %5715 = vperm.xlu0 %5714, %v5145
  %v5716 = vpop.permute.xlu0 %5715
  %5718 = vset.pattern.permute.xlu0 1
  %5719 = vperm.xlu0 %5718, %v5146
  %v5720 = vpop.permute.xlu0 %5719
  %5722 = vset.pattern.permute.xlu0 1
  %5723 = vperm.xlu0 %5722, %v5147
  %v5724 = vpop.permute.xlu0 %5723
  %5726 = vset.pattern.permute.xlu0 1
  %5727 = vperm.xlu0 %5726, %v5148
  %v5728 = vpop.permute.xlu0 %5727
  %5730 = vset.pattern.permute.xlu0 1
  %5731 = vperm.xlu0 %5730, %v5149
  %v5732 = vpop.permute.xlu0 %5731
  %5734 = vset.pattern.permute.xlu0 1
  %5735 = vperm.xlu0 %5734, %v5150
  %v5736 = vpop.permute.xlu0 %5735
  %5738 = vset.pattern.permute.xlu0 1
  %5739 = vperm.xlu0 %5738, %v5151
  %v5740 = vpop.permute.xlu0 %5739
  %5742 = vset.pattern.permute.xlu0 1
  %5743 = vperm.xlu0 %5742, %v5152
  %v5744 = vpop.permute.xlu0 %5743
  %5746 = vset.pattern.permute.xlu0 1
  %5747 = vperm.xlu0 %5746, %v5153
  %v5748 = vpop.permute.xlu0 %5747
  %5750 = vset.pattern.permute.xlu0 1
  %5751 = vperm.xlu0 %5750, %v5154
  %v5752 = vpop.permute.xlu0 %5751
  %5754 = vset.pattern.permute.xlu0 1
  %5755 = vperm.xlu0 %5754, %v5155
  %v5756 = vpop.permute.xlu0 %5755
  %5758 = vset.pattern.permute.xlu0 1
  %5759 = vperm.xlu0 %5758, %v5156
  %v5760 = vpop.permute.xlu0 %5759
  %5762 = vset.pattern.permute.xlu0 1
  %5763 = vperm.xlu0 %5762, %v5157
  %v5764 = vpop.permute.xlu0 %5763
  %5766 = vset.pattern.permute.xlu0 1
  %5767 = vperm.xlu0 %5766, %v5158
  %v5768 = vpop.permute.xlu0 %5767
  %5770 = vset.pattern.permute.xlu0 1
  %5771 = vperm.xlu0 %5770, %v5159
  %v5772 = vpop.permute.xlu0 %5771
  %5774 = vset.pattern.permute.xlu0 1
  %5775 = vperm.xlu0 %5774, %v5160
  %v5776 = vpop.permute.xlu0 %5775
  %5778 = vset.pattern.permute.xlu0 1
  %5779 = vperm.xlu0 %5778, %v5161
  %v5780 = vpop.permute.xlu0 %5779
  %5782 = vset.pattern.permute.xlu0 1
  %5783 = vperm.xlu0 %5782, %v5162
  %v5784 = vpop.permute.xlu0 %5783
  %5786 = vset.pattern.permute.xlu0 1
  %5787 = vperm.xlu0 %5786, %v5163
  %v5788 = vpop.permute.xlu0 %5787
  %5790 = vset.pattern.permute.xlu0 1
  %5791 = vperm.xlu0 %5790, %v5164
  %v5792 = vpop.permute.xlu0 %5791
  %5794 = vset.pattern.permute.xlu0 1
  %5795 = vperm.xlu0 %5794, %v5165
  %v5796 = vpop.permute.xlu0 %5795
  %5798 = vset.pattern.permute.xlu0 1
  %5799 = vperm.xlu0 %5798, %v5166
  %v5800 = vpop.permute.xlu0 %5799
  %5802 = vset.pattern.permute.xlu0 1
  %5803 = vperm.xlu0 %5802, %v5167
  %v5804 = vpop.permute.xlu0 %5803
  %5806 = vset.pattern.permute.xlu0 1
  %5807 = vperm.xlu0 %5806, %v5168
  %v5808 = vpop.permute.xlu0 %5807
  %5810 = vset.pattern.permute.xlu0 1
  %5811 = vperm.xlu0 %5810, %v5169
  %v5812 = vpop.permute.xlu0 %5811
  %5814 = vset.pattern.permute.xlu0 1
  %5815 = vperm.xlu0 %5814, %v5170
  %v5816 = vpop.permute.xlu0 %5815
  %5818 = vset.pattern.permute.xlu0 1
  %5819 = vperm.xlu0 %5818, %v5171
  %v5820 = vpop.permute.xlu0 %5819
  %5822 = vset.pattern.permute.xlu0 1
  %5823 = vperm.xlu0 %5822, %v5172
  %v5824 = vpop.permute.xlu0 %5823
  %5826 = vset.pattern.permute.xlu0 1
  %5827 = vperm.xlu0 %5826, %v5173
  %v5828 = vpop.permute.xlu0 %5827
  %5830 = vset.pattern.permute.xlu0 1
  %5831 = vperm.xlu0 %5830, %v5174
  %v5832 = vpop.permute.xlu0 %5831
  %5834 = vset.pattern.permute.xlu0 1
  %5835 = vperm.xlu0 %5834, %v5175
  %v5836 = vpop.permute.xlu0 %5835
  %5838 = vset.pattern.permute.xlu0 1
  %5839 = vperm.xlu0 %5838, %v5176
  %v5840 = vpop.permute.xlu0 %5839
  %5842 = vset.pattern.permute.xlu0 1
  %5843 = vperm.xlu0 %5842, %v5177
  %v5844 = vpop.permute.xlu0 %5843
  %5846 = vset.pattern.permute.xlu0 1
  %5847 = vperm.xlu0 %5846, %v5178
  %v5848 = vpop.permute.xlu0 %5847
  %5850 = vset.pattern.permute.xlu0 1
  %5851 = vperm.xlu0 %5850, %v5179
  %v5852 = vpop.permute.xlu0 %5851
  %5854 = vset.pattern.permute.xlu0 1
  %5855 = vperm.xlu0 %5854, %v5180
  %v5856 = vpop.permute.xlu0 %5855
  %5858 = vset.pattern.permute.xlu0 1
  %5859 = vperm.xlu0 %5858, %v5181
  %v5860 = vpop.permute.xlu0 %5859
  %5862 = vset.pattern.permute.xlu0 1
  %5863 = vperm.xlu0 %5862, %v5182
  %v5864 = vpop.permute.xlu0 %5863
  %5866 = vset.pattern.permute.xlu0 1
  %5867 = vperm.xlu0 %5866, %v5183
  %v5868 = vpop.permute.xlu0 %5867
  %5870 = vset.pattern.permute.xlu0 1
  %5871 = vperm.xlu0 %5870, %v5184
  %v5872 = vpop.permute.xlu0 %5871
  %5874 = vset.pattern.permute.xlu0 1
  %5875 = vperm.xlu0 %5874, %v5185
  %v5876 = vpop.permute.xlu0 %5875
  %5878 = vset.pattern.permute.xlu0 1
  %5879 = vperm.xlu0 %5878, %v5186
  %v5880 = vpop.permute.xlu0 %5879
  %5882 = vset.pattern.permute.xlu0 1
  %5883 = vperm.xlu0 %5882, %v5187
  %v5884 = vpop.permute.xlu0 %5883
  %5886 = vset.pattern.permute.xlu0 1
  %5887 = vperm.xlu0 %5886, %v5188
  %v5888 = vpop.permute.xlu0 %5887
  %5890 = vset.pattern.permute.xlu0 1
  %5891 = vperm.xlu0 %5890, %v5189
  %v5892 = vpop.permute.xlu0 %5891
  %5894 = vset.pattern.permute.xlu0 1
  %5895 = vperm.xlu0 %5894, %v5190
  %v5896 = vpop.permute.xlu0 %5895
  %5898 = vset.pattern.permute.xlu0 1
  %5899 = vperm.xlu0 %5898, %v5191
  %v5900 = vpop.permute.xlu0 %5899
  %v5902 = vlaneseq
  %v5903 = vshrl.u32 %v5902, 7
  %v5904 = vsub.s32 0, %v5903
  %v5905 = vrot.slane %v5645, %v5904
  %v5906 = vmul.f32 %v5648, %v5905
  %v5907 = vmul.f32 %v5652, %v5905
  %v5908 = vmul.f32 %v5656, %v5905
  %v5909 = vmul.f32 %v5660, %v5905
  %v5910 = vmul.f32 %v5664, %v5905
  %v5911 = vmul.f32 %v5668, %v5905
  %v5912 = vmul.f32 %v5672, %v5905
  %v5913 = vmul.f32 %v5676, %v5905
  %v5914 = vmul.f32 %v5680, %v5905
  %v5915 = vmul.f32 %v5684, %v5905
  %v5916 = vmul.f32 %v5688, %v5905
  %v5917 = vmul.f32 %v5692, %v5905
  %v5918 = vmul.f32 %v5696, %v5905
  %v5919 = vmul.f32 %v5700, %v5905
  %v5920 = vmul.f32 %v5704, %v5905
  %v5921 = vmul.f32 %v5708, %v5905
  %v5922 = vmul.f32 %v5712, %v5905
  %v5923 = vmul.f32 %v5716, %v5905
  %v5924 = vmul.f32 %v5720, %v5905
  %v5925 = vmul.f32 %v5724, %v5905
  %v5926 = vmul.f32 %v5728, %v5905
  %v5927 = vmul.f32 %v5732, %v5905
  %v5928 = vmul.f32 %v5736, %v5905
  %v5929 = vmul.f32 %v5740, %v5905
  %v5930 = vmul.f32 %v5744, %v5905
  %v5931 = vmul.f32 %v5748, %v5905
  %v5932 = vmul.f32 %v5752, %v5905
  %v5933 = vmul.f32 %v5756, %v5905
  %v5934 = vmul.f32 %v5760, %v5905
  %v5935 = vmul.f32 %v5764, %v5905
  %v5936 = vmul.f32 %v5768, %v5905
  %v5937 = vmul.f32 %v5772, %v5905
  %v5938 = vmul.f32 %v5776, %v5905
  %v5939 = vmul.f32 %v5780, %v5905
  %v5940 = vmul.f32 %v5784, %v5905
  %v5941 = vmul.f32 %v5788, %v5905
  %v5942 = vmul.f32 %v5792, %v5905
  %v5943 = vmul.f32 %v5796, %v5905
  %v5944 = vmul.f32 %v5800, %v5905
  %v5945 = vmul.f32 %v5804, %v5905
  %v5946 = vmul.f32 %v5808, %v5905
  %v5947 = vmul.f32 %v5812, %v5905
  %v5948 = vmul.f32 %v5816, %v5905
  %v5949 = vmul.f32 %v5820, %v5905
  %v5950 = vmul.f32 %v5824, %v5905
  %v5951 = vmul.f32 %v5828, %v5905
  %v5952 = vmul.f32 %v5832, %v5905
  %v5953 = vmul.f32 %v5836, %v5905
  %v5954 = vmul.f32 %v5840, %v5905
  %v5955 = vmul.f32 %v5844, %v5905
  %v5956 = vmul.f32 %v5848, %v5905
  %v5957 = vmul.f32 %v5852, %v5905
  %v5958 = vmul.f32 %v5856, %v5905
  %v5959 = vmul.f32 %v5860, %v5905
  %v5960 = vmul.f32 %v5864, %v5905
  %v5961 = vmul.f32 %v5868, %v5905
  %v5962 = vmul.f32 %v5872, %v5905
  %v5963 = vmul.f32 %v5876, %v5905
  %v5964 = vmul.f32 %v5880, %v5905
  %v5965 = vmul.f32 %v5884, %v5905
  %v5966 = vmul.f32 %v5888, %v5905
  %v5967 = vmul.f32 %v5892, %v5905
  %v5968 = vmul.f32 %v5896, %v5905
  %v5969 = vmul.f32 %v5900, %v5905
  %v5970 = vadd.f32 %v5581, %v5906
  %v5971 = vadd.f32 %v5582, %v5907
  %v5972 = vadd.f32 %v5583, %v5908
  %v5973 = vadd.f32 %v5584, %v5909
  %v5974 = vadd.f32 %v5585, %v5910
  %v5975 = vadd.f32 %v5586, %v5911
  %v5976 = vadd.f32 %v5587, %v5912
  %v5977 = vadd.f32 %v5588, %v5913
  %v5978 = vadd.f32 %v5589, %v5914
  %v5979 = vadd.f32 %v5590, %v5915
  %v5980 = vadd.f32 %v5591, %v5916
  %v5981 = vadd.f32 %v5592, %v5917
  %v5982 = vadd.f32 %v5593, %v5918
  %v5983 = vadd.f32 %v5594, %v5919
  %v5984 = vadd.f32 %v5595, %v5920
  %v5985 = vadd.f32 %v5596, %v5921
  %v5986 = vadd.f32 %v5597, %v5922
  %v5987 = vadd.f32 %v5598, %v5923
  %v5988 = vadd.f32 %v5599, %v5924
  %v5989 = vadd.f32 %v5600, %v5925
  %v5990 = vadd.f32 %v5601, %v5926
  %v5991 = vadd.f32 %v5602, %v5927
  %v5992 = vadd.f32 %v5603, %v5928
  %v5993 = vadd.f32 %v5604, %v5929
  %v5994 = vadd.f32 %v5605, %v5930
  %v5995 = vadd.f32 %v5606, %v5931
  %v5996 = vadd.f32 %v5607, %v5932
  %v5997 = vadd.f32 %v5608, %v5933
  %v5998 = vadd.f32 %v5609, %v5934
  %v5999 = vadd.f32 %v5610, %v5935
  %v6000 = vadd.f32 %v5611, %v5936
  %v6001 = vadd.f32 %v5612, %v5937
  %v6002 = vadd.f32 %v5613, %v5938
  %v6003 = vadd.f32 %v5614, %v5939
  %v6004 = vadd.f32 %v5615, %v5940
  %v6005 = vadd.f32 %v5616, %v5941
  %v6006 = vadd.f32 %v5617, %v5942
  %v6007 = vadd.f32 %v5618, %v5943
  %v6008 = vadd.f32 %v5619, %v5944
  %v6009 = vadd.f32 %v5620, %v5945
  %v6010 = vadd.f32 %v5621, %v5946
  %v6011 = vadd.f32 %v5622, %v5947
  %v6012 = vadd.f32 %v5623, %v5948
  %v6013 = vadd.f32 %v5624, %v5949
  %v6014 = vadd.f32 %v5625, %v5950
  %v6015 = vadd.f32 %v5626, %v5951
  %v6016 = vadd.f32 %v5627, %v5952
  %v6017 = vadd.f32 %v5628, %v5953
  %v6018 = vadd.f32 %v5629, %v5954
  %v6019 = vadd.f32 %v5630, %v5955
  %v6020 = vadd.f32 %v5631, %v5956
  %v6021 = vadd.f32 %v5632, %v5957
  %v6022 = vadd.f32 %v5633, %v5958
  %v6023 = vadd.f32 %v5634, %v5959
  %v6024 = vadd.f32 %v5635, %v5960
  %v6025 = vadd.f32 %v5636, %v5961
  %v6026 = vadd.f32 %v5637, %v5962
  %v6027 = vadd.f32 %v5638, %v5963
  %v6028 = vadd.f32 %v5639, %v5964
  %v6029 = vadd.f32 %v5640, %v5965
  %v6030 = vadd.f32 %v5641, %v5966
  %v6031 = vadd.f32 %v5642, %v5967
  %v6032 = vadd.f32 %v5643, %v5968
  %v6033 = vadd.f32 %v5644, %v5969
  %v6034 = vld [vmem:[%s0 + $0xe] sm:$0x1]
  %6035 = vset.pattern.permute.xlu0 2
  %6036 = vperm.xlu0 %6035, %v5128
  %v6037 = vpop.permute.xlu0 %6036
  %6039 = vset.pattern.permute.xlu0 2
  %6040 = vperm.xlu0 %6039, %v5129
  %v6041 = vpop.permute.xlu0 %6040
  %6043 = vset.pattern.permute.xlu0 2
  %6044 = vperm.xlu0 %6043, %v5130
  %v6045 = vpop.permute.xlu0 %6044
  %6047 = vset.pattern.permute.xlu0 2
  %6048 = vperm.xlu0 %6047, %v5131
  %v6049 = vpop.permute.xlu0 %6048
  %6051 = vset.pattern.permute.xlu0 2
  %6052 = vperm.xlu0 %6051, %v5132
  %v6053 = vpop.permute.xlu0 %6052
  %6055 = vset.pattern.permute.xlu0 2
  %6056 = vperm.xlu0 %6055, %v5133
  %v6057 = vpop.permute.xlu0 %6056
  %6059 = vset.pattern.permute.xlu0 2
  %6060 = vperm.xlu0 %6059, %v5134
  %v6061 = vpop.permute.xlu0 %6060
  %6063 = vset.pattern.permute.xlu0 2
  %6064 = vperm.xlu0 %6063, %v5135
  %v6065 = vpop.permute.xlu0 %6064
  %6067 = vset.pattern.permute.xlu0 2
  %6068 = vperm.xlu0 %6067, %v5136
  %v6069 = vpop.permute.xlu0 %6068
  %6071 = vset.pattern.permute.xlu0 2
  %6072 = vperm.xlu0 %6071, %v5137
  %v6073 = vpop.permute.xlu0 %6072
  %6075 = vset.pattern.permute.xlu0 2
  %6076 = vperm.xlu0 %6075, %v5138
  %v6077 = vpop.permute.xlu0 %6076
  %6079 = vset.pattern.permute.xlu0 2
  %6080 = vperm.xlu0 %6079, %v5139
  %v6081 = vpop.permute.xlu0 %6080
  %6083 = vset.pattern.permute.xlu0 2
  %6084 = vperm.xlu0 %6083, %v5140
  %v6085 = vpop.permute.xlu0 %6084
  %6087 = vset.pattern.permute.xlu0 2
  %6088 = vperm.xlu0 %6087, %v5141
  %v6089 = vpop.permute.xlu0 %6088
  %6091 = vset.pattern.permute.xlu0 2
  %6092 = vperm.xlu0 %6091, %v5142
  %v6093 = vpop.permute.xlu0 %6092
  %6095 = vset.pattern.permute.xlu0 2
  %6096 = vperm.xlu0 %6095, %v5143
  %v6097 = vpop.permute.xlu0 %6096
  %6099 = vset.pattern.permute.xlu0 2
  %6100 = vperm.xlu0 %6099, %v5144
  %v6101 = vpop.permute.xlu0 %6100
  %6103 = vset.pattern.permute.xlu0 2
  %6104 = vperm.xlu0 %6103, %v5145
  %v6105 = vpop.permute.xlu0 %6104
  %6107 = vset.pattern.permute.xlu0 2
  %6108 = vperm.xlu0 %6107, %v5146
  %v6109 = vpop.permute.xlu0 %6108
  %6111 = vset.pattern.permute.xlu0 2
  %6112 = vperm.xlu0 %6111, %v5147
  %v6113 = vpop.permute.xlu0 %6112
  %6115 = vset.pattern.permute.xlu0 2
  %6116 = vperm.xlu0 %6115, %v5148
  %v6117 = vpop.permute.xlu0 %6116
  %6119 = vset.pattern.permute.xlu0 2
  %6120 = vperm.xlu0 %6119, %v5149
  %v6121 = vpop.permute.xlu0 %6120
  %6123 = vset.pattern.permute.xlu0 2
  %6124 = vperm.xlu0 %6123, %v5150
  %v6125 = vpop.permute.xlu0 %6124
  %6127 = vset.pattern.permute.xlu0 2
  %6128 = vperm.xlu0 %6127, %v5151
  %v6129 = vpop.permute.xlu0 %6128
  %6131 = vset.pattern.permute.xlu0 2
  %6132 = vperm.xlu0 %6131, %v5152
  %v6133 = vpop.permute.xlu0 %6132
  %6135 = vset.pattern.permute.xlu0 2
  %6136 = vperm.xlu0 %6135, %v5153
  %v6137 = vpop.permute.xlu0 %6136
  %6139 = vset.pattern.permute.xlu0 2
  %6140 = vperm.xlu0 %6139, %v5154
  %v6141 = vpop.permute.xlu0 %6140
  %6143 = vset.pattern.permute.xlu0 2
  %6144 = vperm.xlu0 %6143, %v5155
  %v6145 = vpop.permute.xlu0 %6144
  %6147 = vset.pattern.permute.xlu0 2
  %6148 = vperm.xlu0 %6147, %v5156
  %v6149 = vpop.permute.xlu0 %6148
  %6151 = vset.pattern.permute.xlu0 2
  %6152 = vperm.xlu0 %6151, %v5157
  %v6153 = vpop.permute.xlu0 %6152
  %6155 = vset.pattern.permute.xlu0 2
  %6156 = vperm.xlu0 %6155, %v5158
  %v6157 = vpop.permute.xlu0 %6156
  %6159 = vset.pattern.permute.xlu0 2
  %6160 = vperm.xlu0 %6159, %v5159
  %v6161 = vpop.permute.xlu0 %6160
  %6163 = vset.pattern.permute.xlu0 2
  %6164 = vperm.xlu0 %6163, %v5160
  %v6165 = vpop.permute.xlu0 %6164
  %6167 = vset.pattern.permute.xlu0 2
  %6168 = vperm.xlu0 %6167, %v5161
  %v6169 = vpop.permute.xlu0 %6168
  %6171 = vset.pattern.permute.xlu0 2
  %6172 = vperm.xlu0 %6171, %v5162
  %v6173 = vpop.permute.xlu0 %6172
  %6175 = vset.pattern.permute.xlu0 2
  %6176 = vperm.xlu0 %6175, %v5163
  %v6177 = vpop.permute.xlu0 %6176
  %6179 = vset.pattern.permute.xlu0 2
  %6180 = vperm.xlu0 %6179, %v5164
  %v6181 = vpop.permute.xlu0 %6180
  %6183 = vset.pattern.permute.xlu0 2
  %6184 = vperm.xlu0 %6183, %v5165
  %v6185 = vpop.permute.xlu0 %6184
  %6187 = vset.pattern.permute.xlu0 2
  %6188 = vperm.xlu0 %6187, %v5166
  %v6189 = vpop.permute.xlu0 %6188
  %6191 = vset.pattern.permute.xlu0 2
  %6192 = vperm.xlu0 %6191, %v5167
  %v6193 = vpop.permute.xlu0 %6192
  %6195 = vset.pattern.permute.xlu0 2
  %6196 = vperm.xlu0 %6195, %v5168
  %v6197 = vpop.permute.xlu0 %6196
  %6199 = vset.pattern.permute.xlu0 2
  %6200 = vperm.xlu0 %6199, %v5169
  %v6201 = vpop.permute.xlu0 %6200
  %6203 = vset.pattern.permute.xlu0 2
  %6204 = vperm.xlu0 %6203, %v5170
  %v6205 = vpop.permute.xlu0 %6204
  %6207 = vset.pattern.permute.xlu0 2
  %6208 = vperm.xlu0 %6207, %v5171
  %v6209 = vpop.permute.xlu0 %6208
  %6211 = vset.pattern.permute.xlu0 2
  %6212 = vperm.xlu0 %6211, %v5172
  %v6213 = vpop.permute.xlu0 %6212
  %6215 = vset.pattern.permute.xlu0 2
  %6216 = vperm.xlu0 %6215, %v5173
  %v6217 = vpop.permute.xlu0 %6216
  %6219 = vset.pattern.permute.xlu0 2
  %6220 = vperm.xlu0 %6219, %v5174
  %v6221 = vpop.permute.xlu0 %6220
  %6223 = vset.pattern.permute.xlu0 2
  %6224 = vperm.xlu0 %6223, %v5175
  %v6225 = vpop.permute.xlu0 %6224
  %6227 = vset.pattern.permute.xlu0 2
  %6228 = vperm.xlu0 %6227, %v5176
  %v6229 = vpop.permute.xlu0 %6228
  %6231 = vset.pattern.permute.xlu0 2
  %6232 = vperm.xlu0 %6231, %v5177
  %v6233 = vpop.permute.xlu0 %6232
  %6235 = vset.pattern.permute.xlu0 2
  %6236 = vperm.xlu0 %6235, %v5178
  %v6237 = vpop.permute.xlu0 %6236
  %6239 = vset.pattern.permute.xlu0 2
  %6240 = vperm.xlu0 %6239, %v5179
  %v6241 = vpop.permute.xlu0 %6240
  %6243 = vset.pattern.permute.xlu0 2
  %6244 = vperm.xlu0 %6243, %v5180
  %v6245 = vpop.permute.xlu0 %6244
  %6247 = vset.pattern.permute.xlu0 2
  %6248 = vperm.xlu0 %6247, %v5181
  %v6249 = vpop.permute.xlu0 %6248
  %6251 = vset.pattern.permute.xlu0 2
  %6252 = vperm.xlu0 %6251, %v5182
  %v6253 = vpop.permute.xlu0 %6252
  %6255 = vset.pattern.permute.xlu0 2
  %6256 = vperm.xlu0 %6255, %v5183
  %v6257 = vpop.permute.xlu0 %6256
  %6259 = vset.pattern.permute.xlu0 2
  %6260 = vperm.xlu0 %6259, %v5184
  %v6261 = vpop.permute.xlu0 %6260
  %6263 = vset.pattern.permute.xlu0 2
  %6264 = vperm.xlu0 %6263, %v5185
  %v6265 = vpop.permute.xlu0 %6264
  %6267 = vset.pattern.permute.xlu0 2
  %6268 = vperm.xlu0 %6267, %v5186
  %v6269 = vpop.permute.xlu0 %6268
  %6271 = vset.pattern.permute.xlu0 2
  %6272 = vperm.xlu0 %6271, %v5187
  %v6273 = vpop.permute.xlu0 %6272
  %6275 = vset.pattern.permute.xlu0 2
  %6276 = vperm.xlu0 %6275, %v5188
  %v6277 = vpop.permute.xlu0 %6276
  %6279 = vset.pattern.permute.xlu0 2
  %6280 = vperm.xlu0 %6279, %v5189
  %v6281 = vpop.permute.xlu0 %6280
  %6283 = vset.pattern.permute.xlu0 2
  %6284 = vperm.xlu0 %6283, %v5190
  %v6285 = vpop.permute.xlu0 %6284
  %6287 = vset.pattern.permute.xlu0 2
  %6288 = vperm.xlu0 %6287, %v5191
  %v6289 = vpop.permute.xlu0 %6288
  %v6291 = vlaneseq
  %v6292 = vshrl.u32 %v6291, 7
  %v6293 = vsub.s32 0, %v6292
  %v6294 = vrot.slane %v6034, %v6293
  %v6295 = vmul.f32 %v6037, %v6294
  %v6296 = vmul.f32 %v6041, %v6294
  %v6297 = vmul.f32 %v6045, %v6294
  %v6298 = vmul.f32 %v6049, %v6294
  %v6299 = vmul.f32 %v6053, %v6294
  %v6300 = vmul.f32 %v6057, %v6294
  %v6301 = vmul.f32 %v6061, %v6294
  %v6302 = vmul.f32 %v6065, %v6294
  %v6303 = vmul.f32 %v6069, %v6294
  %v6304 = vmul.f32 %v6073, %v6294
  %v6305 = vmul.f32 %v6077, %v6294
  %v6306 = vmul.f32 %v6081, %v6294
  %v6307 = vmul.f32 %v6085, %v6294
  %v6308 = vmul.f32 %v6089, %v6294
  %v6309 = vmul.f32 %v6093, %v6294
  %v6310 = vmul.f32 %v6097, %v6294
  %v6311 = vmul.f32 %v6101, %v6294
  %v6312 = vmul.f32 %v6105, %v6294
  %v6313 = vmul.f32 %v6109, %v6294
  %v6314 = vmul.f32 %v6113, %v6294
  %v6315 = vmul.f32 %v6117, %v6294
  %v6316 = vmul.f32 %v6121, %v6294
  %v6317 = vmul.f32 %v6125, %v6294
  %v6318 = vmul.f32 %v6129, %v6294
  %v6319 = vmul.f32 %v6133, %v6294
  %v6320 = vmul.f32 %v6137, %v6294
  %v6321 = vmul.f32 %v6141, %v6294
  %v6322 = vmul.f32 %v6145, %v6294
  %v6323 = vmul.f32 %v6149, %v6294
  %v6324 = vmul.f32 %v6153, %v6294
  %v6325 = vmul.f32 %v6157, %v6294
  %v6326 = vmul.f32 %v6161, %v6294
  %v6327 = vmul.f32 %v6165, %v6294
  %v6328 = vmul.f32 %v6169, %v6294
  %v6329 = vmul.f32 %v6173, %v6294
  %v6330 = vmul.f32 %v6177, %v6294
  %v6331 = vmul.f32 %v6181, %v6294
  %v6332 = vmul.f32 %v6185, %v6294
  %v6333 = vmul.f32 %v6189, %v6294
  %v6334 = vmul.f32 %v6193, %v6294
  %v6335 = vmul.f32 %v6197, %v6294
  %v6336 = vmul.f32 %v6201, %v6294
  %v6337 = vmul.f32 %v6205, %v6294
  %v6338 = vmul.f32 %v6209, %v6294
  %v6339 = vmul.f32 %v6213, %v6294
  %v6340 = vmul.f32 %v6217, %v6294
  %v6341 = vmul.f32 %v6221, %v6294
  %v6342 = vmul.f32 %v6225, %v6294
  %v6343 = vmul.f32 %v6229, %v6294
  %v6344 = vmul.f32 %v6233, %v6294
  %v6345 = vmul.f32 %v6237, %v6294
  %v6346 = vmul.f32 %v6241, %v6294
  %v6347 = vmul.f32 %v6245, %v6294
  %v6348 = vmul.f32 %v6249, %v6294
  %v6349 = vmul.f32 %v6253, %v6294
  %v6350 = vmul.f32 %v6257, %v6294
  %v6351 = vmul.f32 %v6261, %v6294
  %v6352 = vmul.f32 %v6265, %v6294
  %v6353 = vmul.f32 %v6269, %v6294
  %v6354 = vmul.f32 %v6273, %v6294
  %v6355 = vmul.f32 %v6277, %v6294
  %v6356 = vmul.f32 %v6281, %v6294
  %v6357 = vmul.f32 %v6285, %v6294
  %v6358 = vmul.f32 %v6289, %v6294
  %v6359 = vadd.f32 %v5970, %v6295
  %v6360 = vadd.f32 %v5971, %v6296
  %v6361 = vadd.f32 %v5972, %v6297
  %v6362 = vadd.f32 %v5973, %v6298
  %v6363 = vadd.f32 %v5974, %v6299
  %v6364 = vadd.f32 %v5975, %v6300
  %v6365 = vadd.f32 %v5976, %v6301
  %v6366 = vadd.f32 %v5977, %v6302
  %v6367 = vadd.f32 %v5978, %v6303
  %v6368 = vadd.f32 %v5979, %v6304
  %v6369 = vadd.f32 %v5980, %v6305
  %v6370 = vadd.f32 %v5981, %v6306
  %v6371 = vadd.f32 %v5982, %v6307
  %v6372 = vadd.f32 %v5983, %v6308
  %v6373 = vadd.f32 %v5984, %v6309
  %v6374 = vadd.f32 %v5985, %v6310
  %v6375 = vadd.f32 %v5986, %v6311
  %v6376 = vadd.f32 %v5987, %v6312
  %v6377 = vadd.f32 %v5988, %v6313
  %v6378 = vadd.f32 %v5989, %v6314
  %v6379 = vadd.f32 %v5990, %v6315
  %v6380 = vadd.f32 %v5991, %v6316
  %v6381 = vadd.f32 %v5992, %v6317
  %v6382 = vadd.f32 %v5993, %v6318
  %v6383 = vadd.f32 %v5994, %v6319
  %v6384 = vadd.f32 %v5995, %v6320
  %v6385 = vadd.f32 %v5996, %v6321
  %v6386 = vadd.f32 %v5997, %v6322
  %v6387 = vadd.f32 %v5998, %v6323
  %v6388 = vadd.f32 %v5999, %v6324
  %v6389 = vadd.f32 %v6000, %v6325
  %v6390 = vadd.f32 %v6001, %v6326
  %v6391 = vadd.f32 %v6002, %v6327
  %v6392 = vadd.f32 %v6003, %v6328
  %v6393 = vadd.f32 %v6004, %v6329
  %v6394 = vadd.f32 %v6005, %v6330
  %v6395 = vadd.f32 %v6006, %v6331
  %v6396 = vadd.f32 %v6007, %v6332
  %v6397 = vadd.f32 %v6008, %v6333
  %v6398 = vadd.f32 %v6009, %v6334
  %v6399 = vadd.f32 %v6010, %v6335
  %v6400 = vadd.f32 %v6011, %v6336
  %v6401 = vadd.f32 %v6012, %v6337
  %v6402 = vadd.f32 %v6013, %v6338
  %v6403 = vadd.f32 %v6014, %v6339
  %v6404 = vadd.f32 %v6015, %v6340
  %v6405 = vadd.f32 %v6016, %v6341
  %v6406 = vadd.f32 %v6017, %v6342
  %v6407 = vadd.f32 %v6018, %v6343
  %v6408 = vadd.f32 %v6019, %v6344
  %v6409 = vadd.f32 %v6020, %v6345
  %v6410 = vadd.f32 %v6021, %v6346
  %v6411 = vadd.f32 %v6022, %v6347
  %v6412 = vadd.f32 %v6023, %v6348
  %v6413 = vadd.f32 %v6024, %v6349
  %v6414 = vadd.f32 %v6025, %v6350
  %v6415 = vadd.f32 %v6026, %v6351
  %v6416 = vadd.f32 %v6027, %v6352
  %v6417 = vadd.f32 %v6028, %v6353
  %v6418 = vadd.f32 %v6029, %v6354
  %v6419 = vadd.f32 %v6030, %v6355
  %v6420 = vadd.f32 %v6031, %v6356
  %v6421 = vadd.f32 %v6032, %v6357
  %v6422 = vadd.f32 %v6033, %v6358
  %v6423 = vld [vmem:[%s3832 + $0x2] sm:$0xff]
  %v6424 = vld [vmem:[%s3832 + $0xa] sm:$0xff]
  %v6425 = vld [vmem:[%s3832 + $0x1a] sm:$0xff]
  %v6426 = vld [vmem:[%s3832 + $0x22] sm:$0xff]
  %v6427 = vld [vmem:[%s3832 + $0x32] sm:$0xff]
  %v6428 = vld [vmem:[%s3832 + $0x3a] sm:$0xff]
  %v6429 = vld [vmem:[%s3832 + $0x4a] sm:$0xff]
  %v6430 = vld [vmem:[%s3832 + $0x52] sm:$0xff]
  %v6431 = vld [vmem:[%s3832 + $0x62] sm:$0xff]
  %v6432 = vld [vmem:[%s3832 + $0x6a] sm:$0xff]
  %v6433 = vld [vmem:[%s3832 + $0x7a] sm:$0xff]
  %v6434 = vld [vmem:[%s3832 + $0x82] sm:$0xff]
  %v6435 = vld [vmem:[%s3832 + $0x92] sm:$0xff]
  %v6436 = vld [vmem:[%s3832 + $0x9a] sm:$0xff]
  %v6437 = vld [vmem:[%s3832 + $0xaa] sm:$0xff]
  %v6438 = vld [vmem:[%s3832 + $0xb2] sm:$0xff]
  %v6439 = vld [vmem:[%s3832 + $0xc2] sm:$0xff]
  %v6440 = vld [vmem:[%s3832 + $0xca] sm:$0xff]
  %v6441 = vld [vmem:[%s3832 + $0xda] sm:$0xff]
  %v6442 = vld [vmem:[%s3832 + $0xe2] sm:$0xff]
  %v6443 = vld [vmem:[%s3832 + $0xf2] sm:$0xff]
  %v6444 = vld [vmem:[%s3832 + $0xfa] sm:$0xff]
  %v6445 = vld [vmem:[%s3832 + $0x10a] sm:$0xff]
  %v6446 = vld [vmem:[%s3832 + $0x112] sm:$0xff]
  %v6447 = vld [vmem:[%s3832 + $0x122] sm:$0xff]
  %v6448 = vld [vmem:[%s3832 + $0x12a] sm:$0xff]
  %v6449 = vld [vmem:[%s3832 + $0x13a] sm:$0xff]
  %v6450 = vld [vmem:[%s3832 + $0x142] sm:$0xff]
  %v6451 = vld [vmem:[%s3832 + $0x152] sm:$0xff]
  %v6452 = vld [vmem:[%s3832 + $0x15a] sm:$0xff]
  %v6453 = vld [vmem:[%s3832 + $0x16a] sm:$0xff]
  %v6454 = vld [vmem:[%s3832 + $0x172] sm:$0xff]
  %v6455 = vld [vmem:[%s3832 + $0x1b2] sm:$0xff]
  %v6456 = vld [vmem:[%s3832 + $0x1ba] sm:$0xff]
  %v6457 = vld [vmem:[%s3832 + $0x1ca] sm:$0xff]
  %v6458 = vld [vmem:[%s3832 + $0x1d2] sm:$0xff]
  %v6459 = vld [vmem:[%s3832 + $0x1e2] sm:$0xff]
  %v6460 = vld [vmem:[%s3832 + $0x1ea] sm:$0xff]
  %v6461 = vld [vmem:[%s3832 + $0x1fa] sm:$0xff]
  %v6462 = vld [vmem:[%s3832 + $0x202] sm:$0xff]
  %v6463 = vld [vmem:[%s3832 + $0x212] sm:$0xff]
  %v6464 = vld [vmem:[%s3832 + $0x21a] sm:$0xff]
  %v6465 = vld [vmem:[%s3832 + $0x22a] sm:$0xff]
  %v6466 = vld [vmem:[%s3832 + $0x232] sm:$0xff]
  %v6467 = vld [vmem:[%s3832 + $0x242] sm:$0xff]
  %v6468 = vld [vmem:[%s3832 + $0x24a] sm:$0xff]
  %v6469 = vld [vmem:[%s3832 + $0x25a] sm:$0xff]
  %v6470 = vld [vmem:[%s3832 + $0x262] sm:$0xff]
  %v6471 = vld [vmem:[%s3832 + $0x272] sm:$0xff]
  %v6472 = vld [vmem:[%s3832 + $0x27a] sm:$0xff]
  %v6473 = vld [vmem:[%s3832 + $0x28a] sm:$0xff]
  %v6474 = vld [vmem:[%s3832 + $0x292] sm:$0xff]
  %v6475 = vld [vmem:[%s3832 + $0x2a2] sm:$0xff]
  %v6476 = vld [vmem:[%s3832 + $0x2aa] sm:$0xff]
  %v6477 = vld [vmem:[%s3832 + $0x2ba] sm:$0xff]
  %v6478 = vld [vmem:[%s3832 + $0x2c2] sm:$0xff]
  %v6479 = vld [vmem:[%s3832 + $0x2d2] sm:$0xff]
  %v6480 = vld [vmem:[%s3832 + $0x2da] sm:$0xff]
  %v6481 = vld [vmem:[%s3832 + $0x2ea] sm:$0xff]
  %v6482 = vld [vmem:[%s3832 + $0x2f2] sm:$0xff]
  %v6483 = vld [vmem:[%s3832 + $0x302] sm:$0xff]
  %v6484 = vld [vmem:[%s3832 + $0x30a] sm:$0xff]
  %v6485 = vld [vmem:[%s3832 + $0x31a] sm:$0xff]
  %v6486 = vld [vmem:[%s3832 + $0x322] sm:$0xff]
  %v6487 = vld [vmem:[%s0 + $0xf] sm:$0x1]
  %6489 = vset.pattern.permute.xlu0 0
  %6490 = vperm.xlu0 %6489, %v6423
  %v6491 = vpop.permute.xlu0 %6490
  %6494 = vset.pattern.permute.xlu0 0
  %6495 = vperm.xlu0 %6494, %v6424
  %v6496 = vpop.permute.xlu0 %6495
  %6499 = vset.pattern.permute.xlu0 0
  %6500 = vperm.xlu0 %6499, %v6425
  %v6501 = vpop.permute.xlu0 %6500
  %6504 = vset.pattern.permute.xlu0 0
  %6505 = vperm.xlu0 %6504, %v6426
  %v6506 = vpop.permute.xlu0 %6505
  %6509 = vset.pattern.permute.xlu0 0
  %6510 = vperm.xlu0 %6509, %v6427
  %v6511 = vpop.permute.xlu0 %6510
  %6514 = vset.pattern.permute.xlu0 0
  %6515 = vperm.xlu0 %6514, %v6428
  %v6516 = vpop.permute.xlu0 %6515
  %6519 = vset.pattern.permute.xlu0 0
  %6520 = vperm.xlu0 %6519, %v6429
  %v6521 = vpop.permute.xlu0 %6520
  %6524 = vset.pattern.permute.xlu0 0
  %6525 = vperm.xlu0 %6524, %v6430
  %v6526 = vpop.permute.xlu0 %6525
  %6529 = vset.pattern.permute.xlu0 0
  %6530 = vperm.xlu0 %6529, %v6431
  %v6531 = vpop.permute.xlu0 %6530
  %6534 = vset.pattern.permute.xlu0 0
  %6535 = vperm.xlu0 %6534, %v6432
  %v6536 = vpop.permute.xlu0 %6535
  %6539 = vset.pattern.permute.xlu0 0
  %6540 = vperm.xlu0 %6539, %v6433
  %v6541 = vpop.permute.xlu0 %6540
  %6544 = vset.pattern.permute.xlu0 0
  %6545 = vperm.xlu0 %6544, %v6434
  %v6546 = vpop.permute.xlu0 %6545
  %6549 = vset.pattern.permute.xlu0 0
  %6550 = vperm.xlu0 %6549, %v6435
  %v6551 = vpop.permute.xlu0 %6550
  %6554 = vset.pattern.permute.xlu0 0
  %6555 = vperm.xlu0 %6554, %v6436
  %v6556 = vpop.permute.xlu0 %6555
  %6559 = vset.pattern.permute.xlu0 0
  %6560 = vperm.xlu0 %6559, %v6437
  %v6561 = vpop.permute.xlu0 %6560
  %6564 = vset.pattern.permute.xlu0 0
  %6565 = vperm.xlu0 %6564, %v6438
  %v6566 = vpop.permute.xlu0 %6565
  %6569 = vset.pattern.permute.xlu0 0
  %6570 = vperm.xlu0 %6569, %v6439
  %v6571 = vpop.permute.xlu0 %6570
  %6574 = vset.pattern.permute.xlu0 0
  %6575 = vperm.xlu0 %6574, %v6440
  %v6576 = vpop.permute.xlu0 %6575
  %6579 = vset.pattern.permute.xlu0 0
  %6580 = vperm.xlu0 %6579, %v6441
  %v6581 = vpop.permute.xlu0 %6580
  %6584 = vset.pattern.permute.xlu0 0
  %6585 = vperm.xlu0 %6584, %v6442
  %v6586 = vpop.permute.xlu0 %6585
  %6589 = vset.pattern.permute.xlu0 0
  %6590 = vperm.xlu0 %6589, %v6443
  %v6591 = vpop.permute.xlu0 %6590
  %6594 = vset.pattern.permute.xlu0 0
  %6595 = vperm.xlu0 %6594, %v6444
  %v6596 = vpop.permute.xlu0 %6595
  %6599 = vset.pattern.permute.xlu0 0
  %6600 = vperm.xlu0 %6599, %v6445
  %v6601 = vpop.permute.xlu0 %6600
  %6604 = vset.pattern.permute.xlu0 0
  %6605 = vperm.xlu0 %6604, %v6446
  %v6606 = vpop.permute.xlu0 %6605
  %6609 = vset.pattern.permute.xlu0 0
  %6610 = vperm.xlu0 %6609, %v6447
  %v6611 = vpop.permute.xlu0 %6610
  %6614 = vset.pattern.permute.xlu0 0
  %6615 = vperm.xlu0 %6614, %v6448
  %v6616 = vpop.permute.xlu0 %6615
  %6619 = vset.pattern.permute.xlu0 0
  %6620 = vperm.xlu0 %6619, %v6449
  %v6621 = vpop.permute.xlu0 %6620
  %6624 = vset.pattern.permute.xlu0 0
  %6625 = vperm.xlu0 %6624, %v6450
  %v6626 = vpop.permute.xlu0 %6625
  %6629 = vset.pattern.permute.xlu0 0
  %6630 = vperm.xlu0 %6629, %v6451
  %v6631 = vpop.permute.xlu0 %6630
  %6634 = vset.pattern.permute.xlu0 0
  %6635 = vperm.xlu0 %6634, %v6452
  %v6636 = vpop.permute.xlu0 %6635
  %6639 = vset.pattern.permute.xlu0 0
  %6640 = vperm.xlu0 %6639, %v6453
  %v6641 = vpop.permute.xlu0 %6640
  %6644 = vset.pattern.permute.xlu0 0
  %6645 = vperm.xlu0 %6644, %v6454
  %v6646 = vpop.permute.xlu0 %6645
  %6649 = vset.pattern.permute.xlu0 0
  %6650 = vperm.xlu0 %6649, %v6455
  %v6651 = vpop.permute.xlu0 %6650
  %6654 = vset.pattern.permute.xlu0 0
  %6655 = vperm.xlu0 %6654, %v6456
  %v6656 = vpop.permute.xlu0 %6655
  %6659 = vset.pattern.permute.xlu0 0
  %6660 = vperm.xlu0 %6659, %v6457
  %v6661 = vpop.permute.xlu0 %6660
  %6664 = vset.pattern.permute.xlu0 0
  %6665 = vperm.xlu0 %6664, %v6458
  %v6666 = vpop.permute.xlu0 %6665
  %6669 = vset.pattern.permute.xlu0 0
  %6670 = vperm.xlu0 %6669, %v6459
  %v6671 = vpop.permute.xlu0 %6670
  %6674 = vset.pattern.permute.xlu0 0
  %6675 = vperm.xlu0 %6674, %v6460
  %v6676 = vpop.permute.xlu0 %6675
  %6679 = vset.pattern.permute.xlu0 0
  %6680 = vperm.xlu0 %6679, %v6461
  %v6681 = vpop.permute.xlu0 %6680
  %6684 = vset.pattern.permute.xlu0 0
  %6685 = vperm.xlu0 %6684, %v6462
  %v6686 = vpop.permute.xlu0 %6685
  %6689 = vset.pattern.permute.xlu0 0
  %6690 = vperm.xlu0 %6689, %v6463
  %v6691 = vpop.permute.xlu0 %6690
  %6694 = vset.pattern.permute.xlu0 0
  %6695 = vperm.xlu0 %6694, %v6464
  %v6696 = vpop.permute.xlu0 %6695
  %6699 = vset.pattern.permute.xlu0 0
  %6700 = vperm.xlu0 %6699, %v6465
  %v6701 = vpop.permute.xlu0 %6700
  %6704 = vset.pattern.permute.xlu0 0
  %6705 = vperm.xlu0 %6704, %v6466
  %v6706 = vpop.permute.xlu0 %6705
  %6709 = vset.pattern.permute.xlu0 0
  %6710 = vperm.xlu0 %6709, %v6467
  %v6711 = vpop.permute.xlu0 %6710
  %6714 = vset.pattern.permute.xlu0 0
  %6715 = vperm.xlu0 %6714, %v6468
  %v6716 = vpop.permute.xlu0 %6715
  %6719 = vset.pattern.permute.xlu0 0
  %6720 = vperm.xlu0 %6719, %v6469
  %v6721 = vpop.permute.xlu0 %6720
  %6724 = vset.pattern.permute.xlu0 0
  %6725 = vperm.xlu0 %6724, %v6470
  %v6726 = vpop.permute.xlu0 %6725
  %6729 = vset.pattern.permute.xlu0 0
  %6730 = vperm.xlu0 %6729, %v6471
  %v6731 = vpop.permute.xlu0 %6730
  %6734 = vset.pattern.permute.xlu0 0
  %6735 = vperm.xlu0 %6734, %v6472
  %v6736 = vpop.permute.xlu0 %6735
  %6739 = vset.pattern.permute.xlu0 0
  %6740 = vperm.xlu0 %6739, %v6473
  %v6741 = vpop.permute.xlu0 %6740
  %6744 = vset.pattern.permute.xlu0 0
  %6745 = vperm.xlu0 %6744, %v6474
  %v6746 = vpop.permute.xlu0 %6745
  %6749 = vset.pattern.permute.xlu0 0
  %6750 = vperm.xlu0 %6749, %v6475
  %v6751 = vpop.permute.xlu0 %6750
  %6754 = vset.pattern.permute.xlu0 0
  %6755 = vperm.xlu0 %6754, %v6476
  %v6756 = vpop.permute.xlu0 %6755
  %6759 = vset.pattern.permute.xlu0 0
  %6760 = vperm.xlu0 %6759, %v6477
  %v6761 = vpop.permute.xlu0 %6760
  %6764 = vset.pattern.permute.xlu0 0
  %6765 = vperm.xlu0 %6764, %v6478
  %v6766 = vpop.permute.xlu0 %6765
  %6769 = vset.pattern.permute.xlu0 0
  %6770 = vperm.xlu0 %6769, %v6479
  %v6771 = vpop.permute.xlu0 %6770
  %6774 = vset.pattern.permute.xlu0 0
  %6775 = vperm.xlu0 %6774, %v6480
  %v6776 = vpop.permute.xlu0 %6775
  %6779 = vset.pattern.permute.xlu0 0
  %6780 = vperm.xlu0 %6779, %v6481
  %v6781 = vpop.permute.xlu0 %6780
  %6784 = vset.pattern.permute.xlu0 0
  %6785 = vperm.xlu0 %6784, %v6482
  %v6786 = vpop.permute.xlu0 %6785
  %6789 = vset.pattern.permute.xlu0 0
  %6790 = vperm.xlu0 %6789, %v6483
  %v6791 = vpop.permute.xlu0 %6790
  %6794 = vset.pattern.permute.xlu0 0
  %6795 = vperm.xlu0 %6794, %v6484
  %v6796 = vpop.permute.xlu0 %6795
  %6799 = vset.pattern.permute.xlu0 0
  %6800 = vperm.xlu0 %6799, %v6485
  %v6801 = vpop.permute.xlu0 %6800
  %6804 = vset.pattern.permute.xlu0 0
  %6805 = vperm.xlu0 %6804, %v6486
  %v6806 = vpop.permute.xlu0 %6805
  %v6808 = vlaneseq
  %v6809 = vshrl.u32 %v6808, 7
  %v6810 = vsub.s32 0, %v6809
  %v6811 = vrot.slane %v6487, %v6810
  %v6812 = vmul.f32 %v6491, %v6811
  %v6813 = vmul.f32 %v6496, %v6811
  %v6814 = vmul.f32 %v6501, %v6811
  %v6815 = vmul.f32 %v6506, %v6811
  %v6816 = vmul.f32 %v6511, %v6811
  %v6817 = vmul.f32 %v6516, %v6811
  %v6818 = vmul.f32 %v6521, %v6811
  %v6819 = vmul.f32 %v6526, %v6811
  %v6820 = vmul.f32 %v6531, %v6811
  %v6821 = vmul.f32 %v6536, %v6811
  %v6822 = vmul.f32 %v6541, %v6811
  %v6823 = vmul.f32 %v6546, %v6811
  %v6824 = vmul.f32 %v6551, %v6811
  %v6825 = vmul.f32 %v6556, %v6811
  %v6826 = vmul.f32 %v6561, %v6811
  %v6827 = vmul.f32 %v6566, %v6811
  %v6828 = vmul.f32 %v6571, %v6811
  %v6829 = vmul.f32 %v6576, %v6811
  %v6830 = vmul.f32 %v6581, %v6811
  %v6831 = vmul.f32 %v6586, %v6811
  %v6832 = vmul.f32 %v6591, %v6811
  %v6833 = vmul.f32 %v6596, %v6811
  %v6834 = vmul.f32 %v6601, %v6811
  %v6835 = vmul.f32 %v6606, %v6811
  %v6836 = vmul.f32 %v6611, %v6811
  %v6837 = vmul.f32 %v6616, %v6811
  %v6838 = vmul.f32 %v6621, %v6811
  %v6839 = vmul.f32 %v6626, %v6811
  %v6840 = vmul.f32 %v6631, %v6811
  %v6841 = vmul.f32 %v6636, %v6811
  %v6842 = vmul.f32 %v6641, %v6811
  %v6843 = vmul.f32 %v6646, %v6811
  %v6844 = vmul.f32 %v6651, %v6811
  %v6845 = vmul.f32 %v6656, %v6811
  %v6846 = vmul.f32 %v6661, %v6811
  %v6847 = vmul.f32 %v6666, %v6811
  %v6848 = vmul.f32 %v6671, %v6811
  %v6849 = vmul.f32 %v6676, %v6811
  %v6850 = vmul.f32 %v6681, %v6811
  %v6851 = vmul.f32 %v6686, %v6811
  %v6852 = vmul.f32 %v6691, %v6811
  %v6853 = vmul.f32 %v6696, %v6811
  %v6854 = vmul.f32 %v6701, %v6811
  %v6855 = vmul.f32 %v6706, %v6811
  %v6856 = vmul.f32 %v6711, %v6811
  %v6857 = vmul.f32 %v6716, %v6811
  %v6858 = vmul.f32 %v6721, %v6811
  %v6859 = vmul.f32 %v6726, %v6811
  %v6860 = vmul.f32 %v6731, %v6811
  %v6861 = vmul.f32 %v6736, %v6811
  %v6862 = vmul.f32 %v6741, %v6811
  %v6863 = vmul.f32 %v6746, %v6811
  %v6864 = vmul.f32 %v6751, %v6811
  %v6865 = vmul.f32 %v6756, %v6811
  %v6866 = vmul.f32 %v6761, %v6811
  %v6867 = vmul.f32 %v6766, %v6811
  %v6868 = vmul.f32 %v6771, %v6811
  %v6869 = vmul.f32 %v6776, %v6811
  %v6870 = vmul.f32 %v6781, %v6811
  %v6871 = vmul.f32 %v6786, %v6811
  %v6872 = vmul.f32 %v6791, %v6811
  %v6873 = vmul.f32 %v6796, %v6811
  %v6874 = vmul.f32 %v6801, %v6811
  %v6875 = vmul.f32 %v6806, %v6811
  %v6876 = vadd.f32 %v6359, %v6812
  %v6877 = vadd.f32 %v6360, %v6813
  %v6878 = vadd.f32 %v6361, %v6814
  %v6879 = vadd.f32 %v6362, %v6815
  %v6880 = vadd.f32 %v6363, %v6816
  %v6881 = vadd.f32 %v6364, %v6817
  %v6882 = vadd.f32 %v6365, %v6818
  %v6883 = vadd.f32 %v6366, %v6819
  %v6884 = vadd.f32 %v6367, %v6820
  %v6885 = vadd.f32 %v6368, %v6821
  %v6886 = vadd.f32 %v6369, %v6822
  %v6887 = vadd.f32 %v6370, %v6823
  %v6888 = vadd.f32 %v6371, %v6824
  %v6889 = vadd.f32 %v6372, %v6825
  %v6890 = vadd.f32 %v6373, %v6826
  %v6891 = vadd.f32 %v6374, %v6827
  %v6892 = vadd.f32 %v6375, %v6828
  %v6893 = vadd.f32 %v6376, %v6829
  %v6894 = vadd.f32 %v6377, %v6830
  %v6895 = vadd.f32 %v6378, %v6831
  %v6896 = vadd.f32 %v6379, %v6832
  %v6897 = vadd.f32 %v6380, %v6833
  %v6898 = vadd.f32 %v6381, %v6834
  %v6899 = vadd.f32 %v6382, %v6835
  %v6900 = vadd.f32 %v6383, %v6836
  %v6901 = vadd.f32 %v6384, %v6837
  %v6902 = vadd.f32 %v6385, %v6838
  %v6903 = vadd.f32 %v6386, %v6839
  %v6904 = vadd.f32 %v6387, %v6840
  %v6905 = vadd.f32 %v6388, %v6841
  %v6906 = vadd.f32 %v6389, %v6842
  %v6907 = vadd.f32 %v6390, %v6843
  %v6908 = vadd.f32 %v6391, %v6844
  %v6909 = vadd.f32 %v6392, %v6845
  %v6910 = vadd.f32 %v6393, %v6846
  %v6911 = vadd.f32 %v6394, %v6847
  %v6912 = vadd.f32 %v6395, %v6848
  %v6913 = vadd.f32 %v6396, %v6849
  %v6914 = vadd.f32 %v6397, %v6850
  %v6915 = vadd.f32 %v6398, %v6851
  %v6916 = vadd.f32 %v6399, %v6852
  %v6917 = vadd.f32 %v6400, %v6853
  %v6918 = vadd.f32 %v6401, %v6854
  %v6919 = vadd.f32 %v6402, %v6855
  %v6920 = vadd.f32 %v6403, %v6856
  %v6921 = vadd.f32 %v6404, %v6857
  %v6922 = vadd.f32 %v6405, %v6858
  %v6923 = vadd.f32 %v6406, %v6859
  %v6924 = vadd.f32 %v6407, %v6860
  %v6925 = vadd.f32 %v6408, %v6861
  %v6926 = vadd.f32 %v6409, %v6862
  %v6927 = vadd.f32 %v6410, %v6863
  %v6928 = vadd.f32 %v6411, %v6864
  %v6929 = vadd.f32 %v6412, %v6865
  %v6930 = vadd.f32 %v6413, %v6866
  %v6931 = vadd.f32 %v6414, %v6867
  %v6932 = vadd.f32 %v6415, %v6868
  %v6933 = vadd.f32 %v6416, %v6869
  %v6934 = vadd.f32 %v6417, %v6870
  %v6935 = vadd.f32 %v6418, %v6871
  %v6936 = vadd.f32 %v6419, %v6872
  %v6937 = vadd.f32 %v6420, %v6873
  %v6938 = vadd.f32 %v6421, %v6874
  %v6939 = vadd.f32 %v6422, %v6875
  %v6940 = vld [vmem:[%s0 + $0x10] sm:$0x1]
  %6941 = vset.pattern.permute.xlu0 1
  %6942 = vperm.xlu0 %6941, %v6423
  %v6943 = vpop.permute.xlu0 %6942
  %6945 = vset.pattern.permute.xlu0 1
  %6946 = vperm.xlu0 %6945, %v6424
  %v6947 = vpop.permute.xlu0 %6946
  %6949 = vset.pattern.permute.xlu0 1
  %6950 = vperm.xlu0 %6949, %v6425
  %v6951 = vpop.permute.xlu0 %6950
  %6953 = vset.pattern.permute.xlu0 1
  %6954 = vperm.xlu0 %6953, %v6426
  %v6955 = vpop.permute.xlu0 %6954
  %6957 = vset.pattern.permute.xlu0 1
  %6958 = vperm.xlu0 %6957, %v6427
  %v6959 = vpop.permute.xlu0 %6958
  %6961 = vset.pattern.permute.xlu0 1
  %6962 = vperm.xlu0 %6961, %v6428
  %v6963 = vpop.permute.xlu0 %6962
  %6965 = vset.pattern.permute.xlu0 1
  %6966 = vperm.xlu0 %6965, %v6429
  %v6967 = vpop.permute.xlu0 %6966
  %6969 = vset.pattern.permute.xlu0 1
  %6970 = vperm.xlu0 %6969, %v6430
  %v6971 = vpop.permute.xlu0 %6970
  %6973 = vset.pattern.permute.xlu0 1
  %6974 = vperm.xlu0 %6973, %v6431
  %v6975 = vpop.permute.xlu0 %6974
  %6977 = vset.pattern.permute.xlu0 1
  %6978 = vperm.xlu0 %6977, %v6432
  %v6979 = vpop.permute.xlu0 %6978
  %6981 = vset.pattern.permute.xlu0 1
  %6982 = vperm.xlu0 %6981, %v6433
  %v6983 = vpop.permute.xlu0 %6982
  %6985 = vset.pattern.permute.xlu0 1
  %6986 = vperm.xlu0 %6985, %v6434
  %v6987 = vpop.permute.xlu0 %6986
  %6989 = vset.pattern.permute.xlu0 1
  %6990 = vperm.xlu0 %6989, %v6435
  %v6991 = vpop.permute.xlu0 %6990
  %6993 = vset.pattern.permute.xlu0 1
  %6994 = vperm.xlu0 %6993, %v6436
  %v6995 = vpop.permute.xlu0 %6994
  %6997 = vset.pattern.permute.xlu0 1
  %6998 = vperm.xlu0 %6997, %v6437
  %v6999 = vpop.permute.xlu0 %6998
  %7001 = vset.pattern.permute.xlu0 1
  %7002 = vperm.xlu0 %7001, %v6438
  %v7003 = vpop.permute.xlu0 %7002
  %7005 = vset.pattern.permute.xlu0 1
  %7006 = vperm.xlu0 %7005, %v6439
  %v7007 = vpop.permute.xlu0 %7006
  %7009 = vset.pattern.permute.xlu0 1
  %7010 = vperm.xlu0 %7009, %v6440
  %v7011 = vpop.permute.xlu0 %7010
  %7013 = vset.pattern.permute.xlu0 1
  %7014 = vperm.xlu0 %7013, %v6441
  %v7015 = vpop.permute.xlu0 %7014
  %7017 = vset.pattern.permute.xlu0 1
  %7018 = vperm.xlu0 %7017, %v6442
  %v7019 = vpop.permute.xlu0 %7018
  %7021 = vset.pattern.permute.xlu0 1
  %7022 = vperm.xlu0 %7021, %v6443
  %v7023 = vpop.permute.xlu0 %7022
  %7025 = vset.pattern.permute.xlu0 1
  %7026 = vperm.xlu0 %7025, %v6444
  %v7027 = vpop.permute.xlu0 %7026
  %7029 = vset.pattern.permute.xlu0 1
  %7030 = vperm.xlu0 %7029, %v6445
  %v7031 = vpop.permute.xlu0 %7030
  %7033 = vset.pattern.permute.xlu0 1
  %7034 = vperm.xlu0 %7033, %v6446
  %v7035 = vpop.permute.xlu0 %7034
  %7037 = vset.pattern.permute.xlu0 1
  %7038 = vperm.xlu0 %7037, %v6447
  %v7039 = vpop.permute.xlu0 %7038
  %7041 = vset.pattern.permute.xlu0 1
  %7042 = vperm.xlu0 %7041, %v6448
  %v7043 = vpop.permute.xlu0 %7042
  %7045 = vset.pattern.permute.xlu0 1
  %7046 = vperm.xlu0 %7045, %v6449
  %v7047 = vpop.permute.xlu0 %7046
  %7049 = vset.pattern.permute.xlu0 1
  %7050 = vperm.xlu0 %7049, %v6450
  %v7051 = vpop.permute.xlu0 %7050
  %7053 = vset.pattern.permute.xlu0 1
  %7054 = vperm.xlu0 %7053, %v6451
  %v7055 = vpop.permute.xlu0 %7054
  %7057 = vset.pattern.permute.xlu0 1
  %7058 = vperm.xlu0 %7057, %v6452
  %v7059 = vpop.permute.xlu0 %7058
  %7061 = vset.pattern.permute.xlu0 1
  %7062 = vperm.xlu0 %7061, %v6453
  %v7063 = vpop.permute.xlu0 %7062
  %7065 = vset.pattern.permute.xlu0 1
  %7066 = vperm.xlu0 %7065, %v6454
  %v7067 = vpop.permute.xlu0 %7066
  %7069 = vset.pattern.permute.xlu0 1
  %7070 = vperm.xlu0 %7069, %v6455
  %v7071 = vpop.permute.xlu0 %7070
  %7073 = vset.pattern.permute.xlu0 1
  %7074 = vperm.xlu0 %7073, %v6456
  %v7075 = vpop.permute.xlu0 %7074
  %7077 = vset.pattern.permute.xlu0 1
  %7078 = vperm.xlu0 %7077, %v6457
  %v7079 = vpop.permute.xlu0 %7078
  %7081 = vset.pattern.permute.xlu0 1
  %7082 = vperm.xlu0 %7081, %v6458
  %v7083 = vpop.permute.xlu0 %7082
  %7085 = vset.pattern.permute.xlu0 1
  %7086 = vperm.xlu0 %7085, %v6459
  %v7087 = vpop.permute.xlu0 %7086
  %7089 = vset.pattern.permute.xlu0 1
  %7090 = vperm.xlu0 %7089, %v6460
  %v7091 = vpop.permute.xlu0 %7090
  %7093 = vset.pattern.permute.xlu0 1
  %7094 = vperm.xlu0 %7093, %v6461
  %v7095 = vpop.permute.xlu0 %7094
  %7097 = vset.pattern.permute.xlu0 1
  %7098 = vperm.xlu0 %7097, %v6462
  %v7099 = vpop.permute.xlu0 %7098
  %7101 = vset.pattern.permute.xlu0 1
  %7102 = vperm.xlu0 %7101, %v6463
  %v7103 = vpop.permute.xlu0 %7102
  %7105 = vset.pattern.permute.xlu0 1
  %7106 = vperm.xlu0 %7105, %v6464
  %v7107 = vpop.permute.xlu0 %7106
  %7109 = vset.pattern.permute.xlu0 1
  %7110 = vperm.xlu0 %7109, %v6465
  %v7111 = vpop.permute.xlu0 %7110
  %7113 = vset.pattern.permute.xlu0 1
  %7114 = vperm.xlu0 %7113, %v6466
  %v7115 = vpop.permute.xlu0 %7114
  %7117 = vset.pattern.permute.xlu0 1
  %7118 = vperm.xlu0 %7117, %v6467
  %v7119 = vpop.permute.xlu0 %7118
  %7121 = vset.pattern.permute.xlu0 1
  %7122 = vperm.xlu0 %7121, %v6468
  %v7123 = vpop.permute.xlu0 %7122
  %7125 = vset.pattern.permute.xlu0 1
  %7126 = vperm.xlu0 %7125, %v6469
  %v7127 = vpop.permute.xlu0 %7126
  %7129 = vset.pattern.permute.xlu0 1
  %7130 = vperm.xlu0 %7129, %v6470
  %v7131 = vpop.permute.xlu0 %7130
  %7133 = vset.pattern.permute.xlu0 1
  %7134 = vperm.xlu0 %7133, %v6471
  %v7135 = vpop.permute.xlu0 %7134
  %7137 = vset.pattern.permute.xlu0 1
  %7138 = vperm.xlu0 %7137, %v6472
  %v7139 = vpop.permute.xlu0 %7138
  %7141 = vset.pattern.permute.xlu0 1
  %7142 = vperm.xlu0 %7141, %v6473
  %v7143 = vpop.permute.xlu0 %7142
  %7145 = vset.pattern.permute.xlu0 1
  %7146 = vperm.xlu0 %7145, %v6474
  %v7147 = vpop.permute.xlu0 %7146
  %7149 = vset.pattern.permute.xlu0 1
  %7150 = vperm.xlu0 %7149, %v6475
  %v7151 = vpop.permute.xlu0 %7150
  %7153 = vset.pattern.permute.xlu0 1
  %7154 = vperm.xlu0 %7153, %v6476
  %v7155 = vpop.permute.xlu0 %7154
  %7157 = vset.pattern.permute.xlu0 1
  %7158 = vperm.xlu0 %7157, %v6477
  %v7159 = vpop.permute.xlu0 %7158
  %7161 = vset.pattern.permute.xlu0 1
  %7162 = vperm.xlu0 %7161, %v6478
  %v7163 = vpop.permute.xlu0 %7162
  %7165 = vset.pattern.permute.xlu0 1
  %7166 = vperm.xlu0 %7165, %v6479
  %v7167 = vpop.permute.xlu0 %7166
  %7169 = vset.pattern.permute.xlu0 1
  %7170 = vperm.xlu0 %7169, %v6480
  %v7171 = vpop.permute.xlu0 %7170
  %7173 = vset.pattern.permute.xlu0 1
  %7174 = vperm.xlu0 %7173, %v6481
  %v7175 = vpop.permute.xlu0 %7174
  %7177 = vset.pattern.permute.xlu0 1
  %7178 = vperm.xlu0 %7177, %v6482
  %v7179 = vpop.permute.xlu0 %7178
  %7181 = vset.pattern.permute.xlu0 1
  %7182 = vperm.xlu0 %7181, %v6483
  %v7183 = vpop.permute.xlu0 %7182
  %7185 = vset.pattern.permute.xlu0 1
  %7186 = vperm.xlu0 %7185, %v6484
  %v7187 = vpop.permute.xlu0 %7186
  %7189 = vset.pattern.permute.xlu0 1
  %7190 = vperm.xlu0 %7189, %v6485
  %v7191 = vpop.permute.xlu0 %7190
  %7193 = vset.pattern.permute.xlu0 1
  %7194 = vperm.xlu0 %7193, %v6486
  %v7195 = vpop.permute.xlu0 %7194
  %v7197 = vlaneseq
  %v7198 = vshrl.u32 %v7197, 7
  %v7199 = vsub.s32 0, %v7198
  %v7200 = vrot.slane %v6940, %v7199
  %v7201 = vmul.f32 %v6943, %v7200
  %v7202 = vmul.f32 %v6947, %v7200
  %v7203 = vmul.f32 %v6951, %v7200
  %v7204 = vmul.f32 %v6955, %v7200
  %v7205 = vmul.f32 %v6959, %v7200
  %v7206 = vmul.f32 %v6963, %v7200
  %v7207 = vmul.f32 %v6967, %v7200
  %v7208 = vmul.f32 %v6971, %v7200
  %v7209 = vmul.f32 %v6975, %v7200
  %v7210 = vmul.f32 %v6979, %v7200
  %v7211 = vmul.f32 %v6983, %v7200
  %v7212 = vmul.f32 %v6987, %v7200
  %v7213 = vmul.f32 %v6991, %v7200
  %v7214 = vmul.f32 %v6995, %v7200
  %v7215 = vmul.f32 %v6999, %v7200
  %v7216 = vmul.f32 %v7003, %v7200
  %v7217 = vmul.f32 %v7007, %v7200
  %v7218 = vmul.f32 %v7011, %v7200
  %v7219 = vmul.f32 %v7015, %v7200
  %v7220 = vmul.f32 %v7019, %v7200
  %v7221 = vmul.f32 %v7023, %v7200
  %v7222 = vmul.f32 %v7027, %v7200
  %v7223 = vmul.f32 %v7031, %v7200
  %v7224 = vmul.f32 %v7035, %v7200
  %v7225 = vmul.f32 %v7039, %v7200
  %v7226 = vmul.f32 %v7043, %v7200
  %v7227 = vmul.f32 %v7047, %v7200
  %v7228 = vmul.f32 %v7051, %v7200
  %v7229 = vmul.f32 %v7055, %v7200
  %v7230 = vmul.f32 %v7059, %v7200
  %v7231 = vmul.f32 %v7063, %v7200
  %v7232 = vmul.f32 %v7067, %v7200
  %v7233 = vmul.f32 %v7071, %v7200
  %v7234 = vmul.f32 %v7075, %v7200
  %v7235 = vmul.f32 %v7079, %v7200
  %v7236 = vmul.f32 %v7083, %v7200
  %v7237 = vmul.f32 %v7087, %v7200
  %v7238 = vmul.f32 %v7091, %v7200
  %v7239 = vmul.f32 %v7095, %v7200
  %v7240 = vmul.f32 %v7099, %v7200
  %v7241 = vmul.f32 %v7103, %v7200
  %v7242 = vmul.f32 %v7107, %v7200
  %v7243 = vmul.f32 %v7111, %v7200
  %v7244 = vmul.f32 %v7115, %v7200
  %v7245 = vmul.f32 %v7119, %v7200
  %v7246 = vmul.f32 %v7123, %v7200
  %v7247 = vmul.f32 %v7127, %v7200
  %v7248 = vmul.f32 %v7131, %v7200
  %v7249 = vmul.f32 %v7135, %v7200
  %v7250 = vmul.f32 %v7139, %v7200
  %v7251 = vmul.f32 %v7143, %v7200
  %v7252 = vmul.f32 %v7147, %v7200
  %v7253 = vmul.f32 %v7151, %v7200
  %v7254 = vmul.f32 %v7155, %v7200
  %v7255 = vmul.f32 %v7159, %v7200
  %v7256 = vmul.f32 %v7163, %v7200
  %v7257 = vmul.f32 %v7167, %v7200
  %v7258 = vmul.f32 %v7171, %v7200
  %v7259 = vmul.f32 %v7175, %v7200
  %v7260 = vmul.f32 %v7179, %v7200
  %v7261 = vmul.f32 %v7183, %v7200
  %v7262 = vmul.f32 %v7187, %v7200
  %v7263 = vmul.f32 %v7191, %v7200
  %v7264 = vmul.f32 %v7195, %v7200
  %v7265 = vadd.f32 %v6876, %v7201
  %v7266 = vadd.f32 %v6877, %v7202
  %v7267 = vadd.f32 %v6878, %v7203
  %v7268 = vadd.f32 %v6879, %v7204
  %v7269 = vadd.f32 %v6880, %v7205
  %v7270 = vadd.f32 %v6881, %v7206
  %v7271 = vadd.f32 %v6882, %v7207
  %v7272 = vadd.f32 %v6883, %v7208
  %v7273 = vadd.f32 %v6884, %v7209
  %v7274 = vadd.f32 %v6885, %v7210
  %v7275 = vadd.f32 %v6886, %v7211
  %v7276 = vadd.f32 %v6887, %v7212
  %v7277 = vadd.f32 %v6888, %v7213
  %v7278 = vadd.f32 %v6889, %v7214
  %v7279 = vadd.f32 %v6890, %v7215
  %v7280 = vadd.f32 %v6891, %v7216
  %v7281 = vadd.f32 %v6892, %v7217
  %v7282 = vadd.f32 %v6893, %v7218
  %v7283 = vadd.f32 %v6894, %v7219
  %v7284 = vadd.f32 %v6895, %v7220
  %v7285 = vadd.f32 %v6896, %v7221
  %v7286 = vadd.f32 %v6897, %v7222
  %v7287 = vadd.f32 %v6898, %v7223
  %v7288 = vadd.f32 %v6899, %v7224
  %v7289 = vadd.f32 %v6900, %v7225
  %v7290 = vadd.f32 %v6901, %v7226
  %v7291 = vadd.f32 %v6902, %v7227
  %v7292 = vadd.f32 %v6903, %v7228
  %v7293 = vadd.f32 %v6904, %v7229
  %v7294 = vadd.f32 %v6905, %v7230
  %v7295 = vadd.f32 %v6906, %v7231
  %v7296 = vadd.f32 %v6907, %v7232
  %v7297 = vadd.f32 %v6908, %v7233
  %v7298 = vadd.f32 %v6909, %v7234
  %v7299 = vadd.f32 %v6910, %v7235
  %v7300 = vadd.f32 %v6911, %v7236
  %v7301 = vadd.f32 %v6912, %v7237
  %v7302 = vadd.f32 %v6913, %v7238
  %v7303 = vadd.f32 %v6914, %v7239
  %v7304 = vadd.f32 %v6915, %v7240
  %v7305 = vadd.f32 %v6916, %v7241
  %v7306 = vadd.f32 %v6917, %v7242
  %v7307 = vadd.f32 %v6918, %v7243
  %v7308 = vadd.f32 %v6919, %v7244
  %v7309 = vadd.f32 %v6920, %v7245
  %v7310 = vadd.f32 %v6921, %v7246
  %v7311 = vadd.f32 %v6922, %v7247
  %v7312 = vadd.f32 %v6923, %v7248
  %v7313 = vadd.f32 %v6924, %v7249
  %v7314 = vadd.f32 %v6925, %v7250
  %v7315 = vadd.f32 %v6926, %v7251
  %v7316 = vadd.f32 %v6927, %v7252
  %v7317 = vadd.f32 %v6928, %v7253
  %v7318 = vadd.f32 %v6929, %v7254
  %v7319 = vadd.f32 %v6930, %v7255
  %v7320 = vadd.f32 %v6931, %v7256
  %v7321 = vadd.f32 %v6932, %v7257
  %v7322 = vadd.f32 %v6933, %v7258
  %v7323 = vadd.f32 %v6934, %v7259
  %v7324 = vadd.f32 %v6935, %v7260
  %v7325 = vadd.f32 %v6936, %v7261
  %v7326 = vadd.f32 %v6937, %v7262
  %v7327 = vadd.f32 %v6938, %v7263
  %v7328 = vadd.f32 %v6939, %v7264
  %v7329 = vld [vmem:[%s0 + $0x11] sm:$0x1]
  %7330 = vset.pattern.permute.xlu0 2
  %7331 = vperm.xlu0 %7330, %v6423
  %v7332 = vpop.permute.xlu0 %7331
  %7334 = vset.pattern.permute.xlu0 2
  %7335 = vperm.xlu0 %7334, %v6424
  %v7336 = vpop.permute.xlu0 %7335
  %7338 = vset.pattern.permute.xlu0 2
  %7339 = vperm.xlu0 %7338, %v6425
  %v7340 = vpop.permute.xlu0 %7339
  %7342 = vset.pattern.permute.xlu0 2
  %7343 = vperm.xlu0 %7342, %v6426
  %v7344 = vpop.permute.xlu0 %7343
  %7346 = vset.pattern.permute.xlu0 2
  %7347 = vperm.xlu0 %7346, %v6427
  %v7348 = vpop.permute.xlu0 %7347
  %7350 = vset.pattern.permute.xlu0 2
  %7351 = vperm.xlu0 %7350, %v6428
  %v7352 = vpop.permute.xlu0 %7351
  %7354 = vset.pattern.permute.xlu0 2
  %7355 = vperm.xlu0 %7354, %v6429
  %v7356 = vpop.permute.xlu0 %7355
  %7358 = vset.pattern.permute.xlu0 2
  %7359 = vperm.xlu0 %7358, %v6430
  %v7360 = vpop.permute.xlu0 %7359
  %7362 = vset.pattern.permute.xlu0 2
  %7363 = vperm.xlu0 %7362, %v6431
  %v7364 = vpop.permute.xlu0 %7363
  %7366 = vset.pattern.permute.xlu0 2
  %7367 = vperm.xlu0 %7366, %v6432
  %v7368 = vpop.permute.xlu0 %7367
  %7370 = vset.pattern.permute.xlu0 2
  %7371 = vperm.xlu0 %7370, %v6433
  %v7372 = vpop.permute.xlu0 %7371
  %7374 = vset.pattern.permute.xlu0 2
  %7375 = vperm.xlu0 %7374, %v6434
  %v7376 = vpop.permute.xlu0 %7375
  %7378 = vset.pattern.permute.xlu0 2
  %7379 = vperm.xlu0 %7378, %v6435
  %v7380 = vpop.permute.xlu0 %7379
  %7382 = vset.pattern.permute.xlu0 2
  %7383 = vperm.xlu0 %7382, %v6436
  %v7384 = vpop.permute.xlu0 %7383
  %7386 = vset.pattern.permute.xlu0 2
  %7387 = vperm.xlu0 %7386, %v6437
  %v7388 = vpop.permute.xlu0 %7387
  %7390 = vset.pattern.permute.xlu0 2
  %7391 = vperm.xlu0 %7390, %v6438
  %v7392 = vpop.permute.xlu0 %7391
  %7394 = vset.pattern.permute.xlu0 2
  %7395 = vperm.xlu0 %7394, %v6439
  %v7396 = vpop.permute.xlu0 %7395
  %7398 = vset.pattern.permute.xlu0 2
  %7399 = vperm.xlu0 %7398, %v6440
  %v7400 = vpop.permute.xlu0 %7399
  %7402 = vset.pattern.permute.xlu0 2
  %7403 = vperm.xlu0 %7402, %v6441
  %v7404 = vpop.permute.xlu0 %7403
  %7406 = vset.pattern.permute.xlu0 2
  %7407 = vperm.xlu0 %7406, %v6442
  %v7408 = vpop.permute.xlu0 %7407
  %7410 = vset.pattern.permute.xlu0 2
  %7411 = vperm.xlu0 %7410, %v6443
  %v7412 = vpop.permute.xlu0 %7411
  %7414 = vset.pattern.permute.xlu0 2
  %7415 = vperm.xlu0 %7414, %v6444
  %v7416 = vpop.permute.xlu0 %7415
  %7418 = vset.pattern.permute.xlu0 2
  %7419 = vperm.xlu0 %7418, %v6445
  %v7420 = vpop.permute.xlu0 %7419
  %7422 = vset.pattern.permute.xlu0 2
  %7423 = vperm.xlu0 %7422, %v6446
  %v7424 = vpop.permute.xlu0 %7423
  %7426 = vset.pattern.permute.xlu0 2
  %7427 = vperm.xlu0 %7426, %v6447
  %v7428 = vpop.permute.xlu0 %7427
  %7430 = vset.pattern.permute.xlu0 2
  %7431 = vperm.xlu0 %7430, %v6448
  %v7432 = vpop.permute.xlu0 %7431
  %7434 = vset.pattern.permute.xlu0 2
  %7435 = vperm.xlu0 %7434, %v6449
  %v7436 = vpop.permute.xlu0 %7435
  %7438 = vset.pattern.permute.xlu0 2
  %7439 = vperm.xlu0 %7438, %v6450
  %v7440 = vpop.permute.xlu0 %7439
  %7442 = vset.pattern.permute.xlu0 2
  %7443 = vperm.xlu0 %7442, %v6451
  %v7444 = vpop.permute.xlu0 %7443
  %7446 = vset.pattern.permute.xlu0 2
  %7447 = vperm.xlu0 %7446, %v6452
  %v7448 = vpop.permute.xlu0 %7447
  %7450 = vset.pattern.permute.xlu0 2
  %7451 = vperm.xlu0 %7450, %v6453
  %v7452 = vpop.permute.xlu0 %7451
  %7454 = vset.pattern.permute.xlu0 2
  %7455 = vperm.xlu0 %7454, %v6454
  %v7456 = vpop.permute.xlu0 %7455
  %7458 = vset.pattern.permute.xlu0 2
  %7459 = vperm.xlu0 %7458, %v6455
  %v7460 = vpop.permute.xlu0 %7459
  %7462 = vset.pattern.permute.xlu0 2
  %7463 = vperm.xlu0 %7462, %v6456
  %v7464 = vpop.permute.xlu0 %7463
  %7466 = vset.pattern.permute.xlu0 2
  %7467 = vperm.xlu0 %7466, %v6457
  %v7468 = vpop.permute.xlu0 %7467
  %7470 = vset.pattern.permute.xlu0 2
  %7471 = vperm.xlu0 %7470, %v6458
  %v7472 = vpop.permute.xlu0 %7471
  %7474 = vset.pattern.permute.xlu0 2
  %7475 = vperm.xlu0 %7474, %v6459
  %v7476 = vpop.permute.xlu0 %7475
  %7478 = vset.pattern.permute.xlu0 2
  %7479 = vperm.xlu0 %7478, %v6460
  %v7480 = vpop.permute.xlu0 %7479
  %7482 = vset.pattern.permute.xlu0 2
  %7483 = vperm.xlu0 %7482, %v6461
  %v7484 = vpop.permute.xlu0 %7483
  %7486 = vset.pattern.permute.xlu0 2
  %7487 = vperm.xlu0 %7486, %v6462
  %v7488 = vpop.permute.xlu0 %7487
  %7490 = vset.pattern.permute.xlu0 2
  %7491 = vperm.xlu0 %7490, %v6463
  %v7492 = vpop.permute.xlu0 %7491
  %7494 = vset.pattern.permute.xlu0 2
  %7495 = vperm.xlu0 %7494, %v6464
  %v7496 = vpop.permute.xlu0 %7495
  %7498 = vset.pattern.permute.xlu0 2
  %7499 = vperm.xlu0 %7498, %v6465
  %v7500 = vpop.permute.xlu0 %7499
  %7502 = vset.pattern.permute.xlu0 2
  %7503 = vperm.xlu0 %7502, %v6466
  %v7504 = vpop.permute.xlu0 %7503
  %7506 = vset.pattern.permute.xlu0 2
  %7507 = vperm.xlu0 %7506, %v6467
  %v7508 = vpop.permute.xlu0 %7507
  %7510 = vset.pattern.permute.xlu0 2
  %7511 = vperm.xlu0 %7510, %v6468
  %v7512 = vpop.permute.xlu0 %7511
  %7514 = vset.pattern.permute.xlu0 2
  %7515 = vperm.xlu0 %7514, %v6469
  %v7516 = vpop.permute.xlu0 %7515
  %7518 = vset.pattern.permute.xlu0 2
  %7519 = vperm.xlu0 %7518, %v6470
  %v7520 = vpop.permute.xlu0 %7519
  %7522 = vset.pattern.permute.xlu0 2
  %7523 = vperm.xlu0 %7522, %v6471
  %v7524 = vpop.permute.xlu0 %7523
  %7526 = vset.pattern.permute.xlu0 2
  %7527 = vperm.xlu0 %7526, %v6472
  %v7528 = vpop.permute.xlu0 %7527
  %7530 = vset.pattern.permute.xlu0 2
  %7531 = vperm.xlu0 %7530, %v6473
  %v7532 = vpop.permute.xlu0 %7531
  %7534 = vset.pattern.permute.xlu0 2
  %7535 = vperm.xlu0 %7534, %v6474
  %v7536 = vpop.permute.xlu0 %7535
  %7538 = vset.pattern.permute.xlu0 2
  %7539 = vperm.xlu0 %7538, %v6475
  %v7540 = vpop.permute.xlu0 %7539
  %7542 = vset.pattern.permute.xlu0 2
  %7543 = vperm.xlu0 %7542, %v6476
  %v7544 = vpop.permute.xlu0 %7543
  %7546 = vset.pattern.permute.xlu0 2
  %7547 = vperm.xlu0 %7546, %v6477
  %v7548 = vpop.permute.xlu0 %7547
  %7550 = vset.pattern.permute.xlu0 2
  %7551 = vperm.xlu0 %7550, %v6478
  %v7552 = vpop.permute.xlu0 %7551
  %7554 = vset.pattern.permute.xlu0 2
  %7555 = vperm.xlu0 %7554, %v6479
  %v7556 = vpop.permute.xlu0 %7555
  %7558 = vset.pattern.permute.xlu0 2
  %7559 = vperm.xlu0 %7558, %v6480
  %v7560 = vpop.permute.xlu0 %7559
  %7562 = vset.pattern.permute.xlu0 2
  %7563 = vperm.xlu0 %7562, %v6481
  %v7564 = vpop.permute.xlu0 %7563
  %7566 = vset.pattern.permute.xlu0 2
  %7567 = vperm.xlu0 %7566, %v6482
  %v7568 = vpop.permute.xlu0 %7567
  %7570 = vset.pattern.permute.xlu0 2
  %7571 = vperm.xlu0 %7570, %v6483
  %v7572 = vpop.permute.xlu0 %7571
  %7574 = vset.pattern.permute.xlu0 2
  %7575 = vperm.xlu0 %7574, %v6484
  %v7576 = vpop.permute.xlu0 %7575
  %7578 = vset.pattern.permute.xlu0 2
  %7579 = vperm.xlu0 %7578, %v6485
  %v7580 = vpop.permute.xlu0 %7579
  %7582 = vset.pattern.permute.xlu0 2
  %7583 = vperm.xlu0 %7582, %v6486
  %v7584 = vpop.permute.xlu0 %7583
  %v7586 = vlaneseq
  %v7587 = vshrl.u32 %v7586, 7
  %v7588 = vsub.s32 0, %v7587
  %v7589 = vrot.slane %v7329, %v7588
  %v7590 = vmul.f32 %v7332, %v7589
  %v7591 = vmul.f32 %v7336, %v7589
  %v7592 = vmul.f32 %v7340, %v7589
  %v7593 = vmul.f32 %v7344, %v7589
  %v7594 = vmul.f32 %v7348, %v7589
  %v7595 = vmul.f32 %v7352, %v7589
  %v7596 = vmul.f32 %v7356, %v7589
  %v7597 = vmul.f32 %v7360, %v7589
  %v7598 = vmul.f32 %v7364, %v7589
  %v7599 = vmul.f32 %v7368, %v7589
  %v7600 = vmul.f32 %v7372, %v7589
  %v7601 = vmul.f32 %v7376, %v7589
  %v7602 = vmul.f32 %v7380, %v7589
  %v7603 = vmul.f32 %v7384, %v7589
  %v7604 = vmul.f32 %v7388, %v7589
  %v7605 = vmul.f32 %v7392, %v7589
  %v7606 = vmul.f32 %v7396, %v7589
  %v7607 = vmul.f32 %v7400, %v7589
  %v7608 = vmul.f32 %v7404, %v7589
  %v7609 = vmul.f32 %v7408, %v7589
  %v7610 = vmul.f32 %v7412, %v7589
  %v7611 = vmul.f32 %v7416, %v7589
  %v7612 = vmul.f32 %v7420, %v7589
  %v7613 = vmul.f32 %v7424, %v7589
  %v7614 = vmul.f32 %v7428, %v7589
  %v7615 = vmul.f32 %v7432, %v7589
  %v7616 = vmul.f32 %v7436, %v7589
  %v7617 = vmul.f32 %v7440, %v7589
  %v7618 = vmul.f32 %v7444, %v7589
  %v7619 = vmul.f32 %v7448, %v7589
  %v7620 = vmul.f32 %v7452, %v7589
  %v7621 = vmul.f32 %v7456, %v7589
  %v7622 = vmul.f32 %v7460, %v7589
  %v7623 = vmul.f32 %v7464, %v7589
  %v7624 = vmul.f32 %v7468, %v7589
  %v7625 = vmul.f32 %v7472, %v7589
  %v7626 = vmul.f32 %v7476, %v7589
  %v7627 = vmul.f32 %v7480, %v7589
  %v7628 = vmul.f32 %v7484, %v7589
  %v7629 = vmul.f32 %v7488, %v7589
  %v7630 = vmul.f32 %v7492, %v7589
  %v7631 = vmul.f32 %v7496, %v7589
  %v7632 = vmul.f32 %v7500, %v7589
  %v7633 = vmul.f32 %v7504, %v7589
  %v7634 = vmul.f32 %v7508, %v7589
  %v7635 = vmul.f32 %v7512, %v7589
  %v7636 = vmul.f32 %v7516, %v7589
  %v7637 = vmul.f32 %v7520, %v7589
  %v7638 = vmul.f32 %v7524, %v7589
  %v7639 = vmul.f32 %v7528, %v7589
  %v7640 = vmul.f32 %v7532, %v7589
  %v7641 = vmul.f32 %v7536, %v7589
  %v7642 = vmul.f32 %v7540, %v7589
  %v7643 = vmul.f32 %v7544, %v7589
  %v7644 = vmul.f32 %v7548, %v7589
  %v7645 = vmul.f32 %v7552, %v7589
  %v7646 = vmul.f32 %v7556, %v7589
  %v7647 = vmul.f32 %v7560, %v7589
  %v7648 = vmul.f32 %v7564, %v7589
  %v7649 = vmul.f32 %v7568, %v7589
  %v7650 = vmul.f32 %v7572, %v7589
  %v7651 = vmul.f32 %v7576, %v7589
  %v7652 = vmul.f32 %v7580, %v7589
  %v7653 = vmul.f32 %v7584, %v7589
  %v7654 = vadd.f32 %v7265, %v7590
  %v7655 = vadd.f32 %v7266, %v7591
  %v7656 = vadd.f32 %v7267, %v7592
  %v7657 = vadd.f32 %v7268, %v7593
  %v7658 = vadd.f32 %v7269, %v7594
  %v7659 = vadd.f32 %v7270, %v7595
  %v7660 = vadd.f32 %v7271, %v7596
  %v7661 = vadd.f32 %v7272, %v7597
  %v7662 = vadd.f32 %v7273, %v7598
  %v7663 = vadd.f32 %v7274, %v7599
  %v7664 = vadd.f32 %v7275, %v7600
  %v7665 = vadd.f32 %v7276, %v7601
  %v7666 = vadd.f32 %v7277, %v7602
  %v7667 = vadd.f32 %v7278, %v7603
  %v7668 = vadd.f32 %v7279, %v7604
  %v7669 = vadd.f32 %v7280, %v7605
  %v7670 = vadd.f32 %v7281, %v7606
  %v7671 = vadd.f32 %v7282, %v7607
  %v7672 = vadd.f32 %v7283, %v7608
  %v7673 = vadd.f32 %v7284, %v7609
  %v7674 = vadd.f32 %v7285, %v7610
  %v7675 = vadd.f32 %v7286, %v7611
  %v7676 = vadd.f32 %v7287, %v7612
  %v7677 = vadd.f32 %v7288, %v7613
  %v7678 = vadd.f32 %v7289, %v7614
  %v7679 = vadd.f32 %v7290, %v7615
  %v7680 = vadd.f32 %v7291, %v7616
  %v7681 = vadd.f32 %v7292, %v7617
  %v7682 = vadd.f32 %v7293, %v7618
  %v7683 = vadd.f32 %v7294, %v7619
  %v7684 = vadd.f32 %v7295, %v7620
  %v7685 = vadd.f32 %v7296, %v7621
  %v7686 = vadd.f32 %v7297, %v7622
  %v7687 = vadd.f32 %v7298, %v7623
  %v7688 = vadd.f32 %v7299, %v7624
  %v7689 = vadd.f32 %v7300, %v7625
  %v7690 = vadd.f32 %v7301, %v7626
  %v7691 = vadd.f32 %v7302, %v7627
  %v7692 = vadd.f32 %v7303, %v7628
  %v7693 = vadd.f32 %v7304, %v7629
  %v7694 = vadd.f32 %v7305, %v7630
  %v7695 = vadd.f32 %v7306, %v7631
  %v7696 = vadd.f32 %v7307, %v7632
  %v7697 = vadd.f32 %v7308, %v7633
  %v7698 = vadd.f32 %v7309, %v7634
  %v7699 = vadd.f32 %v7310, %v7635
  %v7700 = vadd.f32 %v7311, %v7636
  %v7701 = vadd.f32 %v7312, %v7637
  %v7702 = vadd.f32 %v7313, %v7638
  %v7703 = vadd.f32 %v7314, %v7639
  %v7704 = vadd.f32 %v7315, %v7640
  %v7705 = vadd.f32 %v7316, %v7641
  %v7706 = vadd.f32 %v7317, %v7642
  %v7707 = vadd.f32 %v7318, %v7643
  %v7708 = vadd.f32 %v7319, %v7644
  %v7709 = vadd.f32 %v7320, %v7645
  %v7710 = vadd.f32 %v7321, %v7646
  %v7711 = vadd.f32 %v7322, %v7647
  %v7712 = vadd.f32 %v7323, %v7648
  %v7713 = vadd.f32 %v7324, %v7649
  %v7714 = vadd.f32 %v7325, %v7650
  %v7715 = vadd.f32 %v7326, %v7651
  %v7716 = vadd.f32 %v7327, %v7652
  %v7717 = vadd.f32 %v7328, %v7653
  %s7718 = scalar_lea.vmem %s1, 48
  %v7719 = vld [vmem:[%s7718] sm:$0xff]
  %v7720 = vld [vmem:[%s7718 + $0x8] sm:$0xff]
  %v7721 = vld [vmem:[%s7718 + $0x18] sm:$0xff]
  %v7722 = vld [vmem:[%s7718 + $0x20] sm:$0xff]
  %v7723 = vld [vmem:[%s7718 + $0x30] sm:$0xff]
  %v7724 = vld [vmem:[%s7718 + $0x38] sm:$0xff]
  %v7725 = vld [vmem:[%s7718 + $0x48] sm:$0xff]
  %v7726 = vld [vmem:[%s7718 + $0x50] sm:$0xff]
  %v7727 = vld [vmem:[%s7718 + $0x60] sm:$0xff]
  %v7728 = vld [vmem:[%s7718 + $0x68] sm:$0xff]
  %v7729 = vld [vmem:[%s7718 + $0x78] sm:$0xff]
  %v7730 = vld [vmem:[%s7718 + $0x80] sm:$0xff]
  %v7731 = vld [vmem:[%s7718 + $0x90] sm:$0xff]
  %v7732 = vld [vmem:[%s7718 + $0x98] sm:$0xff]
  %v7733 = vld [vmem:[%s7718 + $0xa8] sm:$0xff]
  %v7734 = vld [vmem:[%s7718 + $0xb0] sm:$0xff]
  %v7735 = vld [vmem:[%s7718 + $0xc0] sm:$0xff]
  %v7736 = vld [vmem:[%s7718 + $0xc8] sm:$0xff]
  %v7737 = vld [vmem:[%s7718 + $0xd8] sm:$0xff]
  %v7738 = vld [vmem:[%s7718 + $0xe0] sm:$0xff]
  %v7739 = vld [vmem:[%s7718 + $0xf0] sm:$0xff]
  %v7740 = vld [vmem:[%s7718 + $0xf8] sm:$0xff]
  %v7741 = vld [vmem:[%s7718 + $0x108] sm:$0xff]
  %v7742 = vld [vmem:[%s7718 + $0x110] sm:$0xff]
  %v7743 = vld [vmem:[%s7718 + $0x120] sm:$0xff]
  %v7744 = vld [vmem:[%s7718 + $0x128] sm:$0xff]
  %v7745 = vld [vmem:[%s7718 + $0x138] sm:$0xff]
  %v7746 = vld [vmem:[%s7718 + $0x140] sm:$0xff]
  %v7747 = vld [vmem:[%s7718 + $0x150] sm:$0xff]
  %v7748 = vld [vmem:[%s7718 + $0x158] sm:$0xff]
  %v7749 = vld [vmem:[%s7718 + $0x168] sm:$0xff]
  %v7750 = vld [vmem:[%s7718 + $0x170] sm:$0xff]
  %v7751 = vld [vmem:[%s7718 + $0x1b0] sm:$0xff]
  %v7752 = vld [vmem:[%s7718 + $0x1b8] sm:$0xff]
  %v7753 = vld [vmem:[%s7718 + $0x1c8] sm:$0xff]
  %v7754 = vld [vmem:[%s7718 + $0x1d0] sm:$0xff]
  %v7755 = vld [vmem:[%s7718 + $0x1e0] sm:$0xff]
  %v7756 = vld [vmem:[%s7718 + $0x1e8] sm:$0xff]
  %v7757 = vld [vmem:[%s7718 + $0x1f8] sm:$0xff]
  %v7758 = vld [vmem:[%s7718 + $0x200] sm:$0xff]
  %v7759 = vld [vmem:[%s7718 + $0x210] sm:$0xff]
  %v7760 = vld [vmem:[%s7718 + $0x218] sm:$0xff]
  %v7761 = vld [vmem:[%s7718 + $0x228] sm:$0xff]
  %v7762 = vld [vmem:[%s7718 + $0x230] sm:$0xff]
  %v7763 = vld [vmem:[%s7718 + $0x240] sm:$0xff]
  %v7764 = vld [vmem:[%s7718 + $0x248] sm:$0xff]
  %v7765 = vld [vmem:[%s7718 + $0x258] sm:$0xff]
  %v7766 = vld [vmem:[%s7718 + $0x260] sm:$0xff]
  %v7767 = vld [vmem:[%s7718 + $0x270] sm:$0xff]
  %v7768 = vld [vmem:[%s7718 + $0x278] sm:$0xff]
  %v7769 = vld [vmem:[%s7718 + $0x288] sm:$0xff]
  %v7770 = vld [vmem:[%s7718 + $0x290] sm:$0xff]
  %v7771 = vld [vmem:[%s7718 + $0x2a0] sm:$0xff]
  %v7772 = vld [vmem:[%s7718 + $0x2a8] sm:$0xff]
  %v7773 = vld [vmem:[%s7718 + $0x2b8] sm:$0xff]
  %v7774 = vld [vmem:[%s7718 + $0x2c0] sm:$0xff]
  %v7775 = vld [vmem:[%s7718 + $0x2d0] sm:$0xff]
  %v7776 = vld [vmem:[%s7718 + $0x2d8] sm:$0xff]
  %v7777 = vld [vmem:[%s7718 + $0x2e8] sm:$0xff]
  %v7778 = vld [vmem:[%s7718 + $0x2f0] sm:$0xff]
  %v7779 = vld [vmem:[%s7718 + $0x300] sm:$0xff]
  %v7780 = vld [vmem:[%s7718 + $0x308] sm:$0xff]
  %v7781 = vld [vmem:[%s7718 + $0x318] sm:$0xff]
  %v7782 = vld [vmem:[%s7718 + $0x320] sm:$0xff]
  %v7783 = vld [vmem:[%s0 + $0x12] sm:$0x1]
  %7785 = vset.pattern.permute.xlu0 0
  %7786 = vperm.xlu0 %7785, %v7719
  %v7787 = vpop.permute.xlu0 %7786
  %7790 = vset.pattern.permute.xlu0 0
  %7791 = vperm.xlu0 %7790, %v7720
  %v7792 = vpop.permute.xlu0 %7791
  %7795 = vset.pattern.permute.xlu0 0
  %7796 = vperm.xlu0 %7795, %v7721
  %v7797 = vpop.permute.xlu0 %7796
  %7800 = vset.pattern.permute.xlu0 0
  %7801 = vperm.xlu0 %7800, %v7722
  %v7802 = vpop.permute.xlu0 %7801
  %7805 = vset.pattern.permute.xlu0 0
  %7806 = vperm.xlu0 %7805, %v7723
  %v7807 = vpop.permute.xlu0 %7806
  %7810 = vset.pattern.permute.xlu0 0
  %7811 = vperm.xlu0 %7810, %v7724
  %v7812 = vpop.permute.xlu0 %7811
  %7815 = vset.pattern.permute.xlu0 0
  %7816 = vperm.xlu0 %7815, %v7725
  %v7817 = vpop.permute.xlu0 %7816
  %7820 = vset.pattern.permute.xlu0 0
  %7821 = vperm.xlu0 %7820, %v7726
  %v7822 = vpop.permute.xlu0 %7821
  %7825 = vset.pattern.permute.xlu0 0
  %7826 = vperm.xlu0 %7825, %v7727
  %v7827 = vpop.permute.xlu0 %7826
  %7830 = vset.pattern.permute.xlu0 0
  %7831 = vperm.xlu0 %7830, %v7728
  %v7832 = vpop.permute.xlu0 %7831
  %7835 = vset.pattern.permute.xlu0 0
  %7836 = vperm.xlu0 %7835, %v7729
  %v7837 = vpop.permute.xlu0 %7836
  %7840 = vset.pattern.permute.xlu0 0
  %7841 = vperm.xlu0 %7840, %v7730
  %v7842 = vpop.permute.xlu0 %7841
  %7845 = vset.pattern.permute.xlu0 0
  %7846 = vperm.xlu0 %7845, %v7731
  %v7847 = vpop.permute.xlu0 %7846
  %7850 = vset.pattern.permute.xlu0 0
  %7851 = vperm.xlu0 %7850, %v7732
  %v7852 = vpop.permute.xlu0 %7851
  %7855 = vset.pattern.permute.xlu0 0
  %7856 = vperm.xlu0 %7855, %v7733
  %v7857 = vpop.permute.xlu0 %7856
  %7860 = vset.pattern.permute.xlu0 0
  %7861 = vperm.xlu0 %7860, %v7734
  %v7862 = vpop.permute.xlu0 %7861
  %7865 = vset.pattern.permute.xlu0 0
  %7866 = vperm.xlu0 %7865, %v7735
  %v7867 = vpop.permute.xlu0 %7866
  %7870 = vset.pattern.permute.xlu0 0
  %7871 = vperm.xlu0 %7870, %v7736
  %v7872 = vpop.permute.xlu0 %7871
  %7875 = vset.pattern.permute.xlu0 0
  %7876 = vperm.xlu0 %7875, %v7737
  %v7877 = vpop.permute.xlu0 %7876
  %7880 = vset.pattern.permute.xlu0 0
  %7881 = vperm.xlu0 %7880, %v7738
  %v7882 = vpop.permute.xlu0 %7881
  %7885 = vset.pattern.permute.xlu0 0
  %7886 = vperm.xlu0 %7885, %v7739
  %v7887 = vpop.permute.xlu0 %7886
  %7890 = vset.pattern.permute.xlu0 0
  %7891 = vperm.xlu0 %7890, %v7740
  %v7892 = vpop.permute.xlu0 %7891
  %7895 = vset.pattern.permute.xlu0 0
  %7896 = vperm.xlu0 %7895, %v7741
  %v7897 = vpop.permute.xlu0 %7896
  %7900 = vset.pattern.permute.xlu0 0
  %7901 = vperm.xlu0 %7900, %v7742
  %v7902 = vpop.permute.xlu0 %7901
  %7905 = vset.pattern.permute.xlu0 0
  %7906 = vperm.xlu0 %7905, %v7743
  %v7907 = vpop.permute.xlu0 %7906
  %7910 = vset.pattern.permute.xlu0 0
  %7911 = vperm.xlu0 %7910, %v7744
  %v7912 = vpop.permute.xlu0 %7911
  %7915 = vset.pattern.permute.xlu0 0
  %7916 = vperm.xlu0 %7915, %v7745
  %v7917 = vpop.permute.xlu0 %7916
  %7920 = vset.pattern.permute.xlu0 0
  %7921 = vperm.xlu0 %7920, %v7746
  %v7922 = vpop.permute.xlu0 %7921
  %7925 = vset.pattern.permute.xlu0 0
  %7926 = vperm.xlu0 %7925, %v7747
  %v7927 = vpop.permute.xlu0 %7926
  %7930 = vset.pattern.permute.xlu0 0
  %7931 = vperm.xlu0 %7930, %v7748
  %v7932 = vpop.permute.xlu0 %7931
  %7935 = vset.pattern.permute.xlu0 0
  %7936 = vperm.xlu0 %7935, %v7749
  %v7937 = vpop.permute.xlu0 %7936
  %7940 = vset.pattern.permute.xlu0 0
  %7941 = vperm.xlu0 %7940, %v7750
  %v7942 = vpop.permute.xlu0 %7941
  %7945 = vset.pattern.permute.xlu0 0
  %7946 = vperm.xlu0 %7945, %v7751
  %v7947 = vpop.permute.xlu0 %7946
  %7950 = vset.pattern.permute.xlu0 0
  %7951 = vperm.xlu0 %7950, %v7752
  %v7952 = vpop.permute.xlu0 %7951
  %7955 = vset.pattern.permute.xlu0 0
  %7956 = vperm.xlu0 %7955, %v7753
  %v7957 = vpop.permute.xlu0 %7956
  %7960 = vset.pattern.permute.xlu0 0
  %7961 = vperm.xlu0 %7960, %v7754
  %v7962 = vpop.permute.xlu0 %7961
  %7965 = vset.pattern.permute.xlu0 0
  %7966 = vperm.xlu0 %7965, %v7755
  %v7967 = vpop.permute.xlu0 %7966
  %7970 = vset.pattern.permute.xlu0 0
  %7971 = vperm.xlu0 %7970, %v7756
  %v7972 = vpop.permute.xlu0 %7971
  %7975 = vset.pattern.permute.xlu0 0
  %7976 = vperm.xlu0 %7975, %v7757
  %v7977 = vpop.permute.xlu0 %7976
  %7980 = vset.pattern.permute.xlu0 0
  %7981 = vperm.xlu0 %7980, %v7758
  %v7982 = vpop.permute.xlu0 %7981
  %7985 = vset.pattern.permute.xlu0 0
  %7986 = vperm.xlu0 %7985, %v7759
  %v7987 = vpop.permute.xlu0 %7986
  %7990 = vset.pattern.permute.xlu0 0
  %7991 = vperm.xlu0 %7990, %v7760
  %v7992 = vpop.permute.xlu0 %7991
  %7995 = vset.pattern.permute.xlu0 0
  %7996 = vperm.xlu0 %7995, %v7761
  %v7997 = vpop.permute.xlu0 %7996
  %8000 = vset.pattern.permute.xlu0 0
  %8001 = vperm.xlu0 %8000, %v7762
  %v8002 = vpop.permute.xlu0 %8001
  %8005 = vset.pattern.permute.xlu0 0
  %8006 = vperm.xlu0 %8005, %v7763
  %v8007 = vpop.permute.xlu0 %8006
  %8010 = vset.pattern.permute.xlu0 0
  %8011 = vperm.xlu0 %8010, %v7764
  %v8012 = vpop.permute.xlu0 %8011
  %8015 = vset.pattern.permute.xlu0 0
  %8016 = vperm.xlu0 %8015, %v7765
  %v8017 = vpop.permute.xlu0 %8016
  %8020 = vset.pattern.permute.xlu0 0
  %8021 = vperm.xlu0 %8020, %v7766
  %v8022 = vpop.permute.xlu0 %8021
  %8025 = vset.pattern.permute.xlu0 0
  %8026 = vperm.xlu0 %8025, %v7767
  %v8027 = vpop.permute.xlu0 %8026
  %8030 = vset.pattern.permute.xlu0 0
  %8031 = vperm.xlu0 %8030, %v7768
  %v8032 = vpop.permute.xlu0 %8031
  %8035 = vset.pattern.permute.xlu0 0
  %8036 = vperm.xlu0 %8035, %v7769
  %v8037 = vpop.permute.xlu0 %8036
  %8040 = vset.pattern.permute.xlu0 0
  %8041 = vperm.xlu0 %8040, %v7770
  %v8042 = vpop.permute.xlu0 %8041
  %8045 = vset.pattern.permute.xlu0 0
  %8046 = vperm.xlu0 %8045, %v7771
  %v8047 = vpop.permute.xlu0 %8046
  %8050 = vset.pattern.permute.xlu0 0
  %8051 = vperm.xlu0 %8050, %v7772
  %v8052 = vpop.permute.xlu0 %8051
  %8055 = vset.pattern.permute.xlu0 0
  %8056 = vperm.xlu0 %8055, %v7773
  %v8057 = vpop.permute.xlu0 %8056
  %8060 = vset.pattern.permute.xlu0 0
  %8061 = vperm.xlu0 %8060, %v7774
  %v8062 = vpop.permute.xlu0 %8061
  %8065 = vset.pattern.permute.xlu0 0
  %8066 = vperm.xlu0 %8065, %v7775
  %v8067 = vpop.permute.xlu0 %8066
  %8070 = vset.pattern.permute.xlu0 0
  %8071 = vperm.xlu0 %8070, %v7776
  %v8072 = vpop.permute.xlu0 %8071
  %8075 = vset.pattern.permute.xlu0 0
  %8076 = vperm.xlu0 %8075, %v7777
  %v8077 = vpop.permute.xlu0 %8076
  %8080 = vset.pattern.permute.xlu0 0
  %8081 = vperm.xlu0 %8080, %v7778
  %v8082 = vpop.permute.xlu0 %8081
  %8085 = vset.pattern.permute.xlu0 0
  %8086 = vperm.xlu0 %8085, %v7779
  %v8087 = vpop.permute.xlu0 %8086
  %8090 = vset.pattern.permute.xlu0 0
  %8091 = vperm.xlu0 %8090, %v7780
  %v8092 = vpop.permute.xlu0 %8091
  %8095 = vset.pattern.permute.xlu0 0
  %8096 = vperm.xlu0 %8095, %v7781
  %v8097 = vpop.permute.xlu0 %8096
  %8100 = vset.pattern.permute.xlu0 0
  %8101 = vperm.xlu0 %8100, %v7782
  %v8102 = vpop.permute.xlu0 %8101
  %v8104 = vlaneseq
  %v8105 = vshrl.u32 %v8104, 7
  %v8106 = vsub.s32 0, %v8105
  %v8107 = vrot.slane %v7783, %v8106
  %v8108 = vmul.f32 %v7787, %v8107
  %v8109 = vmul.f32 %v7792, %v8107
  %v8110 = vmul.f32 %v7797, %v8107
  %v8111 = vmul.f32 %v7802, %v8107
  %v8112 = vmul.f32 %v7807, %v8107
  %v8113 = vmul.f32 %v7812, %v8107
  %v8114 = vmul.f32 %v7817, %v8107
  %v8115 = vmul.f32 %v7822, %v8107
  %v8116 = vmul.f32 %v7827, %v8107
  %v8117 = vmul.f32 %v7832, %v8107
  %v8118 = vmul.f32 %v7837, %v8107
  %v8119 = vmul.f32 %v7842, %v8107
  %v8120 = vmul.f32 %v7847, %v8107
  %v8121 = vmul.f32 %v7852, %v8107
  %v8122 = vmul.f32 %v7857, %v8107
  %v8123 = vmul.f32 %v7862, %v8107
  %v8124 = vmul.f32 %v7867, %v8107
  %v8125 = vmul.f32 %v7872, %v8107
  %v8126 = vmul.f32 %v7877, %v8107
  %v8127 = vmul.f32 %v7882, %v8107
  %v8128 = vmul.f32 %v7887, %v8107
  %v8129 = vmul.f32 %v7892, %v8107
  %v8130 = vmul.f32 %v7897, %v8107
  %v8131 = vmul.f32 %v7902, %v8107
  %v8132 = vmul.f32 %v7907, %v8107
  %v8133 = vmul.f32 %v7912, %v8107
  %v8134 = vmul.f32 %v7917, %v8107
  %v8135 = vmul.f32 %v7922, %v8107
  %v8136 = vmul.f32 %v7927, %v8107
  %v8137 = vmul.f32 %v7932, %v8107
  %v8138 = vmul.f32 %v7937, %v8107
  %v8139 = vmul.f32 %v7942, %v8107
  %v8140 = vmul.f32 %v7947, %v8107
  %v8141 = vmul.f32 %v7952, %v8107
  %v8142 = vmul.f32 %v7957, %v8107
  %v8143 = vmul.f32 %v7962, %v8107
  %v8144 = vmul.f32 %v7967, %v8107
  %v8145 = vmul.f32 %v7972, %v8107
  %v8146 = vmul.f32 %v7977, %v8107
  %v8147 = vmul.f32 %v7982, %v8107
  %v8148 = vmul.f32 %v7987, %v8107
  %v8149 = vmul.f32 %v7992, %v8107
  %v8150 = vmul.f32 %v7997, %v8107
  %v8151 = vmul.f32 %v8002, %v8107
  %v8152 = vmul.f32 %v8007, %v8107
  %v8153 = vmul.f32 %v8012, %v8107
  %v8154 = vmul.f32 %v8017, %v8107
  %v8155 = vmul.f32 %v8022, %v8107
  %v8156 = vmul.f32 %v8027, %v8107
  %v8157 = vmul.f32 %v8032, %v8107
  %v8158 = vmul.f32 %v8037, %v8107
  %v8159 = vmul.f32 %v8042, %v8107
  %v8160 = vmul.f32 %v8047, %v8107
  %v8161 = vmul.f32 %v8052, %v8107
  %v8162 = vmul.f32 %v8057, %v8107
  %v8163 = vmul.f32 %v8062, %v8107
  %v8164 = vmul.f32 %v8067, %v8107
  %v8165 = vmul.f32 %v8072, %v8107
  %v8166 = vmul.f32 %v8077, %v8107
  %v8167 = vmul.f32 %v8082, %v8107
  %v8168 = vmul.f32 %v8087, %v8107
  %v8169 = vmul.f32 %v8092, %v8107
  %v8170 = vmul.f32 %v8097, %v8107
  %v8171 = vmul.f32 %v8102, %v8107
  %v8172 = vadd.f32 %v7654, %v8108
  %v8173 = vadd.f32 %v7655, %v8109
  %v8174 = vadd.f32 %v7656, %v8110
  %v8175 = vadd.f32 %v7657, %v8111
  %v8176 = vadd.f32 %v7658, %v8112
  %v8177 = vadd.f32 %v7659, %v8113
  %v8178 = vadd.f32 %v7660, %v8114
  %v8179 = vadd.f32 %v7661, %v8115
  %v8180 = vadd.f32 %v7662, %v8116
  %v8181 = vadd.f32 %v7663, %v8117
  %v8182 = vadd.f32 %v7664, %v8118
  %v8183 = vadd.f32 %v7665, %v8119
  %v8184 = vadd.f32 %v7666, %v8120
  %v8185 = vadd.f32 %v7667, %v8121
  %v8186 = vadd.f32 %v7668, %v8122
  %v8187 = vadd.f32 %v7669, %v8123
  %v8188 = vadd.f32 %v7670, %v8124
  %v8189 = vadd.f32 %v7671, %v8125
  %v8190 = vadd.f32 %v7672, %v8126
  %v8191 = vadd.f32 %v7673, %v8127
  %v8192 = vadd.f32 %v7674, %v8128
  %v8193 = vadd.f32 %v7675, %v8129
  %v8194 = vadd.f32 %v7676, %v8130
  %v8195 = vadd.f32 %v7677, %v8131
  %v8196 = vadd.f32 %v7678, %v8132
  %v8197 = vadd.f32 %v7679, %v8133
  %v8198 = vadd.f32 %v7680, %v8134
  %v8199 = vadd.f32 %v7681, %v8135
  %v8200 = vadd.f32 %v7682, %v8136
  %v8201 = vadd.f32 %v7683, %v8137
  %v8202 = vadd.f32 %v7684, %v8138
  %v8203 = vadd.f32 %v7685, %v8139
  %v8204 = vadd.f32 %v7686, %v8140
  %v8205 = vadd.f32 %v7687, %v8141
  %v8206 = vadd.f32 %v7688, %v8142
  %v8207 = vadd.f32 %v7689, %v8143
  %v8208 = vadd.f32 %v7690, %v8144
  %v8209 = vadd.f32 %v7691, %v8145
  %v8210 = vadd.f32 %v7692, %v8146
  %v8211 = vadd.f32 %v7693, %v8147
  %v8212 = vadd.f32 %v7694, %v8148
  %v8213 = vadd.f32 %v7695, %v8149
  %v8214 = vadd.f32 %v7696, %v8150
  %v8215 = vadd.f32 %v7697, %v8151
  %v8216 = vadd.f32 %v7698, %v8152
  %v8217 = vadd.f32 %v7699, %v8153
  %v8218 = vadd.f32 %v7700, %v8154
  %v8219 = vadd.f32 %v7701, %v8155
  %v8220 = vadd.f32 %v7702, %v8156
  %v8221 = vadd.f32 %v7703, %v8157
  %v8222 = vadd.f32 %v7704, %v8158
  %v8223 = vadd.f32 %v7705, %v8159
  %v8224 = vadd.f32 %v7706, %v8160
  %v8225 = vadd.f32 %v7707, %v8161
  %v8226 = vadd.f32 %v7708, %v8162
  %v8227 = vadd.f32 %v7709, %v8163
  %v8228 = vadd.f32 %v7710, %v8164
  %v8229 = vadd.f32 %v7711, %v8165
  %v8230 = vadd.f32 %v7712, %v8166
  %v8231 = vadd.f32 %v7713, %v8167
  %v8232 = vadd.f32 %v7714, %v8168
  %v8233 = vadd.f32 %v7715, %v8169
  %v8234 = vadd.f32 %v7716, %v8170
  %v8235 = vadd.f32 %v7717, %v8171
  %v8236 = vld [vmem:[%s0 + $0x13] sm:$0x1]
  %8237 = vset.pattern.permute.xlu0 1
  %8238 = vperm.xlu0 %8237, %v7719
  %v8239 = vpop.permute.xlu0 %8238
  %8241 = vset.pattern.permute.xlu0 1
  %8242 = vperm.xlu0 %8241, %v7720
  %v8243 = vpop.permute.xlu0 %8242
  %8245 = vset.pattern.permute.xlu0 1
  %8246 = vperm.xlu0 %8245, %v7721
  %v8247 = vpop.permute.xlu0 %8246
  %8249 = vset.pattern.permute.xlu0 1
  %8250 = vperm.xlu0 %8249, %v7722
  %v8251 = vpop.permute.xlu0 %8250
  %8253 = vset.pattern.permute.xlu0 1
  %8254 = vperm.xlu0 %8253, %v7723
  %v8255 = vpop.permute.xlu0 %8254
  %8257 = vset.pattern.permute.xlu0 1
  %8258 = vperm.xlu0 %8257, %v7724
  %v8259 = vpop.permute.xlu0 %8258
  %8261 = vset.pattern.permute.xlu0 1
  %8262 = vperm.xlu0 %8261, %v7725
  %v8263 = vpop.permute.xlu0 %8262
  %8265 = vset.pattern.permute.xlu0 1
  %8266 = vperm.xlu0 %8265, %v7726
  %v8267 = vpop.permute.xlu0 %8266
  %8269 = vset.pattern.permute.xlu0 1
  %8270 = vperm.xlu0 %8269, %v7727
  %v8271 = vpop.permute.xlu0 %8270
  %8273 = vset.pattern.permute.xlu0 1
  %8274 = vperm.xlu0 %8273, %v7728
  %v8275 = vpop.permute.xlu0 %8274
  %8277 = vset.pattern.permute.xlu0 1
  %8278 = vperm.xlu0 %8277, %v7729
  %v8279 = vpop.permute.xlu0 %8278
  %8281 = vset.pattern.permute.xlu0 1
  %8282 = vperm.xlu0 %8281, %v7730
  %v8283 = vpop.permute.xlu0 %8282
  %8285 = vset.pattern.permute.xlu0 1
  %8286 = vperm.xlu0 %8285, %v7731
  %v8287 = vpop.permute.xlu0 %8286
  %8289 = vset.pattern.permute.xlu0 1
  %8290 = vperm.xlu0 %8289, %v7732
  %v8291 = vpop.permute.xlu0 %8290
  %8293 = vset.pattern.permute.xlu0 1
  %8294 = vperm.xlu0 %8293, %v7733
  %v8295 = vpop.permute.xlu0 %8294
  %8297 = vset.pattern.permute.xlu0 1
  %8298 = vperm.xlu0 %8297, %v7734
  %v8299 = vpop.permute.xlu0 %8298
  %8301 = vset.pattern.permute.xlu0 1
  %8302 = vperm.xlu0 %8301, %v7735
  %v8303 = vpop.permute.xlu0 %8302
  %8305 = vset.pattern.permute.xlu0 1
  %8306 = vperm.xlu0 %8305, %v7736
  %v8307 = vpop.permute.xlu0 %8306
  %8309 = vset.pattern.permute.xlu0 1
  %8310 = vperm.xlu0 %8309, %v7737
  %v8311 = vpop.permute.xlu0 %8310
  %8313 = vset.pattern.permute.xlu0 1
  %8314 = vperm.xlu0 %8313, %v7738
  %v8315 = vpop.permute.xlu0 %8314
  %8317 = vset.pattern.permute.xlu0 1
  %8318 = vperm.xlu0 %8317, %v7739
  %v8319 = vpop.permute.xlu0 %8318
  %8321 = vset.pattern.permute.xlu0 1
  %8322 = vperm.xlu0 %8321, %v7740
  %v8323 = vpop.permute.xlu0 %8322
  %8325 = vset.pattern.permute.xlu0 1
  %8326 = vperm.xlu0 %8325, %v7741
  %v8327 = vpop.permute.xlu0 %8326
  %8329 = vset.pattern.permute.xlu0 1
  %8330 = vperm.xlu0 %8329, %v7742
  %v8331 = vpop.permute.xlu0 %8330
  %8333 = vset.pattern.permute.xlu0 1
  %8334 = vperm.xlu0 %8333, %v7743
  %v8335 = vpop.permute.xlu0 %8334
  %8337 = vset.pattern.permute.xlu0 1
  %8338 = vperm.xlu0 %8337, %v7744
  %v8339 = vpop.permute.xlu0 %8338
  %8341 = vset.pattern.permute.xlu0 1
  %8342 = vperm.xlu0 %8341, %v7745
  %v8343 = vpop.permute.xlu0 %8342
  %8345 = vset.pattern.permute.xlu0 1
  %8346 = vperm.xlu0 %8345, %v7746
  %v8347 = vpop.permute.xlu0 %8346
  %8349 = vset.pattern.permute.xlu0 1
  %8350 = vperm.xlu0 %8349, %v7747
  %v8351 = vpop.permute.xlu0 %8350
  %8353 = vset.pattern.permute.xlu0 1
  %8354 = vperm.xlu0 %8353, %v7748
  %v8355 = vpop.permute.xlu0 %8354
  %8357 = vset.pattern.permute.xlu0 1
  %8358 = vperm.xlu0 %8357, %v7749
  %v8359 = vpop.permute.xlu0 %8358
  %8361 = vset.pattern.permute.xlu0 1
  %8362 = vperm.xlu0 %8361, %v7750
  %v8363 = vpop.permute.xlu0 %8362
  %8365 = vset.pattern.permute.xlu0 1
  %8366 = vperm.xlu0 %8365, %v7751
  %v8367 = vpop.permute.xlu0 %8366
  %8369 = vset.pattern.permute.xlu0 1
  %8370 = vperm.xlu0 %8369, %v7752
  %v8371 = vpop.permute.xlu0 %8370
  %8373 = vset.pattern.permute.xlu0 1
  %8374 = vperm.xlu0 %8373, %v7753
  %v8375 = vpop.permute.xlu0 %8374
  %8377 = vset.pattern.permute.xlu0 1
  %8378 = vperm.xlu0 %8377, %v7754
  %v8379 = vpop.permute.xlu0 %8378
  %8381 = vset.pattern.permute.xlu0 1
  %8382 = vperm.xlu0 %8381, %v7755
  %v8383 = vpop.permute.xlu0 %8382
  %8385 = vset.pattern.permute.xlu0 1
  %8386 = vperm.xlu0 %8385, %v7756
  %v8387 = vpop.permute.xlu0 %8386
  %8389 = vset.pattern.permute.xlu0 1
  %8390 = vperm.xlu0 %8389, %v7757
  %v8391 = vpop.permute.xlu0 %8390
  %8393 = vset.pattern.permute.xlu0 1
  %8394 = vperm.xlu0 %8393, %v7758
  %v8395 = vpop.permute.xlu0 %8394
  %8397 = vset.pattern.permute.xlu0 1
  %8398 = vperm.xlu0 %8397, %v7759
  %v8399 = vpop.permute.xlu0 %8398
  %8401 = vset.pattern.permute.xlu0 1
  %8402 = vperm.xlu0 %8401, %v7760
  %v8403 = vpop.permute.xlu0 %8402
  %8405 = vset.pattern.permute.xlu0 1
  %8406 = vperm.xlu0 %8405, %v7761
  %v8407 = vpop.permute.xlu0 %8406
  %8409 = vset.pattern.permute.xlu0 1
  %8410 = vperm.xlu0 %8409, %v7762
  %v8411 = vpop.permute.xlu0 %8410
  %8413 = vset.pattern.permute.xlu0 1
  %8414 = vperm.xlu0 %8413, %v7763
  %v8415 = vpop.permute.xlu0 %8414
  %8417 = vset.pattern.permute.xlu0 1
  %8418 = vperm.xlu0 %8417, %v7764
  %v8419 = vpop.permute.xlu0 %8418
  %8421 = vset.pattern.permute.xlu0 1
  %8422 = vperm.xlu0 %8421, %v7765
  %v8423 = vpop.permute.xlu0 %8422
  %8425 = vset.pattern.permute.xlu0 1
  %8426 = vperm.xlu0 %8425, %v7766
  %v8427 = vpop.permute.xlu0 %8426
  %8429 = vset.pattern.permute.xlu0 1
  %8430 = vperm.xlu0 %8429, %v7767
  %v8431 = vpop.permute.xlu0 %8430
  %8433 = vset.pattern.permute.xlu0 1
  %8434 = vperm.xlu0 %8433, %v7768
  %v8435 = vpop.permute.xlu0 %8434
  %8437 = vset.pattern.permute.xlu0 1
  %8438 = vperm.xlu0 %8437, %v7769
  %v8439 = vpop.permute.xlu0 %8438
  %8441 = vset.pattern.permute.xlu0 1
  %8442 = vperm.xlu0 %8441, %v7770
  %v8443 = vpop.permute.xlu0 %8442
  %8445 = vset.pattern.permute.xlu0 1
  %8446 = vperm.xlu0 %8445, %v7771
  %v8447 = vpop.permute.xlu0 %8446
  %8449 = vset.pattern.permute.xlu0 1
  %8450 = vperm.xlu0 %8449, %v7772
  %v8451 = vpop.permute.xlu0 %8450
  %8453 = vset.pattern.permute.xlu0 1
  %8454 = vperm.xlu0 %8453, %v7773
  %v8455 = vpop.permute.xlu0 %8454
  %8457 = vset.pattern.permute.xlu0 1
  %8458 = vperm.xlu0 %8457, %v7774
  %v8459 = vpop.permute.xlu0 %8458
  %8461 = vset.pattern.permute.xlu0 1
  %8462 = vperm.xlu0 %8461, %v7775
  %v8463 = vpop.permute.xlu0 %8462
  %8465 = vset.pattern.permute.xlu0 1
  %8466 = vperm.xlu0 %8465, %v7776
  %v8467 = vpop.permute.xlu0 %8466
  %8469 = vset.pattern.permute.xlu0 1
  %8470 = vperm.xlu0 %8469, %v7777
  %v8471 = vpop.permute.xlu0 %8470
  %8473 = vset.pattern.permute.xlu0 1
  %8474 = vperm.xlu0 %8473, %v7778
  %v8475 = vpop.permute.xlu0 %8474
  %8477 = vset.pattern.permute.xlu0 1
  %8478 = vperm.xlu0 %8477, %v7779
  %v8479 = vpop.permute.xlu0 %8478
  %8481 = vset.pattern.permute.xlu0 1
  %8482 = vperm.xlu0 %8481, %v7780
  %v8483 = vpop.permute.xlu0 %8482
  %8485 = vset.pattern.permute.xlu0 1
  %8486 = vperm.xlu0 %8485, %v7781
  %v8487 = vpop.permute.xlu0 %8486
  %8489 = vset.pattern.permute.xlu0 1
  %8490 = vperm.xlu0 %8489, %v7782
  %v8491 = vpop.permute.xlu0 %8490
  %v8493 = vlaneseq
  %v8494 = vshrl.u32 %v8493, 7
  %v8495 = vsub.s32 0, %v8494
  %v8496 = vrot.slane %v8236, %v8495
  %v8497 = vmul.f32 %v8239, %v8496
  %v8498 = vmul.f32 %v8243, %v8496
  %v8499 = vmul.f32 %v8247, %v8496
  %v8500 = vmul.f32 %v8251, %v8496
  %v8501 = vmul.f32 %v8255, %v8496
  %v8502 = vmul.f32 %v8259, %v8496
  %v8503 = vmul.f32 %v8263, %v8496
  %v8504 = vmul.f32 %v8267, %v8496
  %v8505 = vmul.f32 %v8271, %v8496
  %v8506 = vmul.f32 %v8275, %v8496
  %v8507 = vmul.f32 %v8279, %v8496
  %v8508 = vmul.f32 %v8283, %v8496
  %v8509 = vmul.f32 %v8287, %v8496
  %v8510 = vmul.f32 %v8291, %v8496
  %v8511 = vmul.f32 %v8295, %v8496
  %v8512 = vmul.f32 %v8299, %v8496
  %v8513 = vmul.f32 %v8303, %v8496
  %v8514 = vmul.f32 %v8307, %v8496
  %v8515 = vmul.f32 %v8311, %v8496
  %v8516 = vmul.f32 %v8315, %v8496
  %v8517 = vmul.f32 %v8319, %v8496
  %v8518 = vmul.f32 %v8323, %v8496
  %v8519 = vmul.f32 %v8327, %v8496
  %v8520 = vmul.f32 %v8331, %v8496
  %v8521 = vmul.f32 %v8335, %v8496
  %v8522 = vmul.f32 %v8339, %v8496
  %v8523 = vmul.f32 %v8343, %v8496
  %v8524 = vmul.f32 %v8347, %v8496
  %v8525 = vmul.f32 %v8351, %v8496
  %v8526 = vmul.f32 %v8355, %v8496
  %v8527 = vmul.f32 %v8359, %v8496
  %v8528 = vmul.f32 %v8363, %v8496
  %v8529 = vmul.f32 %v8367, %v8496
  %v8530 = vmul.f32 %v8371, %v8496
  %v8531 = vmul.f32 %v8375, %v8496
  %v8532 = vmul.f32 %v8379, %v8496
  %v8533 = vmul.f32 %v8383, %v8496
  %v8534 = vmul.f32 %v8387, %v8496
  %v8535 = vmul.f32 %v8391, %v8496
  %v8536 = vmul.f32 %v8395, %v8496
  %v8537 = vmul.f32 %v8399, %v8496
  %v8538 = vmul.f32 %v8403, %v8496
  %v8539 = vmul.f32 %v8407, %v8496
  %v8540 = vmul.f32 %v8411, %v8496
  %v8541 = vmul.f32 %v8415, %v8496
  %v8542 = vmul.f32 %v8419, %v8496
  %v8543 = vmul.f32 %v8423, %v8496
  %v8544 = vmul.f32 %v8427, %v8496
  %v8545 = vmul.f32 %v8431, %v8496
  %v8546 = vmul.f32 %v8435, %v8496
  %v8547 = vmul.f32 %v8439, %v8496
  %v8548 = vmul.f32 %v8443, %v8496
  %v8549 = vmul.f32 %v8447, %v8496
  %v8550 = vmul.f32 %v8451, %v8496
  %v8551 = vmul.f32 %v8455, %v8496
  %v8552 = vmul.f32 %v8459, %v8496
  %v8553 = vmul.f32 %v8463, %v8496
  %v8554 = vmul.f32 %v8467, %v8496
  %v8555 = vmul.f32 %v8471, %v8496
  %v8556 = vmul.f32 %v8475, %v8496
  %v8557 = vmul.f32 %v8479, %v8496
  %v8558 = vmul.f32 %v8483, %v8496
  %v8559 = vmul.f32 %v8487, %v8496
  %v8560 = vmul.f32 %v8491, %v8496
  %v8561 = vadd.f32 %v8172, %v8497
  %v8562 = vadd.f32 %v8173, %v8498
  %v8563 = vadd.f32 %v8174, %v8499
  %v8564 = vadd.f32 %v8175, %v8500
  %v8565 = vadd.f32 %v8176, %v8501
  %v8566 = vadd.f32 %v8177, %v8502
  %v8567 = vadd.f32 %v8178, %v8503
  %v8568 = vadd.f32 %v8179, %v8504
  %v8569 = vadd.f32 %v8180, %v8505
  %v8570 = vadd.f32 %v8181, %v8506
  %v8571 = vadd.f32 %v8182, %v8507
  %v8572 = vadd.f32 %v8183, %v8508
  %v8573 = vadd.f32 %v8184, %v8509
  %v8574 = vadd.f32 %v8185, %v8510
  %v8575 = vadd.f32 %v8186, %v8511
  %v8576 = vadd.f32 %v8187, %v8512
  %v8577 = vadd.f32 %v8188, %v8513
  %v8578 = vadd.f32 %v8189, %v8514
  %v8579 = vadd.f32 %v8190, %v8515
  %v8580 = vadd.f32 %v8191, %v8516
  %v8581 = vadd.f32 %v8192, %v8517
  %v8582 = vadd.f32 %v8193, %v8518
  %v8583 = vadd.f32 %v8194, %v8519
  %v8584 = vadd.f32 %v8195, %v8520
  %v8585 = vadd.f32 %v8196, %v8521
  %v8586 = vadd.f32 %v8197, %v8522
  %v8587 = vadd.f32 %v8198, %v8523
  %v8588 = vadd.f32 %v8199, %v8524
  %v8589 = vadd.f32 %v8200, %v8525
  %v8590 = vadd.f32 %v8201, %v8526
  %v8591 = vadd.f32 %v8202, %v8527
  %v8592 = vadd.f32 %v8203, %v8528
  %v8593 = vadd.f32 %v8204, %v8529
  %v8594 = vadd.f32 %v8205, %v8530
  %v8595 = vadd.f32 %v8206, %v8531
  %v8596 = vadd.f32 %v8207, %v8532
  %v8597 = vadd.f32 %v8208, %v8533
  %v8598 = vadd.f32 %v8209, %v8534
  %v8599 = vadd.f32 %v8210, %v8535
  %v8600 = vadd.f32 %v8211, %v8536
  %v8601 = vadd.f32 %v8212, %v8537
  %v8602 = vadd.f32 %v8213, %v8538
  %v8603 = vadd.f32 %v8214, %v8539
  %v8604 = vadd.f32 %v8215, %v8540
  %v8605 = vadd.f32 %v8216, %v8541
  %v8606 = vadd.f32 %v8217, %v8542
  %v8607 = vadd.f32 %v8218, %v8543
  %v8608 = vadd.f32 %v8219, %v8544
  %v8609 = vadd.f32 %v8220, %v8545
  %v8610 = vadd.f32 %v8221, %v8546
  %v8611 = vadd.f32 %v8222, %v8547
  %v8612 = vadd.f32 %v8223, %v8548
  %v8613 = vadd.f32 %v8224, %v8549
  %v8614 = vadd.f32 %v8225, %v8550
  %v8615 = vadd.f32 %v8226, %v8551
  %v8616 = vadd.f32 %v8227, %v8552
  %v8617 = vadd.f32 %v8228, %v8553
  %v8618 = vadd.f32 %v8229, %v8554
  %v8619 = vadd.f32 %v8230, %v8555
  %v8620 = vadd.f32 %v8231, %v8556
  %v8621 = vadd.f32 %v8232, %v8557
  %v8622 = vadd.f32 %v8233, %v8558
  %v8623 = vadd.f32 %v8234, %v8559
  %v8624 = vadd.f32 %v8235, %v8560
  %v8625 = vld [vmem:[%s0 + $0x14] sm:$0x1]
  %8626 = vset.pattern.permute.xlu0 2
  %8627 = vperm.xlu0 %8626, %v7719
  %v8628 = vpop.permute.xlu0 %8627
  %8630 = vset.pattern.permute.xlu0 2
  %8631 = vperm.xlu0 %8630, %v7720
  %v8632 = vpop.permute.xlu0 %8631
  %8634 = vset.pattern.permute.xlu0 2
  %8635 = vperm.xlu0 %8634, %v7721
  %v8636 = vpop.permute.xlu0 %8635
  %8638 = vset.pattern.permute.xlu0 2
  %8639 = vperm.xlu0 %8638, %v7722
  %v8640 = vpop.permute.xlu0 %8639
  %8642 = vset.pattern.permute.xlu0 2
  %8643 = vperm.xlu0 %8642, %v7723
  %v8644 = vpop.permute.xlu0 %8643
  %8646 = vset.pattern.permute.xlu0 2
  %8647 = vperm.xlu0 %8646, %v7724
  %v8648 = vpop.permute.xlu0 %8647
  %8650 = vset.pattern.permute.xlu0 2
  %8651 = vperm.xlu0 %8650, %v7725
  %v8652 = vpop.permute.xlu0 %8651
  %8654 = vset.pattern.permute.xlu0 2
  %8655 = vperm.xlu0 %8654, %v7726
  %v8656 = vpop.permute.xlu0 %8655
  %8658 = vset.pattern.permute.xlu0 2
  %8659 = vperm.xlu0 %8658, %v7727
  %v8660 = vpop.permute.xlu0 %8659
  %8662 = vset.pattern.permute.xlu0 2
  %8663 = vperm.xlu0 %8662, %v7728
  %v8664 = vpop.permute.xlu0 %8663
  %8666 = vset.pattern.permute.xlu0 2
  %8667 = vperm.xlu0 %8666, %v7729
  %v8668 = vpop.permute.xlu0 %8667
  %8670 = vset.pattern.permute.xlu0 2
  %8671 = vperm.xlu0 %8670, %v7730
  %v8672 = vpop.permute.xlu0 %8671
  %8674 = vset.pattern.permute.xlu0 2
  %8675 = vperm.xlu0 %8674, %v7731
  %v8676 = vpop.permute.xlu0 %8675
  %8678 = vset.pattern.permute.xlu0 2
  %8679 = vperm.xlu0 %8678, %v7732
  %v8680 = vpop.permute.xlu0 %8679
  %8682 = vset.pattern.permute.xlu0 2
  %8683 = vperm.xlu0 %8682, %v7733
  %v8684 = vpop.permute.xlu0 %8683
  %8686 = vset.pattern.permute.xlu0 2
  %8687 = vperm.xlu0 %8686, %v7734
  %v8688 = vpop.permute.xlu0 %8687
  %8690 = vset.pattern.permute.xlu0 2
  %8691 = vperm.xlu0 %8690, %v7735
  %v8692 = vpop.permute.xlu0 %8691
  %8694 = vset.pattern.permute.xlu0 2
  %8695 = vperm.xlu0 %8694, %v7736
  %v8696 = vpop.permute.xlu0 %8695
  %8698 = vset.pattern.permute.xlu0 2
  %8699 = vperm.xlu0 %8698, %v7737
  %v8700 = vpop.permute.xlu0 %8699
  %8702 = vset.pattern.permute.xlu0 2
  %8703 = vperm.xlu0 %8702, %v7738
  %v8704 = vpop.permute.xlu0 %8703
  %8706 = vset.pattern.permute.xlu0 2
  %8707 = vperm.xlu0 %8706, %v7739
  %v8708 = vpop.permute.xlu0 %8707
  %8710 = vset.pattern.permute.xlu0 2
  %8711 = vperm.xlu0 %8710, %v7740
  %v8712 = vpop.permute.xlu0 %8711
  %8714 = vset.pattern.permute.xlu0 2
  %8715 = vperm.xlu0 %8714, %v7741
  %v8716 = vpop.permute.xlu0 %8715
  %8718 = vset.pattern.permute.xlu0 2
  %8719 = vperm.xlu0 %8718, %v7742
  %v8720 = vpop.permute.xlu0 %8719
  %8722 = vset.pattern.permute.xlu0 2
  %8723 = vperm.xlu0 %8722, %v7743
  %v8724 = vpop.permute.xlu0 %8723
  %8726 = vset.pattern.permute.xlu0 2
  %8727 = vperm.xlu0 %8726, %v7744
  %v8728 = vpop.permute.xlu0 %8727
  %8730 = vset.pattern.permute.xlu0 2
  %8731 = vperm.xlu0 %8730, %v7745
  %v8732 = vpop.permute.xlu0 %8731
  %8734 = vset.pattern.permute.xlu0 2
  %8735 = vperm.xlu0 %8734, %v7746
  %v8736 = vpop.permute.xlu0 %8735
  %8738 = vset.pattern.permute.xlu0 2
  %8739 = vperm.xlu0 %8738, %v7747
  %v8740 = vpop.permute.xlu0 %8739
  %8742 = vset.pattern.permute.xlu0 2
  %8743 = vperm.xlu0 %8742, %v7748
  %v8744 = vpop.permute.xlu0 %8743
  %8746 = vset.pattern.permute.xlu0 2
  %8747 = vperm.xlu0 %8746, %v7749
  %v8748 = vpop.permute.xlu0 %8747
  %8750 = vset.pattern.permute.xlu0 2
  %8751 = vperm.xlu0 %8750, %v7750
  %v8752 = vpop.permute.xlu0 %8751
  %8754 = vset.pattern.permute.xlu0 2
  %8755 = vperm.xlu0 %8754, %v7751
  %v8756 = vpop.permute.xlu0 %8755
  %8758 = vset.pattern.permute.xlu0 2
  %8759 = vperm.xlu0 %8758, %v7752
  %v8760 = vpop.permute.xlu0 %8759
  %8762 = vset.pattern.permute.xlu0 2
  %8763 = vperm.xlu0 %8762, %v7753
  %v8764 = vpop.permute.xlu0 %8763
  %8766 = vset.pattern.permute.xlu0 2
  %8767 = vperm.xlu0 %8766, %v7754
  %v8768 = vpop.permute.xlu0 %8767
  %8770 = vset.pattern.permute.xlu0 2
  %8771 = vperm.xlu0 %8770, %v7755
  %v8772 = vpop.permute.xlu0 %8771
  %8774 = vset.pattern.permute.xlu0 2
  %8775 = vperm.xlu0 %8774, %v7756
  %v8776 = vpop.permute.xlu0 %8775
  %8778 = vset.pattern.permute.xlu0 2
  %8779 = vperm.xlu0 %8778, %v7757
  %v8780 = vpop.permute.xlu0 %8779
  %8782 = vset.pattern.permute.xlu0 2
  %8783 = vperm.xlu0 %8782, %v7758
  %v8784 = vpop.permute.xlu0 %8783
  %8786 = vset.pattern.permute.xlu0 2
  %8787 = vperm.xlu0 %8786, %v7759
  %v8788 = vpop.permute.xlu0 %8787
  %8790 = vset.pattern.permute.xlu0 2
  %8791 = vperm.xlu0 %8790, %v7760
  %v8792 = vpop.permute.xlu0 %8791
  %8794 = vset.pattern.permute.xlu0 2
  %8795 = vperm.xlu0 %8794, %v7761
  %v8796 = vpop.permute.xlu0 %8795
  %8798 = vset.pattern.permute.xlu0 2
  %8799 = vperm.xlu0 %8798, %v7762
  %v8800 = vpop.permute.xlu0 %8799
  %8802 = vset.pattern.permute.xlu0 2
  %8803 = vperm.xlu0 %8802, %v7763
  %v8804 = vpop.permute.xlu0 %8803
  %8806 = vset.pattern.permute.xlu0 2
  %8807 = vperm.xlu0 %8806, %v7764
  %v8808 = vpop.permute.xlu0 %8807
  %8810 = vset.pattern.permute.xlu0 2
  %8811 = vperm.xlu0 %8810, %v7765
  %v8812 = vpop.permute.xlu0 %8811
  %8814 = vset.pattern.permute.xlu0 2
  %8815 = vperm.xlu0 %8814, %v7766
  %v8816 = vpop.permute.xlu0 %8815
  %8818 = vset.pattern.permute.xlu0 2
  %8819 = vperm.xlu0 %8818, %v7767
  %v8820 = vpop.permute.xlu0 %8819
  %8822 = vset.pattern.permute.xlu0 2
  %8823 = vperm.xlu0 %8822, %v7768
  %v8824 = vpop.permute.xlu0 %8823
  %8826 = vset.pattern.permute.xlu0 2
  %8827 = vperm.xlu0 %8826, %v7769
  %v8828 = vpop.permute.xlu0 %8827
  %8830 = vset.pattern.permute.xlu0 2
  %8831 = vperm.xlu0 %8830, %v7770
  %v8832 = vpop.permute.xlu0 %8831
  %8834 = vset.pattern.permute.xlu0 2
  %8835 = vperm.xlu0 %8834, %v7771
  %v8836 = vpop.permute.xlu0 %8835
  %8838 = vset.pattern.permute.xlu0 2
  %8839 = vperm.xlu0 %8838, %v7772
  %v8840 = vpop.permute.xlu0 %8839
  %8842 = vset.pattern.permute.xlu0 2
  %8843 = vperm.xlu0 %8842, %v7773
  %v8844 = vpop.permute.xlu0 %8843
  %8846 = vset.pattern.permute.xlu0 2
  %8847 = vperm.xlu0 %8846, %v7774
  %v8848 = vpop.permute.xlu0 %8847
  %8850 = vset.pattern.permute.xlu0 2
  %8851 = vperm.xlu0 %8850, %v7775
  %v8852 = vpop.permute.xlu0 %8851
  %8854 = vset.pattern.permute.xlu0 2
  %8855 = vperm.xlu0 %8854, %v7776
  %v8856 = vpop.permute.xlu0 %8855
  %8858 = vset.pattern.permute.xlu0 2
  %8859 = vperm.xlu0 %8858, %v7777
  %v8860 = vpop.permute.xlu0 %8859
  %8862 = vset.pattern.permute.xlu0 2
  %8863 = vperm.xlu0 %8862, %v7778
  %v8864 = vpop.permute.xlu0 %8863
  %8866 = vset.pattern.permute.xlu0 2
  %8867 = vperm.xlu0 %8866, %v7779
  %v8868 = vpop.permute.xlu0 %8867
  %8870 = vset.pattern.permute.xlu0 2
  %8871 = vperm.xlu0 %8870, %v7780
  %v8872 = vpop.permute.xlu0 %8871
  %8874 = vset.pattern.permute.xlu0 2
  %8875 = vperm.xlu0 %8874, %v7781
  %v8876 = vpop.permute.xlu0 %8875
  %8878 = vset.pattern.permute.xlu0 2
  %8879 = vperm.xlu0 %8878, %v7782
  %v8880 = vpop.permute.xlu0 %8879
  %v8882 = vlaneseq
  %v8883 = vshrl.u32 %v8882, 7
  %v8884 = vsub.s32 0, %v8883
  %v8885 = vrot.slane %v8625, %v8884
  %v8886 = vmul.f32 %v8628, %v8885
  %v8887 = vmul.f32 %v8632, %v8885
  %v8888 = vmul.f32 %v8636, %v8885
  %v8889 = vmul.f32 %v8640, %v8885
  %v8890 = vmul.f32 %v8644, %v8885
  %v8891 = vmul.f32 %v8648, %v8885
  %v8892 = vmul.f32 %v8652, %v8885
  %v8893 = vmul.f32 %v8656, %v8885
  %v8894 = vmul.f32 %v8660, %v8885
  %v8895 = vmul.f32 %v8664, %v8885
  %v8896 = vmul.f32 %v8668, %v8885
  %v8897 = vmul.f32 %v8672, %v8885
  %v8898 = vmul.f32 %v8676, %v8885
  %v8899 = vmul.f32 %v8680, %v8885
  %v8900 = vmul.f32 %v8684, %v8885
  %v8901 = vmul.f32 %v8688, %v8885
  %v8902 = vmul.f32 %v8692, %v8885
  %v8903 = vmul.f32 %v8696, %v8885
  %v8904 = vmul.f32 %v8700, %v8885
  %v8905 = vmul.f32 %v8704, %v8885
  %v8906 = vmul.f32 %v8708, %v8885
  %v8907 = vmul.f32 %v8712, %v8885
  %v8908 = vmul.f32 %v8716, %v8885
  %v8909 = vmul.f32 %v8720, %v8885
  %v8910 = vmul.f32 %v8724, %v8885
  %v8911 = vmul.f32 %v8728, %v8885
  %v8912 = vmul.f32 %v8732, %v8885
  %v8913 = vmul.f32 %v8736, %v8885
  %v8914 = vmul.f32 %v8740, %v8885
  %v8915 = vmul.f32 %v8744, %v8885
  %v8916 = vmul.f32 %v8748, %v8885
  %v8917 = vmul.f32 %v8752, %v8885
  %v8918 = vmul.f32 %v8756, %v8885
  %v8919 = vmul.f32 %v8760, %v8885
  %v8920 = vmul.f32 %v8764, %v8885
  %v8921 = vmul.f32 %v8768, %v8885
  %v8922 = vmul.f32 %v8772, %v8885
  %v8923 = vmul.f32 %v8776, %v8885
  %v8924 = vmul.f32 %v8780, %v8885
  %v8925 = vmul.f32 %v8784, %v8885
  %v8926 = vmul.f32 %v8788, %v8885
  %v8927 = vmul.f32 %v8792, %v8885
  %v8928 = vmul.f32 %v8796, %v8885
  %v8929 = vmul.f32 %v8800, %v8885
  %v8930 = vmul.f32 %v8804, %v8885
  %v8931 = vmul.f32 %v8808, %v8885
  %v8932 = vmul.f32 %v8812, %v8885
  %v8933 = vmul.f32 %v8816, %v8885
  %v8934 = vmul.f32 %v8820, %v8885
  %v8935 = vmul.f32 %v8824, %v8885
  %v8936 = vmul.f32 %v8828, %v8885
  %v8937 = vmul.f32 %v8832, %v8885
  %v8938 = vmul.f32 %v8836, %v8885
  %v8939 = vmul.f32 %v8840, %v8885
  %v8940 = vmul.f32 %v8844, %v8885
  %v8941 = vmul.f32 %v8848, %v8885
  %v8942 = vmul.f32 %v8852, %v8885
  %v8943 = vmul.f32 %v8856, %v8885
  %v8944 = vmul.f32 %v8860, %v8885
  %v8945 = vmul.f32 %v8864, %v8885
  %v8946 = vmul.f32 %v8868, %v8885
  %v8947 = vmul.f32 %v8872, %v8885
  %v8948 = vmul.f32 %v8876, %v8885
  %v8949 = vmul.f32 %v8880, %v8885
  %v8950 = vadd.f32 %v8561, %v8886
  %v8951 = vadd.f32 %v8562, %v8887
  %v8952 = vadd.f32 %v8563, %v8888
  %v8953 = vadd.f32 %v8564, %v8889
  %v8954 = vadd.f32 %v8565, %v8890
  %v8955 = vadd.f32 %v8566, %v8891
  %v8956 = vadd.f32 %v8567, %v8892
  %v8957 = vadd.f32 %v8568, %v8893
  %v8958 = vadd.f32 %v8569, %v8894
  %v8959 = vadd.f32 %v8570, %v8895
  %v8960 = vadd.f32 %v8571, %v8896
  %v8961 = vadd.f32 %v8572, %v8897
  %v8962 = vadd.f32 %v8573, %v8898
  %v8963 = vadd.f32 %v8574, %v8899
  %v8964 = vadd.f32 %v8575, %v8900
  %v8965 = vadd.f32 %v8576, %v8901
  %v8966 = vadd.f32 %v8577, %v8902
  %v8967 = vadd.f32 %v8578, %v8903
  %v8968 = vadd.f32 %v8579, %v8904
  %v8969 = vadd.f32 %v8580, %v8905
  %v8970 = vadd.f32 %v8581, %v8906
  %v8971 = vadd.f32 %v8582, %v8907
  %v8972 = vadd.f32 %v8583, %v8908
  %v8973 = vadd.f32 %v8584, %v8909
  %v8974 = vadd.f32 %v8585, %v8910
  %v8975 = vadd.f32 %v8586, %v8911
  %v8976 = vadd.f32 %v8587, %v8912
  %v8977 = vadd.f32 %v8588, %v8913
  %v8978 = vadd.f32 %v8589, %v8914
  %v8979 = vadd.f32 %v8590, %v8915
  %v8980 = vadd.f32 %v8591, %v8916
  %v8981 = vadd.f32 %v8592, %v8917
  %v8982 = vadd.f32 %v8593, %v8918
  %v8983 = vadd.f32 %v8594, %v8919
  %v8984 = vadd.f32 %v8595, %v8920
  %v8985 = vadd.f32 %v8596, %v8921
  %v8986 = vadd.f32 %v8597, %v8922
  %v8987 = vadd.f32 %v8598, %v8923
  %v8988 = vadd.f32 %v8599, %v8924
  %v8989 = vadd.f32 %v8600, %v8925
  %v8990 = vadd.f32 %v8601, %v8926
  %v8991 = vadd.f32 %v8602, %v8927
  %v8992 = vadd.f32 %v8603, %v8928
  %v8993 = vadd.f32 %v8604, %v8929
  %v8994 = vadd.f32 %v8605, %v8930
  %v8995 = vadd.f32 %v8606, %v8931
  %v8996 = vadd.f32 %v8607, %v8932
  %v8997 = vadd.f32 %v8608, %v8933
  %v8998 = vadd.f32 %v8609, %v8934
  %v8999 = vadd.f32 %v8610, %v8935
  %v9000 = vadd.f32 %v8611, %v8936
  %v9001 = vadd.f32 %v8612, %v8937
  %v9002 = vadd.f32 %v8613, %v8938
  %v9003 = vadd.f32 %v8614, %v8939
  %v9004 = vadd.f32 %v8615, %v8940
  %v9005 = vadd.f32 %v8616, %v8941
  %v9006 = vadd.f32 %v8617, %v8942
  %v9007 = vadd.f32 %v8618, %v8943
  %v9008 = vadd.f32 %v8619, %v8944
  %v9009 = vadd.f32 %v8620, %v8945
  %v9010 = vadd.f32 %v8621, %v8946
  %v9011 = vadd.f32 %v8622, %v8947
  %v9012 = vadd.f32 %v8623, %v8948
  %v9013 = vadd.f32 %v8624, %v8949
  %v9014 = vld [vmem:[%s7718 + $0x1] sm:$0xff]
  %v9015 = vld [vmem:[%s7718 + $0x9] sm:$0xff]
  %v9016 = vld [vmem:[%s7718 + $0x19] sm:$0xff]
  %v9017 = vld [vmem:[%s7718 + $0x21] sm:$0xff]
  %v9018 = vld [vmem:[%s7718 + $0x31] sm:$0xff]
  %v9019 = vld [vmem:[%s7718 + $0x39] sm:$0xff]
  %v9020 = vld [vmem:[%s7718 + $0x49] sm:$0xff]
  %v9021 = vld [vmem:[%s7718 + $0x51] sm:$0xff]
  %v9022 = vld [vmem:[%s7718 + $0x61] sm:$0xff]
  %v9023 = vld [vmem:[%s7718 + $0x69] sm:$0xff]
  %v9024 = vld [vmem:[%s7718 + $0x79] sm:$0xff]
  %v9025 = vld [vmem:[%s7718 + $0x81] sm:$0xff]
  %v9026 = vld [vmem:[%s7718 + $0x91] sm:$0xff]
  %v9027 = vld [vmem:[%s7718 + $0x99] sm:$0xff]
  %v9028 = vld [vmem:[%s7718 + $0xa9] sm:$0xff]
  %v9029 = vld [vmem:[%s7718 + $0xb1] sm:$0xff]
  %v9030 = vld [vmem:[%s7718 + $0xc1] sm:$0xff]
  %v9031 = vld [vmem:[%s7718 + $0xc9] sm:$0xff]
  %v9032 = vld [vmem:[%s7718 + $0xd9] sm:$0xff]
  %v9033 = vld [vmem:[%s7718 + $0xe1] sm:$0xff]
  %v9034 = vld [vmem:[%s7718 + $0xf1] sm:$0xff]
  %v9035 = vld [vmem:[%s7718 + $0xf9] sm:$0xff]
  %v9036 = vld [vmem:[%s7718 + $0x109] sm:$0xff]
  %v9037 = vld [vmem:[%s7718 + $0x111] sm:$0xff]
  %v9038 = vld [vmem:[%s7718 + $0x121] sm:$0xff]
  %v9039 = vld [vmem:[%s7718 + $0x129] sm:$0xff]
  %v9040 = vld [vmem:[%s7718 + $0x139] sm:$0xff]
  %v9041 = vld [vmem:[%s7718 + $0x141] sm:$0xff]
  %v9042 = vld [vmem:[%s7718 + $0x151] sm:$0xff]
  %v9043 = vld [vmem:[%s7718 + $0x159] sm:$0xff]
  %v9044 = vld [vmem:[%s7718 + $0x169] sm:$0xff]
  %v9045 = vld [vmem:[%s7718 + $0x171] sm:$0xff]
  %v9046 = vld [vmem:[%s7718 + $0x1b1] sm:$0xff]
  %v9047 = vld [vmem:[%s7718 + $0x1b9] sm:$0xff]
  %v9048 = vld [vmem:[%s7718 + $0x1c9] sm:$0xff]
  %v9049 = vld [vmem:[%s7718 + $0x1d1] sm:$0xff]
  %v9050 = vld [vmem:[%s7718 + $0x1e1] sm:$0xff]
  %v9051 = vld [vmem:[%s7718 + $0x1e9] sm:$0xff]
  %v9052 = vld [vmem:[%s7718 + $0x1f9] sm:$0xff]
  %v9053 = vld [vmem:[%s7718 + $0x201] sm:$0xff]
  %v9054 = vld [vmem:[%s7718 + $0x211] sm:$0xff]
  %v9055 = vld [vmem:[%s7718 + $0x219] sm:$0xff]
  %v9056 = vld [vmem:[%s7718 + $0x229] sm:$0xff]
  %v9057 = vld [vmem:[%s7718 + $0x231] sm:$0xff]
  %v9058 = vld [vmem:[%s7718 + $0x241] sm:$0xff]
  %v9059 = vld [vmem:[%s7718 + $0x249] sm:$0xff]
  %v9060 = vld [vmem:[%s7718 + $0x259] sm:$0xff]
  %v9061 = vld [vmem:[%s7718 + $0x261] sm:$0xff]
  %v9062 = vld [vmem:[%s7718 + $0x271] sm:$0xff]
  %v9063 = vld [vmem:[%s7718 + $0x279] sm:$0xff]
  %v9064 = vld [vmem:[%s7718 + $0x289] sm:$0xff]
  %v9065 = vld [vmem:[%s7718 + $0x291] sm:$0xff]
  %v9066 = vld [vmem:[%s7718 + $0x2a1] sm:$0xff]
  %v9067 = vld [vmem:[%s7718 + $0x2a9] sm:$0xff]
  %v9068 = vld [vmem:[%s7718 + $0x2b9] sm:$0xff]
  %v9069 = vld [vmem:[%s7718 + $0x2c1] sm:$0xff]
  %v9070 = vld [vmem:[%s7718 + $0x2d1] sm:$0xff]
  %v9071 = vld [vmem:[%s7718 + $0x2d9] sm:$0xff]
  %v9072 = vld [vmem:[%s7718 + $0x2e9] sm:$0xff]
  %v9073 = vld [vmem:[%s7718 + $0x2f1] sm:$0xff]
  %v9074 = vld [vmem:[%s7718 + $0x301] sm:$0xff]
  %v9075 = vld [vmem:[%s7718 + $0x309] sm:$0xff]
  %v9076 = vld [vmem:[%s7718 + $0x319] sm:$0xff]
  %v9077 = vld [vmem:[%s7718 + $0x321] sm:$0xff]
  %v9078 = vld [vmem:[%s0 + $0x15] sm:$0x1]
  %9080 = vset.pattern.permute.xlu0 0
  %9081 = vperm.xlu0 %9080, %v9014
  %v9082 = vpop.permute.xlu0 %9081
  %9085 = vset.pattern.permute.xlu0 0
  %9086 = vperm.xlu0 %9085, %v9015
  %v9087 = vpop.permute.xlu0 %9086
  %9090 = vset.pattern.permute.xlu0 0
  %9091 = vperm.xlu0 %9090, %v9016
  %v9092 = vpop.permute.xlu0 %9091
  %9095 = vset.pattern.permute.xlu0 0
  %9096 = vperm.xlu0 %9095, %v9017
  %v9097 = vpop.permute.xlu0 %9096
  %9100 = vset.pattern.permute.xlu0 0
  %9101 = vperm.xlu0 %9100, %v9018
  %v9102 = vpop.permute.xlu0 %9101
  %9105 = vset.pattern.permute.xlu0 0
  %9106 = vperm.xlu0 %9105, %v9019
  %v9107 = vpop.permute.xlu0 %9106
  %9110 = vset.pattern.permute.xlu0 0
  %9111 = vperm.xlu0 %9110, %v9020
  %v9112 = vpop.permute.xlu0 %9111
  %9115 = vset.pattern.permute.xlu0 0
  %9116 = vperm.xlu0 %9115, %v9021
  %v9117 = vpop.permute.xlu0 %9116
  %9120 = vset.pattern.permute.xlu0 0
  %9121 = vperm.xlu0 %9120, %v9022
  %v9122 = vpop.permute.xlu0 %9121
  %9125 = vset.pattern.permute.xlu0 0
  %9126 = vperm.xlu0 %9125, %v9023
  %v9127 = vpop.permute.xlu0 %9126
  %9130 = vset.pattern.permute.xlu0 0
  %9131 = vperm.xlu0 %9130, %v9024
  %v9132 = vpop.permute.xlu0 %9131
  %9135 = vset.pattern.permute.xlu0 0
  %9136 = vperm.xlu0 %9135, %v9025
  %v9137 = vpop.permute.xlu0 %9136
  %9140 = vset.pattern.permute.xlu0 0
  %9141 = vperm.xlu0 %9140, %v9026
  %v9142 = vpop.permute.xlu0 %9141
  %9145 = vset.pattern.permute.xlu0 0
  %9146 = vperm.xlu0 %9145, %v9027
  %v9147 = vpop.permute.xlu0 %9146
  %9150 = vset.pattern.permute.xlu0 0
  %9151 = vperm.xlu0 %9150, %v9028
  %v9152 = vpop.permute.xlu0 %9151
  %9155 = vset.pattern.permute.xlu0 0
  %9156 = vperm.xlu0 %9155, %v9029
  %v9157 = vpop.permute.xlu0 %9156
  %9160 = vset.pattern.permute.xlu0 0
  %9161 = vperm.xlu0 %9160, %v9030
  %v9162 = vpop.permute.xlu0 %9161
  %9165 = vset.pattern.permute.xlu0 0
  %9166 = vperm.xlu0 %9165, %v9031
  %v9167 = vpop.permute.xlu0 %9166
  %9170 = vset.pattern.permute.xlu0 0
  %9171 = vperm.xlu0 %9170, %v9032
  %v9172 = vpop.permute.xlu0 %9171
  %9175 = vset.pattern.permute.xlu0 0
  %9176 = vperm.xlu0 %9175, %v9033
  %v9177 = vpop.permute.xlu0 %9176
  %9180 = vset.pattern.permute.xlu0 0
  %9181 = vperm.xlu0 %9180, %v9034
  %v9182 = vpop.permute.xlu0 %9181
  %9185 = vset.pattern.permute.xlu0 0
  %9186 = vperm.xlu0 %9185, %v9035
  %v9187 = vpop.permute.xlu0 %9186
  %9190 = vset.pattern.permute.xlu0 0
  %9191 = vperm.xlu0 %9190, %v9036
  %v9192 = vpop.permute.xlu0 %9191
  %9195 = vset.pattern.permute.xlu0 0
  %9196 = vperm.xlu0 %9195, %v9037
  %v9197 = vpop.permute.xlu0 %9196
  %9200 = vset.pattern.permute.xlu0 0
  %9201 = vperm.xlu0 %9200, %v9038
  %v9202 = vpop.permute.xlu0 %9201
  %9205 = vset.pattern.permute.xlu0 0
  %9206 = vperm.xlu0 %9205, %v9039
  %v9207 = vpop.permute.xlu0 %9206
  %9210 = vset.pattern.permute.xlu0 0
  %9211 = vperm.xlu0 %9210, %v9040
  %v9212 = vpop.permute.xlu0 %9211
  %9215 = vset.pattern.permute.xlu0 0
  %9216 = vperm.xlu0 %9215, %v9041
  %v9217 = vpop.permute.xlu0 %9216
  %9220 = vset.pattern.permute.xlu0 0
  %9221 = vperm.xlu0 %9220, %v9042
  %v9222 = vpop.permute.xlu0 %9221
  %9225 = vset.pattern.permute.xlu0 0
  %9226 = vperm.xlu0 %9225, %v9043
  %v9227 = vpop.permute.xlu0 %9226
  %9230 = vset.pattern.permute.xlu0 0
  %9231 = vperm.xlu0 %9230, %v9044
  %v9232 = vpop.permute.xlu0 %9231
  %9235 = vset.pattern.permute.xlu0 0
  %9236 = vperm.xlu0 %9235, %v9045
  %v9237 = vpop.permute.xlu0 %9236
  %9240 = vset.pattern.permute.xlu0 0
  %9241 = vperm.xlu0 %9240, %v9046
  %v9242 = vpop.permute.xlu0 %9241
  %9245 = vset.pattern.permute.xlu0 0
  %9246 = vperm.xlu0 %9245, %v9047
  %v9247 = vpop.permute.xlu0 %9246
  %9250 = vset.pattern.permute.xlu0 0
  %9251 = vperm.xlu0 %9250, %v9048
  %v9252 = vpop.permute.xlu0 %9251
  %9255 = vset.pattern.permute.xlu0 0
  %9256 = vperm.xlu0 %9255, %v9049
  %v9257 = vpop.permute.xlu0 %9256
  %9260 = vset.pattern.permute.xlu0 0
  %9261 = vperm.xlu0 %9260, %v9050
  %v9262 = vpop.permute.xlu0 %9261
  %9265 = vset.pattern.permute.xlu0 0
  %9266 = vperm.xlu0 %9265, %v9051
  %v9267 = vpop.permute.xlu0 %9266
  %9270 = vset.pattern.permute.xlu0 0
  %9271 = vperm.xlu0 %9270, %v9052
  %v9272 = vpop.permute.xlu0 %9271
  %9275 = vset.pattern.permute.xlu0 0
  %9276 = vperm.xlu0 %9275, %v9053
  %v9277 = vpop.permute.xlu0 %9276
  %9280 = vset.pattern.permute.xlu0 0
  %9281 = vperm.xlu0 %9280, %v9054
  %v9282 = vpop.permute.xlu0 %9281
  %9285 = vset.pattern.permute.xlu0 0
  %9286 = vperm.xlu0 %9285, %v9055
  %v9287 = vpop.permute.xlu0 %9286
  %9290 = vset.pattern.permute.xlu0 0
  %9291 = vperm.xlu0 %9290, %v9056
  %v9292 = vpop.permute.xlu0 %9291
  %9295 = vset.pattern.permute.xlu0 0
  %9296 = vperm.xlu0 %9295, %v9057
  %v9297 = vpop.permute.xlu0 %9296
  %9300 = vset.pattern.permute.xlu0 0
  %9301 = vperm.xlu0 %9300, %v9058
  %v9302 = vpop.permute.xlu0 %9301
  %9305 = vset.pattern.permute.xlu0 0
  %9306 = vperm.xlu0 %9305, %v9059
  %v9307 = vpop.permute.xlu0 %9306
  %9310 = vset.pattern.permute.xlu0 0
  %9311 = vperm.xlu0 %9310, %v9060
  %v9312 = vpop.permute.xlu0 %9311
  %9315 = vset.pattern.permute.xlu0 0
  %9316 = vperm.xlu0 %9315, %v9061
  %v9317 = vpop.permute.xlu0 %9316
  %9320 = vset.pattern.permute.xlu0 0
  %9321 = vperm.xlu0 %9320, %v9062
  %v9322 = vpop.permute.xlu0 %9321
  %9325 = vset.pattern.permute.xlu0 0
  %9326 = vperm.xlu0 %9325, %v9063
  %v9327 = vpop.permute.xlu0 %9326
  %9330 = vset.pattern.permute.xlu0 0
  %9331 = vperm.xlu0 %9330, %v9064
  %v9332 = vpop.permute.xlu0 %9331
  %9335 = vset.pattern.permute.xlu0 0
  %9336 = vperm.xlu0 %9335, %v9065
  %v9337 = vpop.permute.xlu0 %9336
  %9340 = vset.pattern.permute.xlu0 0
  %9341 = vperm.xlu0 %9340, %v9066
  %v9342 = vpop.permute.xlu0 %9341
  %9345 = vset.pattern.permute.xlu0 0
  %9346 = vperm.xlu0 %9345, %v9067
  %v9347 = vpop.permute.xlu0 %9346
  %9350 = vset.pattern.permute.xlu0 0
  %9351 = vperm.xlu0 %9350, %v9068
  %v9352 = vpop.permute.xlu0 %9351
  %9355 = vset.pattern.permute.xlu0 0
  %9356 = vperm.xlu0 %9355, %v9069
  %v9357 = vpop.permute.xlu0 %9356
  %9360 = vset.pattern.permute.xlu0 0
  %9361 = vperm.xlu0 %9360, %v9070
  %v9362 = vpop.permute.xlu0 %9361
  %9365 = vset.pattern.permute.xlu0 0
  %9366 = vperm.xlu0 %9365, %v9071
  %v9367 = vpop.permute.xlu0 %9366
  %9370 = vset.pattern.permute.xlu0 0
  %9371 = vperm.xlu0 %9370, %v9072
  %v9372 = vpop.permute.xlu0 %9371
  %9375 = vset.pattern.permute.xlu0 0
  %9376 = vperm.xlu0 %9375, %v9073
  %v9377 = vpop.permute.xlu0 %9376
  %9380 = vset.pattern.permute.xlu0 0
  %9381 = vperm.xlu0 %9380, %v9074
  %v9382 = vpop.permute.xlu0 %9381
  %9385 = vset.pattern.permute.xlu0 0
  %9386 = vperm.xlu0 %9385, %v9075
  %v9387 = vpop.permute.xlu0 %9386
  %9390 = vset.pattern.permute.xlu0 0
  %9391 = vperm.xlu0 %9390, %v9076
  %v9392 = vpop.permute.xlu0 %9391
  %9395 = vset.pattern.permute.xlu0 0
  %9396 = vperm.xlu0 %9395, %v9077
  %v9397 = vpop.permute.xlu0 %9396
  %v9399 = vlaneseq
  %v9400 = vshrl.u32 %v9399, 7
  %v9401 = vsub.s32 0, %v9400
  %v9402 = vrot.slane %v9078, %v9401
  %v9403 = vmul.f32 %v9082, %v9402
  %v9404 = vmul.f32 %v9087, %v9402
  %v9405 = vmul.f32 %v9092, %v9402
  %v9406 = vmul.f32 %v9097, %v9402
  %v9407 = vmul.f32 %v9102, %v9402
  %v9408 = vmul.f32 %v9107, %v9402
  %v9409 = vmul.f32 %v9112, %v9402
  %v9410 = vmul.f32 %v9117, %v9402
  %v9411 = vmul.f32 %v9122, %v9402
  %v9412 = vmul.f32 %v9127, %v9402
  %v9413 = vmul.f32 %v9132, %v9402
  %v9414 = vmul.f32 %v9137, %v9402
  %v9415 = vmul.f32 %v9142, %v9402
  %v9416 = vmul.f32 %v9147, %v9402
  %v9417 = vmul.f32 %v9152, %v9402
  %v9418 = vmul.f32 %v9157, %v9402
  %v9419 = vmul.f32 %v9162, %v9402
  %v9420 = vmul.f32 %v9167, %v9402
  %v9421 = vmul.f32 %v9172, %v9402
  %v9422 = vmul.f32 %v9177, %v9402
  %v9423 = vmul.f32 %v9182, %v9402
  %v9424 = vmul.f32 %v9187, %v9402
  %v9425 = vmul.f32 %v9192, %v9402
  %v9426 = vmul.f32 %v9197, %v9402
  %v9427 = vmul.f32 %v9202, %v9402
  %v9428 = vmul.f32 %v9207, %v9402
  %v9429 = vmul.f32 %v9212, %v9402
  %v9430 = vmul.f32 %v9217, %v9402
  %v9431 = vmul.f32 %v9222, %v9402
  %v9432 = vmul.f32 %v9227, %v9402
  %v9433 = vmul.f32 %v9232, %v9402
  %v9434 = vmul.f32 %v9237, %v9402
  %v9435 = vmul.f32 %v9242, %v9402
  %v9436 = vmul.f32 %v9247, %v9402
  %v9437 = vmul.f32 %v9252, %v9402
  %v9438 = vmul.f32 %v9257, %v9402
  %v9439 = vmul.f32 %v9262, %v9402
  %v9440 = vmul.f32 %v9267, %v9402
  %v9441 = vmul.f32 %v9272, %v9402
  %v9442 = vmul.f32 %v9277, %v9402
  %v9443 = vmul.f32 %v9282, %v9402
  %v9444 = vmul.f32 %v9287, %v9402
  %v9445 = vmul.f32 %v9292, %v9402
  %v9446 = vmul.f32 %v9297, %v9402
  %v9447 = vmul.f32 %v9302, %v9402
  %v9448 = vmul.f32 %v9307, %v9402
  %v9449 = vmul.f32 %v9312, %v9402
  %v9450 = vmul.f32 %v9317, %v9402
  %v9451 = vmul.f32 %v9322, %v9402
  %v9452 = vmul.f32 %v9327, %v9402
  %v9453 = vmul.f32 %v9332, %v9402
  %v9454 = vmul.f32 %v9337, %v9402
  %v9455 = vmul.f32 %v9342, %v9402
  %v9456 = vmul.f32 %v9347, %v9402
  %v9457 = vmul.f32 %v9352, %v9402
  %v9458 = vmul.f32 %v9357, %v9402
  %v9459 = vmul.f32 %v9362, %v9402
  %v9460 = vmul.f32 %v9367, %v9402
  %v9461 = vmul.f32 %v9372, %v9402
  %v9462 = vmul.f32 %v9377, %v9402
  %v9463 = vmul.f32 %v9382, %v9402
  %v9464 = vmul.f32 %v9387, %v9402
  %v9465 = vmul.f32 %v9392, %v9402
  %v9466 = vmul.f32 %v9397, %v9402
  %v9467 = vadd.f32 %v8950, %v9403
  %v9468 = vadd.f32 %v8951, %v9404
  %v9469 = vadd.f32 %v8952, %v9405
  %v9470 = vadd.f32 %v8953, %v9406
  %v9471 = vadd.f32 %v8954, %v9407
  %v9472 = vadd.f32 %v8955, %v9408
  %v9473 = vadd.f32 %v8956, %v9409
  %v9474 = vadd.f32 %v8957, %v9410
  %v9475 = vadd.f32 %v8958, %v9411
  %v9476 = vadd.f32 %v8959, %v9412
  %v9477 = vadd.f32 %v8960, %v9413
  %v9478 = vadd.f32 %v8961, %v9414
  %v9479 = vadd.f32 %v8962, %v9415
  %v9480 = vadd.f32 %v8963, %v9416
  %v9481 = vadd.f32 %v8964, %v9417
  %v9482 = vadd.f32 %v8965, %v9418
  %v9483 = vadd.f32 %v8966, %v9419
  %v9484 = vadd.f32 %v8967, %v9420
  %v9485 = vadd.f32 %v8968, %v9421
  %v9486 = vadd.f32 %v8969, %v9422
  %v9487 = vadd.f32 %v8970, %v9423
  %v9488 = vadd.f32 %v8971, %v9424
  %v9489 = vadd.f32 %v8972, %v9425
  %v9490 = vadd.f32 %v8973, %v9426
  %v9491 = vadd.f32 %v8974, %v9427
  %v9492 = vadd.f32 %v8975, %v9428
  %v9493 = vadd.f32 %v8976, %v9429
  %v9494 = vadd.f32 %v8977, %v9430
  %v9495 = vadd.f32 %v8978, %v9431
  %v9496 = vadd.f32 %v8979, %v9432
  %v9497 = vadd.f32 %v8980, %v9433
  %v9498 = vadd.f32 %v8981, %v9434
  %v9499 = vadd.f32 %v8982, %v9435
  %v9500 = vadd.f32 %v8983, %v9436
  %v9501 = vadd.f32 %v8984, %v9437
  %v9502 = vadd.f32 %v8985, %v9438
  %v9503 = vadd.f32 %v8986, %v9439
  %v9504 = vadd.f32 %v8987, %v9440
  %v9505 = vadd.f32 %v8988, %v9441
  %v9506 = vadd.f32 %v8989, %v9442
  %v9507 = vadd.f32 %v8990, %v9443
  %v9508 = vadd.f32 %v8991, %v9444
  %v9509 = vadd.f32 %v8992, %v9445
  %v9510 = vadd.f32 %v8993, %v9446
  %v9511 = vadd.f32 %v8994, %v9447
  %v9512 = vadd.f32 %v8995, %v9448
  %v9513 = vadd.f32 %v8996, %v9449
  %v9514 = vadd.f32 %v8997, %v9450
  %v9515 = vadd.f32 %v8998, %v9451
  %v9516 = vadd.f32 %v8999, %v9452
  %v9517 = vadd.f32 %v9000, %v9453
  %v9518 = vadd.f32 %v9001, %v9454
  %v9519 = vadd.f32 %v9002, %v9455
  %v9520 = vadd.f32 %v9003, %v9456
  %v9521 = vadd.f32 %v9004, %v9457
  %v9522 = vadd.f32 %v9005, %v9458
  %v9523 = vadd.f32 %v9006, %v9459
  %v9524 = vadd.f32 %v9007, %v9460
  %v9525 = vadd.f32 %v9008, %v9461
  %v9526 = vadd.f32 %v9009, %v9462
  %v9527 = vadd.f32 %v9010, %v9463
  %v9528 = vadd.f32 %v9011, %v9464
  %v9529 = vadd.f32 %v9012, %v9465
  %v9530 = vadd.f32 %v9013, %v9466
  %v9531 = vld [vmem:[%s0 + $0x16] sm:$0x1]
  %9532 = vset.pattern.permute.xlu0 1
  %9533 = vperm.xlu0 %9532, %v9014
  %v9534 = vpop.permute.xlu0 %9533
  %9536 = vset.pattern.permute.xlu0 1
  %9537 = vperm.xlu0 %9536, %v9015
  %v9538 = vpop.permute.xlu0 %9537
  %9540 = vset.pattern.permute.xlu0 1
  %9541 = vperm.xlu0 %9540, %v9016
  %v9542 = vpop.permute.xlu0 %9541
  %9544 = vset.pattern.permute.xlu0 1
  %9545 = vperm.xlu0 %9544, %v9017
  %v9546 = vpop.permute.xlu0 %9545
  %9548 = vset.pattern.permute.xlu0 1
  %9549 = vperm.xlu0 %9548, %v9018
  %v9550 = vpop.permute.xlu0 %9549
  %9552 = vset.pattern.permute.xlu0 1
  %9553 = vperm.xlu0 %9552, %v9019
  %v9554 = vpop.permute.xlu0 %9553
  %9556 = vset.pattern.permute.xlu0 1
  %9557 = vperm.xlu0 %9556, %v9020
  %v9558 = vpop.permute.xlu0 %9557
  %9560 = vset.pattern.permute.xlu0 1
  %9561 = vperm.xlu0 %9560, %v9021
  %v9562 = vpop.permute.xlu0 %9561
  %9564 = vset.pattern.permute.xlu0 1
  %9565 = vperm.xlu0 %9564, %v9022
  %v9566 = vpop.permute.xlu0 %9565
  %9568 = vset.pattern.permute.xlu0 1
  %9569 = vperm.xlu0 %9568, %v9023
  %v9570 = vpop.permute.xlu0 %9569
  %9572 = vset.pattern.permute.xlu0 1
  %9573 = vperm.xlu0 %9572, %v9024
  %v9574 = vpop.permute.xlu0 %9573
  %9576 = vset.pattern.permute.xlu0 1
  %9577 = vperm.xlu0 %9576, %v9025
  %v9578 = vpop.permute.xlu0 %9577
  %9580 = vset.pattern.permute.xlu0 1
  %9581 = vperm.xlu0 %9580, %v9026
  %v9582 = vpop.permute.xlu0 %9581
  %9584 = vset.pattern.permute.xlu0 1
  %9585 = vperm.xlu0 %9584, %v9027
  %v9586 = vpop.permute.xlu0 %9585
  %9588 = vset.pattern.permute.xlu0 1
  %9589 = vperm.xlu0 %9588, %v9028
  %v9590 = vpop.permute.xlu0 %9589
  %9592 = vset.pattern.permute.xlu0 1
  %9593 = vperm.xlu0 %9592, %v9029
  %v9594 = vpop.permute.xlu0 %9593
  %9596 = vset.pattern.permute.xlu0 1
  %9597 = vperm.xlu0 %9596, %v9030
  %v9598 = vpop.permute.xlu0 %9597
  %9600 = vset.pattern.permute.xlu0 1
  %9601 = vperm.xlu0 %9600, %v9031
  %v9602 = vpop.permute.xlu0 %9601
  %9604 = vset.pattern.permute.xlu0 1
  %9605 = vperm.xlu0 %9604, %v9032
  %v9606 = vpop.permute.xlu0 %9605
  %9608 = vset.pattern.permute.xlu0 1
  %9609 = vperm.xlu0 %9608, %v9033
  %v9610 = vpop.permute.xlu0 %9609
  %9612 = vset.pattern.permute.xlu0 1
  %9613 = vperm.xlu0 %9612, %v9034
  %v9614 = vpop.permute.xlu0 %9613
  %9616 = vset.pattern.permute.xlu0 1
  %9617 = vperm.xlu0 %9616, %v9035
  %v9618 = vpop.permute.xlu0 %9617
  %9620 = vset.pattern.permute.xlu0 1
  %9621 = vperm.xlu0 %9620, %v9036
  %v9622 = vpop.permute.xlu0 %9621
  %9624 = vset.pattern.permute.xlu0 1
  %9625 = vperm.xlu0 %9624, %v9037
  %v9626 = vpop.permute.xlu0 %9625
  %9628 = vset.pattern.permute.xlu0 1
  %9629 = vperm.xlu0 %9628, %v9038
  %v9630 = vpop.permute.xlu0 %9629
  %9632 = vset.pattern.permute.xlu0 1
  %9633 = vperm.xlu0 %9632, %v9039
  %v9634 = vpop.permute.xlu0 %9633
  %9636 = vset.pattern.permute.xlu0 1
  %9637 = vperm.xlu0 %9636, %v9040
  %v9638 = vpop.permute.xlu0 %9637
  %9640 = vset.pattern.permute.xlu0 1
  %9641 = vperm.xlu0 %9640, %v9041
  %v9642 = vpop.permute.xlu0 %9641
  %9644 = vset.pattern.permute.xlu0 1
  %9645 = vperm.xlu0 %9644, %v9042
  %v9646 = vpop.permute.xlu0 %9645
  %9648 = vset.pattern.permute.xlu0 1
  %9649 = vperm.xlu0 %9648, %v9043
  %v9650 = vpop.permute.xlu0 %9649
  %9652 = vset.pattern.permute.xlu0 1
  %9653 = vperm.xlu0 %9652, %v9044
  %v9654 = vpop.permute.xlu0 %9653
  %9656 = vset.pattern.permute.xlu0 1
  %9657 = vperm.xlu0 %9656, %v9045
  %v9658 = vpop.permute.xlu0 %9657
  %9660 = vset.pattern.permute.xlu0 1
  %9661 = vperm.xlu0 %9660, %v9046
  %v9662 = vpop.permute.xlu0 %9661
  %9664 = vset.pattern.permute.xlu0 1
  %9665 = vperm.xlu0 %9664, %v9047
  %v9666 = vpop.permute.xlu0 %9665
  %9668 = vset.pattern.permute.xlu0 1
  %9669 = vperm.xlu0 %9668, %v9048
  %v9670 = vpop.permute.xlu0 %9669
  %9672 = vset.pattern.permute.xlu0 1
  %9673 = vperm.xlu0 %9672, %v9049
  %v9674 = vpop.permute.xlu0 %9673
  %9676 = vset.pattern.permute.xlu0 1
  %9677 = vperm.xlu0 %9676, %v9050
  %v9678 = vpop.permute.xlu0 %9677
  %9680 = vset.pattern.permute.xlu0 1
  %9681 = vperm.xlu0 %9680, %v9051
  %v9682 = vpop.permute.xlu0 %9681
  %9684 = vset.pattern.permute.xlu0 1
  %9685 = vperm.xlu0 %9684, %v9052
  %v9686 = vpop.permute.xlu0 %9685
  %9688 = vset.pattern.permute.xlu0 1
  %9689 = vperm.xlu0 %9688, %v9053
  %v9690 = vpop.permute.xlu0 %9689
  %9692 = vset.pattern.permute.xlu0 1
  %9693 = vperm.xlu0 %9692, %v9054
  %v9694 = vpop.permute.xlu0 %9693
  %9696 = vset.pattern.permute.xlu0 1
  %9697 = vperm.xlu0 %9696, %v9055
  %v9698 = vpop.permute.xlu0 %9697
  %9700 = vset.pattern.permute.xlu0 1
  %9701 = vperm.xlu0 %9700, %v9056
  %v9702 = vpop.permute.xlu0 %9701
  %9704 = vset.pattern.permute.xlu0 1
  %9705 = vperm.xlu0 %9704, %v9057
  %v9706 = vpop.permute.xlu0 %9705
  %9708 = vset.pattern.permute.xlu0 1
  %9709 = vperm.xlu0 %9708, %v9058
  %v9710 = vpop.permute.xlu0 %9709
  %9712 = vset.pattern.permute.xlu0 1
  %9713 = vperm.xlu0 %9712, %v9059
  %v9714 = vpop.permute.xlu0 %9713
  %9716 = vset.pattern.permute.xlu0 1
  %9717 = vperm.xlu0 %9716, %v9060
  %v9718 = vpop.permute.xlu0 %9717
  %9720 = vset.pattern.permute.xlu0 1
  %9721 = vperm.xlu0 %9720, %v9061
  %v9722 = vpop.permute.xlu0 %9721
  %9724 = vset.pattern.permute.xlu0 1
  %9725 = vperm.xlu0 %9724, %v9062
  %v9726 = vpop.permute.xlu0 %9725
  %9728 = vset.pattern.permute.xlu0 1
  %9729 = vperm.xlu0 %9728, %v9063
  %v9730 = vpop.permute.xlu0 %9729
  %9732 = vset.pattern.permute.xlu0 1
  %9733 = vperm.xlu0 %9732, %v9064
  %v9734 = vpop.permute.xlu0 %9733
  %9736 = vset.pattern.permute.xlu0 1
  %9737 = vperm.xlu0 %9736, %v9065
  %v9738 = vpop.permute.xlu0 %9737
  %9740 = vset.pattern.permute.xlu0 1
  %9741 = vperm.xlu0 %9740, %v9066
  %v9742 = vpop.permute.xlu0 %9741
  %9744 = vset.pattern.permute.xlu0 1
  %9745 = vperm.xlu0 %9744, %v9067
  %v9746 = vpop.permute.xlu0 %9745
  %9748 = vset.pattern.permute.xlu0 1
  %9749 = vperm.xlu0 %9748, %v9068
  %v9750 = vpop.permute.xlu0 %9749
  %9752 = vset.pattern.permute.xlu0 1
  %9753 = vperm.xlu0 %9752, %v9069
  %v9754 = vpop.permute.xlu0 %9753
  %9756 = vset.pattern.permute.xlu0 1
  %9757 = vperm.xlu0 %9756, %v9070
  %v9758 = vpop.permute.xlu0 %9757
  %9760 = vset.pattern.permute.xlu0 1
  %9761 = vperm.xlu0 %9760, %v9071
  %v9762 = vpop.permute.xlu0 %9761
  %9764 = vset.pattern.permute.xlu0 1
  %9765 = vperm.xlu0 %9764, %v9072
  %v9766 = vpop.permute.xlu0 %9765
  %9768 = vset.pattern.permute.xlu0 1
  %9769 = vperm.xlu0 %9768, %v9073
  %v9770 = vpop.permute.xlu0 %9769
  %9772 = vset.pattern.permute.xlu0 1
  %9773 = vperm.xlu0 %9772, %v9074
  %v9774 = vpop.permute.xlu0 %9773
  %9776 = vset.pattern.permute.xlu0 1
  %9777 = vperm.xlu0 %9776, %v9075
  %v9778 = vpop.permute.xlu0 %9777
  %9780 = vset.pattern.permute.xlu0 1
  %9781 = vperm.xlu0 %9780, %v9076
  %v9782 = vpop.permute.xlu0 %9781
  %9784 = vset.pattern.permute.xlu0 1
  %9785 = vperm.xlu0 %9784, %v9077
  %v9786 = vpop.permute.xlu0 %9785
  %v9788 = vlaneseq
  %v9789 = vshrl.u32 %v9788, 7
  %v9790 = vsub.s32 0, %v9789
  %v9791 = vrot.slane %v9531, %v9790
  %v9792 = vmul.f32 %v9534, %v9791
  %v9793 = vmul.f32 %v9538, %v9791
  %v9794 = vmul.f32 %v9542, %v9791
  %v9795 = vmul.f32 %v9546, %v9791
  %v9796 = vmul.f32 %v9550, %v9791
  %v9797 = vmul.f32 %v9554, %v9791
  %v9798 = vmul.f32 %v9558, %v9791
  %v9799 = vmul.f32 %v9562, %v9791
  %v9800 = vmul.f32 %v9566, %v9791
  %v9801 = vmul.f32 %v9570, %v9791
  %v9802 = vmul.f32 %v9574, %v9791
  %v9803 = vmul.f32 %v9578, %v9791
  %v9804 = vmul.f32 %v9582, %v9791
  %v9805 = vmul.f32 %v9586, %v9791
  %v9806 = vmul.f32 %v9590, %v9791
  %v9807 = vmul.f32 %v9594, %v9791
  %v9808 = vmul.f32 %v9598, %v9791
  %v9809 = vmul.f32 %v9602, %v9791
  %v9810 = vmul.f32 %v9606, %v9791
  %v9811 = vmul.f32 %v9610, %v9791
  %v9812 = vmul.f32 %v9614, %v9791
  %v9813 = vmul.f32 %v9618, %v9791
  %v9814 = vmul.f32 %v9622, %v9791
  %v9815 = vmul.f32 %v9626, %v9791
  %v9816 = vmul.f32 %v9630, %v9791
  %v9817 = vmul.f32 %v9634, %v9791
  %v9818 = vmul.f32 %v9638, %v9791
  %v9819 = vmul.f32 %v9642, %v9791
  %v9820 = vmul.f32 %v9646, %v9791
  %v9821 = vmul.f32 %v9650, %v9791
  %v9822 = vmul.f32 %v9654, %v9791
  %v9823 = vmul.f32 %v9658, %v9791
  %v9824 = vmul.f32 %v9662, %v9791
  %v9825 = vmul.f32 %v9666, %v9791
  %v9826 = vmul.f32 %v9670, %v9791
  %v9827 = vmul.f32 %v9674, %v9791
  %v9828 = vmul.f32 %v9678, %v9791
  %v9829 = vmul.f32 %v9682, %v9791
  %v9830 = vmul.f32 %v9686, %v9791
  %v9831 = vmul.f32 %v9690, %v9791
  %v9832 = vmul.f32 %v9694, %v9791
  %v9833 = vmul.f32 %v9698, %v9791
  %v9834 = vmul.f32 %v9702, %v9791
  %v9835 = vmul.f32 %v9706, %v9791
  %v9836 = vmul.f32 %v9710, %v9791
  %v9837 = vmul.f32 %v9714, %v9791
  %v9838 = vmul.f32 %v9718, %v9791
  %v9839 = vmul.f32 %v9722, %v9791
  %v9840 = vmul.f32 %v9726, %v9791
  %v9841 = vmul.f32 %v9730, %v9791
  %v9842 = vmul.f32 %v9734, %v9791
  %v9843 = vmul.f32 %v9738, %v9791
  %v9844 = vmul.f32 %v9742, %v9791
  %v9845 = vmul.f32 %v9746, %v9791
  %v9846 = vmul.f32 %v9750, %v9791
  %v9847 = vmul.f32 %v9754, %v9791
  %v9848 = vmul.f32 %v9758, %v9791
  %v9849 = vmul.f32 %v9762, %v9791
  %v9850 = vmul.f32 %v9766, %v9791
  %v9851 = vmul.f32 %v9770, %v9791
  %v9852 = vmul.f32 %v9774, %v9791
  %v9853 = vmul.f32 %v9778, %v9791
  %v9854 = vmul.f32 %v9782, %v9791
  %v9855 = vmul.f32 %v9786, %v9791
  %v9856 = vadd.f32 %v9467, %v9792
  %v9857 = vadd.f32 %v9468, %v9793
  %v9858 = vadd.f32 %v9469, %v9794
  %v9859 = vadd.f32 %v9470, %v9795
  %v9860 = vadd.f32 %v9471, %v9796
  %v9861 = vadd.f32 %v9472, %v9797
  %v9862 = vadd.f32 %v9473, %v9798
  %v9863 = vadd.f32 %v9474, %v9799
  %v9864 = vadd.f32 %v9475, %v9800
  %v9865 = vadd.f32 %v9476, %v9801
  %v9866 = vadd.f32 %v9477, %v9802
  %v9867 = vadd.f32 %v9478, %v9803
  %v9868 = vadd.f32 %v9479, %v9804
  %v9869 = vadd.f32 %v9480, %v9805
  %v9870 = vadd.f32 %v9481, %v9806
  %v9871 = vadd.f32 %v9482, %v9807
  %v9872 = vadd.f32 %v9483, %v9808
  %v9873 = vadd.f32 %v9484, %v9809
  %v9874 = vadd.f32 %v9485, %v9810
  %v9875 = vadd.f32 %v9486, %v9811
  %v9876 = vadd.f32 %v9487, %v9812
  %v9877 = vadd.f32 %v9488, %v9813
  %v9878 = vadd.f32 %v9489, %v9814
  %v9879 = vadd.f32 %v9490, %v9815
  %v9880 = vadd.f32 %v9491, %v9816
  %v9881 = vadd.f32 %v9492, %v9817
  %v9882 = vadd.f32 %v9493, %v9818
  %v9883 = vadd.f32 %v9494, %v9819
  %v9884 = vadd.f32 %v9495, %v9820
  %v9885 = vadd.f32 %v9496, %v9821
  %v9886 = vadd.f32 %v9497, %v9822
  %v9887 = vadd.f32 %v9498, %v9823
  %v9888 = vadd.f32 %v9499, %v9824
  %v9889 = vadd.f32 %v9500, %v9825
  %v9890 = vadd.f32 %v9501, %v9826
  %v9891 = vadd.f32 %v9502, %v9827
  %v9892 = vadd.f32 %v9503, %v9828
  %v9893 = vadd.f32 %v9504, %v9829
  %v9894 = vadd.f32 %v9505, %v9830
  %v9895 = vadd.f32 %v9506, %v9831
  %v9896 = vadd.f32 %v9507, %v9832
  %v9897 = vadd.f32 %v9508, %v9833
  %v9898 = vadd.f32 %v9509, %v9834
  %v9899 = vadd.f32 %v9510, %v9835
  %v9900 = vadd.f32 %v9511, %v9836
  %v9901 = vadd.f32 %v9512, %v9837
  %v9902 = vadd.f32 %v9513, %v9838
  %v9903 = vadd.f32 %v9514, %v9839
  %v9904 = vadd.f32 %v9515, %v9840
  %v9905 = vadd.f32 %v9516, %v9841
  %v9906 = vadd.f32 %v9517, %v9842
  %v9907 = vadd.f32 %v9518, %v9843
  %v9908 = vadd.f32 %v9519, %v9844
  %v9909 = vadd.f32 %v9520, %v9845
  %v9910 = vadd.f32 %v9521, %v9846
  %v9911 = vadd.f32 %v9522, %v9847
  %v9912 = vadd.f32 %v9523, %v9848
  %v9913 = vadd.f32 %v9524, %v9849
  %v9914 = vadd.f32 %v9525, %v9850
  %v9915 = vadd.f32 %v9526, %v9851
  %v9916 = vadd.f32 %v9527, %v9852
  %v9917 = vadd.f32 %v9528, %v9853
  %v9918 = vadd.f32 %v9529, %v9854
  %v9919 = vadd.f32 %v9530, %v9855
  %v9920 = vld [vmem:[%s0 + $0x17] sm:$0x1]
  %9921 = vset.pattern.permute.xlu0 2
  %9922 = vperm.xlu0 %9921, %v9014
  %v9923 = vpop.permute.xlu0 %9922
  %9925 = vset.pattern.permute.xlu0 2
  %9926 = vperm.xlu0 %9925, %v9015
  %v9927 = vpop.permute.xlu0 %9926
  %9929 = vset.pattern.permute.xlu0 2
  %9930 = vperm.xlu0 %9929, %v9016
  %v9931 = vpop.permute.xlu0 %9930
  %9933 = vset.pattern.permute.xlu0 2
  %9934 = vperm.xlu0 %9933, %v9017
  %v9935 = vpop.permute.xlu0 %9934
  %9937 = vset.pattern.permute.xlu0 2
  %9938 = vperm.xlu0 %9937, %v9018
  %v9939 = vpop.permute.xlu0 %9938
  %9941 = vset.pattern.permute.xlu0 2
  %9942 = vperm.xlu0 %9941, %v9019
  %v9943 = vpop.permute.xlu0 %9942
  %9945 = vset.pattern.permute.xlu0 2
  %9946 = vperm.xlu0 %9945, %v9020
  %v9947 = vpop.permute.xlu0 %9946
  %9949 = vset.pattern.permute.xlu0 2
  %9950 = vperm.xlu0 %9949, %v9021
  %v9951 = vpop.permute.xlu0 %9950
  %9953 = vset.pattern.permute.xlu0 2
  %9954 = vperm.xlu0 %9953, %v9022
  %v9955 = vpop.permute.xlu0 %9954
  %9957 = vset.pattern.permute.xlu0 2
  %9958 = vperm.xlu0 %9957, %v9023
  %v9959 = vpop.permute.xlu0 %9958
  %9961 = vset.pattern.permute.xlu0 2
  %9962 = vperm.xlu0 %9961, %v9024
  %v9963 = vpop.permute.xlu0 %9962
  %9965 = vset.pattern.permute.xlu0 2
  %9966 = vperm.xlu0 %9965, %v9025
  %v9967 = vpop.permute.xlu0 %9966
  %9969 = vset.pattern.permute.xlu0 2
  %9970 = vperm.xlu0 %9969, %v9026
  %v9971 = vpop.permute.xlu0 %9970
  %9973 = vset.pattern.permute.xlu0 2
  %9974 = vperm.xlu0 %9973, %v9027
  %v9975 = vpop.permute.xlu0 %9974
  %9977 = vset.pattern.permute.xlu0 2
  %9978 = vperm.xlu0 %9977, %v9028
  %v9979 = vpop.permute.xlu0 %9978
  %9981 = vset.pattern.permute.xlu0 2
  %9982 = vperm.xlu0 %9981, %v9029
  %v9983 = vpop.permute.xlu0 %9982
  %9985 = vset.pattern.permute.xlu0 2
  %9986 = vperm.xlu0 %9985, %v9030
  %v9987 = vpop.permute.xlu0 %9986
  %9989 = vset.pattern.permute.xlu0 2
  %9990 = vperm.xlu0 %9989, %v9031
  %v9991 = vpop.permute.xlu0 %9990
  %9993 = vset.pattern.permute.xlu0 2
  %9994 = vperm.xlu0 %9993, %v9032
  %v9995 = vpop.permute.xlu0 %9994
  %9997 = vset.pattern.permute.xlu0 2
  %9998 = vperm.xlu0 %9997, %v9033
  %v9999 = vpop.permute.xlu0 %9998
  %10001 = vset.pattern.permute.xlu0 2
  %10002 = vperm.xlu0 %10001, %v9034
  %v10003 = vpop.permute.xlu0 %10002
  %10005 = vset.pattern.permute.xlu0 2
  %10006 = vperm.xlu0 %10005, %v9035
  %v10007 = vpop.permute.xlu0 %10006
  %10009 = vset.pattern.permute.xlu0 2
  %10010 = vperm.xlu0 %10009, %v9036
  %v10011 = vpop.permute.xlu0 %10010
  %10013 = vset.pattern.permute.xlu0 2
  %10014 = vperm.xlu0 %10013, %v9037
  %v10015 = vpop.permute.xlu0 %10014
  %10017 = vset.pattern.permute.xlu0 2
  %10018 = vperm.xlu0 %10017, %v9038
  %v10019 = vpop.permute.xlu0 %10018
  %10021 = vset.pattern.permute.xlu0 2
  %10022 = vperm.xlu0 %10021, %v9039
  %v10023 = vpop.permute.xlu0 %10022
  %10025 = vset.pattern.permute.xlu0 2
  %10026 = vperm.xlu0 %10025, %v9040
  %v10027 = vpop.permute.xlu0 %10026
  %10029 = vset.pattern.permute.xlu0 2
  %10030 = vperm.xlu0 %10029, %v9041
  %v10031 = vpop.permute.xlu0 %10030
  %10033 = vset.pattern.permute.xlu0 2
  %10034 = vperm.xlu0 %10033, %v9042
  %v10035 = vpop.permute.xlu0 %10034
  %10037 = vset.pattern.permute.xlu0 2
  %10038 = vperm.xlu0 %10037, %v9043
  %v10039 = vpop.permute.xlu0 %10038
  %10041 = vset.pattern.permute.xlu0 2
  %10042 = vperm.xlu0 %10041, %v9044
  %v10043 = vpop.permute.xlu0 %10042
  %10045 = vset.pattern.permute.xlu0 2
  %10046 = vperm.xlu0 %10045, %v9045
  %v10047 = vpop.permute.xlu0 %10046
  %10049 = vset.pattern.permute.xlu0 2
  %10050 = vperm.xlu0 %10049, %v9046
  %v10051 = vpop.permute.xlu0 %10050
  %10053 = vset.pattern.permute.xlu0 2
  %10054 = vperm.xlu0 %10053, %v9047
  %v10055 = vpop.permute.xlu0 %10054
  %10057 = vset.pattern.permute.xlu0 2
  %10058 = vperm.xlu0 %10057, %v9048
  %v10059 = vpop.permute.xlu0 %10058
  %10061 = vset.pattern.permute.xlu0 2
  %10062 = vperm.xlu0 %10061, %v9049
  %v10063 = vpop.permute.xlu0 %10062
  %10065 = vset.pattern.permute.xlu0 2
  %10066 = vperm.xlu0 %10065, %v9050
  %v10067 = vpop.permute.xlu0 %10066
  %10069 = vset.pattern.permute.xlu0 2
  %10070 = vperm.xlu0 %10069, %v9051
  %v10071 = vpop.permute.xlu0 %10070
  %10073 = vset.pattern.permute.xlu0 2
  %10074 = vperm.xlu0 %10073, %v9052
  %v10075 = vpop.permute.xlu0 %10074
  %10077 = vset.pattern.permute.xlu0 2
  %10078 = vperm.xlu0 %10077, %v9053
  %v10079 = vpop.permute.xlu0 %10078
  %10081 = vset.pattern.permute.xlu0 2
  %10082 = vperm.xlu0 %10081, %v9054
  %v10083 = vpop.permute.xlu0 %10082
  %10085 = vset.pattern.permute.xlu0 2
  %10086 = vperm.xlu0 %10085, %v9055
  %v10087 = vpop.permute.xlu0 %10086
  %10089 = vset.pattern.permute.xlu0 2
  %10090 = vperm.xlu0 %10089, %v9056
  %v10091 = vpop.permute.xlu0 %10090
  %10093 = vset.pattern.permute.xlu0 2
  %10094 = vperm.xlu0 %10093, %v9057
  %v10095 = vpop.permute.xlu0 %10094
  %10097 = vset.pattern.permute.xlu0 2
  %10098 = vperm.xlu0 %10097, %v9058
  %v10099 = vpop.permute.xlu0 %10098
  %10101 = vset.pattern.permute.xlu0 2
  %10102 = vperm.xlu0 %10101, %v9059
  %v10103 = vpop.permute.xlu0 %10102
  %10105 = vset.pattern.permute.xlu0 2
  %10106 = vperm.xlu0 %10105, %v9060
  %v10107 = vpop.permute.xlu0 %10106
  %10109 = vset.pattern.permute.xlu0 2
  %10110 = vperm.xlu0 %10109, %v9061
  %v10111 = vpop.permute.xlu0 %10110
  %10113 = vset.pattern.permute.xlu0 2
  %10114 = vperm.xlu0 %10113, %v9062
  %v10115 = vpop.permute.xlu0 %10114
  %10117 = vset.pattern.permute.xlu0 2
  %10118 = vperm.xlu0 %10117, %v9063
  %v10119 = vpop.permute.xlu0 %10118
  %10121 = vset.pattern.permute.xlu0 2
  %10122 = vperm.xlu0 %10121, %v9064
  %v10123 = vpop.permute.xlu0 %10122
  %10125 = vset.pattern.permute.xlu0 2
  %10126 = vperm.xlu0 %10125, %v9065
  %v10127 = vpop.permute.xlu0 %10126
  %10129 = vset.pattern.permute.xlu0 2
  %10130 = vperm.xlu0 %10129, %v9066
  %v10131 = vpop.permute.xlu0 %10130
  %10133 = vset.pattern.permute.xlu0 2
  %10134 = vperm.xlu0 %10133, %v9067
  %v10135 = vpop.permute.xlu0 %10134
  %10137 = vset.pattern.permute.xlu0 2
  %10138 = vperm.xlu0 %10137, %v9068
  %v10139 = vpop.permute.xlu0 %10138
  %10141 = vset.pattern.permute.xlu0 2
  %10142 = vperm.xlu0 %10141, %v9069
  %v10143 = vpop.permute.xlu0 %10142
  %10145 = vset.pattern.permute.xlu0 2
  %10146 = vperm.xlu0 %10145, %v9070
  %v10147 = vpop.permute.xlu0 %10146
  %10149 = vset.pattern.permute.xlu0 2
  %10150 = vperm.xlu0 %10149, %v9071
  %v10151 = vpop.permute.xlu0 %10150
  %10153 = vset.pattern.permute.xlu0 2
  %10154 = vperm.xlu0 %10153, %v9072
  %v10155 = vpop.permute.xlu0 %10154
  %10157 = vset.pattern.permute.xlu0 2
  %10158 = vperm.xlu0 %10157, %v9073
  %v10159 = vpop.permute.xlu0 %10158
  %10161 = vset.pattern.permute.xlu0 2
  %10162 = vperm.xlu0 %10161, %v9074
  %v10163 = vpop.permute.xlu0 %10162
  %10165 = vset.pattern.permute.xlu0 2
  %10166 = vperm.xlu0 %10165, %v9075
  %v10167 = vpop.permute.xlu0 %10166
  %10169 = vset.pattern.permute.xlu0 2
  %10170 = vperm.xlu0 %10169, %v9076
  %v10171 = vpop.permute.xlu0 %10170
  %10173 = vset.pattern.permute.xlu0 2
  %10174 = vperm.xlu0 %10173, %v9077
  %v10175 = vpop.permute.xlu0 %10174
  %v10177 = vlaneseq
  %v10178 = vshrl.u32 %v10177, 7
  %v10179 = vsub.s32 0, %v10178
  %v10180 = vrot.slane %v9920, %v10179
  %v10181 = vmul.f32 %v9923, %v10180
  %v10182 = vmul.f32 %v9927, %v10180
  %v10183 = vmul.f32 %v9931, %v10180
  %v10184 = vmul.f32 %v9935, %v10180
  %v10185 = vmul.f32 %v9939, %v10180
  %v10186 = vmul.f32 %v9943, %v10180
  %v10187 = vmul.f32 %v9947, %v10180
  %v10188 = vmul.f32 %v9951, %v10180
  %v10189 = vmul.f32 %v9955, %v10180
  %v10190 = vmul.f32 %v9959, %v10180
  %v10191 = vmul.f32 %v9963, %v10180
  %v10192 = vmul.f32 %v9967, %v10180
  %v10193 = vmul.f32 %v9971, %v10180
  %v10194 = vmul.f32 %v9975, %v10180
  %v10195 = vmul.f32 %v9979, %v10180
  %v10196 = vmul.f32 %v9983, %v10180
  %v10197 = vmul.f32 %v9987, %v10180
  %v10198 = vmul.f32 %v9991, %v10180
  %v10199 = vmul.f32 %v9995, %v10180
  %v10200 = vmul.f32 %v9999, %v10180
  %v10201 = vmul.f32 %v10003, %v10180
  %v10202 = vmul.f32 %v10007, %v10180
  %v10203 = vmul.f32 %v10011, %v10180
  %v10204 = vmul.f32 %v10015, %v10180
  %v10205 = vmul.f32 %v10019, %v10180
  %v10206 = vmul.f32 %v10023, %v10180
  %v10207 = vmul.f32 %v10027, %v10180
  %v10208 = vmul.f32 %v10031, %v10180
  %v10209 = vmul.f32 %v10035, %v10180
  %v10210 = vmul.f32 %v10039, %v10180
  %v10211 = vmul.f32 %v10043, %v10180
  %v10212 = vmul.f32 %v10047, %v10180
  %v10213 = vmul.f32 %v10051, %v10180
  %v10214 = vmul.f32 %v10055, %v10180
  %v10215 = vmul.f32 %v10059, %v10180
  %v10216 = vmul.f32 %v10063, %v10180
  %v10217 = vmul.f32 %v10067, %v10180
  %v10218 = vmul.f32 %v10071, %v10180
  %v10219 = vmul.f32 %v10075, %v10180
  %v10220 = vmul.f32 %v10079, %v10180
  %v10221 = vmul.f32 %v10083, %v10180
  %v10222 = vmul.f32 %v10087, %v10180
  %v10223 = vmul.f32 %v10091, %v10180
  %v10224 = vmul.f32 %v10095, %v10180
  %v10225 = vmul.f32 %v10099, %v10180
  %v10226 = vmul.f32 %v10103, %v10180
  %v10227 = vmul.f32 %v10107, %v10180
  %v10228 = vmul.f32 %v10111, %v10180
  %v10229 = vmul.f32 %v10115, %v10180
  %v10230 = vmul.f32 %v10119, %v10180
  %v10231 = vmul.f32 %v10123, %v10180
  %v10232 = vmul.f32 %v10127, %v10180
  %v10233 = vmul.f32 %v10131, %v10180
  %v10234 = vmul.f32 %v10135, %v10180
  %v10235 = vmul.f32 %v10139, %v10180
  %v10236 = vmul.f32 %v10143, %v10180
  %v10237 = vmul.f32 %v10147, %v10180
  %v10238 = vmul.f32 %v10151, %v10180
  %v10239 = vmul.f32 %v10155, %v10180
  %v10240 = vmul.f32 %v10159, %v10180
  %v10241 = vmul.f32 %v10163, %v10180
  %v10242 = vmul.f32 %v10167, %v10180
  %v10243 = vmul.f32 %v10171, %v10180
  %v10244 = vmul.f32 %v10175, %v10180
  %v10245 = vadd.f32 %v9856, %v10181
  %v10246 = vadd.f32 %v9857, %v10182
  %v10247 = vadd.f32 %v9858, %v10183
  %v10248 = vadd.f32 %v9859, %v10184
  %v10249 = vadd.f32 %v9860, %v10185
  %v10250 = vadd.f32 %v9861, %v10186
  %v10251 = vadd.f32 %v9862, %v10187
  %v10252 = vadd.f32 %v9863, %v10188
  %v10253 = vadd.f32 %v9864, %v10189
  %v10254 = vadd.f32 %v9865, %v10190
  %v10255 = vadd.f32 %v9866, %v10191
  %v10256 = vadd.f32 %v9867, %v10192
  %v10257 = vadd.f32 %v9868, %v10193
  %v10258 = vadd.f32 %v9869, %v10194
  %v10259 = vadd.f32 %v9870, %v10195
  %v10260 = vadd.f32 %v9871, %v10196
  %v10261 = vadd.f32 %v9872, %v10197
  %v10262 = vadd.f32 %v9873, %v10198
  %v10263 = vadd.f32 %v9874, %v10199
  %v10264 = vadd.f32 %v9875, %v10200
  %v10265 = vadd.f32 %v9876, %v10201
  %v10266 = vadd.f32 %v9877, %v10202
  %v10267 = vadd.f32 %v9878, %v10203
  %v10268 = vadd.f32 %v9879, %v10204
  %v10269 = vadd.f32 %v9880, %v10205
  %v10270 = vadd.f32 %v9881, %v10206
  %v10271 = vadd.f32 %v9882, %v10207
  %v10272 = vadd.f32 %v9883, %v10208
  %v10273 = vadd.f32 %v9884, %v10209
  %v10274 = vadd.f32 %v9885, %v10210
  %v10275 = vadd.f32 %v9886, %v10211
  %v10276 = vadd.f32 %v9887, %v10212
  %v10277 = vadd.f32 %v9888, %v10213
  %v10278 = vadd.f32 %v9889, %v10214
  %v10279 = vadd.f32 %v9890, %v10215
  %v10280 = vadd.f32 %v9891, %v10216
  %v10281 = vadd.f32 %v9892, %v10217
  %v10282 = vadd.f32 %v9893, %v10218
  %v10283 = vadd.f32 %v9894, %v10219
  %v10284 = vadd.f32 %v9895, %v10220
  %v10285 = vadd.f32 %v9896, %v10221
  %v10286 = vadd.f32 %v9897, %v10222
  %v10287 = vadd.f32 %v9898, %v10223
  %v10288 = vadd.f32 %v9899, %v10224
  %v10289 = vadd.f32 %v9900, %v10225
  %v10290 = vadd.f32 %v9901, %v10226
  %v10291 = vadd.f32 %v9902, %v10227
  %v10292 = vadd.f32 %v9903, %v10228
  %v10293 = vadd.f32 %v9904, %v10229
  %v10294 = vadd.f32 %v9905, %v10230
  %v10295 = vadd.f32 %v9906, %v10231
  %v10296 = vadd.f32 %v9907, %v10232
  %v10297 = vadd.f32 %v9908, %v10233
  %v10298 = vadd.f32 %v9909, %v10234
  %v10299 = vadd.f32 %v9910, %v10235
  %v10300 = vadd.f32 %v9911, %v10236
  %v10301 = vadd.f32 %v9912, %v10237
  %v10302 = vadd.f32 %v9913, %v10238
  %v10303 = vadd.f32 %v9914, %v10239
  %v10304 = vadd.f32 %v9915, %v10240
  %v10305 = vadd.f32 %v9916, %v10241
  %v10306 = vadd.f32 %v9917, %v10242
  %v10307 = vadd.f32 %v9918, %v10243
  %v10308 = vadd.f32 %v9919, %v10244
  %v10309 = vld [vmem:[%s7718 + $0x2] sm:$0xff]
  %v10310 = vld [vmem:[%s7718 + $0xa] sm:$0xff]
  %v10311 = vld [vmem:[%s7718 + $0x1a] sm:$0xff]
  %v10312 = vld [vmem:[%s7718 + $0x22] sm:$0xff]
  %v10313 = vld [vmem:[%s7718 + $0x32] sm:$0xff]
  %v10314 = vld [vmem:[%s7718 + $0x3a] sm:$0xff]
  %v10315 = vld [vmem:[%s7718 + $0x4a] sm:$0xff]
  %v10316 = vld [vmem:[%s7718 + $0x52] sm:$0xff]
  %v10317 = vld [vmem:[%s7718 + $0x62] sm:$0xff]
  %v10318 = vld [vmem:[%s7718 + $0x6a] sm:$0xff]
  %v10319 = vld [vmem:[%s7718 + $0x7a] sm:$0xff]
  %v10320 = vld [vmem:[%s7718 + $0x82] sm:$0xff]
  %v10321 = vld [vmem:[%s7718 + $0x92] sm:$0xff]
  %v10322 = vld [vmem:[%s7718 + $0x9a] sm:$0xff]
  %v10323 = vld [vmem:[%s7718 + $0xaa] sm:$0xff]
  %v10324 = vld [vmem:[%s7718 + $0xb2] sm:$0xff]
  %v10325 = vld [vmem:[%s7718 + $0xc2] sm:$0xff]
  %v10326 = vld [vmem:[%s7718 + $0xca] sm:$0xff]
  %v10327 = vld [vmem:[%s7718 + $0xda] sm:$0xff]
  %v10328 = vld [vmem:[%s7718 + $0xe2] sm:$0xff]
  %v10329 = vld [vmem:[%s7718 + $0xf2] sm:$0xff]
  %v10330 = vld [vmem:[%s7718 + $0xfa] sm:$0xff]
  %v10331 = vld [vmem:[%s7718 + $0x10a] sm:$0xff]
  %v10332 = vld [vmem:[%s7718 + $0x112] sm:$0xff]
  %v10333 = vld [vmem:[%s7718 + $0x122] sm:$0xff]
  %v10334 = vld [vmem:[%s7718 + $0x12a] sm:$0xff]
  %v10335 = vld [vmem:[%s7718 + $0x13a] sm:$0xff]
  %v10336 = vld [vmem:[%s7718 + $0x142] sm:$0xff]
  %v10337 = vld [vmem:[%s7718 + $0x152] sm:$0xff]
  %v10338 = vld [vmem:[%s7718 + $0x15a] sm:$0xff]
  %v10339 = vld [vmem:[%s7718 + $0x16a] sm:$0xff]
  %v10340 = vld [vmem:[%s7718 + $0x172] sm:$0xff]
  %v10341 = vld [vmem:[%s7718 + $0x1b2] sm:$0xff]
  %v10342 = vld [vmem:[%s7718 + $0x1ba] sm:$0xff]
  %v10343 = vld [vmem:[%s7718 + $0x1ca] sm:$0xff]
  %v10344 = vld [vmem:[%s7718 + $0x1d2] sm:$0xff]
  %v10345 = vld [vmem:[%s7718 + $0x1e2] sm:$0xff]
  %v10346 = vld [vmem:[%s7718 + $0x1ea] sm:$0xff]
  %v10347 = vld [vmem:[%s7718 + $0x1fa] sm:$0xff]
  %v10348 = vld [vmem:[%s7718 + $0x202] sm:$0xff]
  %v10349 = vld [vmem:[%s7718 + $0x212] sm:$0xff]
  %v10350 = vld [vmem:[%s7718 + $0x21a] sm:$0xff]
  %v10351 = vld [vmem:[%s7718 + $0x22a] sm:$0xff]
  %v10352 = vld [vmem:[%s7718 + $0x232] sm:$0xff]
  %v10353 = vld [vmem:[%s7718 + $0x242] sm:$0xff]
  %v10354 = vld [vmem:[%s7718 + $0x24a] sm:$0xff]
  %v10355 = vld [vmem:[%s7718 + $0x25a] sm:$0xff]
  %v10356 = vld [vmem:[%s7718 + $0x262] sm:$0xff]
  %v10357 = vld [vmem:[%s7718 + $0x272] sm:$0xff]
  %v10358 = vld [vmem:[%s7718 + $0x27a] sm:$0xff]
  %v10359 = vld [vmem:[%s7718 + $0x28a] sm:$0xff]
  %v10360 = vld [vmem:[%s7718 + $0x292] sm:$0xff]
  %v10361 = vld [vmem:[%s7718 + $0x2a2] sm:$0xff]
  %v10362 = vld [vmem:[%s7718 + $0x2aa] sm:$0xff]
  %v10363 = vld [vmem:[%s7718 + $0x2ba] sm:$0xff]
  %v10364 = vld [vmem:[%s7718 + $0x2c2] sm:$0xff]
  %v10365 = vld [vmem:[%s7718 + $0x2d2] sm:$0xff]
  %v10366 = vld [vmem:[%s7718 + $0x2da] sm:$0xff]
  %v10367 = vld [vmem:[%s7718 + $0x2ea] sm:$0xff]
  %v10368 = vld [vmem:[%s7718 + $0x2f2] sm:$0xff]
  %v10369 = vld [vmem:[%s7718 + $0x302] sm:$0xff]
  %v10370 = vld [vmem:[%s7718 + $0x30a] sm:$0xff]
  %v10371 = vld [vmem:[%s7718 + $0x31a] sm:$0xff]
  %v10372 = vld [vmem:[%s7718 + $0x322] sm:$0xff]
  %v10373 = vld [vmem:[%s0 + $0x18] sm:$0x1]
  %10375 = vset.pattern.permute.xlu0 0
  %10376 = vperm.xlu0 %10375, %v10309
  %v10377 = vpop.permute.xlu0 %10376
  %10380 = vset.pattern.permute.xlu0 0
  %10381 = vperm.xlu0 %10380, %v10310
  %v10382 = vpop.permute.xlu0 %10381
  %10385 = vset.pattern.permute.xlu0 0
  %10386 = vperm.xlu0 %10385, %v10311
  %v10387 = vpop.permute.xlu0 %10386
  %10390 = vset.pattern.permute.xlu0 0
  %10391 = vperm.xlu0 %10390, %v10312
  %v10392 = vpop.permute.xlu0 %10391
  %10395 = vset.pattern.permute.xlu0 0
  %10396 = vperm.xlu0 %10395, %v10313
  %v10397 = vpop.permute.xlu0 %10396
  %10400 = vset.pattern.permute.xlu0 0
  %10401 = vperm.xlu0 %10400, %v10314
  %v10402 = vpop.permute.xlu0 %10401
  %10405 = vset.pattern.permute.xlu0 0
  %10406 = vperm.xlu0 %10405, %v10315
  %v10407 = vpop.permute.xlu0 %10406
  %10410 = vset.pattern.permute.xlu0 0
  %10411 = vperm.xlu0 %10410, %v10316
  %v10412 = vpop.permute.xlu0 %10411
  %10415 = vset.pattern.permute.xlu0 0
  %10416 = vperm.xlu0 %10415, %v10317
  %v10417 = vpop.permute.xlu0 %10416
  %10420 = vset.pattern.permute.xlu0 0
  %10421 = vperm.xlu0 %10420, %v10318
  %v10422 = vpop.permute.xlu0 %10421
  %10425 = vset.pattern.permute.xlu0 0
  %10426 = vperm.xlu0 %10425, %v10319
  %v10427 = vpop.permute.xlu0 %10426
  %10430 = vset.pattern.permute.xlu0 0
  %10431 = vperm.xlu0 %10430, %v10320
  %v10432 = vpop.permute.xlu0 %10431
  %10435 = vset.pattern.permute.xlu0 0
  %10436 = vperm.xlu0 %10435, %v10321
  %v10437 = vpop.permute.xlu0 %10436
  %10440 = vset.pattern.permute.xlu0 0
  %10441 = vperm.xlu0 %10440, %v10322
  %v10442 = vpop.permute.xlu0 %10441
  %10445 = vset.pattern.permute.xlu0 0
  %10446 = vperm.xlu0 %10445, %v10323
  %v10447 = vpop.permute.xlu0 %10446
  %10450 = vset.pattern.permute.xlu0 0
  %10451 = vperm.xlu0 %10450, %v10324
  %v10452 = vpop.permute.xlu0 %10451
  %10455 = vset.pattern.permute.xlu0 0
  %10456 = vperm.xlu0 %10455, %v10325
  %v10457 = vpop.permute.xlu0 %10456
  %10460 = vset.pattern.permute.xlu0 0
  %10461 = vperm.xlu0 %10460, %v10326
  %v10462 = vpop.permute.xlu0 %10461
  %10465 = vset.pattern.permute.xlu0 0
  %10466 = vperm.xlu0 %10465, %v10327
  %v10467 = vpop.permute.xlu0 %10466
  %10470 = vset.pattern.permute.xlu0 0
  %10471 = vperm.xlu0 %10470, %v10328
  %v10472 = vpop.permute.xlu0 %10471
  %10475 = vset.pattern.permute.xlu0 0
  %10476 = vperm.xlu0 %10475, %v10329
  %v10477 = vpop.permute.xlu0 %10476
  %10480 = vset.pattern.permute.xlu0 0
  %10481 = vperm.xlu0 %10480, %v10330
  %v10482 = vpop.permute.xlu0 %10481
  %10485 = vset.pattern.permute.xlu0 0
  %10486 = vperm.xlu0 %10485, %v10331
  %v10487 = vpop.permute.xlu0 %10486
  %10490 = vset.pattern.permute.xlu0 0
  %10491 = vperm.xlu0 %10490, %v10332
  %v10492 = vpop.permute.xlu0 %10491
  %10495 = vset.pattern.permute.xlu0 0
  %10496 = vperm.xlu0 %10495, %v10333
  %v10497 = vpop.permute.xlu0 %10496
  %10500 = vset.pattern.permute.xlu0 0
  %10501 = vperm.xlu0 %10500, %v10334
  %v10502 = vpop.permute.xlu0 %10501
  %10505 = vset.pattern.permute.xlu0 0
  %10506 = vperm.xlu0 %10505, %v10335
  %v10507 = vpop.permute.xlu0 %10506
  %10510 = vset.pattern.permute.xlu0 0
  %10511 = vperm.xlu0 %10510, %v10336
  %v10512 = vpop.permute.xlu0 %10511
  %10515 = vset.pattern.permute.xlu0 0
  %10516 = vperm.xlu0 %10515, %v10337
  %v10517 = vpop.permute.xlu0 %10516
  %10520 = vset.pattern.permute.xlu0 0
  %10521 = vperm.xlu0 %10520, %v10338
  %v10522 = vpop.permute.xlu0 %10521
  %10525 = vset.pattern.permute.xlu0 0
  %10526 = vperm.xlu0 %10525, %v10339
  %v10527 = vpop.permute.xlu0 %10526
  %10530 = vset.pattern.permute.xlu0 0
  %10531 = vperm.xlu0 %10530, %v10340
  %v10532 = vpop.permute.xlu0 %10531
  %10535 = vset.pattern.permute.xlu0 0
  %10536 = vperm.xlu0 %10535, %v10341
  %v10537 = vpop.permute.xlu0 %10536
  %10540 = vset.pattern.permute.xlu0 0
  %10541 = vperm.xlu0 %10540, %v10342
  %v10542 = vpop.permute.xlu0 %10541
  %10545 = vset.pattern.permute.xlu0 0
  %10546 = vperm.xlu0 %10545, %v10343
  %v10547 = vpop.permute.xlu0 %10546
  %10550 = vset.pattern.permute.xlu0 0
  %10551 = vperm.xlu0 %10550, %v10344
  %v10552 = vpop.permute.xlu0 %10551
  %10555 = vset.pattern.permute.xlu0 0
  %10556 = vperm.xlu0 %10555, %v10345
  %v10557 = vpop.permute.xlu0 %10556
  %10560 = vset.pattern.permute.xlu0 0
  %10561 = vperm.xlu0 %10560, %v10346
  %v10562 = vpop.permute.xlu0 %10561
  %10565 = vset.pattern.permute.xlu0 0
  %10566 = vperm.xlu0 %10565, %v10347
  %v10567 = vpop.permute.xlu0 %10566
  %10570 = vset.pattern.permute.xlu0 0
  %10571 = vperm.xlu0 %10570, %v10348
  %v10572 = vpop.permute.xlu0 %10571
  %10575 = vset.pattern.permute.xlu0 0
  %10576 = vperm.xlu0 %10575, %v10349
  %v10577 = vpop.permute.xlu0 %10576
  %10580 = vset.pattern.permute.xlu0 0
  %10581 = vperm.xlu0 %10580, %v10350
  %v10582 = vpop.permute.xlu0 %10581
  %10585 = vset.pattern.permute.xlu0 0
  %10586 = vperm.xlu0 %10585, %v10351
  %v10587 = vpop.permute.xlu0 %10586
  %10590 = vset.pattern.permute.xlu0 0
  %10591 = vperm.xlu0 %10590, %v10352
  %v10592 = vpop.permute.xlu0 %10591
  %10595 = vset.pattern.permute.xlu0 0
  %10596 = vperm.xlu0 %10595, %v10353
  %v10597 = vpop.permute.xlu0 %10596
  %10600 = vset.pattern.permute.xlu0 0
  %10601 = vperm.xlu0 %10600, %v10354
  %v10602 = vpop.permute.xlu0 %10601
  %10605 = vset.pattern.permute.xlu0 0
  %10606 = vperm.xlu0 %10605, %v10355
  %v10607 = vpop.permute.xlu0 %10606
  %10610 = vset.pattern.permute.xlu0 0
  %10611 = vperm.xlu0 %10610, %v10356
  %v10612 = vpop.permute.xlu0 %10611
  %10615 = vset.pattern.permute.xlu0 0
  %10616 = vperm.xlu0 %10615, %v10357
  %v10617 = vpop.permute.xlu0 %10616
  %10620 = vset.pattern.permute.xlu0 0
  %10621 = vperm.xlu0 %10620, %v10358
  %v10622 = vpop.permute.xlu0 %10621
  %10625 = vset.pattern.permute.xlu0 0
  %10626 = vperm.xlu0 %10625, %v10359
  %v10627 = vpop.permute.xlu0 %10626
  %10630 = vset.pattern.permute.xlu0 0
  %10631 = vperm.xlu0 %10630, %v10360
  %v10632 = vpop.permute.xlu0 %10631
  %10635 = vset.pattern.permute.xlu0 0
  %10636 = vperm.xlu0 %10635, %v10361
  %v10637 = vpop.permute.xlu0 %10636
  %10640 = vset.pattern.permute.xlu0 0
  %10641 = vperm.xlu0 %10640, %v10362
  %v10642 = vpop.permute.xlu0 %10641
  %10645 = vset.pattern.permute.xlu0 0
  %10646 = vperm.xlu0 %10645, %v10363
  %v10647 = vpop.permute.xlu0 %10646
  %10650 = vset.pattern.permute.xlu0 0
  %10651 = vperm.xlu0 %10650, %v10364
  %v10652 = vpop.permute.xlu0 %10651
  %10655 = vset.pattern.permute.xlu0 0
  %10656 = vperm.xlu0 %10655, %v10365
  %v10657 = vpop.permute.xlu0 %10656
  %10660 = vset.pattern.permute.xlu0 0
  %10661 = vperm.xlu0 %10660, %v10366
  %v10662 = vpop.permute.xlu0 %10661
  %10665 = vset.pattern.permute.xlu0 0
  %10666 = vperm.xlu0 %10665, %v10367
  %v10667 = vpop.permute.xlu0 %10666
  %10670 = vset.pattern.permute.xlu0 0
  %10671 = vperm.xlu0 %10670, %v10368
  %v10672 = vpop.permute.xlu0 %10671
  %10675 = vset.pattern.permute.xlu0 0
  %10676 = vperm.xlu0 %10675, %v10369
  %v10677 = vpop.permute.xlu0 %10676
  %10680 = vset.pattern.permute.xlu0 0
  %10681 = vperm.xlu0 %10680, %v10370
  %v10682 = vpop.permute.xlu0 %10681
  %10685 = vset.pattern.permute.xlu0 0
  %10686 = vperm.xlu0 %10685, %v10371
  %v10687 = vpop.permute.xlu0 %10686
  %10690 = vset.pattern.permute.xlu0 0
  %10691 = vperm.xlu0 %10690, %v10372
  %v10692 = vpop.permute.xlu0 %10691
  %v10694 = vlaneseq
  %v10695 = vshrl.u32 %v10694, 7
  %v10696 = vsub.s32 0, %v10695
  %v10697 = vrot.slane %v10373, %v10696
  %v10698 = vmul.f32 %v10377, %v10697
  %v10699 = vmul.f32 %v10382, %v10697
  %v10700 = vmul.f32 %v10387, %v10697
  %v10701 = vmul.f32 %v10392, %v10697
  %v10702 = vmul.f32 %v10397, %v10697
  %v10703 = vmul.f32 %v10402, %v10697
  %v10704 = vmul.f32 %v10407, %v10697
  %v10705 = vmul.f32 %v10412, %v10697
  %v10706 = vmul.f32 %v10417, %v10697
  %v10707 = vmul.f32 %v10422, %v10697
  %v10708 = vmul.f32 %v10427, %v10697
  %v10709 = vmul.f32 %v10432, %v10697
  %v10710 = vmul.f32 %v10437, %v10697
  %v10711 = vmul.f32 %v10442, %v10697
  %v10712 = vmul.f32 %v10447, %v10697
  %v10713 = vmul.f32 %v10452, %v10697
  %v10714 = vmul.f32 %v10457, %v10697
  %v10715 = vmul.f32 %v10462, %v10697
  %v10716 = vmul.f32 %v10467, %v10697
  %v10717 = vmul.f32 %v10472, %v10697
  %v10718 = vmul.f32 %v10477, %v10697
  %v10719 = vmul.f32 %v10482, %v10697
  %v10720 = vmul.f32 %v10487, %v10697
  %v10721 = vmul.f32 %v10492, %v10697
  %v10722 = vmul.f32 %v10497, %v10697
  %v10723 = vmul.f32 %v10502, %v10697
  %v10724 = vmul.f32 %v10507, %v10697
  %v10725 = vmul.f32 %v10512, %v10697
  %v10726 = vmul.f32 %v10517, %v10697
  %v10727 = vmul.f32 %v10522, %v10697
  %v10728 = vmul.f32 %v10527, %v10697
  %v10729 = vmul.f32 %v10532, %v10697
  %v10730 = vmul.f32 %v10537, %v10697
  %v10731 = vmul.f32 %v10542, %v10697
  %v10732 = vmul.f32 %v10547, %v10697
  %v10733 = vmul.f32 %v10552, %v10697
  %v10734 = vmul.f32 %v10557, %v10697
  %v10735 = vmul.f32 %v10562, %v10697
  %v10736 = vmul.f32 %v10567, %v10697
  %v10737 = vmul.f32 %v10572, %v10697
  %v10738 = vmul.f32 %v10577, %v10697
  %v10739 = vmul.f32 %v10582, %v10697
  %v10740 = vmul.f32 %v10587, %v10697
  %v10741 = vmul.f32 %v10592, %v10697
  %v10742 = vmul.f32 %v10597, %v10697
  %v10743 = vmul.f32 %v10602, %v10697
  %v10744 = vmul.f32 %v10607, %v10697
  %v10745 = vmul.f32 %v10612, %v10697
  %v10746 = vmul.f32 %v10617, %v10697
  %v10747 = vmul.f32 %v10622, %v10697
  %v10748 = vmul.f32 %v10627, %v10697
  %v10749 = vmul.f32 %v10632, %v10697
  %v10750 = vmul.f32 %v10637, %v10697
  %v10751 = vmul.f32 %v10642, %v10697
  %v10752 = vmul.f32 %v10647, %v10697
  %v10753 = vmul.f32 %v10652, %v10697
  %v10754 = vmul.f32 %v10657, %v10697
  %v10755 = vmul.f32 %v10662, %v10697
  %v10756 = vmul.f32 %v10667, %v10697
  %v10757 = vmul.f32 %v10672, %v10697
  %v10758 = vmul.f32 %v10677, %v10697
  %v10759 = vmul.f32 %v10682, %v10697
  %v10760 = vmul.f32 %v10687, %v10697
  %v10761 = vmul.f32 %v10692, %v10697
  %v10762 = vadd.f32 %v10245, %v10698
  %v10763 = vadd.f32 %v10246, %v10699
  %v10764 = vadd.f32 %v10247, %v10700
  %v10765 = vadd.f32 %v10248, %v10701
  %v10766 = vadd.f32 %v10249, %v10702
  %v10767 = vadd.f32 %v10250, %v10703
  %v10768 = vadd.f32 %v10251, %v10704
  %v10769 = vadd.f32 %v10252, %v10705
  %v10770 = vadd.f32 %v10253, %v10706
  %v10771 = vadd.f32 %v10254, %v10707
  %v10772 = vadd.f32 %v10255, %v10708
  %v10773 = vadd.f32 %v10256, %v10709
  %v10774 = vadd.f32 %v10257, %v10710
  %v10775 = vadd.f32 %v10258, %v10711
  %v10776 = vadd.f32 %v10259, %v10712
  %v10777 = vadd.f32 %v10260, %v10713
  %v10778 = vadd.f32 %v10261, %v10714
  %v10779 = vadd.f32 %v10262, %v10715
  %v10780 = vadd.f32 %v10263, %v10716
  %v10781 = vadd.f32 %v10264, %v10717
  %v10782 = vadd.f32 %v10265, %v10718
  %v10783 = vadd.f32 %v10266, %v10719
  %v10784 = vadd.f32 %v10267, %v10720
  %v10785 = vadd.f32 %v10268, %v10721
  %v10786 = vadd.f32 %v10269, %v10722
  %v10787 = vadd.f32 %v10270, %v10723
  %v10788 = vadd.f32 %v10271, %v10724
  %v10789 = vadd.f32 %v10272, %v10725
  %v10790 = vadd.f32 %v10273, %v10726
  %v10791 = vadd.f32 %v10274, %v10727
  %v10792 = vadd.f32 %v10275, %v10728
  %v10793 = vadd.f32 %v10276, %v10729
  %v10794 = vadd.f32 %v10277, %v10730
  %v10795 = vadd.f32 %v10278, %v10731
  %v10796 = vadd.f32 %v10279, %v10732
  %v10797 = vadd.f32 %v10280, %v10733
  %v10798 = vadd.f32 %v10281, %v10734
  %v10799 = vadd.f32 %v10282, %v10735
  %v10800 = vadd.f32 %v10283, %v10736
  %v10801 = vadd.f32 %v10284, %v10737
  %v10802 = vadd.f32 %v10285, %v10738
  %v10803 = vadd.f32 %v10286, %v10739
  %v10804 = vadd.f32 %v10287, %v10740
  %v10805 = vadd.f32 %v10288, %v10741
  %v10806 = vadd.f32 %v10289, %v10742
  %v10807 = vadd.f32 %v10290, %v10743
  %v10808 = vadd.f32 %v10291, %v10744
  %v10809 = vadd.f32 %v10292, %v10745
  %v10810 = vadd.f32 %v10293, %v10746
  %v10811 = vadd.f32 %v10294, %v10747
  %v10812 = vadd.f32 %v10295, %v10748
  %v10813 = vadd.f32 %v10296, %v10749
  %v10814 = vadd.f32 %v10297, %v10750
  %v10815 = vadd.f32 %v10298, %v10751
  %v10816 = vadd.f32 %v10299, %v10752
  %v10817 = vadd.f32 %v10300, %v10753
  %v10818 = vadd.f32 %v10301, %v10754
  %v10819 = vadd.f32 %v10302, %v10755
  %v10820 = vadd.f32 %v10303, %v10756
  %v10821 = vadd.f32 %v10304, %v10757
  %v10822 = vadd.f32 %v10305, %v10758
  %v10823 = vadd.f32 %v10306, %v10759
  %v10824 = vadd.f32 %v10307, %v10760
  %v10825 = vadd.f32 %v10308, %v10761
  %v10826 = vld [vmem:[%s0 + $0x19] sm:$0x1]
  %10827 = vset.pattern.permute.xlu0 1
  %10828 = vperm.xlu0 %10827, %v10309
  %v10829 = vpop.permute.xlu0 %10828
  %10831 = vset.pattern.permute.xlu0 1
  %10832 = vperm.xlu0 %10831, %v10310
  %v10833 = vpop.permute.xlu0 %10832
  %10835 = vset.pattern.permute.xlu0 1
  %10836 = vperm.xlu0 %10835, %v10311
  %v10837 = vpop.permute.xlu0 %10836
  %10839 = vset.pattern.permute.xlu0 1
  %10840 = vperm.xlu0 %10839, %v10312
  %v10841 = vpop.permute.xlu0 %10840
  %10843 = vset.pattern.permute.xlu0 1
  %10844 = vperm.xlu0 %10843, %v10313
  %v10845 = vpop.permute.xlu0 %10844
  %10847 = vset.pattern.permute.xlu0 1
  %10848 = vperm.xlu0 %10847, %v10314
  %v10849 = vpop.permute.xlu0 %10848
  %10851 = vset.pattern.permute.xlu0 1
  %10852 = vperm.xlu0 %10851, %v10315
  %v10853 = vpop.permute.xlu0 %10852
  %10855 = vset.pattern.permute.xlu0 1
  %10856 = vperm.xlu0 %10855, %v10316
  %v10857 = vpop.permute.xlu0 %10856
  %10859 = vset.pattern.permute.xlu0 1
  %10860 = vperm.xlu0 %10859, %v10317
  %v10861 = vpop.permute.xlu0 %10860
  %10863 = vset.pattern.permute.xlu0 1
  %10864 = vperm.xlu0 %10863, %v10318
  %v10865 = vpop.permute.xlu0 %10864
  %10867 = vset.pattern.permute.xlu0 1
  %10868 = vperm.xlu0 %10867, %v10319
  %v10869 = vpop.permute.xlu0 %10868
  %10871 = vset.pattern.permute.xlu0 1
  %10872 = vperm.xlu0 %10871, %v10320
  %v10873 = vpop.permute.xlu0 %10872
  %10875 = vset.pattern.permute.xlu0 1
  %10876 = vperm.xlu0 %10875, %v10321
  %v10877 = vpop.permute.xlu0 %10876
  %10879 = vset.pattern.permute.xlu0 1
  %10880 = vperm.xlu0 %10879, %v10322
  %v10881 = vpop.permute.xlu0 %10880
  %10883 = vset.pattern.permute.xlu0 1
  %10884 = vperm.xlu0 %10883, %v10323
  %v10885 = vpop.permute.xlu0 %10884
  %10887 = vset.pattern.permute.xlu0 1
  %10888 = vperm.xlu0 %10887, %v10324
  %v10889 = vpop.permute.xlu0 %10888
  %10891 = vset.pattern.permute.xlu0 1
  %10892 = vperm.xlu0 %10891, %v10325
  %v10893 = vpop.permute.xlu0 %10892
  %10895 = vset.pattern.permute.xlu0 1
  %10896 = vperm.xlu0 %10895, %v10326
  %v10897 = vpop.permute.xlu0 %10896
  %10899 = vset.pattern.permute.xlu0 1
  %10900 = vperm.xlu0 %10899, %v10327
  %v10901 = vpop.permute.xlu0 %10900
  %10903 = vset.pattern.permute.xlu0 1
  %10904 = vperm.xlu0 %10903, %v10328
  %v10905 = vpop.permute.xlu0 %10904
  %10907 = vset.pattern.permute.xlu0 1
  %10908 = vperm.xlu0 %10907, %v10329
  %v10909 = vpop.permute.xlu0 %10908
  %10911 = vset.pattern.permute.xlu0 1
  %10912 = vperm.xlu0 %10911, %v10330
  %v10913 = vpop.permute.xlu0 %10912
  %10915 = vset.pattern.permute.xlu0 1
  %10916 = vperm.xlu0 %10915, %v10331
  %v10917 = vpop.permute.xlu0 %10916
  %10919 = vset.pattern.permute.xlu0 1
  %10920 = vperm.xlu0 %10919, %v10332
  %v10921 = vpop.permute.xlu0 %10920
  %10923 = vset.pattern.permute.xlu0 1
  %10924 = vperm.xlu0 %10923, %v10333
  %v10925 = vpop.permute.xlu0 %10924
  %10927 = vset.pattern.permute.xlu0 1
  %10928 = vperm.xlu0 %10927, %v10334
  %v10929 = vpop.permute.xlu0 %10928
  %10931 = vset.pattern.permute.xlu0 1
  %10932 = vperm.xlu0 %10931, %v10335
  %v10933 = vpop.permute.xlu0 %10932
  %10935 = vset.pattern.permute.xlu0 1
  %10936 = vperm.xlu0 %10935, %v10336
  %v10937 = vpop.permute.xlu0 %10936
  %10939 = vset.pattern.permute.xlu0 1
  %10940 = vperm.xlu0 %10939, %v10337
  %v10941 = vpop.permute.xlu0 %10940
  %10943 = vset.pattern.permute.xlu0 1
  %10944 = vperm.xlu0 %10943, %v10338
  %v10945 = vpop.permute.xlu0 %10944
  %10947 = vset.pattern.permute.xlu0 1
  %10948 = vperm.xlu0 %10947, %v10339
  %v10949 = vpop.permute.xlu0 %10948
  %10951 = vset.pattern.permute.xlu0 1
  %10952 = vperm.xlu0 %10951, %v10340
  %v10953 = vpop.permute.xlu0 %10952
  %10955 = vset.pattern.permute.xlu0 1
  %10956 = vperm.xlu0 %10955, %v10341
  %v10957 = vpop.permute.xlu0 %10956
  %10959 = vset.pattern.permute.xlu0 1
  %10960 = vperm.xlu0 %10959, %v10342
  %v10961 = vpop.permute.xlu0 %10960
  %10963 = vset.pattern.permute.xlu0 1
  %10964 = vperm.xlu0 %10963, %v10343
  %v10965 = vpop.permute.xlu0 %10964
  %10967 = vset.pattern.permute.xlu0 1
  %10968 = vperm.xlu0 %10967, %v10344
  %v10969 = vpop.permute.xlu0 %10968
  %10971 = vset.pattern.permute.xlu0 1
  %10972 = vperm.xlu0 %10971, %v10345
  %v10973 = vpop.permute.xlu0 %10972
  %10975 = vset.pattern.permute.xlu0 1
  %10976 = vperm.xlu0 %10975, %v10346
  %v10977 = vpop.permute.xlu0 %10976
  %10979 = vset.pattern.permute.xlu0 1
  %10980 = vperm.xlu0 %10979, %v10347
  %v10981 = vpop.permute.xlu0 %10980
  %10983 = vset.pattern.permute.xlu0 1
  %10984 = vperm.xlu0 %10983, %v10348
  %v10985 = vpop.permute.xlu0 %10984
  %10987 = vset.pattern.permute.xlu0 1
  %10988 = vperm.xlu0 %10987, %v10349
  %v10989 = vpop.permute.xlu0 %10988
  %10991 = vset.pattern.permute.xlu0 1
  %10992 = vperm.xlu0 %10991, %v10350
  %v10993 = vpop.permute.xlu0 %10992
  %10995 = vset.pattern.permute.xlu0 1
  %10996 = vperm.xlu0 %10995, %v10351
  %v10997 = vpop.permute.xlu0 %10996
  %10999 = vset.pattern.permute.xlu0 1
  %11000 = vperm.xlu0 %10999, %v10352
  %v11001 = vpop.permute.xlu0 %11000
  %11003 = vset.pattern.permute.xlu0 1
  %11004 = vperm.xlu0 %11003, %v10353
  %v11005 = vpop.permute.xlu0 %11004
  %11007 = vset.pattern.permute.xlu0 1
  %11008 = vperm.xlu0 %11007, %v10354
  %v11009 = vpop.permute.xlu0 %11008
  %11011 = vset.pattern.permute.xlu0 1
  %11012 = vperm.xlu0 %11011, %v10355
  %v11013 = vpop.permute.xlu0 %11012
  %11015 = vset.pattern.permute.xlu0 1
  %11016 = vperm.xlu0 %11015, %v10356
  %v11017 = vpop.permute.xlu0 %11016
  %11019 = vset.pattern.permute.xlu0 1
  %11020 = vperm.xlu0 %11019, %v10357
  %v11021 = vpop.permute.xlu0 %11020
  %11023 = vset.pattern.permute.xlu0 1
  %11024 = vperm.xlu0 %11023, %v10358
  %v11025 = vpop.permute.xlu0 %11024
  %11027 = vset.pattern.permute.xlu0 1
  %11028 = vperm.xlu0 %11027, %v10359
  %v11029 = vpop.permute.xlu0 %11028
  %11031 = vset.pattern.permute.xlu0 1
  %11032 = vperm.xlu0 %11031, %v10360
  %v11033 = vpop.permute.xlu0 %11032
  %11035 = vset.pattern.permute.xlu0 1
  %11036 = vperm.xlu0 %11035, %v10361
  %v11037 = vpop.permute.xlu0 %11036
  %11039 = vset.pattern.permute.xlu0 1
  %11040 = vperm.xlu0 %11039, %v10362
  %v11041 = vpop.permute.xlu0 %11040
  %11043 = vset.pattern.permute.xlu0 1
  %11044 = vperm.xlu0 %11043, %v10363
  %v11045 = vpop.permute.xlu0 %11044
  %11047 = vset.pattern.permute.xlu0 1
  %11048 = vperm.xlu0 %11047, %v10364
  %v11049 = vpop.permute.xlu0 %11048
  %11051 = vset.pattern.permute.xlu0 1
  %11052 = vperm.xlu0 %11051, %v10365
  %v11053 = vpop.permute.xlu0 %11052
  %11055 = vset.pattern.permute.xlu0 1
  %11056 = vperm.xlu0 %11055, %v10366
  %v11057 = vpop.permute.xlu0 %11056
  %11059 = vset.pattern.permute.xlu0 1
  %11060 = vperm.xlu0 %11059, %v10367
  %v11061 = vpop.permute.xlu0 %11060
  %11063 = vset.pattern.permute.xlu0 1
  %11064 = vperm.xlu0 %11063, %v10368
  %v11065 = vpop.permute.xlu0 %11064
  %11067 = vset.pattern.permute.xlu0 1
  %11068 = vperm.xlu0 %11067, %v10369
  %v11069 = vpop.permute.xlu0 %11068
  %11071 = vset.pattern.permute.xlu0 1
  %11072 = vperm.xlu0 %11071, %v10370
  %v11073 = vpop.permute.xlu0 %11072
  %11075 = vset.pattern.permute.xlu0 1
  %11076 = vperm.xlu0 %11075, %v10371
  %v11077 = vpop.permute.xlu0 %11076
  %11079 = vset.pattern.permute.xlu0 1
  %11080 = vperm.xlu0 %11079, %v10372
  %v11081 = vpop.permute.xlu0 %11080
  %v11083 = vlaneseq
  %v11084 = vshrl.u32 %v11083, 7
  %v11085 = vsub.s32 0, %v11084
  %v11086 = vrot.slane %v10826, %v11085
  %v11087 = vmul.f32 %v10829, %v11086
  %v11088 = vmul.f32 %v10833, %v11086
  %v11089 = vmul.f32 %v10837, %v11086
  %v11090 = vmul.f32 %v10841, %v11086
  %v11091 = vmul.f32 %v10845, %v11086
  %v11092 = vmul.f32 %v10849, %v11086
  %v11093 = vmul.f32 %v10853, %v11086
  %v11094 = vmul.f32 %v10857, %v11086
  %v11095 = vmul.f32 %v10861, %v11086
  %v11096 = vmul.f32 %v10865, %v11086
  %v11097 = vmul.f32 %v10869, %v11086
  %v11098 = vmul.f32 %v10873, %v11086
  %v11099 = vmul.f32 %v10877, %v11086
  %v11100 = vmul.f32 %v10881, %v11086
  %v11101 = vmul.f32 %v10885, %v11086
  %v11102 = vmul.f32 %v10889, %v11086
  %v11103 = vmul.f32 %v10893, %v11086
  %v11104 = vmul.f32 %v10897, %v11086
  %v11105 = vmul.f32 %v10901, %v11086
  %v11106 = vmul.f32 %v10905, %v11086
  %v11107 = vmul.f32 %v10909, %v11086
  %v11108 = vmul.f32 %v10913, %v11086
  %v11109 = vmul.f32 %v10917, %v11086
  %v11110 = vmul.f32 %v10921, %v11086
  %v11111 = vmul.f32 %v10925, %v11086
  %v11112 = vmul.f32 %v10929, %v11086
  %v11113 = vmul.f32 %v10933, %v11086
  %v11114 = vmul.f32 %v10937, %v11086
  %v11115 = vmul.f32 %v10941, %v11086
  %v11116 = vmul.f32 %v10945, %v11086
  %v11117 = vmul.f32 %v10949, %v11086
  %v11118 = vmul.f32 %v10953, %v11086
  %v11119 = vmul.f32 %v10957, %v11086
  %v11120 = vmul.f32 %v10961, %v11086
  %v11121 = vmul.f32 %v10965, %v11086
  %v11122 = vmul.f32 %v10969, %v11086
  %v11123 = vmul.f32 %v10973, %v11086
  %v11124 = vmul.f32 %v10977, %v11086
  %v11125 = vmul.f32 %v10981, %v11086
  %v11126 = vmul.f32 %v10985, %v11086
  %v11127 = vmul.f32 %v10989, %v11086
  %v11128 = vmul.f32 %v10993, %v11086
  %v11129 = vmul.f32 %v10997, %v11086
  %v11130 = vmul.f32 %v11001, %v11086
  %v11131 = vmul.f32 %v11005, %v11086
  %v11132 = vmul.f32 %v11009, %v11086
  %v11133 = vmul.f32 %v11013, %v11086
  %v11134 = vmul.f32 %v11017, %v11086
  %v11135 = vmul.f32 %v11021, %v11086
  %v11136 = vmul.f32 %v11025, %v11086
  %v11137 = vmul.f32 %v11029, %v11086
  %v11138 = vmul.f32 %v11033, %v11086
  %v11139 = vmul.f32 %v11037, %v11086
  %v11140 = vmul.f32 %v11041, %v11086
  %v11141 = vmul.f32 %v11045, %v11086
  %v11142 = vmul.f32 %v11049, %v11086
  %v11143 = vmul.f32 %v11053, %v11086
  %v11144 = vmul.f32 %v11057, %v11086
  %v11145 = vmul.f32 %v11061, %v11086
  %v11146 = vmul.f32 %v11065, %v11086
  %v11147 = vmul.f32 %v11069, %v11086
  %v11148 = vmul.f32 %v11073, %v11086
  %v11149 = vmul.f32 %v11077, %v11086
  %v11150 = vmul.f32 %v11081, %v11086
  %v11151 = vadd.f32 %v10762, %v11087
  %v11152 = vadd.f32 %v10763, %v11088
  %v11153 = vadd.f32 %v10764, %v11089
  %v11154 = vadd.f32 %v10765, %v11090
  %v11155 = vadd.f32 %v10766, %v11091
  %v11156 = vadd.f32 %v10767, %v11092
  %v11157 = vadd.f32 %v10768, %v11093
  %v11158 = vadd.f32 %v10769, %v11094
  %v11159 = vadd.f32 %v10770, %v11095
  %v11160 = vadd.f32 %v10771, %v11096
  %v11161 = vadd.f32 %v10772, %v11097
  %v11162 = vadd.f32 %v10773, %v11098
  %v11163 = vadd.f32 %v10774, %v11099
  %v11164 = vadd.f32 %v10775, %v11100
  %v11165 = vadd.f32 %v10776, %v11101
  %v11166 = vadd.f32 %v10777, %v11102
  %v11167 = vadd.f32 %v10778, %v11103
  %v11168 = vadd.f32 %v10779, %v11104
  %v11169 = vadd.f32 %v10780, %v11105
  %v11170 = vadd.f32 %v10781, %v11106
  %v11171 = vadd.f32 %v10782, %v11107
  %v11172 = vadd.f32 %v10783, %v11108
  %v11173 = vadd.f32 %v10784, %v11109
  %v11174 = vadd.f32 %v10785, %v11110
  %v11175 = vadd.f32 %v10786, %v11111
  %v11176 = vadd.f32 %v10787, %v11112
  %v11177 = vadd.f32 %v10788, %v11113
  %v11178 = vadd.f32 %v10789, %v11114
  %v11179 = vadd.f32 %v10790, %v11115
  %v11180 = vadd.f32 %v10791, %v11116
  %v11181 = vadd.f32 %v10792, %v11117
  %v11182 = vadd.f32 %v10793, %v11118
  %v11183 = vadd.f32 %v10794, %v11119
  %v11184 = vadd.f32 %v10795, %v11120
  %v11185 = vadd.f32 %v10796, %v11121
  %v11186 = vadd.f32 %v10797, %v11122
  %v11187 = vadd.f32 %v10798, %v11123
  %v11188 = vadd.f32 %v10799, %v11124
  %v11189 = vadd.f32 %v10800, %v11125
  %v11190 = vadd.f32 %v10801, %v11126
  %v11191 = vadd.f32 %v10802, %v11127
  %v11192 = vadd.f32 %v10803, %v11128
  %v11193 = vadd.f32 %v10804, %v11129
  %v11194 = vadd.f32 %v10805, %v11130
  %v11195 = vadd.f32 %v10806, %v11131
  %v11196 = vadd.f32 %v10807, %v11132
  %v11197 = vadd.f32 %v10808, %v11133
  %v11198 = vadd.f32 %v10809, %v11134
  %v11199 = vadd.f32 %v10810, %v11135
  %v11200 = vadd.f32 %v10811, %v11136
  %v11201 = vadd.f32 %v10812, %v11137
  %v11202 = vadd.f32 %v10813, %v11138
  %v11203 = vadd.f32 %v10814, %v11139
  %v11204 = vadd.f32 %v10815, %v11140
  %v11205 = vadd.f32 %v10816, %v11141
  %v11206 = vadd.f32 %v10817, %v11142
  %v11207 = vadd.f32 %v10818, %v11143
  %v11208 = vadd.f32 %v10819, %v11144
  %v11209 = vadd.f32 %v10820, %v11145
  %v11210 = vadd.f32 %v10821, %v11146
  %v11211 = vadd.f32 %v10822, %v11147
  %v11212 = vadd.f32 %v10823, %v11148
  %v11213 = vadd.f32 %v10824, %v11149
  %v11214 = vadd.f32 %v10825, %v11150
  %v11215 = vld [vmem:[%s0 + $0x1a] sm:$0x1]
  %11216 = vset.pattern.permute.xlu0 2
  %11217 = vperm.xlu0 %11216, %v10309
  %v11218 = vpop.permute.xlu0 %11217
  %11220 = vset.pattern.permute.xlu0 2
  %11221 = vperm.xlu0 %11220, %v10310
  %v11222 = vpop.permute.xlu0 %11221
  %11224 = vset.pattern.permute.xlu0 2
  %11225 = vperm.xlu0 %11224, %v10311
  %v11226 = vpop.permute.xlu0 %11225
  %11228 = vset.pattern.permute.xlu0 2
  %11229 = vperm.xlu0 %11228, %v10312
  %v11230 = vpop.permute.xlu0 %11229
  %11232 = vset.pattern.permute.xlu0 2
  %11233 = vperm.xlu0 %11232, %v10313
  %v11234 = vpop.permute.xlu0 %11233
  %11236 = vset.pattern.permute.xlu0 2
  %11237 = vperm.xlu0 %11236, %v10314
  %v11238 = vpop.permute.xlu0 %11237
  %11240 = vset.pattern.permute.xlu0 2
  %11241 = vperm.xlu0 %11240, %v10315
  %v11242 = vpop.permute.xlu0 %11241
  %11244 = vset.pattern.permute.xlu0 2
  %11245 = vperm.xlu0 %11244, %v10316
  %v11246 = vpop.permute.xlu0 %11245
  %11248 = vset.pattern.permute.xlu0 2
  %11249 = vperm.xlu0 %11248, %v10317
  %v11250 = vpop.permute.xlu0 %11249
  %11252 = vset.pattern.permute.xlu0 2
  %11253 = vperm.xlu0 %11252, %v10318
  %v11254 = vpop.permute.xlu0 %11253
  %11256 = vset.pattern.permute.xlu0 2
  %11257 = vperm.xlu0 %11256, %v10319
  %v11258 = vpop.permute.xlu0 %11257
  %11260 = vset.pattern.permute.xlu0 2
  %11261 = vperm.xlu0 %11260, %v10320
  %v11262 = vpop.permute.xlu0 %11261
  %11264 = vset.pattern.permute.xlu0 2
  %11265 = vperm.xlu0 %11264, %v10321
  %v11266 = vpop.permute.xlu0 %11265
  %11268 = vset.pattern.permute.xlu0 2
  %11269 = vperm.xlu0 %11268, %v10322
  %v11270 = vpop.permute.xlu0 %11269
  %11272 = vset.pattern.permute.xlu0 2
  %11273 = vperm.xlu0 %11272, %v10323
  %v11274 = vpop.permute.xlu0 %11273
  %11276 = vset.pattern.permute.xlu0 2
  %11277 = vperm.xlu0 %11276, %v10324
  %v11278 = vpop.permute.xlu0 %11277
  %11280 = vset.pattern.permute.xlu0 2
  %11281 = vperm.xlu0 %11280, %v10325
  %v11282 = vpop.permute.xlu0 %11281
  %11284 = vset.pattern.permute.xlu0 2
  %11285 = vperm.xlu0 %11284, %v10326
  %v11286 = vpop.permute.xlu0 %11285
  %11288 = vset.pattern.permute.xlu0 2
  %11289 = vperm.xlu0 %11288, %v10327
  %v11290 = vpop.permute.xlu0 %11289
  %11292 = vset.pattern.permute.xlu0 2
  %11293 = vperm.xlu0 %11292, %v10328
  %v11294 = vpop.permute.xlu0 %11293
  %11296 = vset.pattern.permute.xlu0 2
  %11297 = vperm.xlu0 %11296, %v10329
  %v11298 = vpop.permute.xlu0 %11297
  %11300 = vset.pattern.permute.xlu0 2
  %11301 = vperm.xlu0 %11300, %v10330
  %v11302 = vpop.permute.xlu0 %11301
  %11304 = vset.pattern.permute.xlu0 2
  %11305 = vperm.xlu0 %11304, %v10331
  %v11306 = vpop.permute.xlu0 %11305
  %11308 = vset.pattern.permute.xlu0 2
  %11309 = vperm.xlu0 %11308, %v10332
  %v11310 = vpop.permute.xlu0 %11309
  %11312 = vset.pattern.permute.xlu0 2
  %11313 = vperm.xlu0 %11312, %v10333
  %v11314 = vpop.permute.xlu0 %11313
  %11316 = vset.pattern.permute.xlu0 2
  %11317 = vperm.xlu0 %11316, %v10334
  %v11318 = vpop.permute.xlu0 %11317
  %11320 = vset.pattern.permute.xlu0 2
  %11321 = vperm.xlu0 %11320, %v10335
  %v11322 = vpop.permute.xlu0 %11321
  %11324 = vset.pattern.permute.xlu0 2
  %11325 = vperm.xlu0 %11324, %v10336
  %v11326 = vpop.permute.xlu0 %11325
  %11328 = vset.pattern.permute.xlu0 2
  %11329 = vperm.xlu0 %11328, %v10337
  %v11330 = vpop.permute.xlu0 %11329
  %11332 = vset.pattern.permute.xlu0 2
  %11333 = vperm.xlu0 %11332, %v10338
  %v11334 = vpop.permute.xlu0 %11333
  %11336 = vset.pattern.permute.xlu0 2
  %11337 = vperm.xlu0 %11336, %v10339
  %v11338 = vpop.permute.xlu0 %11337
  %11340 = vset.pattern.permute.xlu0 2
  %11341 = vperm.xlu0 %11340, %v10340
  %v11342 = vpop.permute.xlu0 %11341
  %11344 = vset.pattern.permute.xlu0 2
  %11345 = vperm.xlu0 %11344, %v10341
  %v11346 = vpop.permute.xlu0 %11345
  %11348 = vset.pattern.permute.xlu0 2
  %11349 = vperm.xlu0 %11348, %v10342
  %v11350 = vpop.permute.xlu0 %11349
  %11352 = vset.pattern.permute.xlu0 2
  %11353 = vperm.xlu0 %11352, %v10343
  %v11354 = vpop.permute.xlu0 %11353
  %11356 = vset.pattern.permute.xlu0 2
  %11357 = vperm.xlu0 %11356, %v10344
  %v11358 = vpop.permute.xlu0 %11357
  %11360 = vset.pattern.permute.xlu0 2
  %11361 = vperm.xlu0 %11360, %v10345
  %v11362 = vpop.permute.xlu0 %11361
  %11364 = vset.pattern.permute.xlu0 2
  %11365 = vperm.xlu0 %11364, %v10346
  %v11366 = vpop.permute.xlu0 %11365
  %11368 = vset.pattern.permute.xlu0 2
  %11369 = vperm.xlu0 %11368, %v10347
  %v11370 = vpop.permute.xlu0 %11369
  %11372 = vset.pattern.permute.xlu0 2
  %11373 = vperm.xlu0 %11372, %v10348
  %v11374 = vpop.permute.xlu0 %11373
  %11376 = vset.pattern.permute.xlu0 2
  %11377 = vperm.xlu0 %11376, %v10349
  %v11378 = vpop.permute.xlu0 %11377
  %11380 = vset.pattern.permute.xlu0 2
  %11381 = vperm.xlu0 %11380, %v10350
  %v11382 = vpop.permute.xlu0 %11381
  %11384 = vset.pattern.permute.xlu0 2
  %11385 = vperm.xlu0 %11384, %v10351
  %v11386 = vpop.permute.xlu0 %11385
  %11388 = vset.pattern.permute.xlu0 2
  %11389 = vperm.xlu0 %11388, %v10352
  %v11390 = vpop.permute.xlu0 %11389
  %11392 = vset.pattern.permute.xlu0 2
  %11393 = vperm.xlu0 %11392, %v10353
  %v11394 = vpop.permute.xlu0 %11393
  %11396 = vset.pattern.permute.xlu0 2
  %11397 = vperm.xlu0 %11396, %v10354
  %v11398 = vpop.permute.xlu0 %11397
  %11400 = vset.pattern.permute.xlu0 2
  %11401 = vperm.xlu0 %11400, %v10355
  %v11402 = vpop.permute.xlu0 %11401
  %11404 = vset.pattern.permute.xlu0 2
  %11405 = vperm.xlu0 %11404, %v10356
  %v11406 = vpop.permute.xlu0 %11405
  %11408 = vset.pattern.permute.xlu0 2
  %11409 = vperm.xlu0 %11408, %v10357
  %v11410 = vpop.permute.xlu0 %11409
  %11412 = vset.pattern.permute.xlu0 2
  %11413 = vperm.xlu0 %11412, %v10358
  %v11414 = vpop.permute.xlu0 %11413
  %11416 = vset.pattern.permute.xlu0 2
  %11417 = vperm.xlu0 %11416, %v10359
  %v11418 = vpop.permute.xlu0 %11417
  %11420 = vset.pattern.permute.xlu0 2
  %11421 = vperm.xlu0 %11420, %v10360
  %v11422 = vpop.permute.xlu0 %11421
  %11424 = vset.pattern.permute.xlu0 2
  %11425 = vperm.xlu0 %11424, %v10361
  %v11426 = vpop.permute.xlu0 %11425
  %11428 = vset.pattern.permute.xlu0 2
  %11429 = vperm.xlu0 %11428, %v10362
  %v11430 = vpop.permute.xlu0 %11429
  %11432 = vset.pattern.permute.xlu0 2
  %11433 = vperm.xlu0 %11432, %v10363
  %v11434 = vpop.permute.xlu0 %11433
  %11436 = vset.pattern.permute.xlu0 2
  %11437 = vperm.xlu0 %11436, %v10364
  %v11438 = vpop.permute.xlu0 %11437
  %11440 = vset.pattern.permute.xlu0 2
  %11441 = vperm.xlu0 %11440, %v10365
  %v11442 = vpop.permute.xlu0 %11441
  %11444 = vset.pattern.permute.xlu0 2
  %11445 = vperm.xlu0 %11444, %v10366
  %v11446 = vpop.permute.xlu0 %11445
  %11448 = vset.pattern.permute.xlu0 2
  %11449 = vperm.xlu0 %11448, %v10367
  %v11450 = vpop.permute.xlu0 %11449
  %11452 = vset.pattern.permute.xlu0 2
  %11453 = vperm.xlu0 %11452, %v10368
  %v11454 = vpop.permute.xlu0 %11453
  %11456 = vset.pattern.permute.xlu0 2
  %11457 = vperm.xlu0 %11456, %v10369
  %v11458 = vpop.permute.xlu0 %11457
  %11460 = vset.pattern.permute.xlu0 2
  %11461 = vperm.xlu0 %11460, %v10370
  %v11462 = vpop.permute.xlu0 %11461
  %11464 = vset.pattern.permute.xlu0 2
  %11465 = vperm.xlu0 %11464, %v10371
  %v11466 = vpop.permute.xlu0 %11465
  %11468 = vset.pattern.permute.xlu0 2
  %11469 = vperm.xlu0 %11468, %v10372
  %v11470 = vpop.permute.xlu0 %11469
  %v11472 = vlaneseq
  %v11473 = vshrl.u32 %v11472, 7
  %v11474 = vsub.s32 0, %v11473
  %v11475 = vrot.slane %v11215, %v11474
  %v11476 = vmul.f32 %v11218, %v11475
  %v11477 = vmul.f32 %v11222, %v11475
  %v11478 = vmul.f32 %v11226, %v11475
  %v11479 = vmul.f32 %v11230, %v11475
  %v11480 = vmul.f32 %v11234, %v11475
  %v11481 = vmul.f32 %v11238, %v11475
  %v11482 = vmul.f32 %v11242, %v11475
  %v11483 = vmul.f32 %v11246, %v11475
  %v11484 = vmul.f32 %v11250, %v11475
  %v11485 = vmul.f32 %v11254, %v11475
  %v11486 = vmul.f32 %v11258, %v11475
  %v11487 = vmul.f32 %v11262, %v11475
  %v11488 = vmul.f32 %v11266, %v11475
  %v11489 = vmul.f32 %v11270, %v11475
  %v11490 = vmul.f32 %v11274, %v11475
  %v11491 = vmul.f32 %v11278, %v11475
  %v11492 = vmul.f32 %v11282, %v11475
  %v11493 = vmul.f32 %v11286, %v11475
  %v11494 = vmul.f32 %v11290, %v11475
  %v11495 = vmul.f32 %v11294, %v11475
  %v11496 = vmul.f32 %v11298, %v11475
  %v11497 = vmul.f32 %v11302, %v11475
  %v11498 = vmul.f32 %v11306, %v11475
  %v11499 = vmul.f32 %v11310, %v11475
  %v11500 = vmul.f32 %v11314, %v11475
  %v11501 = vmul.f32 %v11318, %v11475
  %v11502 = vmul.f32 %v11322, %v11475
  %v11503 = vmul.f32 %v11326, %v11475
  %v11504 = vmul.f32 %v11330, %v11475
  %v11505 = vmul.f32 %v11334, %v11475
  %v11506 = vmul.f32 %v11338, %v11475
  %v11507 = vmul.f32 %v11342, %v11475
  %v11508 = vmul.f32 %v11346, %v11475
  %v11509 = vmul.f32 %v11350, %v11475
  %v11510 = vmul.f32 %v11354, %v11475
  %v11511 = vmul.f32 %v11358, %v11475
  %v11512 = vmul.f32 %v11362, %v11475
  %v11513 = vmul.f32 %v11366, %v11475
  %v11514 = vmul.f32 %v11370, %v11475
  %v11515 = vmul.f32 %v11374, %v11475
  %v11516 = vmul.f32 %v11378, %v11475
  %v11517 = vmul.f32 %v11382, %v11475
  %v11518 = vmul.f32 %v11386, %v11475
  %v11519 = vmul.f32 %v11390, %v11475
  %v11520 = vmul.f32 %v11394, %v11475
  %v11521 = vmul.f32 %v11398, %v11475
  %v11522 = vmul.f32 %v11402, %v11475
  %v11523 = vmul.f32 %v11406, %v11475
  %v11524 = vmul.f32 %v11410, %v11475
  %v11525 = vmul.f32 %v11414, %v11475
  %v11526 = vmul.f32 %v11418, %v11475
  %v11527 = vmul.f32 %v11422, %v11475
  %v11528 = vmul.f32 %v11426, %v11475
  %v11529 = vmul.f32 %v11430, %v11475
  %v11530 = vmul.f32 %v11434, %v11475
  %v11531 = vmul.f32 %v11438, %v11475
  %v11532 = vmul.f32 %v11442, %v11475
  %v11533 = vmul.f32 %v11446, %v11475
  %v11534 = vmul.f32 %v11450, %v11475
  %v11535 = vmul.f32 %v11454, %v11475
  %v11536 = vmul.f32 %v11458, %v11475
  %v11537 = vmul.f32 %v11462, %v11475
  %v11538 = vmul.f32 %v11466, %v11475
  %v11539 = vmul.f32 %v11470, %v11475
  %v11540 = vadd.f32 %v11151, %v11476
  %v11541 = vadd.f32 %v11152, %v11477
  %v11542 = vadd.f32 %v11153, %v11478
  %v11543 = vadd.f32 %v11154, %v11479
  %v11544 = vadd.f32 %v11155, %v11480
  %v11545 = vadd.f32 %v11156, %v11481
  %v11546 = vadd.f32 %v11157, %v11482
  %v11547 = vadd.f32 %v11158, %v11483
  %v11548 = vadd.f32 %v11159, %v11484
  %v11549 = vadd.f32 %v11160, %v11485
  %v11550 = vadd.f32 %v11161, %v11486
  %v11551 = vadd.f32 %v11162, %v11487
  %v11552 = vadd.f32 %v11163, %v11488
  %v11553 = vadd.f32 %v11164, %v11489
  %v11554 = vadd.f32 %v11165, %v11490
  %v11555 = vadd.f32 %v11166, %v11491
  %v11556 = vadd.f32 %v11167, %v11492
  %v11557 = vadd.f32 %v11168, %v11493
  %v11558 = vadd.f32 %v11169, %v11494
  %v11559 = vadd.f32 %v11170, %v11495
  %v11560 = vadd.f32 %v11171, %v11496
  %v11561 = vadd.f32 %v11172, %v11497
  %v11562 = vadd.f32 %v11173, %v11498
  %v11563 = vadd.f32 %v11174, %v11499
  %v11564 = vadd.f32 %v11175, %v11500
  %v11565 = vadd.f32 %v11176, %v11501
  %v11566 = vadd.f32 %v11177, %v11502
  %v11567 = vadd.f32 %v11178, %v11503
  %v11568 = vadd.f32 %v11179, %v11504
  %v11569 = vadd.f32 %v11180, %v11505
  %v11570 = vadd.f32 %v11181, %v11506
  %v11571 = vadd.f32 %v11182, %v11507
  %v11572 = vadd.f32 %v11183, %v11508
  %v11573 = vadd.f32 %v11184, %v11509
  %v11574 = vadd.f32 %v11185, %v11510
  %v11575 = vadd.f32 %v11186, %v11511
  %v11576 = vadd.f32 %v11187, %v11512
  %v11577 = vadd.f32 %v11188, %v11513
  %v11578 = vadd.f32 %v11189, %v11514
  %v11579 = vadd.f32 %v11190, %v11515
  %v11580 = vadd.f32 %v11191, %v11516
  %v11581 = vadd.f32 %v11192, %v11517
  %v11582 = vadd.f32 %v11193, %v11518
  %v11583 = vadd.f32 %v11194, %v11519
  %v11584 = vadd.f32 %v11195, %v11520
  %v11585 = vadd.f32 %v11196, %v11521
  %v11586 = vadd.f32 %v11197, %v11522
  %v11587 = vadd.f32 %v11198, %v11523
  %v11588 = vadd.f32 %v11199, %v11524
  %v11589 = vadd.f32 %v11200, %v11525
  %v11590 = vadd.f32 %v11201, %v11526
  %v11591 = vadd.f32 %v11202, %v11527
  %v11592 = vadd.f32 %v11203, %v11528
  %v11593 = vadd.f32 %v11204, %v11529
  %v11594 = vadd.f32 %v11205, %v11530
  %v11595 = vadd.f32 %v11206, %v11531
  %v11596 = vadd.f32 %v11207, %v11532
  %v11597 = vadd.f32 %v11208, %v11533
  %v11598 = vadd.f32 %v11209, %v11534
  %v11599 = vadd.f32 %v11210, %v11535
  %v11600 = vadd.f32 %v11211, %v11536
  %v11601 = vadd.f32 %v11212, %v11537
  %v11602 = vadd.f32 %v11213, %v11538
  %v11603 = vadd.f32 %v11214, %v11539
  %vm11604 = vcmask 97280
  %v11605 = vsel %vm11604, %v11540, 0.0
  %v11606 = vsel %vm11604, %v11572, 0.0
  %v11607 = vadd.f32 %v11605, %v11606
  %v11608 = vsel %vm11604, %v11541, 0.0
  %v11609 = vsel %vm11604, %v11573, 0.0
  %v11610 = vadd.f32 %v11608, %v11609
  %v11611 = vsel %vm11604, %v11542, 0.0
  %v11612 = vsel %vm11604, %v11574, 0.0
  %v11613 = vadd.f32 %v11611, %v11612
  %v11614 = vsel %vm11604, %v11543, 0.0
  %v11615 = vsel %vm11604, %v11575, 0.0
  %v11616 = vadd.f32 %v11614, %v11615
  %v11617 = vsel %vm11604, %v11544, 0.0
  %v11618 = vsel %vm11604, %v11576, 0.0
  %v11619 = vadd.f32 %v11617, %v11618
  %v11620 = vsel %vm11604, %v11545, 0.0
  %v11621 = vsel %vm11604, %v11577, 0.0
  %v11622 = vadd.f32 %v11620, %v11621
  %v11623 = vsel %vm11604, %v11546, 0.0
  %v11624 = vsel %vm11604, %v11578, 0.0
  %v11625 = vadd.f32 %v11623, %v11624
  %v11626 = vsel %vm11604, %v11547, 0.0
  %v11627 = vsel %vm11604, %v11579, 0.0
  %v11628 = vadd.f32 %v11626, %v11627
  %v11629 = vsel %vm11604, %v11548, 0.0
  %v11630 = vsel %vm11604, %v11580, 0.0
  %v11631 = vadd.f32 %v11629, %v11630
  %v11632 = vsel %vm11604, %v11549, 0.0
  %v11633 = vsel %vm11604, %v11581, 0.0
  %v11634 = vadd.f32 %v11632, %v11633
  %v11635 = vsel %vm11604, %v11550, 0.0
  %v11636 = vsel %vm11604, %v11582, 0.0
  %v11637 = vadd.f32 %v11635, %v11636
  %v11638 = vsel %vm11604, %v11551, 0.0
  %v11639 = vsel %vm11604, %v11583, 0.0
  %v11640 = vadd.f32 %v11638, %v11639
  %v11641 = vsel %vm11604, %v11552, 0.0
  %v11642 = vsel %vm11604, %v11584, 0.0
  %v11643 = vadd.f32 %v11641, %v11642
  %v11644 = vsel %vm11604, %v11553, 0.0
  %v11645 = vsel %vm11604, %v11585, 0.0
  %v11646 = vadd.f32 %v11644, %v11645
  %v11647 = vsel %vm11604, %v11554, 0.0
  %v11648 = vsel %vm11604, %v11586, 0.0
  %v11649 = vadd.f32 %v11647, %v11648
  %v11650 = vsel %vm11604, %v11555, 0.0
  %v11651 = vsel %vm11604, %v11587, 0.0
  %v11652 = vadd.f32 %v11650, %v11651
  %v11653 = vsel %vm11604, %v11556, 0.0
  %v11654 = vsel %vm11604, %v11588, 0.0
  %v11655 = vadd.f32 %v11653, %v11654
  %v11656 = vsel %vm11604, %v11557, 0.0
  %v11657 = vsel %vm11604, %v11589, 0.0
  %v11658 = vadd.f32 %v11656, %v11657
  %v11659 = vsel %vm11604, %v11558, 0.0
  %v11660 = vsel %vm11604, %v11590, 0.0
  %v11661 = vadd.f32 %v11659, %v11660
  %v11662 = vsel %vm11604, %v11559, 0.0
  %v11663 = vsel %vm11604, %v11591, 0.0
  %v11664 = vadd.f32 %v11662, %v11663
  %v11665 = vsel %vm11604, %v11560, 0.0
  %v11666 = vsel %vm11604, %v11592, 0.0
  %v11667 = vadd.f32 %v11665, %v11666
  %v11668 = vsel %vm11604, %v11561, 0.0
  %v11669 = vsel %vm11604, %v11593, 0.0
  %v11670 = vadd.f32 %v11668, %v11669
  %v11671 = vsel %vm11604, %v11562, 0.0
  %v11672 = vsel %vm11604, %v11594, 0.0
  %v11673 = vadd.f32 %v11671, %v11672
  %v11674 = vsel %vm11604, %v11563, 0.0
  %v11675 = vsel %vm11604, %v11595, 0.0
  %v11676 = vadd.f32 %v11674, %v11675
  %v11677 = vsel %vm11604, %v11564, 0.0
  %v11678 = vsel %vm11604, %v11596, 0.0
  %v11679 = vadd.f32 %v11677, %v11678
  %v11680 = vsel %vm11604, %v11565, 0.0
  %v11681 = vsel %vm11604, %v11597, 0.0
  %v11682 = vadd.f32 %v11680, %v11681
  %v11683 = vsel %vm11604, %v11566, 0.0
  %v11684 = vsel %vm11604, %v11598, 0.0
  %v11685 = vadd.f32 %v11683, %v11684
  %v11686 = vsel %vm11604, %v11567, 0.0
  %v11687 = vsel %vm11604, %v11599, 0.0
  %v11688 = vadd.f32 %v11686, %v11687
  %v11689 = vsel %vm11604, %v11568, 0.0
  %v11690 = vsel %vm11604, %v11600, 0.0
  %v11691 = vadd.f32 %v11689, %v11690
  %v11692 = vsel %vm11604, %v11569, 0.0
  %v11693 = vsel %vm11604, %v11601, 0.0
  %v11694 = vadd.f32 %v11692, %v11693
  %v11695 = vsel %vm11604, %v11570, 0.0
  %v11696 = vsel %vm11604, %v11602, 0.0
  %v11697 = vadd.f32 %v11695, %v11696
  %v11698 = vsel %vm11604, %v11571, 0.0
  %v11699 = vsel %vm11604, %v11603, 0.0
  %v11700 = vadd.f32 %v11698, %v11699
  %v11701 = vrcp.pop 2.0
  %v11702 = vmul.f32 %v11607, %v11701
  %v11703 = vmul.f32 %v11610, %v11701
  %v11704 = vmul.f32 %v11613, %v11701
  %v11705 = vmul.f32 %v11616, %v11701
  %v11706 = vmul.f32 %v11619, %v11701
  %v11707 = vmul.f32 %v11622, %v11701
  %v11708 = vmul.f32 %v11625, %v11701
  %v11709 = vmul.f32 %v11628, %v11701
  %v11710 = vmul.f32 %v11631, %v11701
  %v11711 = vmul.f32 %v11634, %v11701
  %v11712 = vmul.f32 %v11637, %v11701
  %v11713 = vmul.f32 %v11640, %v11701
  %v11714 = vmul.f32 %v11643, %v11701
  %v11715 = vmul.f32 %v11646, %v11701
  %v11716 = vmul.f32 %v11649, %v11701
  %v11717 = vmul.f32 %v11652, %v11701
  %v11718 = vmul.f32 %v11655, %v11701
  %v11719 = vmul.f32 %v11658, %v11701
  %v11720 = vmul.f32 %v11661, %v11701
  %v11721 = vmul.f32 %v11664, %v11701
  %v11722 = vmul.f32 %v11667, %v11701
  %v11723 = vmul.f32 %v11670, %v11701
  %v11724 = vmul.f32 %v11673, %v11701
  %v11725 = vmul.f32 %v11676, %v11701
  %v11726 = vmul.f32 %v11679, %v11701
  %v11727 = vmul.f32 %v11682, %v11701
  %v11728 = vmul.f32 %v11685, %v11701
  %v11729 = vmul.f32 %v11688, %v11701
  %v11730 = vmul.f32 %v11691, %v11701
  %v11731 = vmul.f32 %v11694, %v11701
  %v11732 = vmul.f32 %v11697, %v11701
  %v11733 = vmul.f32 %v11700, %v11701
  %v11734 = vsel %vm11604, %v11702, 0.0
  %v11735 = vsel %vm11604, %v11704, 0.0
  %v11736 = vadd.f32 %v11734, %v11735
  %v11737 = vsel %vm11604, %v11706, 0.0
  %v11738 = vadd.f32 %v11736, %v11737
  %v11739 = vsel %vm11604, %v11708, 0.0
  %v11740 = vadd.f32 %v11738, %v11739
  %v11741 = vsel %vm11604, %v11710, 0.0
  %v11742 = vadd.f32 %v11740, %v11741
  %v11743 = vsel %vm11604, %v11712, 0.0
  %v11744 = vadd.f32 %v11742, %v11743
  %v11745 = vsel %vm11604, %v11714, 0.0
  %v11746 = vadd.f32 %v11744, %v11745
  %v11747 = vsel %vm11604, %v11716, 0.0
  %v11748 = vadd.f32 %v11746, %v11747
  %v11749 = vsel %vm11604, %v11718, 0.0
  %v11750 = vadd.f32 %v11748, %v11749
  %v11751 = vsel %vm11604, %v11720, 0.0
  %v11752 = vadd.f32 %v11750, %v11751
  %v11753 = vsel %vm11604, %v11722, 0.0
  %v11754 = vadd.f32 %v11752, %v11753
  %v11755 = vsel %vm11604, %v11724, 0.0
  %v11756 = vadd.f32 %v11754, %v11755
  %v11757 = vsel %vm11604, %v11726, 0.0
  %v11758 = vadd.f32 %v11756, %v11757
  %v11759 = vsel %vm11604, %v11728, 0.0
  %v11760 = vadd.f32 %v11758, %v11759
  %v11761 = vsel %vm11604, %v11730, 0.0
  %v11762 = vadd.f32 %v11760, %v11761
  %v11763 = vsel %vm11604, %v11732, 0.0
  %v11764 = vadd.f32 %v11762, %v11763
  %v11765 = vsel %vm11604, %v11703, 0.0
  %v11766 = vsel %vm11604, %v11705, 0.0
  %v11767 = vadd.f32 %v11765, %v11766
  %v11768 = vsel %vm11604, %v11707, 0.0
  %v11769 = vadd.f32 %v11767, %v11768
  %v11770 = vsel %vm11604, %v11709, 0.0
  %v11771 = vadd.f32 %v11769, %v11770
  %v11772 = vsel %vm11604, %v11711, 0.0
  %v11773 = vadd.f32 %v11771, %v11772
  %v11774 = vsel %vm11604, %v11713, 0.0
  %v11775 = vadd.f32 %v11773, %v11774
  %v11776 = vsel %vm11604, %v11715, 0.0
  %v11777 = vadd.f32 %v11775, %v11776
  %v11778 = vsel %vm11604, %v11717, 0.0
  %v11779 = vadd.f32 %v11777, %v11778
  %v11780 = vsel %vm11604, %v11719, 0.0
  %v11781 = vadd.f32 %v11779, %v11780
  %v11782 = vsel %vm11604, %v11721, 0.0
  %v11783 = vadd.f32 %v11781, %v11782
  %v11784 = vsel %vm11604, %v11723, 0.0
  %v11785 = vadd.f32 %v11783, %v11784
  %v11786 = vsel %vm11604, %v11725, 0.0
  %v11787 = vadd.f32 %v11785, %v11786
  %v11788 = vsel %vm11604, %v11727, 0.0
  %v11789 = vadd.f32 %v11787, %v11788
  %v11790 = vsel %vm11604, %v11729, 0.0
  %v11791 = vadd.f32 %v11789, %v11790
  %v11792 = vsel %vm11604, %v11731, 0.0
  %v11793 = vadd.f32 %v11791, %v11792
  %v11794 = vsel %vm11604, %v11733, 0.0
  %v11795 = vadd.f32 %v11793, %v11794
  %v11796 = vrcp.pop 16.0
  %v11797 = vmul.f32 %v11764, %v11796
  %v11798 = vmul.f32 %v11795, %v11796
  %v11799 = vsel %vm11604, %v11797, 0.0
  %v11800 = vsel %vm11604, %v11798, 0.0
  %v11801 = vadd.f32 %v11799, %v11800
  %v11802 = vrot.slane %v11801, 4
  %v11803 = vadd.f32 %v11801, %v11802
  %v11804 = vrot.slane %v11803, 2
  %v11805 = vadd.f32 %v11803, %v11804
  %v11806 = vrot.slane %v11805, 1
  %v11807 = vadd.f32 %v11805, %v11806
  %v11808 = vmul.f32 %v11807, %v11796
  %v11809 = vsub.f32 %v11540, %v11808
  %v11810 = vsub.f32 %v11541, %v11808
  %v11811 = vsub.f32 %v11542, %v11808
  %v11812 = vsub.f32 %v11543, %v11808
  %v11813 = vsub.f32 %v11544, %v11808
  %v11814 = vsub.f32 %v11545, %v11808
  %v11815 = vsub.f32 %v11546, %v11808
  %v11816 = vsub.f32 %v11547, %v11808
  %v11817 = vsub.f32 %v11548, %v11808
  %v11818 = vsub.f32 %v11549, %v11808
  %v11819 = vsub.f32 %v11550, %v11808
  %v11820 = vsub.f32 %v11551, %v11808
  %v11821 = vsub.f32 %v11552, %v11808
  %v11822 = vsub.f32 %v11553, %v11808
  %v11823 = vsub.f32 %v11554, %v11808
  %v11824 = vsub.f32 %v11555, %v11808
  %v11825 = vsub.f32 %v11556, %v11808
  %v11826 = vsub.f32 %v11557, %v11808
  %v11827 = vsub.f32 %v11558, %v11808
  %v11828 = vsub.f32 %v11559, %v11808
  %v11829 = vsub.f32 %v11560, %v11808
  %v11830 = vsub.f32 %v11561, %v11808
  %v11831 = vsub.f32 %v11562, %v11808
  %v11832 = vsub.f32 %v11563, %v11808
  %v11833 = vsub.f32 %v11564, %v11808
  %v11834 = vsub.f32 %v11565, %v11808
  %v11835 = vsub.f32 %v11566, %v11808
  %v11836 = vsub.f32 %v11567, %v11808
  %v11837 = vsub.f32 %v11568, %v11808
  %v11838 = vsub.f32 %v11569, %v11808
  %v11839 = vsub.f32 %v11570, %v11808
  %v11840 = vsub.f32 %v11571, %v11808
  %v11841 = vsub.f32 %v11572, %v11808
  %v11842 = vsub.f32 %v11573, %v11808
  %v11843 = vsub.f32 %v11574, %v11808
  %v11844 = vsub.f32 %v11575, %v11808
  %v11845 = vsub.f32 %v11576, %v11808
  %v11846 = vsub.f32 %v11577, %v11808
  %v11847 = vsub.f32 %v11578, %v11808
  %v11848 = vsub.f32 %v11579, %v11808
  %v11849 = vsub.f32 %v11580, %v11808
  %v11850 = vsub.f32 %v11581, %v11808
  %v11851 = vsub.f32 %v11582, %v11808
  %v11852 = vsub.f32 %v11583, %v11808
  %v11853 = vsub.f32 %v11584, %v11808
  %v11854 = vsub.f32 %v11585, %v11808
  %v11855 = vsub.f32 %v11586, %v11808
  %v11856 = vsub.f32 %v11587, %v11808
  %v11857 = vsub.f32 %v11588, %v11808
  %v11858 = vsub.f32 %v11589, %v11808
  %v11859 = vsub.f32 %v11590, %v11808
  %v11860 = vsub.f32 %v11591, %v11808
  %v11861 = vsub.f32 %v11592, %v11808
  %v11862 = vsub.f32 %v11593, %v11808
  %v11863 = vsub.f32 %v11594, %v11808
  %v11864 = vsub.f32 %v11595, %v11808
  %v11865 = vsub.f32 %v11596, %v11808
  %v11866 = vsub.f32 %v11597, %v11808
  %v11867 = vsub.f32 %v11598, %v11808
  %v11868 = vsub.f32 %v11599, %v11808
  %v11869 = vsub.f32 %v11600, %v11808
  %v11870 = vsub.f32 %v11601, %v11808
  %v11871 = vsub.f32 %v11602, %v11808
  %v11872 = vsub.f32 %v11603, %v11808
  %v11873 = vmul.f32 %v11809, %v11809
  %v11874 = vmul.f32 %v11810, %v11810
  %v11875 = vmul.f32 %v11811, %v11811
  %v11876 = vmul.f32 %v11812, %v11812
  %v11877 = vmul.f32 %v11813, %v11813
  %v11878 = vmul.f32 %v11814, %v11814
  %v11879 = vmul.f32 %v11815, %v11815
  %v11880 = vmul.f32 %v11816, %v11816
  %v11881 = vmul.f32 %v11817, %v11817
  %v11882 = vmul.f32 %v11818, %v11818
  %v11883 = vmul.f32 %v11819, %v11819
  %v11884 = vmul.f32 %v11820, %v11820
  %v11885 = vmul.f32 %v11821, %v11821
  %v11886 = vmul.f32 %v11822, %v11822
  %v11887 = vmul.f32 %v11823, %v11823
  %v11888 = vmul.f32 %v11824, %v11824
  %v11889 = vmul.f32 %v11825, %v11825
  %v11890 = vmul.f32 %v11826, %v11826
  %v11891 = vmul.f32 %v11827, %v11827
  %v11892 = vmul.f32 %v11828, %v11828
  %v11893 = vmul.f32 %v11829, %v11829
  %v11894 = vmul.f32 %v11830, %v11830
  %v11895 = vmul.f32 %v11831, %v11831
  %v11896 = vmul.f32 %v11832, %v11832
  %v11897 = vmul.f32 %v11833, %v11833
  %v11898 = vmul.f32 %v11834, %v11834
  %v11899 = vmul.f32 %v11835, %v11835
  %v11900 = vmul.f32 %v11836, %v11836
  %v11901 = vmul.f32 %v11837, %v11837
  %v11902 = vmul.f32 %v11838, %v11838
  %v11903 = vmul.f32 %v11839, %v11839
  %v11904 = vmul.f32 %v11840, %v11840
  %v11905 = vmul.f32 %v11841, %v11841
  %v11906 = vmul.f32 %v11842, %v11842
  %v11907 = vmul.f32 %v11843, %v11843
  %v11908 = vmul.f32 %v11844, %v11844
  %v11909 = vmul.f32 %v11845, %v11845
  %v11910 = vmul.f32 %v11846, %v11846
  %v11911 = vmul.f32 %v11847, %v11847
  %v11912 = vmul.f32 %v11848, %v11848
  %v11913 = vmul.f32 %v11849, %v11849
  %v11914 = vmul.f32 %v11850, %v11850
  %v11915 = vmul.f32 %v11851, %v11851
  %v11916 = vmul.f32 %v11852, %v11852
  %v11917 = vmul.f32 %v11853, %v11853
  %v11918 = vmul.f32 %v11854, %v11854
  %v11919 = vmul.f32 %v11855, %v11855
  %v11920 = vmul.f32 %v11856, %v11856
  %v11921 = vmul.f32 %v11857, %v11857
  %v11922 = vmul.f32 %v11858, %v11858
  %v11923 = vmul.f32 %v11859, %v11859
  %v11924 = vmul.f32 %v11860, %v11860
  %v11925 = vmul.f32 %v11861, %v11861
  %v11926 = vmul.f32 %v11862, %v11862
  %v11927 = vmul.f32 %v11863, %v11863
  %v11928 = vmul.f32 %v11864, %v11864
  %v11929 = vmul.f32 %v11865, %v11865
  %v11930 = vmul.f32 %v11866, %v11866
  %v11931 = vmul.f32 %v11867, %v11867
  %v11932 = vmul.f32 %v11868, %v11868
  %v11933 = vmul.f32 %v11869, %v11869
  %v11934 = vmul.f32 %v11870, %v11870
  %v11935 = vmul.f32 %v11871, %v11871
  %v11936 = vmul.f32 %v11872, %v11872
  %v11937 = vsel %vm11604, %v11873, 0.0
  %v11938 = vsel %vm11604, %v11905, 0.0
  %v11939 = vadd.f32 %v11937, %v11938
  %v11940 = vsel %vm11604, %v11874, 0.0
  %v11941 = vsel %vm11604, %v11906, 0.0
  %v11942 = vadd.f32 %v11940, %v11941
  %v11943 = vsel %vm11604, %v11875, 0.0
  %v11944 = vsel %vm11604, %v11907, 0.0
  %v11945 = vadd.f32 %v11943, %v11944
  %v11946 = vsel %vm11604, %v11876, 0.0
  %v11947 = vsel %vm11604, %v11908, 0.0
  %v11948 = vadd.f32 %v11946, %v11947
  %v11949 = vsel %vm11604, %v11877, 0.0
  %v11950 = vsel %vm11604, %v11909, 0.0
  %v11951 = vadd.f32 %v11949, %v11950
  %v11952 = vsel %vm11604, %v11878, 0.0
  %v11953 = vsel %vm11604, %v11910, 0.0
  %v11954 = vadd.f32 %v11952, %v11953
  %v11955 = vsel %vm11604, %v11879, 0.0
  %v11956 = vsel %vm11604, %v11911, 0.0
  %v11957 = vadd.f32 %v11955, %v11956
  %v11958 = vsel %vm11604, %v11880, 0.0
  %v11959 = vsel %vm11604, %v11912, 0.0
  %v11960 = vadd.f32 %v11958, %v11959
  %v11961 = vsel %vm11604, %v11881, 0.0
  %v11962 = vsel %vm11604, %v11913, 0.0
  %v11963 = vadd.f32 %v11961, %v11962
  %v11964 = vsel %vm11604, %v11882, 0.0
  %v11965 = vsel %vm11604, %v11914, 0.0
  %v11966 = vadd.f32 %v11964, %v11965
  %v11967 = vsel %vm11604, %v11883, 0.0
  %v11968 = vsel %vm11604, %v11915, 0.0
  %v11969 = vadd.f32 %v11967, %v11968
  %v11970 = vsel %vm11604, %v11884, 0.0
  %v11971 = vsel %vm11604, %v11916, 0.0
  %v11972 = vadd.f32 %v11970, %v11971
  %v11973 = vsel %vm11604, %v11885, 0.0
  %v11974 = vsel %vm11604, %v11917, 0.0
  %v11975 = vadd.f32 %v11973, %v11974
  %v11976 = vsel %vm11604, %v11886, 0.0
  %v11977 = vsel %vm11604, %v11918, 0.0
  %v11978 = vadd.f32 %v11976, %v11977
  %v11979 = vsel %vm11604, %v11887, 0.0
  %v11980 = vsel %vm11604, %v11919, 0.0
  %v11981 = vadd.f32 %v11979, %v11980
  %v11982 = vsel %vm11604, %v11888, 0.0
  %v11983 = vsel %vm11604, %v11920, 0.0
  %v11984 = vadd.f32 %v11982, %v11983
  %v11985 = vsel %vm11604, %v11889, 0.0
  %v11986 = vsel %vm11604, %v11921, 0.0
  %v11987 = vadd.f32 %v11985, %v11986
  %v11988 = vsel %vm11604, %v11890, 0.0
  %v11989 = vsel %vm11604, %v11922, 0.0
  %v11990 = vadd.f32 %v11988, %v11989
  %v11991 = vsel %vm11604, %v11891, 0.0
  %v11992 = vsel %vm11604, %v11923, 0.0
  %v11993 = vadd.f32 %v11991, %v11992
  %v11994 = vsel %vm11604, %v11892, 0.0
  %v11995 = vsel %vm11604, %v11924, 0.0
  %v11996 = vadd.f32 %v11994, %v11995
  %v11997 = vsel %vm11604, %v11893, 0.0
  %v11998 = vsel %vm11604, %v11925, 0.0
  %v11999 = vadd.f32 %v11997, %v11998
  %v12000 = vsel %vm11604, %v11894, 0.0
  %v12001 = vsel %vm11604, %v11926, 0.0
  %v12002 = vadd.f32 %v12000, %v12001
  %v12003 = vsel %vm11604, %v11895, 0.0
  %v12004 = vsel %vm11604, %v11927, 0.0
  %v12005 = vadd.f32 %v12003, %v12004
  %v12006 = vsel %vm11604, %v11896, 0.0
  %v12007 = vsel %vm11604, %v11928, 0.0
  %v12008 = vadd.f32 %v12006, %v12007
  %v12009 = vsel %vm11604, %v11897, 0.0
  %v12010 = vsel %vm11604, %v11929, 0.0
  %v12011 = vadd.f32 %v12009, %v12010
  %v12012 = vsel %vm11604, %v11898, 0.0
  %v12013 = vsel %vm11604, %v11930, 0.0
  %v12014 = vadd.f32 %v12012, %v12013
  %v12015 = vsel %vm11604, %v11899, 0.0
  %v12016 = vsel %vm11604, %v11931, 0.0
  %v12017 = vadd.f32 %v12015, %v12016
  %v12018 = vsel %vm11604, %v11900, 0.0
  %v12019 = vsel %vm11604, %v11932, 0.0
  %v12020 = vadd.f32 %v12018, %v12019
  %v12021 = vsel %vm11604, %v11901, 0.0
  %v12022 = vsel %vm11604, %v11933, 0.0
  %v12023 = vadd.f32 %v12021, %v12022
  %v12024 = vsel %vm11604, %v11902, 0.0
  %v12025 = vsel %vm11604, %v11934, 0.0
  %v12026 = vadd.f32 %v12024, %v12025
  %v12027 = vsel %vm11604, %v11903, 0.0
  %v12028 = vsel %vm11604, %v11935, 0.0
  %v12029 = vadd.f32 %v12027, %v12028
  %v12030 = vsel %vm11604, %v11904, 0.0
  %v12031 = vsel %vm11604, %v11936, 0.0
  %v12032 = vadd.f32 %v12030, %v12031
  %v12033 = vmul.f32 %v11939, %v11701
  %v12034 = vmul.f32 %v11942, %v11701
  %v12035 = vmul.f32 %v11945, %v11701
  %v12036 = vmul.f32 %v11948, %v11701
  %v12037 = vmul.f32 %v11951, %v11701
  %v12038 = vmul.f32 %v11954, %v11701
  %v12039 = vmul.f32 %v11957, %v11701
  %v12040 = vmul.f32 %v11960, %v11701
  %v12041 = vmul.f32 %v11963, %v11701
  %v12042 = vmul.f32 %v11966, %v11701
  %v12043 = vmul.f32 %v11969, %v11701
  %v12044 = vmul.f32 %v11972, %v11701
  %v12045 = vmul.f32 %v11975, %v11701
  %v12046 = vmul.f32 %v11978, %v11701
  %v12047 = vmul.f32 %v11981, %v11701
  %v12048 = vmul.f32 %v11984, %v11701
  %v12049 = vmul.f32 %v11987, %v11701
  %v12050 = vmul.f32 %v11990, %v11701
  %v12051 = vmul.f32 %v11993, %v11701
  %v12052 = vmul.f32 %v11996, %v11701
  %v12053 = vmul.f32 %v11999, %v11701
  %v12054 = vmul.f32 %v12002, %v11701
  %v12055 = vmul.f32 %v12005, %v11701
  %v12056 = vmul.f32 %v12008, %v11701
  %v12057 = vmul.f32 %v12011, %v11701
  %v12058 = vmul.f32 %v12014, %v11701
  %v12059 = vmul.f32 %v12017, %v11701
  %v12060 = vmul.f32 %v12020, %v11701
  %v12061 = vmul.f32 %v12023, %v11701
  %v12062 = vmul.f32 %v12026, %v11701
  %v12063 = vmul.f32 %v12029, %v11701
  %v12064 = vmul.f32 %v12032, %v11701
  %v12065 = vsel %vm11604, %v12033, 0.0
  %v12066 = vsel %vm11604, %v12035, 0.0
  %v12067 = vadd.f32 %v12065, %v12066
  %v12068 = vsel %vm11604, %v12037, 0.0
  %v12069 = vadd.f32 %v12067, %v12068
  %v12070 = vsel %vm11604, %v12039, 0.0
  %v12071 = vadd.f32 %v12069, %v12070
  %v12072 = vsel %vm11604, %v12041, 0.0
  %v12073 = vadd.f32 %v12071, %v12072
  %v12074 = vsel %vm11604, %v12043, 0.0
  %v12075 = vadd.f32 %v12073, %v12074
  %v12076 = vsel %vm11604, %v12045, 0.0
  %v12077 = vadd.f32 %v12075, %v12076
  %v12078 = vsel %vm11604, %v12047, 0.0
  %v12079 = vadd.f32 %v12077, %v12078
  %v12080 = vsel %vm11604, %v12049, 0.0
  %v12081 = vadd.f32 %v12079, %v12080
  %v12082 = vsel %vm11604, %v12051, 0.0
  %v12083 = vadd.f32 %v12081, %v12082
  %v12084 = vsel %vm11604, %v12053, 0.0
  %v12085 = vadd.f32 %v12083, %v12084
  %v12086 = vsel %vm11604, %v12055, 0.0
  %v12087 = vadd.f32 %v12085, %v12086
  %v12088 = vsel %vm11604, %v12057, 0.0
  %v12089 = vadd.f32 %v12087, %v12088
  %v12090 = vsel %vm11604, %v12059, 0.0
  %v12091 = vadd.f32 %v12089, %v12090
  %v12092 = vsel %vm11604, %v12061, 0.0
  %v12093 = vadd.f32 %v12091, %v12092
  %v12094 = vsel %vm11604, %v12063, 0.0
  %v12095 = vadd.f32 %v12093, %v12094
  %v12096 = vsel %vm11604, %v12034, 0.0
  %v12097 = vsel %vm11604, %v12036, 0.0
  %v12098 = vadd.f32 %v12096, %v12097
  %v12099 = vsel %vm11604, %v12038, 0.0
  %v12100 = vadd.f32 %v12098, %v12099
  %v12101 = vsel %vm11604, %v12040, 0.0
  %v12102 = vadd.f32 %v12100, %v12101
  %v12103 = vsel %vm11604, %v12042, 0.0
  %v12104 = vadd.f32 %v12102, %v12103
  %v12105 = vsel %vm11604, %v12044, 0.0
  %v12106 = vadd.f32 %v12104, %v12105
  %v12107 = vsel %vm11604, %v12046, 0.0
  %v12108 = vadd.f32 %v12106, %v12107
  %v12109 = vsel %vm11604, %v12048, 0.0
  %v12110 = vadd.f32 %v12108, %v12109
  %v12111 = vsel %vm11604, %v12050, 0.0
  %v12112 = vadd.f32 %v12110, %v12111
  %v12113 = vsel %vm11604, %v12052, 0.0
  %v12114 = vadd.f32 %v12112, %v12113
  %v12115 = vsel %vm11604, %v12054, 0.0
  %v12116 = vadd.f32 %v12114, %v12115
  %v12117 = vsel %vm11604, %v12056, 0.0
  %v12118 = vadd.f32 %v12116, %v12117
  %v12119 = vsel %vm11604, %v12058, 0.0
  %v12120 = vadd.f32 %v12118, %v12119
  %v12121 = vsel %vm11604, %v12060, 0.0
  %v12122 = vadd.f32 %v12120, %v12121
  %v12123 = vsel %vm11604, %v12062, 0.0
  %v12124 = vadd.f32 %v12122, %v12123
  %v12125 = vsel %vm11604, %v12064, 0.0
  %v12126 = vadd.f32 %v12124, %v12125
  %v12127 = vmul.f32 %v12095, %v11796
  %v12128 = vmul.f32 %v12126, %v11796
  %v12129 = vsel %vm11604, %v12127, 0.0
  %v12130 = vsel %vm11604, %v12128, 0.0
  %v12131 = vadd.f32 %v12129, %v12130
  %v12132 = vrot.slane %v12131, 4
  %v12133 = vadd.f32 %v12131, %v12132
  %v12134 = vrot.slane %v12133, 2
  %v12135 = vadd.f32 %v12133, %v12134
  %v12136 = vrot.slane %v12135, 1
  %v12137 = vadd.f32 %v12135, %v12136
  %v12138 = vmul.f32 %v12137, %v11796
  %v12139 = vadd.f32 %v12138, 1e-05
  %v12140 = vrsqrt.pop %v12139
  %v12141 = vmul.f32 %v11809, %v12140
  %v12142 = vmul.f32 %v11810, %v12140
  %v12143 = vmul.f32 %v11811, %v12140
  %v12144 = vmul.f32 %v11812, %v12140
  %v12145 = vmul.f32 %v11813, %v12140
  %v12146 = vmul.f32 %v11814, %v12140
  %v12147 = vmul.f32 %v11815, %v12140
  %v12148 = vmul.f32 %v11816, %v12140
  %v12149 = vmul.f32 %v11817, %v12140
  %v12150 = vmul.f32 %v11818, %v12140
  %v12151 = vmul.f32 %v11819, %v12140
  %v12152 = vmul.f32 %v11820, %v12140
  %v12153 = vmul.f32 %v11821, %v12140
  %v12154 = vmul.f32 %v11822, %v12140
  %v12155 = vmul.f32 %v11823, %v12140
  %v12156 = vmul.f32 %v11824, %v12140
  %v12157 = vmul.f32 %v11825, %v12140
  %v12158 = vmul.f32 %v11826, %v12140
  %v12159 = vmul.f32 %v11827, %v12140
  %v12160 = vmul.f32 %v11828, %v12140
  %v12161 = vmul.f32 %v11829, %v12140
  %v12162 = vmul.f32 %v11830, %v12140
  %v12163 = vmul.f32 %v11831, %v12140
  %v12164 = vmul.f32 %v11832, %v12140
  %v12165 = vmul.f32 %v11833, %v12140
  %v12166 = vmul.f32 %v11834, %v12140
  %v12167 = vmul.f32 %v11835, %v12140
  %v12168 = vmul.f32 %v11836, %v12140
  %v12169 = vmul.f32 %v11837, %v12140
  %v12170 = vmul.f32 %v11838, %v12140
  %v12171 = vmul.f32 %v11839, %v12140
  %v12172 = vmul.f32 %v11840, %v12140
  %v12173 = vmul.f32 %v11841, %v12140
  %v12174 = vmul.f32 %v11842, %v12140
  %v12175 = vmul.f32 %v11843, %v12140
  %v12176 = vmul.f32 %v11844, %v12140
  %v12177 = vmul.f32 %v11845, %v12140
  %v12178 = vmul.f32 %v11846, %v12140
  %v12179 = vmul.f32 %v11847, %v12140
  %v12180 = vmul.f32 %v11848, %v12140
  %v12181 = vmul.f32 %v11849, %v12140
  %v12182 = vmul.f32 %v11850, %v12140
  %v12183 = vmul.f32 %v11851, %v12140
  %v12184 = vmul.f32 %v11852, %v12140
  %v12185 = vmul.f32 %v11853, %v12140
  %v12186 = vmul.f32 %v11854, %v12140
  %v12187 = vmul.f32 %v11855, %v12140
  %v12188 = vmul.f32 %v11856, %v12140
  %v12189 = vmul.f32 %v11857, %v12140
  %v12190 = vmul.f32 %v11858, %v12140
  %v12191 = vmul.f32 %v11859, %v12140
  %v12192 = vmul.f32 %v11860, %v12140
  %v12193 = vmul.f32 %v11861, %v12140
  %v12194 = vmul.f32 %v11862, %v12140
  %v12195 = vmul.f32 %v11863, %v12140
  %v12196 = vmul.f32 %v11864, %v12140
  %v12197 = vmul.f32 %v11865, %v12140
  %v12198 = vmul.f32 %v11866, %v12140
  %v12199 = vmul.f32 %v11867, %v12140
  %v12200 = vmul.f32 %v11868, %v12140
  %v12201 = vmul.f32 %v11869, %v12140
  %v12202 = vmul.f32 %v11870, %v12140
  %v12203 = vmul.f32 %v11871, %v12140
  %v12204 = vmul.f32 %v11872, %v12140
  %12205 = vst.msk [vmem:[%s2] sm:$0xff] %vm11604, %v12141
  %12206 = vst.msk [vmem:[%s2 + $0x8] sm:$0xff] %vm11604, %v12142
  %12207 = vst.msk [vmem:[%s2 + $0x10] sm:$0xff] %vm11604, %v12143
  %12208 = vst.msk [vmem:[%s2 + $0x18] sm:$0xff] %vm11604, %v12144
  %12209 = vst.msk [vmem:[%s2 + $0x20] sm:$0xff] %vm11604, %v12145
  %12210 = vst.msk [vmem:[%s2 + $0x28] sm:$0xff] %vm11604, %v12146
  %12211 = vst.msk [vmem:[%s2 + $0x30] sm:$0xff] %vm11604, %v12147
  %12212 = vst.msk [vmem:[%s2 + $0x38] sm:$0xff] %vm11604, %v12148
  %12213 = vst.msk [vmem:[%s2 + $0x40] sm:$0xff] %vm11604, %v12149
  %12214 = vst.msk [vmem:[%s2 + $0x48] sm:$0xff] %vm11604, %v12150
  %12215 = vst.msk [vmem:[%s2 + $0x50] sm:$0xff] %vm11604, %v12151
  %12216 = vst.msk [vmem:[%s2 + $0x58] sm:$0xff] %vm11604, %v12152
  %12217 = vst.msk [vmem:[%s2 + $0x60] sm:$0xff] %vm11604, %v12153
  %12218 = vst.msk [vmem:[%s2 + $0x68] sm:$0xff] %vm11604, %v12154
  %12219 = vst.msk [vmem:[%s2 + $0x70] sm:$0xff] %vm11604, %v12155
  %12220 = vst.msk [vmem:[%s2 + $0x78] sm:$0xff] %vm11604, %v12156
  %12221 = vst.msk [vmem:[%s2 + $0x80] sm:$0xff] %vm11604, %v12157
  %12222 = vst.msk [vmem:[%s2 + $0x88] sm:$0xff] %vm11604, %v12158
  %12223 = vst.msk [vmem:[%s2 + $0x90] sm:$0xff] %vm11604, %v12159
  %12224 = vst.msk [vmem:[%s2 + $0x98] sm:$0xff] %vm11604, %v12160
  %12225 = vst.msk [vmem:[%s2 + $0xa0] sm:$0xff] %vm11604, %v12161
  %12226 = vst.msk [vmem:[%s2 + $0xa8] sm:$0xff] %vm11604, %v12162
  %12227 = vst.msk [vmem:[%s2 + $0xb0] sm:$0xff] %vm11604, %v12163
  %12228 = vst.msk [vmem:[%s2 + $0xb8] sm:$0xff] %vm11604, %v12164
  %12229 = vst.msk [vmem:[%s2 + $0xc0] sm:$0xff] %vm11604, %v12165
  %12230 = vst.msk [vmem:[%s2 + $0xc8] sm:$0xff] %vm11604, %v12166
  %12231 = vst.msk [vmem:[%s2 + $0xd0] sm:$0xff] %vm11604, %v12167
  %12232 = vst.msk [vmem:[%s2 + $0xd8] sm:$0xff] %vm11604, %v12168
  %12233 = vst.msk [vmem:[%s2 + $0xe0] sm:$0xff] %vm11604, %v12169
  %12234 = vst.msk [vmem:[%s2 + $0xe8] sm:$0xff] %vm11604, %v12170
  %12235 = vst.msk [vmem:[%s2 + $0xf0] sm:$0xff] %vm11604, %v12171
  %12236 = vst.msk [vmem:[%s2 + $0xf8] sm:$0xff] %vm11604, %v12172
  %12237 = vst.msk [vmem:[%s2 + $0x100] sm:$0xff] %vm11604, %v12173
  %12238 = vst.msk [vmem:[%s2 + $0x108] sm:$0xff] %vm11604, %v12174
  %12239 = vst.msk [vmem:[%s2 + $0x110] sm:$0xff] %vm11604, %v12175
  %12240 = vst.msk [vmem:[%s2 + $0x118] sm:$0xff] %vm11604, %v12176
  %12241 = vst.msk [vmem:[%s2 + $0x120] sm:$0xff] %vm11604, %v12177
  %12242 = vst.msk [vmem:[%s2 + $0x128] sm:$0xff] %vm11604, %v12178
  %12243 = vst.msk [vmem:[%s2 + $0x130] sm:$0xff] %vm11604, %v12179
  %12244 = vst.msk [vmem:[%s2 + $0x138] sm:$0xff] %vm11604, %v12180
  %12245 = vst.msk [vmem:[%s2 + $0x140] sm:$0xff] %vm11604, %v12181
  %12246 = vst.msk [vmem:[%s2 + $0x148] sm:$0xff] %vm11604, %v12182
  %12247 = vst.msk [vmem:[%s2 + $0x150] sm:$0xff] %vm11604, %v12183
  %12248 = vst.msk [vmem:[%s2 + $0x158] sm:$0xff] %vm11604, %v12184
  %12249 = vst.msk [vmem:[%s2 + $0x160] sm:$0xff] %vm11604, %v12185
  %12250 = vst.msk [vmem:[%s2 + $0x168] sm:$0xff] %vm11604, %v12186
  %12251 = vst.msk [vmem:[%s2 + $0x170] sm:$0xff] %vm11604, %v12187
  %12252 = vst.msk [vmem:[%s2 + $0x178] sm:$0xff] %vm11604, %v12188
  %12253 = vst.msk [vmem:[%s2 + $0x180] sm:$0xff] %vm11604, %v12189
  %12254 = vst.msk [vmem:[%s2 + $0x188] sm:$0xff] %vm11604, %v12190
  %12255 = vst.msk [vmem:[%s2 + $0x190] sm:$0xff] %vm11604, %v12191
  %12256 = vst.msk [vmem:[%s2 + $0x198] sm:$0xff] %vm11604, %v12192
  %12257 = vst.msk [vmem:[%s2 + $0x1a0] sm:$0xff] %vm11604, %v12193
  %12258 = vst.msk [vmem:[%s2 + $0x1a8] sm:$0xff] %vm11604, %v12194
  %12259 = vst.msk [vmem:[%s2 + $0x1b0] sm:$0xff] %vm11604, %v12195
  %12260 = vst.msk [vmem:[%s2 + $0x1b8] sm:$0xff] %vm11604, %v12196
  %12261 = vst.msk [vmem:[%s2 + $0x1c0] sm:$0xff] %vm11604, %v12197
  %12262 = vst.msk [vmem:[%s2 + $0x1c8] sm:$0xff] %vm11604, %v12198
  %12263 = vst.msk [vmem:[%s2 + $0x1d0] sm:$0xff] %vm11604, %v12199
  %12264 = vst.msk [vmem:[%s2 + $0x1d8] sm:$0xff] %vm11604, %v12200
  %12265 = vst.msk [vmem:[%s2 + $0x1e0] sm:$0xff] %vm11604, %v12201
  %12266 = vst.msk [vmem:[%s2 + $0x1e8] sm:$0xff] %vm11604, %v12202
  %12267 = vst.msk [vmem:[%s2 + $0x1f0] sm:$0xff] %vm11604, %v12203
  %12268 = vst.msk [vmem:[%s2 + $0x1f8] sm:$0xff] %vm11604, %v12204
  // Predicated region
  $region10: #{stem_conv_bn.1} parent=0 // pred_check
    _
  $region11: #{stem_conv_bn.1} parent=0 // pred_check_branch
    %12270 = sbr.rel (0) target = $region13
  $region12: #{stem_conv_bn.1} parent=0 // pred_region
    _
  $region13: #{stem_conv_bn.1} parent=0 // pred_fallthru
    _
  // Predicated region
  $region14: #{stem_conv_bn.1} parent=0 // pred_check
    _
  $region15: #{stem_conv_bn.1} parent=0 // pred_check_branch
    %12272 = sbr.rel (0) target = $region17
  $region16: #{stem_conv_bn.1} parent=0 // pred_region
    _
  $region17: #{stem_conv_bn.1} parent=0 // pred_fallthru
    _

</llo_original>
